<compile_context>
chip_gen: v7x
topology: tpu7x:2x2x1
jax: 0.10.0
libtpu: 0.0.40
codegen_flags: <defaults>
</compile_context>

<pallas_src>
import functools

import jax
import jax.numpy as jnp
from jax import lax
from jax.experimental import pallas as pl
from jax.experimental.pallas import tpu as pltpu

HIDDEN = 14


# ----------------------------------------------------------------------------
# Fused encoder kernel (single pallas_call, no grid).
# ----------------------------------------------------------------------------
def encoder_kernel(x_ref, wih1_ref, wrec_ref, bias_ref, out_ref,
                   *, hidden, seq_len, batch):
    # x_ref:    (T, B, Din)   time-major input
    # wih1_ref: (2, Din, 4H)  layer-1 W_ih^T for [fwd, bwd]
    # wrec_ref: (11, H, 4H)   [whh_f1, whh_b1,
    #                          wih_f2a, wih_f2b, whh_f2,
    #                          wih_b2a, wih_b2b, whh_b2,
    #                          wih_3a,  wih_3b,  whh_3 ]  (all transposed)
    # bias_ref: (5, 1, 4H)    [b_f1, b_b1, b_f2, b_b2, b_3]  (b_ih + b_hh)
    # out_ref:  (T, B, H)     latent output (time-major)
    H, T, B = hidden, seq_len, batch
    f32 = jnp.float32

    def cell(gates, c):
        # gates: (B, 4H) in PyTorch order [i, f, g, o]
        i_g = jax.nn.sigmoid(gates[:, 0:H])
        f_g = jax.nn.sigmoid(gates[:, H:2 * H])
        g_g = jnp.tanh(gates[:, 2 * H:3 * H])
        o_g = jax.nn.sigmoid(gates[:, 3 * H:4 * H])
        c_new = f_g * c + i_g * g_g
        h_new = o_g * jnp.tanh(c_new)
        return h_new, c_new

    def run_dir(gin, whh, reverse):
        # gin: list of T (B, 4H) hoisted gate inputs; whh: (H, 4H) value.
        # Fully unrolled recurrence; returns hidden states indexed by the
        # ORIGINAL timestep (so backward outputs are already aligned).
        h = jnp.zeros((B, H), f32)
        c = jnp.zeros((B, H), f32)
        outs = [None] * T
        order = range(T - 1, -1, -1) if reverse else range(T)
        for t in order:
            gates = jnp.dot(h, whh, preferred_element_type=f32) + gin[t]
            h, c = cell(gates, c)
            outs[t] = h
        return outs

    # ---------------- layer 1: BiLSTM over the raw input ----------------
    wih_f1 = wih1_ref[0]                       # (Din, 4H)
    wih_b1 = wih1_ref[1]
    b_f1 = bias_ref[0]                         # (1, 4H)
    b_b1 = bias_ref[1]
    xs = [x_ref[t] for t in range(T)]          # each (B, Din)
    gin_f1 = [jnp.dot(x_t, wih_f1, preferred_element_type=f32) + b_f1
              for x_t in xs]
    gin_b1 = [jnp.dot(x_t, wih_b1, preferred_element_type=f32) + b_b1
              for x_t in xs]
    y1f = run_dir(gin_f1, wrec_ref[0], reverse=False)
    y1b = run_dir(gin_b1, wrec_ref[1], reverse=True)

    # ---------------- layer 2: BiLSTM over concat(y1f, y1b) -------------
    # concat is folded into the projection: [yf | yb] @ Wih^T == yf@Wa + yb@Wb
    w2fa, w2fb, whh_f2 = wrec_ref[2], wrec_ref[3], wrec_ref[4]
    w2ba, w2bb, whh_b2 = wrec_ref[5], wrec_ref[6], wrec_ref[7]
    b_f2, b_b2 = bias_ref[2], bias_ref[3]
    gin_f2 = [jnp.dot(y1f[t], w2fa, preferred_element_type=f32)
              + jnp.dot(y1b[t], w2fb, preferred_element_type=f32) + b_f2
              for t in range(T)]
    gin_b2 = [jnp.dot(y1f[t], w2ba, preferred_element_type=f32)
              + jnp.dot(y1b[t], w2bb, preferred_element_type=f32) + b_b2
              for t in range(T)]
    y2f = run_dir(gin_f2, whh_f2, reverse=False)
    y2b = run_dir(gin_b2, whh_b2, reverse=True)

    # ---------------- layer 3: unidirectional LSTM -> latent ------------
    w3a, w3b, whh_3 = wrec_ref[8], wrec_ref[9], wrec_ref[10]
    b_3 = bias_ref[4]
    gin_3 = [jnp.dot(y2f[t], w3a, preferred_element_type=f32)
             + jnp.dot(y2b[t], w3b, preferred_element_type=f32) + b_3
             for t in range(T)]
    h = jnp.zeros((B, H), f32)
    c = jnp.zeros((B, H), f32)
    for t in range(T):
        gates = jnp.dot(h, whh_3, preferred_element_type=f32) + gin_3[t]
        h, c = cell(gates, c)
        out_ref[t] = h


# ----------------------------------------------------------------------------
# Wrapper: pack/transposed weights once, single pallas_call, one transpose.
# ----------------------------------------------------------------------------
def encoder_forward(x, params):
    """x: (B, T, n_input) -> latent: (B, T, 14)  (matches encoder_model.forward)."""
    B, T, Din = x.shape
    H = HIDDEN

    def prep(p):
        w_ih, w_hh, b_ih, b_hh = p
        return (jnp.asarray(w_ih, jnp.float32).T,            # (Din_or_2H, 4H)
                jnp.asarray(w_hh, jnp.float32).T,            # (H, 4H)
                (jnp.asarray(b_ih, jnp.float32)
                 + jnp.asarray(b_hh, jnp.float32)).reshape(1, 4 * H))

    wih_f1, whh_f1, b_f1 = prep(params["l1_f"])
    wih_b1, whh_b1, b_b1 = prep(params["l1_b"])
    wih_f2, whh_f2, b_f2 = prep(params["l2_f"])
    wih_b2, whh_b2, b_b2 = prep(params["l2_b"])
    wih_3, whh_3, b_3 = prep(params["l3"])

    wih1 = jnp.stack([wih_f1, wih_b1])                       # (2, Din, 4H)
    wrec = jnp.stack([whh_f1, whh_b1,
                      wih_f2[:H], wih_f2[H:], whh_f2,
                      wih_b2[:H], wih_b2[H:], whh_b2,
                      wih_3[:H], wih_3[H:], whh_3])          # (11, H, 4H)
    bias = jnp.stack([b_f1, b_b1, b_f2, b_b2, b_3])          # (5, 1, 4H)

    x_tm = jnp.transpose(x.astype(jnp.float32), (1, 0, 2))   # (T, B, Din)

    kernel = functools.partial(encoder_kernel, hidden=H, seq_len=T, batch=B)
    vmem = pl.BlockSpec(memory_space=pltpu.MemorySpace.VMEM)
    out_tm = pl.pallas_call(
        kernel,
        out_shape=jax.ShapeDtypeStruct((T, B, H), jnp.float32),
        in_specs=[vmem, vmem, vmem, vmem],
        out_specs=vmem,
    )(x_tm, wih1, wrec, bias)
    return jnp.transpose(out_tm, (1, 0, 2))                  # (B, T, H)


# ----------------------------------------------------------------------------
# Parameter construction (deterministic, PyTorch-style uniform init).
# ----------------------------------------------------------------------------
def make_lstm_params(key, input_size, hidden):
    bound = 1.0 / jnp.sqrt(hidden)
    k = jax.random.split(key, 4)
    w_ih = jax.random.uniform(k[0], (4 * hidden, input_size),
                              minval=-bound, maxval=bound, dtype=jnp.float32)
    w_hh = jax.random.uniform(k[1], (4 * hidden, hidden),
                              minval=-bound, maxval=bound, dtype=jnp.float32)
    b_ih = jax.random.uniform(k[2], (4 * hidden,),
                              minval=-bound, maxval=bound, dtype=jnp.float32)
    b_hh = jax.random.uniform(k[3], (4 * hidden,),
                              minval=-bound, maxval=bound, dtype=jnp.float32)
    return (w_ih, w_hh, b_ih, b_hh)


# ----------------------------------------------------------------------------
# Pure-JAX reference (numerical check of the fused Pallas recurrence).
# ----------------------------------------------------------------------------
def _ref_lstm_dir(x_bf, w_ih, w_hh, b_ih, b_hh, reverse):
    B, T, _ = x_bf.shape
    H = w_hh.shape[1]
    xs = jnp.transpose(x_bf, (1, 0, 2))
    if reverse:
        xs = xs[::-1]

    def step(carry, x_t):
        h, c = carry
        gates = x_t @ w_ih.T + h @ w_hh.T + b_ih + b_hh
        i = jax.nn.sigmoid(gates[:, :H])
        f = jax.nn.sigmoid(gates[:, H:2 * H])
        g = jnp.tanh(gates[:, 2 * H:3 * H])
        o = jax.nn.sigmoid(gates[:, 3 * H:])
        c = f * c + i * g
        h = o * jnp.tanh(c)
        return (h, c), h

    (_, _), hs = lax.scan(step, (jnp.zeros((B, H)), jnp.zeros((B, H))), xs)
    if reverse:
        hs = hs[::-1]
    return jnp.transpose(hs, (1, 0, 2))


def _ref_forward(x, p):
    l1 = jnp.concatenate([_ref_lstm_dir(x, *p["l1_f"], False),
                          _ref_lstm_dir(x, *p["l1_b"], True)], axis=-1)
    l2 = jnp.concatenate([_ref_lstm_dir(l1, *p["l2_f"], False),
                          _ref_lstm_dir(l1, *p["l2_b"], True)], axis=-1)
    return _ref_lstm_dir(l2, *p["l3"], False)


# ----------------------------------------------------------------------------
if __name__ == "__main__":
    n_input = 6
    B, T = 2, 8

    root = jax.random.PRNGKey(0)
    kx, k1f, k1b, k2f, k2b, k3 = jax.random.split(root, 6)

    params = {
        "l1_f": make_lstm_params(k1f, n_input, HIDDEN),
        "l1_b": make_lstm_params(k1b, n_input, HIDDEN),
        "l2_f": make_lstm_params(k2f, 2 * HIDDEN, HIDDEN),
        "l2_b": make_lstm_params(k2b, 2 * HIDDEN, HIDDEN),
        "l3":   make_lstm_params(k3, 2 * HIDDEN, HIDDEN),
    }

    x = jax.random.normal(kx, (B, T, n_input), dtype=jnp.float32)

    fwd = jax.jit(encoder_forward)
    latent = jax.block_until_ready(fwd(x, params))
    assert latent.shape == (B, T, HIDDEN), latent.shape

    ref = jax.block_until_ready(_ref_forward(x, params))
    assert jnp.allclose(latent, ref, atol=1e-5, rtol=1e-5), (
        float(jnp.max(jnp.abs(latent - ref))))

    print("KERNEL_OK")
</pallas_src>

<mosaic_0001>
module attributes {stable_mosaic.version = 11 : i64} {
  func.func @encoder_kernel(%arg0: memref<8x2x6xf32, #tpu.memory_space<vmem>>, %arg1: memref<2x6x56xf32, #tpu.memory_space<vmem>>, %arg2: memref<11x14x56xf32, #tpu.memory_space<vmem>>, %arg3: memref<5x1x56xf32, #tpu.memory_space<vmem>>, %arg4: memref<8x2x14xf32, #tpu.memory_space<vmem>>) attributes {dimension_semantics = [], scalar_prefetch = 0 : i64, scratch_operands = 0 : i64, tpu.core_type = #tpu.core_type<tc>} {
    %c0 = arith.constant 0 : index
    %c0_0 = arith.constant 0 : index
    %c0_1 = arith.constant 0 : index
    %0 = vector.load %arg1[%c0, %c0_0, %c0_1] : memref<2x6x56xf32, #tpu.memory_space<vmem>>, vector<1x6x56xf32>
    %1 = vector.shape_cast %0 : vector<1x6x56xf32> to vector<6x56xf32>
    %c1 = arith.constant 1 : index
    %c0_2 = arith.constant 0 : index
    %c0_3 = arith.constant 0 : index
    %2 = vector.load %arg1[%c1, %c0_2, %c0_3] : memref<2x6x56xf32, #tpu.memory_space<vmem>>, vector<1x6x56xf32>
    %3 = vector.shape_cast %2 : vector<1x6x56xf32> to vector<6x56xf32>
    %c0_4 = arith.constant 0 : index
    %c0_5 = arith.constant 0 : index
    %c0_6 = arith.constant 0 : index
    %4 = vector.load %arg3[%c0_4, %c0_5, %c0_6] : memref<5x1x56xf32, #tpu.memory_space<vmem>>, vector<1x1x56xf32>
    %5 = vector.shape_cast %4 : vector<1x1x56xf32> to vector<1x56xf32>
    %c1_7 = arith.constant 1 : index
    %c0_8 = arith.constant 0 : index
    %c0_9 = arith.constant 0 : index
    %6 = vector.load %arg3[%c1_7, %c0_8, %c0_9] : memref<5x1x56xf32, #tpu.memory_space<vmem>>, vector<1x1x56xf32>
    %7 = vector.shape_cast %6 : vector<1x1x56xf32> to vector<1x56xf32>
    %c0_10 = arith.constant 0 : index
    %c0_11 = arith.constant 0 : index
    %c0_12 = arith.constant 0 : index
    %8 = vector.load %arg0[%c0_10, %c0_11, %c0_12] : memref<8x2x6xf32, #tpu.memory_space<vmem>>, vector<1x2x6xf32>
    %9 = vector.shape_cast %8 : vector<1x2x6xf32> to vector<2x6xf32>
    %c1_13 = arith.constant 1 : index
    %c0_14 = arith.constant 0 : index
    %c0_15 = arith.constant 0 : index
    %10 = vector.load %arg0[%c1_13, %c0_14, %c0_15] : memref<8x2x6xf32, #tpu.memory_space<vmem>>, vector<1x2x6xf32>
    %11 = vector.shape_cast %10 : vector<1x2x6xf32> to vector<2x6xf32>
    %c2 = arith.constant 2 : index
    %c0_16 = arith.constant 0 : index
    %c0_17 = arith.constant 0 : index
    %12 = vector.load %arg0[%c2, %c0_16, %c0_17] : memref<8x2x6xf32, #tpu.memory_space<vmem>>, vector<1x2x6xf32>
    %13 = vector.shape_cast %12 : vector<1x2x6xf32> to vector<2x6xf32>
    %c3 = arith.constant 3 : index
    %c0_18 = arith.constant 0 : index
    %c0_19 = arith.constant 0 : index
    %14 = vector.load %arg0[%c3, %c0_18, %c0_19] : memref<8x2x6xf32, #tpu.memory_space<vmem>>, vector<1x2x6xf32>
    %15 = vector.shape_cast %14 : vector<1x2x6xf32> to vector<2x6xf32>
    %c4 = arith.constant 4 : index
    %c0_20 = arith.constant 0 : index
    %c0_21 = arith.constant 0 : index
    %16 = vector.load %arg0[%c4, %c0_20, %c0_21] : memref<8x2x6xf32, #tpu.memory_space<vmem>>, vector<1x2x6xf32>
    %17 = vector.shape_cast %16 : vector<1x2x6xf32> to vector<2x6xf32>
    %c5 = arith.constant 5 : index
    %c0_22 = arith.constant 0 : index
    %c0_23 = arith.constant 0 : index
    %18 = vector.load %arg0[%c5, %c0_22, %c0_23] : memref<8x2x6xf32, #tpu.memory_space<vmem>>, vector<1x2x6xf32>
    %19 = vector.shape_cast %18 : vector<1x2x6xf32> to vector<2x6xf32>
    %c6 = arith.constant 6 : index
    %c0_24 = arith.constant 0 : index
    %c0_25 = arith.constant 0 : index
    %20 = vector.load %arg0[%c6, %c0_24, %c0_25] : memref<8x2x6xf32, #tpu.memory_space<vmem>>, vector<1x2x6xf32>
    %21 = vector.shape_cast %20 : vector<1x2x6xf32> to vector<2x6xf32>
    %c7 = arith.constant 7 : index
    %c0_26 = arith.constant 0 : index
    %c0_27 = arith.constant 0 : index
    %22 = vector.load %arg0[%c7, %c0_26, %c0_27] : memref<8x2x6xf32, #tpu.memory_space<vmem>>, vector<1x2x6xf32>
    %23 = vector.shape_cast %22 : vector<1x2x6xf32> to vector<2x6xf32>
    %cst = arith.constant dense<0.000000e+00> : vector<2x56xf32>
    %24 = tpu.matmul %9, %1, %cst {dimension_numbers = #tpu.dot_dimension_numbers<[1], [0], [0], [1], [0, 0, 1, 1], [], []>} : vector<2x6xf32>, vector<6x56xf32>, vector<2x56xf32> -> vector<2x56xf32>
    %25 = vector.broadcast %5 : vector<1x56xf32> to vector<2x56xf32>
    %26 = arith.addf %24, %25 : vector<2x56xf32>
    %cst_28 = arith.constant dense<0.000000e+00> : vector<2x56xf32>
    %27 = tpu.matmul %11, %1, %cst_28 {dimension_numbers = #tpu.dot_dimension_numbers<[1], [0], [0], [1], [0, 0, 1, 1], [], []>} : vector<2x6xf32>, vector<6x56xf32>, vector<2x56xf32> -> vector<2x56xf32>
    %28 = vector.broadcast %5 : vector<1x56xf32> to vector<2x56xf32>
    %29 = arith.addf %27, %28 : vector<2x56xf32>
    %cst_29 = arith.constant dense<0.000000e+00> : vector<2x56xf32>
    %30 = tpu.matmul %13, %1, %cst_29 {dimension_numbers = #tpu.dot_dimension_numbers<[1], [0], [0], [1], [0, 0, 1, 1], [], []>} : vector<2x6xf32>, vector<6x56xf32>, vector<2x56xf32> -> vector<2x56xf32>
    %31 = vector.broadcast %5 : vector<1x56xf32> to vector<2x56xf32>
    %32 = arith.addf %30, %31 : vector<2x56xf32>
    %cst_30 = arith.constant dense<0.000000e+00> : vector<2x56xf32>
    %33 = tpu.matmul %15, %1, %cst_30 {dimension_numbers = #tpu.dot_dimension_numbers<[1], [0], [0], [1], [0, 0, 1, 1], [], []>} : vector<2x6xf32>, vector<6x56xf32>, vector<2x56xf32> -> vector<2x56xf32>
    %34 = vector.broadcast %5 : vector<1x56xf32> to vector<2x56xf32>
    %35 = arith.addf %33, %34 : vector<2x56xf32>
    %cst_31 = arith.constant dense<0.000000e+00> : vector<2x56xf32>
    %36 = tpu.matmul %17, %1, %cst_31 {dimension_numbers = #tpu.dot_dimension_numbers<[1], [0], [0], [1], [0, 0, 1, 1], [], []>} : vector<2x6xf32>, vector<6x56xf32>, vector<2x56xf32> -> vector<2x56xf32>
    %37 = vector.broadcast %5 : vector<1x56xf32> to vector<2x56xf32>
    %38 = arith.addf %36, %37 : vector<2x56xf32>
    %cst_32 = arith.constant dense<0.000000e+00> : vector<2x56xf32>
    %39 = tpu.matmul %19, %1, %cst_32 {dimension_numbers = #tpu.dot_dimension_numbers<[1], [0], [0], [1], [0, 0, 1, 1], [], []>} : vector<2x6xf32>, vector<6x56xf32>, vector<2x56xf32> -> vector<2x56xf32>
    %40 = vector.broadcast %5 : vector<1x56xf32> to vector<2x56xf32>
    %41 = arith.addf %39, %40 : vector<2x56xf32>
    %cst_33 = arith.constant dense<0.000000e+00> : vector<2x56xf32>
    %42 = tpu.matmul %21, %1, %cst_33 {dimension_numbers = #tpu.dot_dimension_numbers<[1], [0], [0], [1], [0, 0, 1, 1], [], []>} : vector<2x6xf32>, vector<6x56xf32>, vector<2x56xf32> -> vector<2x56xf32>
    %43 = vector.broadcast %5 : vector<1x56xf32> to vector<2x56xf32>
    %44 = arith.addf %42, %43 : vector<2x56xf32>
    %cst_34 = arith.constant dense<0.000000e+00> : vector<2x56xf32>
    %45 = tpu.matmul %23, %1, %cst_34 {dimension_numbers = #tpu.dot_dimension_numbers<[1], [0], [0], [1], [0, 0, 1, 1], [], []>} : vector<2x6xf32>, vector<6x56xf32>, vector<2x56xf32> -> vector<2x56xf32>
    %46 = vector.broadcast %5 : vector<1x56xf32> to vector<2x56xf32>
    %47 = arith.addf %45, %46 : vector<2x56xf32>
    %cst_35 = arith.constant dense<0.000000e+00> : vector<2x56xf32>
    %48 = tpu.matmul %9, %3, %cst_35 {dimension_numbers = #tpu.dot_dimension_numbers<[1], [0], [0], [1], [0, 0, 1, 1], [], []>} : vector<2x6xf32>, vector<6x56xf32>, vector<2x56xf32> -> vector<2x56xf32>
    %49 = vector.broadcast %7 : vector<1x56xf32> to vector<2x56xf32>
    %50 = arith.addf %48, %49 : vector<2x56xf32>
    %cst_36 = arith.constant dense<0.000000e+00> : vector<2x56xf32>
    %51 = tpu.matmul %11, %3, %cst_36 {dimension_numbers = #tpu.dot_dimension_numbers<[1], [0], [0], [1], [0, 0, 1, 1], [], []>} : vector<2x6xf32>, vector<6x56xf32>, vector<2x56xf32> -> vector<2x56xf32>
    %52 = vector.broadcast %7 : vector<1x56xf32> to vector<2x56xf32>
    %53 = arith.addf %51, %52 : vector<2x56xf32>
    %cst_37 = arith.constant dense<0.000000e+00> : vector<2x56xf32>
    %54 = tpu.matmul %13, %3, %cst_37 {dimension_numbers = #tpu.dot_dimension_numbers<[1], [0], [0], [1], [0, 0, 1, 1], [], []>} : vector<2x6xf32>, vector<6x56xf32>, vector<2x56xf32> -> vector<2x56xf32>
    %55 = vector.broadcast %7 : vector<1x56xf32> to vector<2x56xf32>
    %56 = arith.addf %54, %55 : vector<2x56xf32>
    %cst_38 = arith.constant dense<0.000000e+00> : vector<2x56xf32>
    %57 = tpu.matmul %15, %3, %cst_38 {dimension_numbers = #tpu.dot_dimension_numbers<[1], [0], [0], [1], [0, 0, 1, 1], [], []>} : vector<2x6xf32>, vector<6x56xf32>, vector<2x56xf32> -> vector<2x56xf32>
    %58 = vector.broadcast %7 : vector<1x56xf32> to vector<2x56xf32>
    %59 = arith.addf %57, %58 : vector<2x56xf32>
    %cst_39 = arith.constant dense<0.000000e+00> : vector<2x56xf32>
    %60 = tpu.matmul %17, %3, %cst_39 {dimension_numbers = #tpu.dot_dimension_numbers<[1], [0], [0], [1], [0, 0, 1, 1], [], []>} : vector<2x6xf32>, vector<6x56xf32>, vector<2x56xf32> -> vector<2x56xf32>
    %61 = vector.broadcast %7 : vector<1x56xf32> to vector<2x56xf32>
    %62 = arith.addf %60, %61 : vector<2x56xf32>
    %cst_40 = arith.constant dense<0.000000e+00> : vector<2x56xf32>
    %63 = tpu.matmul %19, %3, %cst_40 {dimension_numbers = #tpu.dot_dimension_numbers<[1], [0], [0], [1], [0, 0, 1, 1], [], []>} : vector<2x6xf32>, vector<6x56xf32>, vector<2x56xf32> -> vector<2x56xf32>
    %64 = vector.broadcast %7 : vector<1x56xf32> to vector<2x56xf32>
    %65 = arith.addf %63, %64 : vector<2x56xf32>
    %cst_41 = arith.constant dense<0.000000e+00> : vector<2x56xf32>
    %66 = tpu.matmul %21, %3, %cst_41 {dimension_numbers = #tpu.dot_dimension_numbers<[1], [0], [0], [1], [0, 0, 1, 1], [], []>} : vector<2x6xf32>, vector<6x56xf32>, vector<2x56xf32> -> vector<2x56xf32>
    %67 = vector.broadcast %7 : vector<1x56xf32> to vector<2x56xf32>
    %68 = arith.addf %66, %67 : vector<2x56xf32>
    %cst_42 = arith.constant dense<0.000000e+00> : vector<2x56xf32>
    %69 = tpu.matmul %23, %3, %cst_42 {dimension_numbers = #tpu.dot_dimension_numbers<[1], [0], [0], [1], [0, 0, 1, 1], [], []>} : vector<2x6xf32>, vector<6x56xf32>, vector<2x56xf32> -> vector<2x56xf32>
    %70 = vector.broadcast %7 : vector<1x56xf32> to vector<2x56xf32>
    %71 = arith.addf %69, %70 : vector<2x56xf32>
    %c0_43 = arith.constant 0 : index
    %c0_44 = arith.constant 0 : index
    %c0_45 = arith.constant 0 : index
    %72 = vector.load %arg2[%c0_43, %c0_44, %c0_45] : memref<11x14x56xf32, #tpu.memory_space<vmem>>, vector<1x14x56xf32>
    %73 = vector.shape_cast %72 : vector<1x14x56xf32> to vector<14x56xf32>
    %cst_46 = arith.constant 0.000000e+00 : f32
    %74 = vector.broadcast %cst_46 : f32 to vector<2x14xf32>
    %cst_47 = arith.constant 0.000000e+00 : f32
    %75 = vector.broadcast %cst_47 : f32 to vector<2x14xf32>
    %cst_48 = arith.constant dense<0.000000e+00> : vector<2x56xf32>
    %76 = tpu.matmul %74, %73, %cst_48 {dimension_numbers = #tpu.dot_dimension_numbers<[1], [0], [0], [1], [0, 0, 1, 1], [], []>} : vector<2x14xf32>, vector<14x56xf32>, vector<2x56xf32> -> vector<2x56xf32>
    %77 = arith.addf %76, %26 : vector<2x56xf32>
    %78 = vector.extract_strided_slice %77 {offsets = [0, 0], sizes = [2, 14], strides = [1, 1]} : vector<2x56xf32> to vector<2x14xf32>
    %79 = arith.negf %78 : vector<2x14xf32>
    %80 = math.exp %79 : vector<2x14xf32>
    %cst_49 = arith.constant 1.000000e+00 : f32
    %81 = vector.broadcast %cst_49 : f32 to vector<2x14xf32>
    %82 = arith.addf %81, %80 : vector<2x14xf32>
    %83 = arith.divf %81, %82 : vector<2x14xf32>
    %84 = vector.extract_strided_slice %77 {offsets = [0, 14], sizes = [2, 14], strides = [1, 1]} : vector<2x56xf32> to vector<2x14xf32>
    %85 = arith.negf %84 : vector<2x14xf32>
    %86 = math.exp %85 : vector<2x14xf32>
    %cst_50 = arith.constant 1.000000e+00 : f32
    %87 = vector.broadcast %cst_50 : f32 to vector<2x14xf32>
    %88 = arith.addf %87, %86 : vector<2x14xf32>
    %89 = arith.divf %87, %88 : vector<2x14xf32>
    %90 = vector.extract_strided_slice %77 {offsets = [0, 28], sizes = [2, 14], strides = [1, 1]} : vector<2x56xf32> to vector<2x14xf32>
    %91 = math.tanh %90 : vector<2x14xf32>
    %92 = vector.extract_strided_slice %77 {offsets = [0, 42], sizes = [2, 14], strides = [1, 1]} : vector<2x56xf32> to vector<2x14xf32>
    %93 = arith.negf %92 : vector<2x14xf32>
    %94 = math.exp %93 : vector<2x14xf32>
    %cst_51 = arith.constant 1.000000e+00 : f32
    %95 = vector.broadcast %cst_51 : f32 to vector<2x14xf32>
    %96 = arith.addf %95, %94 : vector<2x14xf32>
    %97 = arith.divf %95, %96 : vector<2x14xf32>
    %98 = arith.mulf %89, %75 : vector<2x14xf32>
    %99 = arith.mulf %83, %91 : vector<2x14xf32>
    %100 = arith.addf %98, %99 : vector<2x14xf32>
    %101 = math.tanh %100 : vector<2x14xf32>
    %102 = arith.mulf %97, %101 : vector<2x14xf32>
    %cst_52 = arith.constant dense<0.000000e+00> : vector<2x56xf32>
    %103 = tpu.matmul %102, %73, %cst_52 {dimension_numbers = #tpu.dot_dimension_numbers<[1], [0], [0], [1], [0, 0, 1, 1], [], []>} : vector<2x14xf32>, vector<14x56xf32>, vector<2x56xf32> -> vector<2x56xf32>
    %104 = arith.addf %103, %29 : vector<2x56xf32>
    %105 = vector.extract_strided_slice %104 {offsets = [0, 0], sizes = [2, 14], strides = [1, 1]} : vector<2x56xf32> to vector<2x14xf32>
    %106 = arith.negf %105 : vector<2x14xf32>
    %107 = math.exp %106 : vector<2x14xf32>
    %cst_53 = arith.constant 1.000000e+00 : f32
    %108 = vector.broadcast %cst_53 : f32 to vector<2x14xf32>
    %109 = arith.addf %108, %107 : vector<2x14xf32>
    %110 = arith.divf %108, %109 : vector<2x14xf32>
    %111 = vector.extract_strided_slice %104 {offsets = [0, 14], sizes = [2, 14], strides = [1, 1]} : vector<2x56xf32> to vector<2x14xf32>
    %112 = arith.negf %111 : vector<2x14xf32>
    %113 = math.exp %112 : vector<2x14xf32>
    %cst_54 = arith.constant 1.000000e+00 : f32
    %114 = vector.broadcast %cst_54 : f32 to vector<2x14xf32>
    %115 = arith.addf %114, %113 : vector<2x14xf32>
    %116 = arith.divf %114, %115 : vector<2x14xf32>
    %117 = vector.extract_strided_slice %104 {offsets = [0, 28], sizes = [2, 14], strides = [1, 1]} : vector<2x56xf32> to vector<2x14xf32>
    %118 = math.tanh %117 : vector<2x14xf32>
    %119 = vector.extract_strided_slice %104 {offsets = [0, 42], sizes = [2, 14], strides = [1, 1]} : vector<2x56xf32> to vector<2x14xf32>
    %120 = arith.negf %119 : vector<2x14xf32>
    %121 = math.exp %120 : vector<2x14xf32>
    %cst_55 = arith.constant 1.000000e+00 : f32
    %122 = vector.broadcast %cst_55 : f32 to vector<2x14xf32>
    %123 = arith.addf %122, %121 : vector<2x14xf32>
    %124 = arith.divf %122, %123 : vector<2x14xf32>
    %125 = arith.mulf %116, %100 : vector<2x14xf32>
    %126 = arith.mulf %110, %118 : vector<2x14xf32>
    %127 = arith.addf %125, %126 : vector<2x14xf32>
    %128 = math.tanh %127 : vector<2x14xf32>
    %129 = arith.mulf %124, %128 : vector<2x14xf32>
    %cst_56 = arith.constant dense<0.000000e+00> : vector<2x56xf32>
    %130 = tpu.matmul %129, %73, %cst_56 {dimension_numbers = #tpu.dot_dimension_numbers<[1], [0], [0], [1], [0, 0, 1, 1], [], []>} : vector<2x14xf32>, vector<14x56xf32>, vector<2x56xf32> -> vector<2x56xf32>
    %131 = arith.addf %130, %32 : vector<2x56xf32>
    %132 = vector.extract_strided_slice %131 {offsets = [0, 0], sizes = [2, 14], strides = [1, 1]} : vector<2x56xf32> to vector<2x14xf32>
    %133 = arith.negf %132 : vector<2x14xf32>
    %134 = math.exp %133 : vector<2x14xf32>
    %cst_57 = arith.constant 1.000000e+00 : f32
    %135 = vector.broadcast %cst_57 : f32 to vector<2x14xf32>
    %136 = arith.addf %135, %134 : vector<2x14xf32>
    %137 = arith.divf %135, %136 : vector<2x14xf32>
    %138 = vector.extract_strided_slice %131 {offsets = [0, 14], sizes = [2, 14], strides = [1, 1]} : vector<2x56xf32> to vector<2x14xf32>
    %139 = arith.negf %138 : vector<2x14xf32>
    %140 = math.exp %139 : vector<2x14xf32>
    %cst_58 = arith.constant 1.000000e+00 : f32
    %141 = vector.broadcast %cst_58 : f32 to vector<2x14xf32>
    %142 = arith.addf %141, %140 : vector<2x14xf32>
    %143 = arith.divf %141, %142 : vector<2x14xf32>
    %144 = vector.extract_strided_slice %131 {offsets = [0, 28], sizes = [2, 14], strides = [1, 1]} : vector<2x56xf32> to vector<2x14xf32>
    %145 = math.tanh %144 : vector<2x14xf32>
    %146 = vector.extract_strided_slice %131 {offsets = [0, 42], sizes = [2, 14], strides = [1, 1]} : vector<2x56xf32> to vector<2x14xf32>
    %147 = arith.negf %146 : vector<2x14xf32>
    %148 = math.exp %147 : vector<2x14xf32>
    %cst_59 = arith.constant 1.000000e+00 : f32
    %149 = vector.broadcast %cst_59 : f32 to vector<2x14xf32>
    %150 = arith.addf %149, %148 : vector<2x14xf32>
    %151 = arith.divf %149, %150 : vector<2x14xf32>
    %152 = arith.mulf %143, %127 : vector<2x14xf32>
    %153 = arith.mulf %137, %145 : vector<2x14xf32>
    %154 = arith.addf %152, %153 : vector<2x14xf32>
    %155 = math.tanh %154 : vector<2x14xf32>
    %156 = arith.mulf %151, %155 : vector<2x14xf32>
    %cst_60 = arith.constant dense<0.000000e+00> : vector<2x56xf32>
    %157 = tpu.matmul %156, %73, %cst_60 {dimension_numbers = #tpu.dot_dimension_numbers<[1], [0], [0], [1], [0, 0, 1, 1], [], []>} : vector<2x14xf32>, vector<14x56xf32>, vector<2x56xf32> -> vector<2x56xf32>
    %158 = arith.addf %157, %35 : vector<2x56xf32>
    %159 = vector.extract_strided_slice %158 {offsets = [0, 0], sizes = [2, 14], strides = [1, 1]} : vector<2x56xf32> to vector<2x14xf32>
    %160 = arith.negf %159 : vector<2x14xf32>
    %161 = math.exp %160 : vector<2x14xf32>
    %cst_61 = arith.constant 1.000000e+00 : f32
    %162 = vector.broadcast %cst_61 : f32 to vector<2x14xf32>
    %163 = arith.addf %162, %161 : vector<2x14xf32>
    %164 = arith.divf %162, %163 : vector<2x14xf32>
    %165 = vector.extract_strided_slice %158 {offsets = [0, 14], sizes = [2, 14], strides = [1, 1]} : vector<2x56xf32> to vector<2x14xf32>
    %166 = arith.negf %165 : vector<2x14xf32>
    %167 = math.exp %166 : vector<2x14xf32>
    %cst_62 = arith.constant 1.000000e+00 : f32
    %168 = vector.broadcast %cst_62 : f32 to vector<2x14xf32>
    %169 = arith.addf %168, %167 : vector<2x14xf32>
    %170 = arith.divf %168, %169 : vector<2x14xf32>
    %171 = vector.extract_strided_slice %158 {offsets = [0, 28], sizes = [2, 14], strides = [1, 1]} : vector<2x56xf32> to vector<2x14xf32>
    %172 = math.tanh %171 : vector<2x14xf32>
    %173 = vector.extract_strided_slice %158 {offsets = [0, 42], sizes = [2, 14], strides = [1, 1]} : vector<2x56xf32> to vector<2x14xf32>
    %174 = arith.negf %173 : vector<2x14xf32>
    %175 = math.exp %174 : vector<2x14xf32>
    %cst_63 = arith.constant 1.000000e+00 : f32
    %176 = vector.broadcast %cst_63 : f32 to vector<2x14xf32>
    %177 = arith.addf %176, %175 : vector<2x14xf32>
    %178 = arith.divf %176, %177 : vector<2x14xf32>
    %179 = arith.mulf %170, %154 : vector<2x14xf32>
    %180 = arith.mulf %164, %172 : vector<2x14xf32>
    %181 = arith.addf %179, %180 : vector<2x14xf32>
    %182 = math.tanh %181 : vector<2x14xf32>
    %183 = arith.mulf %178, %182 : vector<2x14xf32>
    %cst_64 = arith.constant dense<0.000000e+00> : vector<2x56xf32>
    %184 = tpu.matmul %183, %73, %cst_64 {dimension_numbers = #tpu.dot_dimension_numbers<[1], [0], [0], [1], [0, 0, 1, 1], [], []>} : vector<2x14xf32>, vector<14x56xf32>, vector<2x56xf32> -> vector<2x56xf32>
    %185 = arith.addf %184, %38 : vector<2x56xf32>
    %186 = vector.extract_strided_slice %185 {offsets = [0, 0], sizes = [2, 14], strides = [1, 1]} : vector<2x56xf32> to vector<2x14xf32>
    %187 = arith.negf %186 : vector<2x14xf32>
    %188 = math.exp %187 : vector<2x14xf32>
    %cst_65 = arith.constant 1.000000e+00 : f32
    %189 = vector.broadcast %cst_65 : f32 to vector<2x14xf32>
    %190 = arith.addf %189, %188 : vector<2x14xf32>
    %191 = arith.divf %189, %190 : vector<2x14xf32>
    %192 = vector.extract_strided_slice %185 {offsets = [0, 14], sizes = [2, 14], strides = [1, 1]} : vector<2x56xf32> to vector<2x14xf32>
    %193 = arith.negf %192 : vector<2x14xf32>
    %194 = math.exp %193 : vector<2x14xf32>
    %cst_66 = arith.constant 1.000000e+00 : f32
    %195 = vector.broadcast %cst_66 : f32 to vector<2x14xf32>
    %196 = arith.addf %195, %194 : vector<2x14xf32>
    %197 = arith.divf %195, %196 : vector<2x14xf32>
    %198 = vector.extract_strided_slice %185 {offsets = [0, 28], sizes = [2, 14], strides = [1, 1]} : vector<2x56xf32> to vector<2x14xf32>
    %199 = math.tanh %198 : vector<2x14xf32>
    %200 = vector.extract_strided_slice %185 {offsets = [0, 42], sizes = [2, 14], strides = [1, 1]} : vector<2x56xf32> to vector<2x14xf32>
    %201 = arith.negf %200 : vector<2x14xf32>
    %202 = math.exp %201 : vector<2x14xf32>
    %cst_67 = arith.constant 1.000000e+00 : f32
    %203 = vector.broadcast %cst_67 : f32 to vector<2x14xf32>
    %204 = arith.addf %203, %202 : vector<2x14xf32>
    %205 = arith.divf %203, %204 : vector<2x14xf32>
    %206 = arith.mulf %197, %181 : vector<2x14xf32>
    %207 = arith.mulf %191, %199 : vector<2x14xf32>
    %208 = arith.addf %206, %207 : vector<2x14xf32>
    %209 = math.tanh %208 : vector<2x14xf32>
    %210 = arith.mulf %205, %209 : vector<2x14xf32>
    %cst_68 = arith.constant dense<0.000000e+00> : vector<2x56xf32>
    %211 = tpu.matmul %210, %73, %cst_68 {dimension_numbers = #tpu.dot_dimension_numbers<[1], [0], [0], [1], [0, 0, 1, 1], [], []>} : vector<2x14xf32>, vector<14x56xf32>, vector<2x56xf32> -> vector<2x56xf32>
    %212 = arith.addf %211, %41 : vector<2x56xf32>
    %213 = vector.extract_strided_slice %212 {offsets = [0, 0], sizes = [2, 14], strides = [1, 1]} : vector<2x56xf32> to vector<2x14xf32>
    %214 = arith.negf %213 : vector<2x14xf32>
    %215 = math.exp %214 : vector<2x14xf32>
    %cst_69 = arith.constant 1.000000e+00 : f32
    %216 = vector.broadcast %cst_69 : f32 to vector<2x14xf32>
    %217 = arith.addf %216, %215 : vector<2x14xf32>
    %218 = arith.divf %216, %217 : vector<2x14xf32>
    %219 = vector.extract_strided_slice %212 {offsets = [0, 14], sizes = [2, 14], strides = [1, 1]} : vector<2x56xf32> to vector<2x14xf32>
    %220 = arith.negf %219 : vector<2x14xf32>
    %221 = math.exp %220 : vector<2x14xf32>
    %cst_70 = arith.constant 1.000000e+00 : f32
    %222 = vector.broadcast %cst_70 : f32 to vector<2x14xf32>
    %223 = arith.addf %222, %221 : vector<2x14xf32>
    %224 = arith.divf %222, %223 : vector<2x14xf32>
    %225 = vector.extract_strided_slice %212 {offsets = [0, 28], sizes = [2, 14], strides = [1, 1]} : vector<2x56xf32> to vector<2x14xf32>
    %226 = math.tanh %225 : vector<2x14xf32>
    %227 = vector.extract_strided_slice %212 {offsets = [0, 42], sizes = [2, 14], strides = [1, 1]} : vector<2x56xf32> to vector<2x14xf32>
    %228 = arith.negf %227 : vector<2x14xf32>
    %229 = math.exp %228 : vector<2x14xf32>
    %cst_71 = arith.constant 1.000000e+00 : f32
    %230 = vector.broadcast %cst_71 : f32 to vector<2x14xf32>
    %231 = arith.addf %230, %229 : vector<2x14xf32>
    %232 = arith.divf %230, %231 : vector<2x14xf32>
    %233 = arith.mulf %224, %208 : vector<2x14xf32>
    %234 = arith.mulf %218, %226 : vector<2x14xf32>
    %235 = arith.addf %233, %234 : vector<2x14xf32>
    %236 = math.tanh %235 : vector<2x14xf32>
    %237 = arith.mulf %232, %236 : vector<2x14xf32>
    %cst_72 = arith.constant dense<0.000000e+00> : vector<2x56xf32>
    %238 = tpu.matmul %237, %73, %cst_72 {dimension_numbers = #tpu.dot_dimension_numbers<[1], [0], [0], [1], [0, 0, 1, 1], [], []>} : vector<2x14xf32>, vector<14x56xf32>, vector<2x56xf32> -> vector<2x56xf32>
    %239 = arith.addf %238, %44 : vector<2x56xf32>
    %240 = vector.extract_strided_slice %239 {offsets = [0, 0], sizes = [2, 14], strides = [1, 1]} : vector<2x56xf32> to vector<2x14xf32>
    %241 = arith.negf %240 : vector<2x14xf32>
    %242 = math.exp %241 : vector<2x14xf32>
    %cst_73 = arith.constant 1.000000e+00 : f32
    %243 = vector.broadcast %cst_73 : f32 to vector<2x14xf32>
    %244 = arith.addf %243, %242 : vector<2x14xf32>
    %245 = arith.divf %243, %244 : vector<2x14xf32>
    %246 = vector.extract_strided_slice %239 {offsets = [0, 14], sizes = [2, 14], strides = [1, 1]} : vector<2x56xf32> to vector<2x14xf32>
    %247 = arith.negf %246 : vector<2x14xf32>
    %248 = math.exp %247 : vector<2x14xf32>
    %cst_74 = arith.constant 1.000000e+00 : f32
    %249 = vector.broadcast %cst_74 : f32 to vector<2x14xf32>
    %250 = arith.addf %249, %248 : vector<2x14xf32>
    %251 = arith.divf %249, %250 : vector<2x14xf32>
    %252 = vector.extract_strided_slice %239 {offsets = [0, 28], sizes = [2, 14], strides = [1, 1]} : vector<2x56xf32> to vector<2x14xf32>
    %253 = math.tanh %252 : vector<2x14xf32>
    %254 = vector.extract_strided_slice %239 {offsets = [0, 42], sizes = [2, 14], strides = [1, 1]} : vector<2x56xf32> to vector<2x14xf32>
    %255 = arith.negf %254 : vector<2x14xf32>
    %256 = math.exp %255 : vector<2x14xf32>
    %cst_75 = arith.constant 1.000000e+00 : f32
    %257 = vector.broadcast %cst_75 : f32 to vector<2x14xf32>
    %258 = arith.addf %257, %256 : vector<2x14xf32>
    %259 = arith.divf %257, %258 : vector<2x14xf32>
    %260 = arith.mulf %251, %235 : vector<2x14xf32>
    %261 = arith.mulf %245, %253 : vector<2x14xf32>
    %262 = arith.addf %260, %261 : vector<2x14xf32>
    %263 = math.tanh %262 : vector<2x14xf32>
    %264 = arith.mulf %259, %263 : vector<2x14xf32>
    %cst_76 = arith.constant dense<0.000000e+00> : vector<2x56xf32>
    %265 = tpu.matmul %264, %73, %cst_76 {dimension_numbers = #tpu.dot_dimension_numbers<[1], [0], [0], [1], [0, 0, 1, 1], [], []>} : vector<2x14xf32>, vector<14x56xf32>, vector<2x56xf32> -> vector<2x56xf32>
    %266 = arith.addf %265, %47 : vector<2x56xf32>
    %267 = vector.extract_strided_slice %266 {offsets = [0, 0], sizes = [2, 14], strides = [1, 1]} : vector<2x56xf32> to vector<2x14xf32>
    %268 = arith.negf %267 : vector<2x14xf32>
    %269 = math.exp %268 : vector<2x14xf32>
    %cst_77 = arith.constant 1.000000e+00 : f32
    %270 = vector.broadcast %cst_77 : f32 to vector<2x14xf32>
    %271 = arith.addf %270, %269 : vector<2x14xf32>
    %272 = arith.divf %270, %271 : vector<2x14xf32>
    %273 = vector.extract_strided_slice %266 {offsets = [0, 14], sizes = [2, 14], strides = [1, 1]} : vector<2x56xf32> to vector<2x14xf32>
    %274 = arith.negf %273 : vector<2x14xf32>
    %275 = math.exp %274 : vector<2x14xf32>
    %cst_78 = arith.constant 1.000000e+00 : f32
    %276 = vector.broadcast %cst_78 : f32 to vector<2x14xf32>
    %277 = arith.addf %276, %275 : vector<2x14xf32>
    %278 = arith.divf %276, %277 : vector<2x14xf32>
    %279 = vector.extract_strided_slice %266 {offsets = [0, 28], sizes = [2, 14], strides = [1, 1]} : vector<2x56xf32> to vector<2x14xf32>
    %280 = math.tanh %279 : vector<2x14xf32>
    %281 = vector.extract_strided_slice %266 {offsets = [0, 42], sizes = [2, 14], strides = [1, 1]} : vector<2x56xf32> to vector<2x14xf32>
    %282 = arith.negf %281 : vector<2x14xf32>
    %283 = math.exp %282 : vector<2x14xf32>
    %cst_79 = arith.constant 1.000000e+00 : f32
    %284 = vector.broadcast %cst_79 : f32 to vector<2x14xf32>
    %285 = arith.addf %284, %283 : vector<2x14xf32>
    %286 = arith.divf %284, %285 : vector<2x14xf32>
    %287 = arith.mulf %278, %262 : vector<2x14xf32>
    %288 = arith.mulf %272, %280 : vector<2x14xf32>
    %289 = arith.addf %287, %288 : vector<2x14xf32>
    %290 = math.tanh %289 : vector<2x14xf32>
    %291 = arith.mulf %286, %290 : vector<2x14xf32>
    %c1_80 = arith.constant 1 : index
    %c0_81 = arith.constant 0 : index
    %c0_82 = arith.constant 0 : index
    %292 = vector.load %arg2[%c1_80, %c0_81, %c0_82] : memref<11x14x56xf32, #tpu.memory_space<vmem>>, vector<1x14x56xf32>
    %293 = vector.shape_cast %292 : vector<1x14x56xf32> to vector<14x56xf32>
    %cst_83 = arith.constant 0.000000e+00 : f32
    %294 = vector.broadcast %cst_83 : f32 to vector<2x14xf32>
    %cst_84 = arith.constant 0.000000e+00 : f32
    %295 = vector.broadcast %cst_84 : f32 to vector<2x14xf32>
    %cst_85 = arith.constant dense<0.000000e+00> : vector<2x56xf32>
    %296 = tpu.matmul %294, %293, %cst_85 {dimension_numbers = #tpu.dot_dimension_numbers<[1], [0], [0], [1], [0, 0, 1, 1], [], []>} : vector<2x14xf32>, vector<14x56xf32>, vector<2x56xf32> -> vector<2x56xf32>
    %297 = arith.addf %296, %71 : vector<2x56xf32>
    %298 = vector.extract_strided_slice %297 {offsets = [0, 0], sizes = [2, 14], strides = [1, 1]} : vector<2x56xf32> to vector<2x14xf32>
    %299 = arith.negf %298 : vector<2x14xf32>
    %300 = math.exp %299 : vector<2x14xf32>
    %cst_86 = arith.constant 1.000000e+00 : f32
    %301 = vector.broadcast %cst_86 : f32 to vector<2x14xf32>
    %302 = arith.addf %301, %300 : vector<2x14xf32>
    %303 = arith.divf %301, %302 : vector<2x14xf32>
    %304 = vector.extract_strided_slice %297 {offsets = [0, 14], sizes = [2, 14], strides = [1, 1]} : vector<2x56xf32> to vector<2x14xf32>
    %305 = arith.negf %304 : vector<2x14xf32>
    %306 = math.exp %305 : vector<2x14xf32>
    %cst_87 = arith.constant 1.000000e+00 : f32
    %307 = vector.broadcast %cst_87 : f32 to vector<2x14xf32>
    %308 = arith.addf %307, %306 : vector<2x14xf32>
    %309 = arith.divf %307, %308 : vector<2x14xf32>
    %310 = vector.extract_strided_slice %297 {offsets = [0, 28], sizes = [2, 14], strides = [1, 1]} : vector<2x56xf32> to vector<2x14xf32>
    %311 = math.tanh %310 : vector<2x14xf32>
    %312 = vector.extract_strided_slice %297 {offsets = [0, 42], sizes = [2, 14], strides = [1, 1]} : vector<2x56xf32> to vector<2x14xf32>
    %313 = arith.negf %312 : vector<2x14xf32>
    %314 = math.exp %313 : vector<2x14xf32>
    %cst_88 = arith.constant 1.000000e+00 : f32
    %315 = vector.broadcast %cst_88 : f32 to vector<2x14xf32>
    %316 = arith.addf %315, %314 : vector<2x14xf32>
    %317 = arith.divf %315, %316 : vector<2x14xf32>
    %318 = arith.mulf %309, %295 : vector<2x14xf32>
    %319 = arith.mulf %303, %311 : vector<2x14xf32>
    %320 = arith.addf %318, %319 : vector<2x14xf32>
    %321 = math.tanh %320 : vector<2x14xf32>
    %322 = arith.mulf %317, %321 : vector<2x14xf32>
    %cst_89 = arith.constant dense<0.000000e+00> : vector<2x56xf32>
    %323 = tpu.matmul %322, %293, %cst_89 {dimension_numbers = #tpu.dot_dimension_numbers<[1], [0], [0], [1], [0, 0, 1, 1], [], []>} : vector<2x14xf32>, vector<14x56xf32>, vector<2x56xf32> -> vector<2x56xf32>
    %324 = arith.addf %323, %68 : vector<2x56xf32>
    %325 = vector.extract_strided_slice %324 {offsets = [0, 0], sizes = [2, 14], strides = [1, 1]} : vector<2x56xf32> to vector<2x14xf32>
    %326 = arith.negf %325 : vector<2x14xf32>
    %327 = math.exp %326 : vector<2x14xf32>
    %cst_90 = arith.constant 1.000000e+00 : f32
    %328 = vector.broadcast %cst_90 : f32 to vector<2x14xf32>
    %329 = arith.addf %328, %327 : vector<2x14xf32>
    %330 = arith.divf %328, %329 : vector<2x14xf32>
    %331 = vector.extract_strided_slice %324 {offsets = [0, 14], sizes = [2, 14], strides = [1, 1]} : vector<2x56xf32> to vector<2x14xf32>
    %332 = arith.negf %331 : vector<2x14xf32>
    %333 = math.exp %332 : vector<2x14xf32>
    %cst_91 = arith.constant 1.000000e+00 : f32
    %334 = vector.broadcast %cst_91 : f32 to vector<2x14xf32>
    %335 = arith.addf %334, %333 : vector<2x14xf32>
    %336 = arith.divf %334, %335 : vector<2x14xf32>
    %337 = vector.extract_strided_slice %324 {offsets = [0, 28], sizes = [2, 14], strides = [1, 1]} : vector<2x56xf32> to vector<2x14xf32>
    %338 = math.tanh %337 : vector<2x14xf32>
    %339 = vector.extract_strided_slice %324 {offsets = [0, 42], sizes = [2, 14], strides = [1, 1]} : vector<2x56xf32> to vector<2x14xf32>
    %340 = arith.negf %339 : vector<2x14xf32>
    %341 = math.exp %340 : vector<2x14xf32>
    %cst_92 = arith.constant 1.000000e+00 : f32
    %342 = vector.broadcast %cst_92 : f32 to vector<2x14xf32>
    %343 = arith.addf %342, %341 : vector<2x14xf32>
    %344 = arith.divf %342, %343 : vector<2x14xf32>
    %345 = arith.mulf %336, %320 : vector<2x14xf32>
    %346 = arith.mulf %330, %338 : vector<2x14xf32>
    %347 = arith.addf %345, %346 : vector<2x14xf32>
    %348 = math.tanh %347 : vector<2x14xf32>
    %349 = arith.mulf %344, %348 : vector<2x14xf32>
    %cst_93 = arith.constant dense<0.000000e+00> : vector<2x56xf32>
    %350 = tpu.matmul %349, %293, %cst_93 {dimension_numbers = #tpu.dot_dimension_numbers<[1], [0], [0], [1], [0, 0, 1, 1], [], []>} : vector<2x14xf32>, vector<14x56xf32>, vector<2x56xf32> -> vector<2x56xf32>
    %351 = arith.addf %350, %65 : vector<2x56xf32>
    %352 = vector.extract_strided_slice %351 {offsets = [0, 0], sizes = [2, 14], strides = [1, 1]} : vector<2x56xf32> to vector<2x14xf32>
    %353 = arith.negf %352 : vector<2x14xf32>
    %354 = math.exp %353 : vector<2x14xf32>
    %cst_94 = arith.constant 1.000000e+00 : f32
    %355 = vector.broadcast %cst_94 : f32 to vector<2x14xf32>
    %356 = arith.addf %355, %354 : vector<2x14xf32>
    %357 = arith.divf %355, %356 : vector<2x14xf32>
    %358 = vector.extract_strided_slice %351 {offsets = [0, 14], sizes = [2, 14], strides = [1, 1]} : vector<2x56xf32> to vector<2x14xf32>
    %359 = arith.negf %358 : vector<2x14xf32>
    %360 = math.exp %359 : vector<2x14xf32>
    %cst_95 = arith.constant 1.000000e+00 : f32
    %361 = vector.broadcast %cst_95 : f32 to vector<2x14xf32>
    %362 = arith.addf %361, %360 : vector<2x14xf32>
    %363 = arith.divf %361, %362 : vector<2x14xf32>
    %364 = vector.extract_strided_slice %351 {offsets = [0, 28], sizes = [2, 14], strides = [1, 1]} : vector<2x56xf32> to vector<2x14xf32>
    %365 = math.tanh %364 : vector<2x14xf32>
    %366 = vector.extract_strided_slice %351 {offsets = [0, 42], sizes = [2, 14], strides = [1, 1]} : vector<2x56xf32> to vector<2x14xf32>
    %367 = arith.negf %366 : vector<2x14xf32>
    %368 = math.exp %367 : vector<2x14xf32>
    %cst_96 = arith.constant 1.000000e+00 : f32
    %369 = vector.broadcast %cst_96 : f32 to vector<2x14xf32>
    %370 = arith.addf %369, %368 : vector<2x14xf32>
    %371 = arith.divf %369, %370 : vector<2x14xf32>
    %372 = arith.mulf %363, %347 : vector<2x14xf32>
    %373 = arith.mulf %357, %365 : vector<2x14xf32>
    %374 = arith.addf %372, %373 : vector<2x14xf32>
    %375 = math.tanh %374 : vector<2x14xf32>
    %376 = arith.mulf %371, %375 : vector<2x14xf32>
    %cst_97 = arith.constant dense<0.000000e+00> : vector<2x56xf32>
    %377 = tpu.matmul %376, %293, %cst_97 {dimension_numbers = #tpu.dot_dimension_numbers<[1], [0], [0], [1], [0, 0, 1, 1], [], []>} : vector<2x14xf32>, vector<14x56xf32>, vector<2x56xf32> -> vector<2x56xf32>
    %378 = arith.addf %377, %62 : vector<2x56xf32>
    %379 = vector.extract_strided_slice %378 {offsets = [0, 0], sizes = [2, 14], strides = [1, 1]} : vector<2x56xf32> to vector<2x14xf32>
    %380 = arith.negf %379 : vector<2x14xf32>
    %381 = math.exp %380 : vector<2x14xf32>
    %cst_98 = arith.constant 1.000000e+00 : f32
    %382 = vector.broadcast %cst_98 : f32 to vector<2x14xf32>
    %383 = arith.addf %382, %381 : vector<2x14xf32>
    %384 = arith.divf %382, %383 : vector<2x14xf32>
    %385 = vector.extract_strided_slice %378 {offsets = [0, 14], sizes = [2, 14], strides = [1, 1]} : vector<2x56xf32> to vector<2x14xf32>
    %386 = arith.negf %385 : vector<2x14xf32>
    %387 = math.exp %386 : vector<2x14xf32>
    %cst_99 = arith.constant 1.000000e+00 : f32
    %388 = vector.broadcast %cst_99 : f32 to vector<2x14xf32>
    %389 = arith.addf %388, %387 : vector<2x14xf32>
    %390 = arith.divf %388, %389 : vector<2x14xf32>
    %391 = vector.extract_strided_slice %378 {offsets = [0, 28], sizes = [2, 14], strides = [1, 1]} : vector<2x56xf32> to vector<2x14xf32>
    %392 = math.tanh %391 : vector<2x14xf32>
    %393 = vector.extract_strided_slice %378 {offsets = [0, 42], sizes = [2, 14], strides = [1, 1]} : vector<2x56xf32> to vector<2x14xf32>
    %394 = arith.negf %393 : vector<2x14xf32>
    %395 = math.exp %394 : vector<2x14xf32>
    %cst_100 = arith.constant 1.000000e+00 : f32
    %396 = vector.broadcast %cst_100 : f32 to vector<2x14xf32>
    %397 = arith.addf %396, %395 : vector<2x14xf32>
    %398 = arith.divf %396, %397 : vector<2x14xf32>
    %399 = arith.mulf %390, %374 : vector<2x14xf32>
    %400 = arith.mulf %384, %392 : vector<2x14xf32>
    %401 = arith.addf %399, %400 : vector<2x14xf32>
    %402 = math.tanh %401 : vector<2x14xf32>
    %403 = arith.mulf %398, %402 : vector<2x14xf32>
    %cst_101 = arith.constant dense<0.000000e+00> : vector<2x56xf32>
    %404 = tpu.matmul %403, %293, %cst_101 {dimension_numbers = #tpu.dot_dimension_numbers<[1], [0], [0], [1], [0, 0, 1, 1], [], []>} : vector<2x14xf32>, vector<14x56xf32>, vector<2x56xf32> -> vector<2x56xf32>
    %405 = arith.addf %404, %59 : vector<2x56xf32>
    %406 = vector.extract_strided_slice %405 {offsets = [0, 0], sizes = [2, 14], strides = [1, 1]} : vector<2x56xf32> to vector<2x14xf32>
    %407 = arith.negf %406 : vector<2x14xf32>
    %408 = math.exp %407 : vector<2x14xf32>
    %cst_102 = arith.constant 1.000000e+00 : f32
    %409 = vector.broadcast %cst_102 : f32 to vector<2x14xf32>
    %410 = arith.addf %409, %408 : vector<2x14xf32>
    %411 = arith.divf %409, %410 : vector<2x14xf32>
    %412 = vector.extract_strided_slice %405 {offsets = [0, 14], sizes = [2, 14], strides = [1, 1]} : vector<2x56xf32> to vector<2x14xf32>
    %413 = arith.negf %412 : vector<2x14xf32>
    %414 = math.exp %413 : vector<2x14xf32>
    %cst_103 = arith.constant 1.000000e+00 : f32
    %415 = vector.broadcast %cst_103 : f32 to vector<2x14xf32>
    %416 = arith.addf %415, %414 : vector<2x14xf32>
    %417 = arith.divf %415, %416 : vector<2x14xf32>
    %418 = vector.extract_strided_slice %405 {offsets = [0, 28], sizes = [2, 14], strides = [1, 1]} : vector<2x56xf32> to vector<2x14xf32>
    %419 = math.tanh %418 : vector<2x14xf32>
    %420 = vector.extract_strided_slice %405 {offsets = [0, 42], sizes = [2, 14], strides = [1, 1]} : vector<2x56xf32> to vector<2x14xf32>
    %421 = arith.negf %420 : vector<2x14xf32>
    %422 = math.exp %421 : vector<2x14xf32>
    %cst_104 = arith.constant 1.000000e+00 : f32
    %423 = vector.broadcast %cst_104 : f32 to vector<2x14xf32>
    %424 = arith.addf %423, %422 : vector<2x14xf32>
    %425 = arith.divf %423, %424 : vector<2x14xf32>
    %426 = arith.mulf %417, %401 : vector<2x14xf32>
    %427 = arith.mulf %411, %419 : vector<2x14xf32>
    %428 = arith.addf %426, %427 : vector<2x14xf32>
    %429 = math.tanh %428 : vector<2x14xf32>
    %430 = arith.mulf %425, %429 : vector<2x14xf32>
    %cst_105 = arith.constant dense<0.000000e+00> : vector<2x56xf32>
    %431 = tpu.matmul %430, %293, %cst_105 {dimension_numbers = #tpu.dot_dimension_numbers<[1], [0], [0], [1], [0, 0, 1, 1], [], []>} : vector<2x14xf32>, vector<14x56xf32>, vector<2x56xf32> -> vector<2x56xf32>
    %432 = arith.addf %431, %56 : vector<2x56xf32>
    %433 = vector.extract_strided_slice %432 {offsets = [0, 0], sizes = [2, 14], strides = [1, 1]} : vector<2x56xf32> to vector<2x14xf32>
    %434 = arith.negf %433 : vector<2x14xf32>
    %435 = math.exp %434 : vector<2x14xf32>
    %cst_106 = arith.constant 1.000000e+00 : f32
    %436 = vector.broadcast %cst_106 : f32 to vector<2x14xf32>
    %437 = arith.addf %436, %435 : vector<2x14xf32>
    %438 = arith.divf %436, %437 : vector<2x14xf32>
    %439 = vector.extract_strided_slice %432 {offsets = [0, 14], sizes = [2, 14], strides = [1, 1]} : vector<2x56xf32> to vector<2x14xf32>
    %440 = arith.negf %439 : vector<2x14xf32>
    %441 = math.exp %440 : vector<2x14xf32>
    %cst_107 = arith.constant 1.000000e+00 : f32
    %442 = vector.broadcast %cst_107 : f32 to vector<2x14xf32>
    %443 = arith.addf %442, %441 : vector<2x14xf32>
    %444 = arith.divf %442, %443 : vector<2x14xf32>
    %445 = vector.extract_strided_slice %432 {offsets = [0, 28], sizes = [2, 14], strides = [1, 1]} : vector<2x56xf32> to vector<2x14xf32>
    %446 = math.tanh %445 : vector<2x14xf32>
    %447 = vector.extract_strided_slice %432 {offsets = [0, 42], sizes = [2, 14], strides = [1, 1]} : vector<2x56xf32> to vector<2x14xf32>
    %448 = arith.negf %447 : vector<2x14xf32>
    %449 = math.exp %448 : vector<2x14xf32>
    %cst_108 = arith.constant 1.000000e+00 : f32
    %450 = vector.broadcast %cst_108 : f32 to vector<2x14xf32>
    %451 = arith.addf %450, %449 : vector<2x14xf32>
    %452 = arith.divf %450, %451 : vector<2x14xf32>
    %453 = arith.mulf %444, %428 : vector<2x14xf32>
    %454 = arith.mulf %438, %446 : vector<2x14xf32>
    %455 = arith.addf %453, %454 : vector<2x14xf32>
    %456 = math.tanh %455 : vector<2x14xf32>
    %457 = arith.mulf %452, %456 : vector<2x14xf32>
    %cst_109 = arith.constant dense<0.000000e+00> : vector<2x56xf32>
    %458 = tpu.matmul %457, %293, %cst_109 {dimension_numbers = #tpu.dot_dimension_numbers<[1], [0], [0], [1], [0, 0, 1, 1], [], []>} : vector<2x14xf32>, vector<14x56xf32>, vector<2x56xf32> -> vector<2x56xf32>
    %459 = arith.addf %458, %53 : vector<2x56xf32>
    %460 = vector.extract_strided_slice %459 {offsets = [0, 0], sizes = [2, 14], strides = [1, 1]} : vector<2x56xf32> to vector<2x14xf32>
    %461 = arith.negf %460 : vector<2x14xf32>
    %462 = math.exp %461 : vector<2x14xf32>
    %cst_110 = arith.constant 1.000000e+00 : f32
    %463 = vector.broadcast %cst_110 : f32 to vector<2x14xf32>
    %464 = arith.addf %463, %462 : vector<2x14xf32>
    %465 = arith.divf %463, %464 : vector<2x14xf32>
    %466 = vector.extract_strided_slice %459 {offsets = [0, 14], sizes = [2, 14], strides = [1, 1]} : vector<2x56xf32> to vector<2x14xf32>
    %467 = arith.negf %466 : vector<2x14xf32>
    %468 = math.exp %467 : vector<2x14xf32>
    %cst_111 = arith.constant 1.000000e+00 : f32
    %469 = vector.broadcast %cst_111 : f32 to vector<2x14xf32>
    %470 = arith.addf %469, %468 : vector<2x14xf32>
    %471 = arith.divf %469, %470 : vector<2x14xf32>
    %472 = vector.extract_strided_slice %459 {offsets = [0, 28], sizes = [2, 14], strides = [1, 1]} : vector<2x56xf32> to vector<2x14xf32>
    %473 = math.tanh %472 : vector<2x14xf32>
    %474 = vector.extract_strided_slice %459 {offsets = [0, 42], sizes = [2, 14], strides = [1, 1]} : vector<2x56xf32> to vector<2x14xf32>
    %475 = arith.negf %474 : vector<2x14xf32>
    %476 = math.exp %475 : vector<2x14xf32>
    %cst_112 = arith.constant 1.000000e+00 : f32
    %477 = vector.broadcast %cst_112 : f32 to vector<2x14xf32>
    %478 = arith.addf %477, %476 : vector<2x14xf32>
    %479 = arith.divf %477, %478 : vector<2x14xf32>
    %480 = arith.mulf %471, %455 : vector<2x14xf32>
    %481 = arith.mulf %465, %473 : vector<2x14xf32>
    %482 = arith.addf %480, %481 : vector<2x14xf32>
    %483 = math.tanh %482 : vector<2x14xf32>
    %484 = arith.mulf %479, %483 : vector<2x14xf32>
    %cst_113 = arith.constant dense<0.000000e+00> : vector<2x56xf32>
    %485 = tpu.matmul %484, %293, %cst_113 {dimension_numbers = #tpu.dot_dimension_numbers<[1], [0], [0], [1], [0, 0, 1, 1], [], []>} : vector<2x14xf32>, vector<14x56xf32>, vector<2x56xf32> -> vector<2x56xf32>
    %486 = arith.addf %485, %50 : vector<2x56xf32>
    %487 = vector.extract_strided_slice %486 {offsets = [0, 0], sizes = [2, 14], strides = [1, 1]} : vector<2x56xf32> to vector<2x14xf32>
    %488 = arith.negf %487 : vector<2x14xf32>
    %489 = math.exp %488 : vector<2x14xf32>
    %cst_114 = arith.constant 1.000000e+00 : f32
    %490 = vector.broadcast %cst_114 : f32 to vector<2x14xf32>
    %491 = arith.addf %490, %489 : vector<2x14xf32>
    %492 = arith.divf %490, %491 : vector<2x14xf32>
    %493 = vector.extract_strided_slice %486 {offsets = [0, 14], sizes = [2, 14], strides = [1, 1]} : vector<2x56xf32> to vector<2x14xf32>
    %494 = arith.negf %493 : vector<2x14xf32>
    %495 = math.exp %494 : vector<2x14xf32>
    %cst_115 = arith.constant 1.000000e+00 : f32
    %496 = vector.broadcast %cst_115 : f32 to vector<2x14xf32>
    %497 = arith.addf %496, %495 : vector<2x14xf32>
    %498 = arith.divf %496, %497 : vector<2x14xf32>
    %499 = vector.extract_strided_slice %486 {offsets = [0, 28], sizes = [2, 14], strides = [1, 1]} : vector<2x56xf32> to vector<2x14xf32>
    %500 = math.tanh %499 : vector<2x14xf32>
    %501 = vector.extract_strided_slice %486 {offsets = [0, 42], sizes = [2, 14], strides = [1, 1]} : vector<2x56xf32> to vector<2x14xf32>
    %502 = arith.negf %501 : vector<2x14xf32>
    %503 = math.exp %502 : vector<2x14xf32>
    %cst_116 = arith.constant 1.000000e+00 : f32
    %504 = vector.broadcast %cst_116 : f32 to vector<2x14xf32>
    %505 = arith.addf %504, %503 : vector<2x14xf32>
    %506 = arith.divf %504, %505 : vector<2x14xf32>
    %507 = arith.mulf %498, %482 : vector<2x14xf32>
    %508 = arith.mulf %492, %500 : vector<2x14xf32>
    %509 = arith.addf %507, %508 : vector<2x14xf32>
    %510 = math.tanh %509 : vector<2x14xf32>
    %511 = arith.mulf %506, %510 : vector<2x14xf32>
    %c2_117 = arith.constant 2 : index
    %c0_118 = arith.constant 0 : index
    %c0_119 = arith.constant 0 : index
    %512 = vector.load %arg2[%c2_117, %c0_118, %c0_119] : memref<11x14x56xf32, #tpu.memory_space<vmem>>, vector<1x14x56xf32>
    %513 = vector.shape_cast %512 : vector<1x14x56xf32> to vector<14x56xf32>
    %c3_120 = arith.constant 3 : index
    %c0_121 = arith.constant 0 : index
    %c0_122 = arith.constant 0 : index
    %514 = vector.load %arg2[%c3_120, %c0_121, %c0_122] : memref<11x14x56xf32, #tpu.memory_space<vmem>>, vector<1x14x56xf32>
    %515 = vector.shape_cast %514 : vector<1x14x56xf32> to vector<14x56xf32>
    %c4_123 = arith.constant 4 : index
    %c0_124 = arith.constant 0 : index
    %c0_125 = arith.constant 0 : index
    %516 = vector.load %arg2[%c4_123, %c0_124, %c0_125] : memref<11x14x56xf32, #tpu.memory_space<vmem>>, vector<1x14x56xf32>
    %517 = vector.shape_cast %516 : vector<1x14x56xf32> to vector<14x56xf32>
    %c5_126 = arith.constant 5 : index
    %c0_127 = arith.constant 0 : index
    %c0_128 = arith.constant 0 : index
    %518 = vector.load %arg2[%c5_126, %c0_127, %c0_128] : memref<11x14x56xf32, #tpu.memory_space<vmem>>, vector<1x14x56xf32>
    %519 = vector.shape_cast %518 : vector<1x14x56xf32> to vector<14x56xf32>
    %c6_129 = arith.constant 6 : index
    %c0_130 = arith.constant 0 : index
    %c0_131 = arith.constant 0 : index
    %520 = vector.load %arg2[%c6_129, %c0_130, %c0_131] : memref<11x14x56xf32, #tpu.memory_space<vmem>>, vector<1x14x56xf32>
    %521 = vector.shape_cast %520 : vector<1x14x56xf32> to vector<14x56xf32>
    %c7_132 = arith.constant 7 : index
    %c0_133 = arith.constant 0 : index
    %c0_134 = arith.constant 0 : index
    %522 = vector.load %arg2[%c7_132, %c0_133, %c0_134] : memref<11x14x56xf32, #tpu.memory_space<vmem>>, vector<1x14x56xf32>
    %523 = vector.shape_cast %522 : vector<1x14x56xf32> to vector<14x56xf32>
    %c2_135 = arith.constant 2 : index
    %c0_136 = arith.constant 0 : index
    %c0_137 = arith.constant 0 : index
    %524 = vector.load %arg3[%c2_135, %c0_136, %c0_137] : memref<5x1x56xf32, #tpu.memory_space<vmem>>, vector<1x1x56xf32>
    %525 = vector.shape_cast %524 : vector<1x1x56xf32> to vector<1x56xf32>
    %c3_138 = arith.constant 3 : index
    %c0_139 = arith.constant 0 : index
    %c0_140 = arith.constant 0 : index
    %526 = vector.load %arg3[%c3_138, %c0_139, %c0_140] : memref<5x1x56xf32, #tpu.memory_space<vmem>>, vector<1x1x56xf32>
    %527 = vector.shape_cast %526 : vector<1x1x56xf32> to vector<1x56xf32>
    %cst_141 = arith.constant dense<0.000000e+00> : vector<2x56xf32>
    %528 = tpu.matmul %102, %513, %cst_141 {dimension_numbers = #tpu.dot_dimension_numbers<[1], [0], [0], [1], [0, 0, 1, 1], [], []>} : vector<2x14xf32>, vector<14x56xf32>, vector<2x56xf32> -> vector<2x56xf32>
    %cst_142 = arith.constant dense<0.000000e+00> : vector<2x56xf32>
    %529 = tpu.matmul %511, %515, %cst_142 {dimension_numbers = #tpu.dot_dimension_numbers<[1], [0], [0], [1], [0, 0, 1, 1], [], []>} : vector<2x14xf32>, vector<14x56xf32>, vector<2x56xf32> -> vector<2x56xf32>
    %530 = arith.addf %528, %529 : vector<2x56xf32>
    %531 = vector.broadcast %525 : vector<1x56xf32> to vector<2x56xf32>
    %532 = arith.addf %530, %531 : vector<2x56xf32>
    %cst_143 = arith.constant dense<0.000000e+00> : vector<2x56xf32>
    %533 = tpu.matmul %129, %513, %cst_143 {dimension_numbers = #tpu.dot_dimension_numbers<[1], [0], [0], [1], [0, 0, 1, 1], [], []>} : vector<2x14xf32>, vector<14x56xf32>, vector<2x56xf32> -> vector<2x56xf32>
    %cst_144 = arith.constant dense<0.000000e+00> : vector<2x56xf32>
    %534 = tpu.matmul %484, %515, %cst_144 {dimension_numbers = #tpu.dot_dimension_numbers<[1], [0], [0], [1], [0, 0, 1, 1], [], []>} : vector<2x14xf32>, vector<14x56xf32>, vector<2x56xf32> -> vector<2x56xf32>
    %535 = arith.addf %533, %534 : vector<2x56xf32>
    %536 = vector.broadcast %525 : vector<1x56xf32> to vector<2x56xf32>
    %537 = arith.addf %535, %536 : vector<2x56xf32>
    %cst_145 = arith.constant dense<0.000000e+00> : vector<2x56xf32>
    %538 = tpu.matmul %156, %513, %cst_145 {dimension_numbers = #tpu.dot_dimension_numbers<[1], [0], [0], [1], [0, 0, 1, 1], [], []>} : vector<2x14xf32>, vector<14x56xf32>, vector<2x56xf32> -> vector<2x56xf32>
    %cst_146 = arith.constant dense<0.000000e+00> : vector<2x56xf32>
    %539 = tpu.matmul %457, %515, %cst_146 {dimension_numbers = #tpu.dot_dimension_numbers<[1], [0], [0], [1], [0, 0, 1, 1], [], []>} : vector<2x14xf32>, vector<14x56xf32>, vector<2x56xf32> -> vector<2x56xf32>
    %540 = arith.addf %538, %539 : vector<2x56xf32>
    %541 = vector.broadcast %525 : vector<1x56xf32> to vector<2x56xf32>
    %542 = arith.addf %540, %541 : vector<2x56xf32>
    %cst_147 = arith.constant dense<0.000000e+00> : vector<2x56xf32>
    %543 = tpu.matmul %183, %513, %cst_147 {dimension_numbers = #tpu.dot_dimension_numbers<[1], [0], [0], [1], [0, 0, 1, 1], [], []>} : vector<2x14xf32>, vector<14x56xf32>, vector<2x56xf32> -> vector<2x56xf32>
    %cst_148 = arith.constant dense<0.000000e+00> : vector<2x56xf32>
    %544 = tpu.matmul %430, %515, %cst_148 {dimension_numbers = #tpu.dot_dimension_numbers<[1], [0], [0], [1], [0, 0, 1, 1], [], []>} : vector<2x14xf32>, vector<14x56xf32>, vector<2x56xf32> -> vector<2x56xf32>
    %545 = arith.addf %543, %544 : vector<2x56xf32>
    %546 = vector.broadcast %525 : vector<1x56xf32> to vector<2x56xf32>
    %547 = arith.addf %545, %546 : vector<2x56xf32>
    %cst_149 = arith.constant dense<0.000000e+00> : vector<2x56xf32>
    %548 = tpu.matmul %210, %513, %cst_149 {dimension_numbers = #tpu.dot_dimension_numbers<[1], [0], [0], [1], [0, 0, 1, 1], [], []>} : vector<2x14xf32>, vector<14x56xf32>, vector<2x56xf32> -> vector<2x56xf32>
    %cst_150 = arith.constant dense<0.000000e+00> : vector<2x56xf32>
    %549 = tpu.matmul %403, %515, %cst_150 {dimension_numbers = #tpu.dot_dimension_numbers<[1], [0], [0], [1], [0, 0, 1, 1], [], []>} : vector<2x14xf32>, vector<14x56xf32>, vector<2x56xf32> -> vector<2x56xf32>
    %550 = arith.addf %548, %549 : vector<2x56xf32>
    %551 = vector.broadcast %525 : vector<1x56xf32> to vector<2x56xf32>
    %552 = arith.addf %550, %551 : vector<2x56xf32>
    %cst_151 = arith.constant dense<0.000000e+00> : vector<2x56xf32>
    %553 = tpu.matmul %237, %513, %cst_151 {dimension_numbers = #tpu.dot_dimension_numbers<[1], [0], [0], [1], [0, 0, 1, 1], [], []>} : vector<2x14xf32>, vector<14x56xf32>, vector<2x56xf32> -> vector<2x56xf32>
    %cst_152 = arith.constant dense<0.000000e+00> : vector<2x56xf32>
    %554 = tpu.matmul %376, %515, %cst_152 {dimension_numbers = #tpu.dot_dimension_numbers<[1], [0], [0], [1], [0, 0, 1, 1], [], []>} : vector<2x14xf32>, vector<14x56xf32>, vector<2x56xf32> -> vector<2x56xf32>
    %555 = arith.addf %553, %554 : vector<2x56xf32>
    %556 = vector.broadcast %525 : vector<1x56xf32> to vector<2x56xf32>
    %557 = arith.addf %555, %556 : vector<2x56xf32>
    %cst_153 = arith.constant dense<0.000000e+00> : vector<2x56xf32>
    %558 = tpu.matmul %264, %513, %cst_153 {dimension_numbers = #tpu.dot_dimension_numbers<[1], [0], [0], [1], [0, 0, 1, 1], [], []>} : vector<2x14xf32>, vector<14x56xf32>, vector<2x56xf32> -> vector<2x56xf32>
    %cst_154 = arith.constant dense<0.000000e+00> : vector<2x56xf32>
    %559 = tpu.matmul %349, %515, %cst_154 {dimension_numbers = #tpu.dot_dimension_numbers<[1], [0], [0], [1], [0, 0, 1, 1], [], []>} : vector<2x14xf32>, vector<14x56xf32>, vector<2x56xf32> -> vector<2x56xf32>
    %560 = arith.addf %558, %559 : vector<2x56xf32>
    %561 = vector.broadcast %525 : vector<1x56xf32> to vector<2x56xf32>
    %562 = arith.addf %560, %561 : vector<2x56xf32>
    %cst_155 = arith.constant dense<0.000000e+00> : vector<2x56xf32>
    %563 = tpu.matmul %291, %513, %cst_155 {dimension_numbers = #tpu.dot_dimension_numbers<[1], [0], [0], [1], [0, 0, 1, 1], [], []>} : vector<2x14xf32>, vector<14x56xf32>, vector<2x56xf32> -> vector<2x56xf32>
    %cst_156 = arith.constant dense<0.000000e+00> : vector<2x56xf32>
    %564 = tpu.matmul %322, %515, %cst_156 {dimension_numbers = #tpu.dot_dimension_numbers<[1], [0], [0], [1], [0, 0, 1, 1], [], []>} : vector<2x14xf32>, vector<14x56xf32>, vector<2x56xf32> -> vector<2x56xf32>
    %565 = arith.addf %563, %564 : vector<2x56xf32>
    %566 = vector.broadcast %525 : vector<1x56xf32> to vector<2x56xf32>
    %567 = arith.addf %565, %566 : vector<2x56xf32>
    %cst_157 = arith.constant dense<0.000000e+00> : vector<2x56xf32>
    %568 = tpu.matmul %102, %519, %cst_157 {dimension_numbers = #tpu.dot_dimension_numbers<[1], [0], [0], [1], [0, 0, 1, 1], [], []>} : vector<2x14xf32>, vector<14x56xf32>, vector<2x56xf32> -> vector<2x56xf32>
    %cst_158 = arith.constant dense<0.000000e+00> : vector<2x56xf32>
    %569 = tpu.matmul %511, %521, %cst_158 {dimension_numbers = #tpu.dot_dimension_numbers<[1], [0], [0], [1], [0, 0, 1, 1], [], []>} : vector<2x14xf32>, vector<14x56xf32>, vector<2x56xf32> -> vector<2x56xf32>
    %570 = arith.addf %568, %569 : vector<2x56xf32>
    %571 = vector.broadcast %527 : vector<1x56xf32> to vector<2x56xf32>
    %572 = arith.addf %570, %571 : vector<2x56xf32>
    %cst_159 = arith.constant dense<0.000000e+00> : vector<2x56xf32>
    %573 = tpu.matmul %129, %519, %cst_159 {dimension_numbers = #tpu.dot_dimension_numbers<[1], [0], [0], [1], [0, 0, 1, 1], [], []>} : vector<2x14xf32>, vector<14x56xf32>, vector<2x56xf32> -> vector<2x56xf32>
    %cst_160 = arith.constant dense<0.000000e+00> : vector<2x56xf32>
    %574 = tpu.matmul %484, %521, %cst_160 {dimension_numbers = #tpu.dot_dimension_numbers<[1], [0], [0], [1], [0, 0, 1, 1], [], []>} : vector<2x14xf32>, vector<14x56xf32>, vector<2x56xf32> -> vector<2x56xf32>
    %575 = arith.addf %573, %574 : vector<2x56xf32>
    %576 = vector.broadcast %527 : vector<1x56xf32> to vector<2x56xf32>
    %577 = arith.addf %575, %576 : vector<2x56xf32>
    %cst_161 = arith.constant dense<0.000000e+00> : vector<2x56xf32>
    %578 = tpu.matmul %156, %519, %cst_161 {dimension_numbers = #tpu.dot_dimension_numbers<[1], [0], [0], [1], [0, 0, 1, 1], [], []>} : vector<2x14xf32>, vector<14x56xf32>, vector<2x56xf32> -> vector<2x56xf32>
    %cst_162 = arith.constant dense<0.000000e+00> : vector<2x56xf32>
    %579 = tpu.matmul %457, %521, %cst_162 {dimension_numbers = #tpu.dot_dimension_numbers<[1], [0], [0], [1], [0, 0, 1, 1], [], []>} : vector<2x14xf32>, vector<14x56xf32>, vector<2x56xf32> -> vector<2x56xf32>
    %580 = arith.addf %578, %579 : vector<2x56xf32>
    %581 = vector.broadcast %527 : vector<1x56xf32> to vector<2x56xf32>
    %582 = arith.addf %580, %581 : vector<2x56xf32>
    %cst_163 = arith.constant dense<0.000000e+00> : vector<2x56xf32>
    %583 = tpu.matmul %183, %519, %cst_163 {dimension_numbers = #tpu.dot_dimension_numbers<[1], [0], [0], [1], [0, 0, 1, 1], [], []>} : vector<2x14xf32>, vector<14x56xf32>, vector<2x56xf32> -> vector<2x56xf32>
    %cst_164 = arith.constant dense<0.000000e+00> : vector<2x56xf32>
    %584 = tpu.matmul %430, %521, %cst_164 {dimension_numbers = #tpu.dot_dimension_numbers<[1], [0], [0], [1], [0, 0, 1, 1], [], []>} : vector<2x14xf32>, vector<14x56xf32>, vector<2x56xf32> -> vector<2x56xf32>
    %585 = arith.addf %583, %584 : vector<2x56xf32>
    %586 = vector.broadcast %527 : vector<1x56xf32> to vector<2x56xf32>
    %587 = arith.addf %585, %586 : vector<2x56xf32>
    %cst_165 = arith.constant dense<0.000000e+00> : vector<2x56xf32>
    %588 = tpu.matmul %210, %519, %cst_165 {dimension_numbers = #tpu.dot_dimension_numbers<[1], [0], [0], [1], [0, 0, 1, 1], [], []>} : vector<2x14xf32>, vector<14x56xf32>, vector<2x56xf32> -> vector<2x56xf32>
    %cst_166 = arith.constant dense<0.000000e+00> : vector<2x56xf32>
    %589 = tpu.matmul %403, %521, %cst_166 {dimension_numbers = #tpu.dot_dimension_numbers<[1], [0], [0], [1], [0, 0, 1, 1], [], []>} : vector<2x14xf32>, vector<14x56xf32>, vector<2x56xf32> -> vector<2x56xf32>
    %590 = arith.addf %588, %589 : vector<2x56xf32>
    %591 = vector.broadcast %527 : vector<1x56xf32> to vector<2x56xf32>
    %592 = arith.addf %590, %591 : vector<2x56xf32>
    %cst_167 = arith.constant dense<0.000000e+00> : vector<2x56xf32>
    %593 = tpu.matmul %237, %519, %cst_167 {dimension_numbers = #tpu.dot_dimension_numbers<[1], [0], [0], [1], [0, 0, 1, 1], [], []>} : vector<2x14xf32>, vector<14x56xf32>, vector<2x56xf32> -> vector<2x56xf32>
    %cst_168 = arith.constant dense<0.000000e+00> : vector<2x56xf32>
    %594 = tpu.matmul %376, %521, %cst_168 {dimension_numbers = #tpu.dot_dimension_numbers<[1], [0], [0], [1], [0, 0, 1, 1], [], []>} : vector<2x14xf32>, vector<14x56xf32>, vector<2x56xf32> -> vector<2x56xf32>
    %595 = arith.addf %593, %594 : vector<2x56xf32>
    %596 = vector.broadcast %527 : vector<1x56xf32> to vector<2x56xf32>
    %597 = arith.addf %595, %596 : vector<2x56xf32>
    %cst_169 = arith.constant dense<0.000000e+00> : vector<2x56xf32>
    %598 = tpu.matmul %264, %519, %cst_169 {dimension_numbers = #tpu.dot_dimension_numbers<[1], [0], [0], [1], [0, 0, 1, 1], [], []>} : vector<2x14xf32>, vector<14x56xf32>, vector<2x56xf32> -> vector<2x56xf32>
    %cst_170 = arith.constant dense<0.000000e+00> : vector<2x56xf32>
    %599 = tpu.matmul %349, %521, %cst_170 {dimension_numbers = #tpu.dot_dimension_numbers<[1], [0], [0], [1], [0, 0, 1, 1], [], []>} : vector<2x14xf32>, vector<14x56xf32>, vector<2x56xf32> -> vector<2x56xf32>
    %600 = arith.addf %598, %599 : vector<2x56xf32>
    %601 = vector.broadcast %527 : vector<1x56xf32> to vector<2x56xf32>
    %602 = arith.addf %600, %601 : vector<2x56xf32>
    %cst_171 = arith.constant dense<0.000000e+00> : vector<2x56xf32>
    %603 = tpu.matmul %291, %519, %cst_171 {dimension_numbers = #tpu.dot_dimension_numbers<[1], [0], [0], [1], [0, 0, 1, 1], [], []>} : vector<2x14xf32>, vector<14x56xf32>, vector<2x56xf32> -> vector<2x56xf32>
    %cst_172 = arith.constant dense<0.000000e+00> : vector<2x56xf32>
    %604 = tpu.matmul %322, %521, %cst_172 {dimension_numbers = #tpu.dot_dimension_numbers<[1], [0], [0], [1], [0, 0, 1, 1], [], []>} : vector<2x14xf32>, vector<14x56xf32>, vector<2x56xf32> -> vector<2x56xf32>
    %605 = arith.addf %603, %604 : vector<2x56xf32>
    %606 = vector.broadcast %527 : vector<1x56xf32> to vector<2x56xf32>
    %607 = arith.addf %605, %606 : vector<2x56xf32>
    %cst_173 = arith.constant 0.000000e+00 : f32
    %608 = vector.broadcast %cst_173 : f32 to vector<2x14xf32>
    %cst_174 = arith.constant 0.000000e+00 : f32
    %609 = vector.broadcast %cst_174 : f32 to vector<2x14xf32>
    %cst_175 = arith.constant dense<0.000000e+00> : vector<2x56xf32>
    %610 = tpu.matmul %608, %517, %cst_175 {dimension_numbers = #tpu.dot_dimension_numbers<[1], [0], [0], [1], [0, 0, 1, 1], [], []>} : vector<2x14xf32>, vector<14x56xf32>, vector<2x56xf32> -> vector<2x56xf32>
    %611 = arith.addf %610, %532 : vector<2x56xf32>
    %612 = vector.extract_strided_slice %611 {offsets = [0, 0], sizes = [2, 14], strides = [1, 1]} : vector<2x56xf32> to vector<2x14xf32>
    %613 = arith.negf %612 : vector<2x14xf32>
    %614 = math.exp %613 : vector<2x14xf32>
    %cst_176 = arith.constant 1.000000e+00 : f32
    %615 = vector.broadcast %cst_176 : f32 to vector<2x14xf32>
    %616 = arith.addf %615, %614 : vector<2x14xf32>
    %617 = arith.divf %615, %616 : vector<2x14xf32>
    %618 = vector.extract_strided_slice %611 {offsets = [0, 14], sizes = [2, 14], strides = [1, 1]} : vector<2x56xf32> to vector<2x14xf32>
    %619 = arith.negf %618 : vector<2x14xf32>
    %620 = math.exp %619 : vector<2x14xf32>
    %cst_177 = arith.constant 1.000000e+00 : f32
    %621 = vector.broadcast %cst_177 : f32 to vector<2x14xf32>
    %622 = arith.addf %621, %620 : vector<2x14xf32>
    %623 = arith.divf %621, %622 : vector<2x14xf32>
    %624 = vector.extract_strided_slice %611 {offsets = [0, 28], sizes = [2, 14], strides = [1, 1]} : vector<2x56xf32> to vector<2x14xf32>
    %625 = math.tanh %624 : vector<2x14xf32>
    %626 = vector.extract_strided_slice %611 {offsets = [0, 42], sizes = [2, 14], strides = [1, 1]} : vector<2x56xf32> to vector<2x14xf32>
    %627 = arith.negf %626 : vector<2x14xf32>
    %628 = math.exp %627 : vector<2x14xf32>
    %cst_178 = arith.constant 1.000000e+00 : f32
    %629 = vector.broadcast %cst_178 : f32 to vector<2x14xf32>
    %630 = arith.addf %629, %628 : vector<2x14xf32>
    %631 = arith.divf %629, %630 : vector<2x14xf32>
    %632 = arith.mulf %623, %609 : vector<2x14xf32>
    %633 = arith.mulf %617, %625 : vector<2x14xf32>
    %634 = arith.addf %632, %633 : vector<2x14xf32>
    %635 = math.tanh %634 : vector<2x14xf32>
    %636 = arith.mulf %631, %635 : vector<2x14xf32>
    %cst_179 = arith.constant dense<0.000000e+00> : vector<2x56xf32>
    %637 = tpu.matmul %636, %517, %cst_179 {dimension_numbers = #tpu.dot_dimension_numbers<[1], [0], [0], [1], [0, 0, 1, 1], [], []>} : vector<2x14xf32>, vector<14x56xf32>, vector<2x56xf32> -> vector<2x56xf32>
    %638 = arith.addf %637, %537 : vector<2x56xf32>
    %639 = vector.extract_strided_slice %638 {offsets = [0, 0], sizes = [2, 14], strides = [1, 1]} : vector<2x56xf32> to vector<2x14xf32>
    %640 = arith.negf %639 : vector<2x14xf32>
    %641 = math.exp %640 : vector<2x14xf32>
    %cst_180 = arith.constant 1.000000e+00 : f32
    %642 = vector.broadcast %cst_180 : f32 to vector<2x14xf32>
    %643 = arith.addf %642, %641 : vector<2x14xf32>
    %644 = arith.divf %642, %643 : vector<2x14xf32>
    %645 = vector.extract_strided_slice %638 {offsets = [0, 14], sizes = [2, 14], strides = [1, 1]} : vector<2x56xf32> to vector<2x14xf32>
    %646 = arith.negf %645 : vector<2x14xf32>
    %647 = math.exp %646 : vector<2x14xf32>
    %cst_181 = arith.constant 1.000000e+00 : f32
    %648 = vector.broadcast %cst_181 : f32 to vector<2x14xf32>
    %649 = arith.addf %648, %647 : vector<2x14xf32>
    %650 = arith.divf %648, %649 : vector<2x14xf32>
    %651 = vector.extract_strided_slice %638 {offsets = [0, 28], sizes = [2, 14], strides = [1, 1]} : vector<2x56xf32> to vector<2x14xf32>
    %652 = math.tanh %651 : vector<2x14xf32>
    %653 = vector.extract_strided_slice %638 {offsets = [0, 42], sizes = [2, 14], strides = [1, 1]} : vector<2x56xf32> to vector<2x14xf32>
    %654 = arith.negf %653 : vector<2x14xf32>
    %655 = math.exp %654 : vector<2x14xf32>
    %cst_182 = arith.constant 1.000000e+00 : f32
    %656 = vector.broadcast %cst_182 : f32 to vector<2x14xf32>
    %657 = arith.addf %656, %655 : vector<2x14xf32>
    %658 = arith.divf %656, %657 : vector<2x14xf32>
    %659 = arith.mulf %650, %634 : vector<2x14xf32>
    %660 = arith.mulf %644, %652 : vector<2x14xf32>
    %661 = arith.addf %659, %660 : vector<2x14xf32>
    %662 = math.tanh %661 : vector<2x14xf32>
    %663 = arith.mulf %658, %662 : vector<2x14xf32>
    %cst_183 = arith.constant dense<0.000000e+00> : vector<2x56xf32>
    %664 = tpu.matmul %663, %517, %cst_183 {dimension_numbers = #tpu.dot_dimension_numbers<[1], [0], [0], [1], [0, 0, 1, 1], [], []>} : vector<2x14xf32>, vector<14x56xf32>, vector<2x56xf32> -> vector<2x56xf32>
    %665 = arith.addf %664, %542 : vector<2x56xf32>
    %666 = vector.extract_strided_slice %665 {offsets = [0, 0], sizes = [2, 14], strides = [1, 1]} : vector<2x56xf32> to vector<2x14xf32>
    %667 = arith.negf %666 : vector<2x14xf32>
    %668 = math.exp %667 : vector<2x14xf32>
    %cst_184 = arith.constant 1.000000e+00 : f32
    %669 = vector.broadcast %cst_184 : f32 to vector<2x14xf32>
    %670 = arith.addf %669, %668 : vector<2x14xf32>
    %671 = arith.divf %669, %670 : vector<2x14xf32>
    %672 = vector.extract_strided_slice %665 {offsets = [0, 14], sizes = [2, 14], strides = [1, 1]} : vector<2x56xf32> to vector<2x14xf32>
    %673 = arith.negf %672 : vector<2x14xf32>
    %674 = math.exp %673 : vector<2x14xf32>
    %cst_185 = arith.constant 1.000000e+00 : f32
    %675 = vector.broadcast %cst_185 : f32 to vector<2x14xf32>
    %676 = arith.addf %675, %674 : vector<2x14xf32>
    %677 = arith.divf %675, %676 : vector<2x14xf32>
    %678 = vector.extract_strided_slice %665 {offsets = [0, 28], sizes = [2, 14], strides = [1, 1]} : vector<2x56xf32> to vector<2x14xf32>
    %679 = math.tanh %678 : vector<2x14xf32>
    %680 = vector.extract_strided_slice %665 {offsets = [0, 42], sizes = [2, 14], strides = [1, 1]} : vector<2x56xf32> to vector<2x14xf32>
    %681 = arith.negf %680 : vector<2x14xf32>
    %682 = math.exp %681 : vector<2x14xf32>
    %cst_186 = arith.constant 1.000000e+00 : f32
    %683 = vector.broadcast %cst_186 : f32 to vector<2x14xf32>
    %684 = arith.addf %683, %682 : vector<2x14xf32>
    %685 = arith.divf %683, %684 : vector<2x14xf32>
    %686 = arith.mulf %677, %661 : vector<2x14xf32>
    %687 = arith.mulf %671, %679 : vector<2x14xf32>
    %688 = arith.addf %686, %687 : vector<2x14xf32>
    %689 = math.tanh %688 : vector<2x14xf32>
    %690 = arith.mulf %685, %689 : vector<2x14xf32>
    %cst_187 = arith.constant dense<0.000000e+00> : vector<2x56xf32>
    %691 = tpu.matmul %690, %517, %cst_187 {dimension_numbers = #tpu.dot_dimension_numbers<[1], [0], [0], [1], [0, 0, 1, 1], [], []>} : vector<2x14xf32>, vector<14x56xf32>, vector<2x56xf32> -> vector<2x56xf32>
    %692 = arith.addf %691, %547 : vector<2x56xf32>
    %693 = vector.extract_strided_slice %692 {offsets = [0, 0], sizes = [2, 14], strides = [1, 1]} : vector<2x56xf32> to vector<2x14xf32>
    %694 = arith.negf %693 : vector<2x14xf32>
    %695 = math.exp %694 : vector<2x14xf32>
    %cst_188 = arith.constant 1.000000e+00 : f32
    %696 = vector.broadcast %cst_188 : f32 to vector<2x14xf32>
    %697 = arith.addf %696, %695 : vector<2x14xf32>
    %698 = arith.divf %696, %697 : vector<2x14xf32>
    %699 = vector.extract_strided_slice %692 {offsets = [0, 14], sizes = [2, 14], strides = [1, 1]} : vector<2x56xf32> to vector<2x14xf32>
    %700 = arith.negf %699 : vector<2x14xf32>
    %701 = math.exp %700 : vector<2x14xf32>
    %cst_189 = arith.constant 1.000000e+00 : f32
    %702 = vector.broadcast %cst_189 : f32 to vector<2x14xf32>
    %703 = arith.addf %702, %701 : vector<2x14xf32>
    %704 = arith.divf %702, %703 : vector<2x14xf32>
    %705 = vector.extract_strided_slice %692 {offsets = [0, 28], sizes = [2, 14], strides = [1, 1]} : vector<2x56xf32> to vector<2x14xf32>
    %706 = math.tanh %705 : vector<2x14xf32>
    %707 = vector.extract_strided_slice %692 {offsets = [0, 42], sizes = [2, 14], strides = [1, 1]} : vector<2x56xf32> to vector<2x14xf32>
    %708 = arith.negf %707 : vector<2x14xf32>
    %709 = math.exp %708 : vector<2x14xf32>
    %cst_190 = arith.constant 1.000000e+00 : f32
    %710 = vector.broadcast %cst_190 : f32 to vector<2x14xf32>
    %711 = arith.addf %710, %709 : vector<2x14xf32>
    %712 = arith.divf %710, %711 : vector<2x14xf32>
    %713 = arith.mulf %704, %688 : vector<2x14xf32>
    %714 = arith.mulf %698, %706 : vector<2x14xf32>
    %715 = arith.addf %713, %714 : vector<2x14xf32>
    %716 = math.tanh %715 : vector<2x14xf32>
    %717 = arith.mulf %712, %716 : vector<2x14xf32>
    %cst_191 = arith.constant dense<0.000000e+00> : vector<2x56xf32>
    %718 = tpu.matmul %717, %517, %cst_191 {dimension_numbers = #tpu.dot_dimension_numbers<[1], [0], [0], [1], [0, 0, 1, 1], [], []>} : vector<2x14xf32>, vector<14x56xf32>, vector<2x56xf32> -> vector<2x56xf32>
    %719 = arith.addf %718, %552 : vector<2x56xf32>
    %720 = vector.extract_strided_slice %719 {offsets = [0, 0], sizes = [2, 14], strides = [1, 1]} : vector<2x56xf32> to vector<2x14xf32>
    %721 = arith.negf %720 : vector<2x14xf32>
    %722 = math.exp %721 : vector<2x14xf32>
    %cst_192 = arith.constant 1.000000e+00 : f32
    %723 = vector.broadcast %cst_192 : f32 to vector<2x14xf32>
    %724 = arith.addf %723, %722 : vector<2x14xf32>
    %725 = arith.divf %723, %724 : vector<2x14xf32>
    %726 = vector.extract_strided_slice %719 {offsets = [0, 14], sizes = [2, 14], strides = [1, 1]} : vector<2x56xf32> to vector<2x14xf32>
    %727 = arith.negf %726 : vector<2x14xf32>
    %728 = math.exp %727 : vector<2x14xf32>
    %cst_193 = arith.constant 1.000000e+00 : f32
    %729 = vector.broadcast %cst_193 : f32 to vector<2x14xf32>
    %730 = arith.addf %729, %728 : vector<2x14xf32>
    %731 = arith.divf %729, %730 : vector<2x14xf32>
    %732 = vector.extract_strided_slice %719 {offsets = [0, 28], sizes = [2, 14], strides = [1, 1]} : vector<2x56xf32> to vector<2x14xf32>
    %733 = math.tanh %732 : vector<2x14xf32>
    %734 = vector.extract_strided_slice %719 {offsets = [0, 42], sizes = [2, 14], strides = [1, 1]} : vector<2x56xf32> to vector<2x14xf32>
    %735 = arith.negf %734 : vector<2x14xf32>
    %736 = math.exp %735 : vector<2x14xf32>
    %cst_194 = arith.constant 1.000000e+00 : f32
    %737 = vector.broadcast %cst_194 : f32 to vector<2x14xf32>
    %738 = arith.addf %737, %736 : vector<2x14xf32>
    %739 = arith.divf %737, %738 : vector<2x14xf32>
    %740 = arith.mulf %731, %715 : vector<2x14xf32>
    %741 = arith.mulf %725, %733 : vector<2x14xf32>
    %742 = arith.addf %740, %741 : vector<2x14xf32>
    %743 = math.tanh %742 : vector<2x14xf32>
    %744 = arith.mulf %739, %743 : vector<2x14xf32>
    %cst_195 = arith.constant dense<0.000000e+00> : vector<2x56xf32>
    %745 = tpu.matmul %744, %517, %cst_195 {dimension_numbers = #tpu.dot_dimension_numbers<[1], [0], [0], [1], [0, 0, 1, 1], [], []>} : vector<2x14xf32>, vector<14x56xf32>, vector<2x56xf32> -> vector<2x56xf32>
    %746 = arith.addf %745, %557 : vector<2x56xf32>
    %747 = vector.extract_strided_slice %746 {offsets = [0, 0], sizes = [2, 14], strides = [1, 1]} : vector<2x56xf32> to vector<2x14xf32>
    %748 = arith.negf %747 : vector<2x14xf32>
    %749 = math.exp %748 : vector<2x14xf32>
    %cst_196 = arith.constant 1.000000e+00 : f32
    %750 = vector.broadcast %cst_196 : f32 to vector<2x14xf32>
    %751 = arith.addf %750, %749 : vector<2x14xf32>
    %752 = arith.divf %750, %751 : vector<2x14xf32>
    %753 = vector.extract_strided_slice %746 {offsets = [0, 14], sizes = [2, 14], strides = [1, 1]} : vector<2x56xf32> to vector<2x14xf32>
    %754 = arith.negf %753 : vector<2x14xf32>
    %755 = math.exp %754 : vector<2x14xf32>
    %cst_197 = arith.constant 1.000000e+00 : f32
    %756 = vector.broadcast %cst_197 : f32 to vector<2x14xf32>
    %757 = arith.addf %756, %755 : vector<2x14xf32>
    %758 = arith.divf %756, %757 : vector<2x14xf32>
    %759 = vector.extract_strided_slice %746 {offsets = [0, 28], sizes = [2, 14], strides = [1, 1]} : vector<2x56xf32> to vector<2x14xf32>
    %760 = math.tanh %759 : vector<2x14xf32>
    %761 = vector.extract_strided_slice %746 {offsets = [0, 42], sizes = [2, 14], strides = [1, 1]} : vector<2x56xf32> to vector<2x14xf32>
    %762 = arith.negf %761 : vector<2x14xf32>
    %763 = math.exp %762 : vector<2x14xf32>
    %cst_198 = arith.constant 1.000000e+00 : f32
    %764 = vector.broadcast %cst_198 : f32 to vector<2x14xf32>
    %765 = arith.addf %764, %763 : vector<2x14xf32>
    %766 = arith.divf %764, %765 : vector<2x14xf32>
    %767 = arith.mulf %758, %742 : vector<2x14xf32>
    %768 = arith.mulf %752, %760 : vector<2x14xf32>
    %769 = arith.addf %767, %768 : vector<2x14xf32>
    %770 = math.tanh %769 : vector<2x14xf32>
    %771 = arith.mulf %766, %770 : vector<2x14xf32>
    %cst_199 = arith.constant dense<0.000000e+00> : vector<2x56xf32>
    %772 = tpu.matmul %771, %517, %cst_199 {dimension_numbers = #tpu.dot_dimension_numbers<[1], [0], [0], [1], [0, 0, 1, 1], [], []>} : vector<2x14xf32>, vector<14x56xf32>, vector<2x56xf32> -> vector<2x56xf32>
    %773 = arith.addf %772, %562 : vector<2x56xf32>
    %774 = vector.extract_strided_slice %773 {offsets = [0, 0], sizes = [2, 14], strides = [1, 1]} : vector<2x56xf32> to vector<2x14xf32>
    %775 = arith.negf %774 : vector<2x14xf32>
    %776 = math.exp %775 : vector<2x14xf32>
    %cst_200 = arith.constant 1.000000e+00 : f32
    %777 = vector.broadcast %cst_200 : f32 to vector<2x14xf32>
    %778 = arith.addf %777, %776 : vector<2x14xf32>
    %779 = arith.divf %777, %778 : vector<2x14xf32>
    %780 = vector.extract_strided_slice %773 {offsets = [0, 14], sizes = [2, 14], strides = [1, 1]} : vector<2x56xf32> to vector<2x14xf32>
    %781 = arith.negf %780 : vector<2x14xf32>
    %782 = math.exp %781 : vector<2x14xf32>
    %cst_201 = arith.constant 1.000000e+00 : f32
    %783 = vector.broadcast %cst_201 : f32 to vector<2x14xf32>
    %784 = arith.addf %783, %782 : vector<2x14xf32>
    %785 = arith.divf %783, %784 : vector<2x14xf32>
    %786 = vector.extract_strided_slice %773 {offsets = [0, 28], sizes = [2, 14], strides = [1, 1]} : vector<2x56xf32> to vector<2x14xf32>
    %787 = math.tanh %786 : vector<2x14xf32>
    %788 = vector.extract_strided_slice %773 {offsets = [0, 42], sizes = [2, 14], strides = [1, 1]} : vector<2x56xf32> to vector<2x14xf32>
    %789 = arith.negf %788 : vector<2x14xf32>
    %790 = math.exp %789 : vector<2x14xf32>
    %cst_202 = arith.constant 1.000000e+00 : f32
    %791 = vector.broadcast %cst_202 : f32 to vector<2x14xf32>
    %792 = arith.addf %791, %790 : vector<2x14xf32>
    %793 = arith.divf %791, %792 : vector<2x14xf32>
    %794 = arith.mulf %785, %769 : vector<2x14xf32>
    %795 = arith.mulf %779, %787 : vector<2x14xf32>
    %796 = arith.addf %794, %795 : vector<2x14xf32>
    %797 = math.tanh %796 : vector<2x14xf32>
    %798 = arith.mulf %793, %797 : vector<2x14xf32>
    %cst_203 = arith.constant dense<0.000000e+00> : vector<2x56xf32>
    %799 = tpu.matmul %798, %517, %cst_203 {dimension_numbers = #tpu.dot_dimension_numbers<[1], [0], [0], [1], [0, 0, 1, 1], [], []>} : vector<2x14xf32>, vector<14x56xf32>, vector<2x56xf32> -> vector<2x56xf32>
    %800 = arith.addf %799, %567 : vector<2x56xf32>
    %801 = vector.extract_strided_slice %800 {offsets = [0, 0], sizes = [2, 14], strides = [1, 1]} : vector<2x56xf32> to vector<2x14xf32>
    %802 = arith.negf %801 : vector<2x14xf32>
    %803 = math.exp %802 : vector<2x14xf32>
    %cst_204 = arith.constant 1.000000e+00 : f32
    %804 = vector.broadcast %cst_204 : f32 to vector<2x14xf32>
    %805 = arith.addf %804, %803 : vector<2x14xf32>
    %806 = arith.divf %804, %805 : vector<2x14xf32>
    %807 = vector.extract_strided_slice %800 {offsets = [0, 14], sizes = [2, 14], strides = [1, 1]} : vector<2x56xf32> to vector<2x14xf32>
    %808 = arith.negf %807 : vector<2x14xf32>
    %809 = math.exp %808 : vector<2x14xf32>
    %cst_205 = arith.constant 1.000000e+00 : f32
    %810 = vector.broadcast %cst_205 : f32 to vector<2x14xf32>
    %811 = arith.addf %810, %809 : vector<2x14xf32>
    %812 = arith.divf %810, %811 : vector<2x14xf32>
    %813 = vector.extract_strided_slice %800 {offsets = [0, 28], sizes = [2, 14], strides = [1, 1]} : vector<2x56xf32> to vector<2x14xf32>
    %814 = math.tanh %813 : vector<2x14xf32>
    %815 = vector.extract_strided_slice %800 {offsets = [0, 42], sizes = [2, 14], strides = [1, 1]} : vector<2x56xf32> to vector<2x14xf32>
    %816 = arith.negf %815 : vector<2x14xf32>
    %817 = math.exp %816 : vector<2x14xf32>
    %cst_206 = arith.constant 1.000000e+00 : f32
    %818 = vector.broadcast %cst_206 : f32 to vector<2x14xf32>
    %819 = arith.addf %818, %817 : vector<2x14xf32>
    %820 = arith.divf %818, %819 : vector<2x14xf32>
    %821 = arith.mulf %812, %796 : vector<2x14xf32>
    %822 = arith.mulf %806, %814 : vector<2x14xf32>
    %823 = arith.addf %821, %822 : vector<2x14xf32>
    %824 = math.tanh %823 : vector<2x14xf32>
    %825 = arith.mulf %820, %824 : vector<2x14xf32>
    %cst_207 = arith.constant 0.000000e+00 : f32
    %826 = vector.broadcast %cst_207 : f32 to vector<2x14xf32>
    %cst_208 = arith.constant 0.000000e+00 : f32
    %827 = vector.broadcast %cst_208 : f32 to vector<2x14xf32>
    %cst_209 = arith.constant dense<0.000000e+00> : vector<2x56xf32>
    %828 = tpu.matmul %826, %523, %cst_209 {dimension_numbers = #tpu.dot_dimension_numbers<[1], [0], [0], [1], [0, 0, 1, 1], [], []>} : vector<2x14xf32>, vector<14x56xf32>, vector<2x56xf32> -> vector<2x56xf32>
    %829 = arith.addf %828, %607 : vector<2x56xf32>
    %830 = vector.extract_strided_slice %829 {offsets = [0, 0], sizes = [2, 14], strides = [1, 1]} : vector<2x56xf32> to vector<2x14xf32>
    %831 = arith.negf %830 : vector<2x14xf32>
    %832 = math.exp %831 : vector<2x14xf32>
    %cst_210 = arith.constant 1.000000e+00 : f32
    %833 = vector.broadcast %cst_210 : f32 to vector<2x14xf32>
    %834 = arith.addf %833, %832 : vector<2x14xf32>
    %835 = arith.divf %833, %834 : vector<2x14xf32>
    %836 = vector.extract_strided_slice %829 {offsets = [0, 14], sizes = [2, 14], strides = [1, 1]} : vector<2x56xf32> to vector<2x14xf32>
    %837 = arith.negf %836 : vector<2x14xf32>
    %838 = math.exp %837 : vector<2x14xf32>
    %cst_211 = arith.constant 1.000000e+00 : f32
    %839 = vector.broadcast %cst_211 : f32 to vector<2x14xf32>
    %840 = arith.addf %839, %838 : vector<2x14xf32>
    %841 = arith.divf %839, %840 : vector<2x14xf32>
    %842 = vector.extract_strided_slice %829 {offsets = [0, 28], sizes = [2, 14], strides = [1, 1]} : vector<2x56xf32> to vector<2x14xf32>
    %843 = math.tanh %842 : vector<2x14xf32>
    %844 = vector.extract_strided_slice %829 {offsets = [0, 42], sizes = [2, 14], strides = [1, 1]} : vector<2x56xf32> to vector<2x14xf32>
    %845 = arith.negf %844 : vector<2x14xf32>
    %846 = math.exp %845 : vector<2x14xf32>
    %cst_212 = arith.constant 1.000000e+00 : f32
    %847 = vector.broadcast %cst_212 : f32 to vector<2x14xf32>
    %848 = arith.addf %847, %846 : vector<2x14xf32>
    %849 = arith.divf %847, %848 : vector<2x14xf32>
    %850 = arith.mulf %841, %827 : vector<2x14xf32>
    %851 = arith.mulf %835, %843 : vector<2x14xf32>
    %852 = arith.addf %850, %851 : vector<2x14xf32>
    %853 = math.tanh %852 : vector<2x14xf32>
    %854 = arith.mulf %849, %853 : vector<2x14xf32>
    %cst_213 = arith.constant dense<0.000000e+00> : vector<2x56xf32>
    %855 = tpu.matmul %854, %523, %cst_213 {dimension_numbers = #tpu.dot_dimension_numbers<[1], [0], [0], [1], [0, 0, 1, 1], [], []>} : vector<2x14xf32>, vector<14x56xf32>, vector<2x56xf32> -> vector<2x56xf32>
    %856 = arith.addf %855, %602 : vector<2x56xf32>
    %857 = vector.extract_strided_slice %856 {offsets = [0, 0], sizes = [2, 14], strides = [1, 1]} : vector<2x56xf32> to vector<2x14xf32>
    %858 = arith.negf %857 : vector<2x14xf32>
    %859 = math.exp %858 : vector<2x14xf32>
    %cst_214 = arith.constant 1.000000e+00 : f32
    %860 = vector.broadcast %cst_214 : f32 to vector<2x14xf32>
    %861 = arith.addf %860, %859 : vector<2x14xf32>
    %862 = arith.divf %860, %861 : vector<2x14xf32>
    %863 = vector.extract_strided_slice %856 {offsets = [0, 14], sizes = [2, 14], strides = [1, 1]} : vector<2x56xf32> to vector<2x14xf32>
    %864 = arith.negf %863 : vector<2x14xf32>
    %865 = math.exp %864 : vector<2x14xf32>
    %cst_215 = arith.constant 1.000000e+00 : f32
    %866 = vector.broadcast %cst_215 : f32 to vector<2x14xf32>
    %867 = arith.addf %866, %865 : vector<2x14xf32>
    %868 = arith.divf %866, %867 : vector<2x14xf32>
    %869 = vector.extract_strided_slice %856 {offsets = [0, 28], sizes = [2, 14], strides = [1, 1]} : vector<2x56xf32> to vector<2x14xf32>
    %870 = math.tanh %869 : vector<2x14xf32>
    %871 = vector.extract_strided_slice %856 {offsets = [0, 42], sizes = [2, 14], strides = [1, 1]} : vector<2x56xf32> to vector<2x14xf32>
    %872 = arith.negf %871 : vector<2x14xf32>
    %873 = math.exp %872 : vector<2x14xf32>
    %cst_216 = arith.constant 1.000000e+00 : f32
    %874 = vector.broadcast %cst_216 : f32 to vector<2x14xf32>
    %875 = arith.addf %874, %873 : vector<2x14xf32>
    %876 = arith.divf %874, %875 : vector<2x14xf32>
    %877 = arith.mulf %868, %852 : vector<2x14xf32>
    %878 = arith.mulf %862, %870 : vector<2x14xf32>
    %879 = arith.addf %877, %878 : vector<2x14xf32>
    %880 = math.tanh %879 : vector<2x14xf32>
    %881 = arith.mulf %876, %880 : vector<2x14xf32>
    %cst_217 = arith.constant dense<0.000000e+00> : vector<2x56xf32>
    %882 = tpu.matmul %881, %523, %cst_217 {dimension_numbers = #tpu.dot_dimension_numbers<[1], [0], [0], [1], [0, 0, 1, 1], [], []>} : vector<2x14xf32>, vector<14x56xf32>, vector<2x56xf32> -> vector<2x56xf32>
    %883 = arith.addf %882, %597 : vector<2x56xf32>
    %884 = vector.extract_strided_slice %883 {offsets = [0, 0], sizes = [2, 14], strides = [1, 1]} : vector<2x56xf32> to vector<2x14xf32>
    %885 = arith.negf %884 : vector<2x14xf32>
    %886 = math.exp %885 : vector<2x14xf32>
    %cst_218 = arith.constant 1.000000e+00 : f32
    %887 = vector.broadcast %cst_218 : f32 to vector<2x14xf32>
    %888 = arith.addf %887, %886 : vector<2x14xf32>
    %889 = arith.divf %887, %888 : vector<2x14xf32>
    %890 = vector.extract_strided_slice %883 {offsets = [0, 14], sizes = [2, 14], strides = [1, 1]} : vector<2x56xf32> to vector<2x14xf32>
    %891 = arith.negf %890 : vector<2x14xf32>
    %892 = math.exp %891 : vector<2x14xf32>
    %cst_219 = arith.constant 1.000000e+00 : f32
    %893 = vector.broadcast %cst_219 : f32 to vector<2x14xf32>
    %894 = arith.addf %893, %892 : vector<2x14xf32>
    %895 = arith.divf %893, %894 : vector<2x14xf32>
    %896 = vector.extract_strided_slice %883 {offsets = [0, 28], sizes = [2, 14], strides = [1, 1]} : vector<2x56xf32> to vector<2x14xf32>
    %897 = math.tanh %896 : vector<2x14xf32>
    %898 = vector.extract_strided_slice %883 {offsets = [0, 42], sizes = [2, 14], strides = [1, 1]} : vector<2x56xf32> to vector<2x14xf32>
    %899 = arith.negf %898 : vector<2x14xf32>
    %900 = math.exp %899 : vector<2x14xf32>
    %cst_220 = arith.constant 1.000000e+00 : f32
    %901 = vector.broadcast %cst_220 : f32 to vector<2x14xf32>
    %902 = arith.addf %901, %900 : vector<2x14xf32>
    %903 = arith.divf %901, %902 : vector<2x14xf32>
    %904 = arith.mulf %895, %879 : vector<2x14xf32>
    %905 = arith.mulf %889, %897 : vector<2x14xf32>
    %906 = arith.addf %904, %905 : vector<2x14xf32>
    %907 = math.tanh %906 : vector<2x14xf32>
    %908 = arith.mulf %903, %907 : vector<2x14xf32>
    %cst_221 = arith.constant dense<0.000000e+00> : vector<2x56xf32>
    %909 = tpu.matmul %908, %523, %cst_221 {dimension_numbers = #tpu.dot_dimension_numbers<[1], [0], [0], [1], [0, 0, 1, 1], [], []>} : vector<2x14xf32>, vector<14x56xf32>, vector<2x56xf32> -> vector<2x56xf32>
    %910 = arith.addf %909, %592 : vector<2x56xf32>
    %911 = vector.extract_strided_slice %910 {offsets = [0, 0], sizes = [2, 14], strides = [1, 1]} : vector<2x56xf32> to vector<2x14xf32>
    %912 = arith.negf %911 : vector<2x14xf32>
    %913 = math.exp %912 : vector<2x14xf32>
    %cst_222 = arith.constant 1.000000e+00 : f32
    %914 = vector.broadcast %cst_222 : f32 to vector<2x14xf32>
    %915 = arith.addf %914, %913 : vector<2x14xf32>
    %916 = arith.divf %914, %915 : vector<2x14xf32>
    %917 = vector.extract_strided_slice %910 {offsets = [0, 14], sizes = [2, 14], strides = [1, 1]} : vector<2x56xf32> to vector<2x14xf32>
    %918 = arith.negf %917 : vector<2x14xf32>
    %919 = math.exp %918 : vector<2x14xf32>
    %cst_223 = arith.constant 1.000000e+00 : f32
    %920 = vector.broadcast %cst_223 : f32 to vector<2x14xf32>
    %921 = arith.addf %920, %919 : vector<2x14xf32>
    %922 = arith.divf %920, %921 : vector<2x14xf32>
    %923 = vector.extract_strided_slice %910 {offsets = [0, 28], sizes = [2, 14], strides = [1, 1]} : vector<2x56xf32> to vector<2x14xf32>
    %924 = math.tanh %923 : vector<2x14xf32>
    %925 = vector.extract_strided_slice %910 {offsets = [0, 42], sizes = [2, 14], strides = [1, 1]} : vector<2x56xf32> to vector<2x14xf32>
    %926 = arith.negf %925 : vector<2x14xf32>
    %927 = math.exp %926 : vector<2x14xf32>
    %cst_224 = arith.constant 1.000000e+00 : f32
    %928 = vector.broadcast %cst_224 : f32 to vector<2x14xf32>
    %929 = arith.addf %928, %927 : vector<2x14xf32>
    %930 = arith.divf %928, %929 : vector<2x14xf32>
    %931 = arith.mulf %922, %906 : vector<2x14xf32>
    %932 = arith.mulf %916, %924 : vector<2x14xf32>
    %933 = arith.addf %931, %932 : vector<2x14xf32>
    %934 = math.tanh %933 : vector<2x14xf32>
    %935 = arith.mulf %930, %934 : vector<2x14xf32>
    %cst_225 = arith.constant dense<0.000000e+00> : vector<2x56xf32>
    %936 = tpu.matmul %935, %523, %cst_225 {dimension_numbers = #tpu.dot_dimension_numbers<[1], [0], [0], [1], [0, 0, 1, 1], [], []>} : vector<2x14xf32>, vector<14x56xf32>, vector<2x56xf32> -> vector<2x56xf32>
    %937 = arith.addf %936, %587 : vector<2x56xf32>
    %938 = vector.extract_strided_slice %937 {offsets = [0, 0], sizes = [2, 14], strides = [1, 1]} : vector<2x56xf32> to vector<2x14xf32>
    %939 = arith.negf %938 : vector<2x14xf32>
    %940 = math.exp %939 : vector<2x14xf32>
    %cst_226 = arith.constant 1.000000e+00 : f32
    %941 = vector.broadcast %cst_226 : f32 to vector<2x14xf32>
    %942 = arith.addf %941, %940 : vector<2x14xf32>
    %943 = arith.divf %941, %942 : vector<2x14xf32>
    %944 = vector.extract_strided_slice %937 {offsets = [0, 14], sizes = [2, 14], strides = [1, 1]} : vector<2x56xf32> to vector<2x14xf32>
    %945 = arith.negf %944 : vector<2x14xf32>
    %946 = math.exp %945 : vector<2x14xf32>
    %cst_227 = arith.constant 1.000000e+00 : f32
    %947 = vector.broadcast %cst_227 : f32 to vector<2x14xf32>
    %948 = arith.addf %947, %946 : vector<2x14xf32>
    %949 = arith.divf %947, %948 : vector<2x14xf32>
    %950 = vector.extract_strided_slice %937 {offsets = [0, 28], sizes = [2, 14], strides = [1, 1]} : vector<2x56xf32> to vector<2x14xf32>
    %951 = math.tanh %950 : vector<2x14xf32>
    %952 = vector.extract_strided_slice %937 {offsets = [0, 42], sizes = [2, 14], strides = [1, 1]} : vector<2x56xf32> to vector<2x14xf32>
    %953 = arith.negf %952 : vector<2x14xf32>
    %954 = math.exp %953 : vector<2x14xf32>
    %cst_228 = arith.constant 1.000000e+00 : f32
    %955 = vector.broadcast %cst_228 : f32 to vector<2x14xf32>
    %956 = arith.addf %955, %954 : vector<2x14xf32>
    %957 = arith.divf %955, %956 : vector<2x14xf32>
    %958 = arith.mulf %949, %933 : vector<2x14xf32>
    %959 = arith.mulf %943, %951 : vector<2x14xf32>
    %960 = arith.addf %958, %959 : vector<2x14xf32>
    %961 = math.tanh %960 : vector<2x14xf32>
    %962 = arith.mulf %957, %961 : vector<2x14xf32>
    %cst_229 = arith.constant dense<0.000000e+00> : vector<2x56xf32>
    %963 = tpu.matmul %962, %523, %cst_229 {dimension_numbers = #tpu.dot_dimension_numbers<[1], [0], [0], [1], [0, 0, 1, 1], [], []>} : vector<2x14xf32>, vector<14x56xf32>, vector<2x56xf32> -> vector<2x56xf32>
    %964 = arith.addf %963, %582 : vector<2x56xf32>
    %965 = vector.extract_strided_slice %964 {offsets = [0, 0], sizes = [2, 14], strides = [1, 1]} : vector<2x56xf32> to vector<2x14xf32>
    %966 = arith.negf %965 : vector<2x14xf32>
    %967 = math.exp %966 : vector<2x14xf32>
    %cst_230 = arith.constant 1.000000e+00 : f32
    %968 = vector.broadcast %cst_230 : f32 to vector<2x14xf32>
    %969 = arith.addf %968, %967 : vector<2x14xf32>
    %970 = arith.divf %968, %969 : vector<2x14xf32>
    %971 = vector.extract_strided_slice %964 {offsets = [0, 14], sizes = [2, 14], strides = [1, 1]} : vector<2x56xf32> to vector<2x14xf32>
    %972 = arith.negf %971 : vector<2x14xf32>
    %973 = math.exp %972 : vector<2x14xf32>
    %cst_231 = arith.constant 1.000000e+00 : f32
    %974 = vector.broadcast %cst_231 : f32 to vector<2x14xf32>
    %975 = arith.addf %974, %973 : vector<2x14xf32>
    %976 = arith.divf %974, %975 : vector<2x14xf32>
    %977 = vector.extract_strided_slice %964 {offsets = [0, 28], sizes = [2, 14], strides = [1, 1]} : vector<2x56xf32> to vector<2x14xf32>
    %978 = math.tanh %977 : vector<2x14xf32>
    %979 = vector.extract_strided_slice %964 {offsets = [0, 42], sizes = [2, 14], strides = [1, 1]} : vector<2x56xf32> to vector<2x14xf32>
    %980 = arith.negf %979 : vector<2x14xf32>
    %981 = math.exp %980 : vector<2x14xf32>
    %cst_232 = arith.constant 1.000000e+00 : f32
    %982 = vector.broadcast %cst_232 : f32 to vector<2x14xf32>
    %983 = arith.addf %982, %981 : vector<2x14xf32>
    %984 = arith.divf %982, %983 : vector<2x14xf32>
    %985 = arith.mulf %976, %960 : vector<2x14xf32>
    %986 = arith.mulf %970, %978 : vector<2x14xf32>
    %987 = arith.addf %985, %986 : vector<2x14xf32>
    %988 = math.tanh %987 : vector<2x14xf32>
    %989 = arith.mulf %984, %988 : vector<2x14xf32>
    %cst_233 = arith.constant dense<0.000000e+00> : vector<2x56xf32>
    %990 = tpu.matmul %989, %523, %cst_233 {dimension_numbers = #tpu.dot_dimension_numbers<[1], [0], [0], [1], [0, 0, 1, 1], [], []>} : vector<2x14xf32>, vector<14x56xf32>, vector<2x56xf32> -> vector<2x56xf32>
    %991 = arith.addf %990, %577 : vector<2x56xf32>
    %992 = vector.extract_strided_slice %991 {offsets = [0, 0], sizes = [2, 14], strides = [1, 1]} : vector<2x56xf32> to vector<2x14xf32>
    %993 = arith.negf %992 : vector<2x14xf32>
    %994 = math.exp %993 : vector<2x14xf32>
    %cst_234 = arith.constant 1.000000e+00 : f32
    %995 = vector.broadcast %cst_234 : f32 to vector<2x14xf32>
    %996 = arith.addf %995, %994 : vector<2x14xf32>
    %997 = arith.divf %995, %996 : vector<2x14xf32>
    %998 = vector.extract_strided_slice %991 {offsets = [0, 14], sizes = [2, 14], strides = [1, 1]} : vector<2x56xf32> to vector<2x14xf32>
    %999 = arith.negf %998 : vector<2x14xf32>
    %1000 = math.exp %999 : vector<2x14xf32>
    %cst_235 = arith.constant 1.000000e+00 : f32
    %1001 = vector.broadcast %cst_235 : f32 to vector<2x14xf32>
    %1002 = arith.addf %1001, %1000 : vector<2x14xf32>
    %1003 = arith.divf %1001, %1002 : vector<2x14xf32>
    %1004 = vector.extract_strided_slice %991 {offsets = [0, 28], sizes = [2, 14], strides = [1, 1]} : vector<2x56xf32> to vector<2x14xf32>
    %1005 = math.tanh %1004 : vector<2x14xf32>
    %1006 = vector.extract_strided_slice %991 {offsets = [0, 42], sizes = [2, 14], strides = [1, 1]} : vector<2x56xf32> to vector<2x14xf32>
    %1007 = arith.negf %1006 : vector<2x14xf32>
    %1008 = math.exp %1007 : vector<2x14xf32>
    %cst_236 = arith.constant 1.000000e+00 : f32
    %1009 = vector.broadcast %cst_236 : f32 to vector<2x14xf32>
    %1010 = arith.addf %1009, %1008 : vector<2x14xf32>
    %1011 = arith.divf %1009, %1010 : vector<2x14xf32>
    %1012 = arith.mulf %1003, %987 : vector<2x14xf32>
    %1013 = arith.mulf %997, %1005 : vector<2x14xf32>
    %1014 = arith.addf %1012, %1013 : vector<2x14xf32>
    %1015 = math.tanh %1014 : vector<2x14xf32>
    %1016 = arith.mulf %1011, %1015 : vector<2x14xf32>
    %cst_237 = arith.constant dense<0.000000e+00> : vector<2x56xf32>
    %1017 = tpu.matmul %1016, %523, %cst_237 {dimension_numbers = #tpu.dot_dimension_numbers<[1], [0], [0], [1], [0, 0, 1, 1], [], []>} : vector<2x14xf32>, vector<14x56xf32>, vector<2x56xf32> -> vector<2x56xf32>
    %1018 = arith.addf %1017, %572 : vector<2x56xf32>
    %1019 = vector.extract_strided_slice %1018 {offsets = [0, 0], sizes = [2, 14], strides = [1, 1]} : vector<2x56xf32> to vector<2x14xf32>
    %1020 = arith.negf %1019 : vector<2x14xf32>
    %1021 = math.exp %1020 : vector<2x14xf32>
    %cst_238 = arith.constant 1.000000e+00 : f32
    %1022 = vector.broadcast %cst_238 : f32 to vector<2x14xf32>
    %1023 = arith.addf %1022, %1021 : vector<2x14xf32>
    %1024 = arith.divf %1022, %1023 : vector<2x14xf32>
    %1025 = vector.extract_strided_slice %1018 {offsets = [0, 14], sizes = [2, 14], strides = [1, 1]} : vector<2x56xf32> to vector<2x14xf32>
    %1026 = arith.negf %1025 : vector<2x14xf32>
    %1027 = math.exp %1026 : vector<2x14xf32>
    %cst_239 = arith.constant 1.000000e+00 : f32
    %1028 = vector.broadcast %cst_239 : f32 to vector<2x14xf32>
    %1029 = arith.addf %1028, %1027 : vector<2x14xf32>
    %1030 = arith.divf %1028, %1029 : vector<2x14xf32>
    %1031 = vector.extract_strided_slice %1018 {offsets = [0, 28], sizes = [2, 14], strides = [1, 1]} : vector<2x56xf32> to vector<2x14xf32>
    %1032 = math.tanh %1031 : vector<2x14xf32>
    %1033 = vector.extract_strided_slice %1018 {offsets = [0, 42], sizes = [2, 14], strides = [1, 1]} : vector<2x56xf32> to vector<2x14xf32>
    %1034 = arith.negf %1033 : vector<2x14xf32>
    %1035 = math.exp %1034 : vector<2x14xf32>
    %cst_240 = arith.constant 1.000000e+00 : f32
    %1036 = vector.broadcast %cst_240 : f32 to vector<2x14xf32>
    %1037 = arith.addf %1036, %1035 : vector<2x14xf32>
    %1038 = arith.divf %1036, %1037 : vector<2x14xf32>
    %1039 = arith.mulf %1030, %1014 : vector<2x14xf32>
    %1040 = arith.mulf %1024, %1032 : vector<2x14xf32>
    %1041 = arith.addf %1039, %1040 : vector<2x14xf32>
    %1042 = math.tanh %1041 : vector<2x14xf32>
    %1043 = arith.mulf %1038, %1042 : vector<2x14xf32>
    %c8 = arith.constant 8 : index
    %c0_241 = arith.constant 0 : index
    %c0_242 = arith.constant 0 : index
    %1044 = vector.load %arg2[%c8, %c0_241, %c0_242] : memref<11x14x56xf32, #tpu.memory_space<vmem>>, vector<1x14x56xf32>
    %1045 = vector.shape_cast %1044 : vector<1x14x56xf32> to vector<14x56xf32>
    %c9 = arith.constant 9 : index
    %c0_243 = arith.constant 0 : index
    %c0_244 = arith.constant 0 : index
    %1046 = vector.load %arg2[%c9, %c0_243, %c0_244] : memref<11x14x56xf32, #tpu.memory_space<vmem>>, vector<1x14x56xf32>
    %1047 = vector.shape_cast %1046 : vector<1x14x56xf32> to vector<14x56xf32>
    %c10 = arith.constant 10 : index
    %c0_245 = arith.constant 0 : index
    %c0_246 = arith.constant 0 : index
    %1048 = vector.load %arg2[%c10, %c0_245, %c0_246] : memref<11x14x56xf32, #tpu.memory_space<vmem>>, vector<1x14x56xf32>
    %1049 = vector.shape_cast %1048 : vector<1x14x56xf32> to vector<14x56xf32>
    %c4_247 = arith.constant 4 : index
    %c0_248 = arith.constant 0 : index
    %c0_249 = arith.constant 0 : index
    %1050 = vector.load %arg3[%c4_247, %c0_248, %c0_249] : memref<5x1x56xf32, #tpu.memory_space<vmem>>, vector<1x1x56xf32>
    %1051 = vector.shape_cast %1050 : vector<1x1x56xf32> to vector<1x56xf32>
    %cst_250 = arith.constant dense<0.000000e+00> : vector<2x56xf32>
    %1052 = tpu.matmul %636, %1045, %cst_250 {dimension_numbers = #tpu.dot_dimension_numbers<[1], [0], [0], [1], [0, 0, 1, 1], [], []>} : vector<2x14xf32>, vector<14x56xf32>, vector<2x56xf32> -> vector<2x56xf32>
    %cst_251 = arith.constant dense<0.000000e+00> : vector<2x56xf32>
    %1053 = tpu.matmul %1043, %1047, %cst_251 {dimension_numbers = #tpu.dot_dimension_numbers<[1], [0], [0], [1], [0, 0, 1, 1], [], []>} : vector<2x14xf32>, vector<14x56xf32>, vector<2x56xf32> -> vector<2x56xf32>
    %1054 = arith.addf %1052, %1053 : vector<2x56xf32>
    %1055 = vector.broadcast %1051 : vector<1x56xf32> to vector<2x56xf32>
    %1056 = arith.addf %1054, %1055 : vector<2x56xf32>
    %cst_252 = arith.constant dense<0.000000e+00> : vector<2x56xf32>
    %1057 = tpu.matmul %663, %1045, %cst_252 {dimension_numbers = #tpu.dot_dimension_numbers<[1], [0], [0], [1], [0, 0, 1, 1], [], []>} : vector<2x14xf32>, vector<14x56xf32>, vector<2x56xf32> -> vector<2x56xf32>
    %cst_253 = arith.constant dense<0.000000e+00> : vector<2x56xf32>
    %1058 = tpu.matmul %1016, %1047, %cst_253 {dimension_numbers = #tpu.dot_dimension_numbers<[1], [0], [0], [1], [0, 0, 1, 1], [], []>} : vector<2x14xf32>, vector<14x56xf32>, vector<2x56xf32> -> vector<2x56xf32>
    %1059 = arith.addf %1057, %1058 : vector<2x56xf32>
    %1060 = vector.broadcast %1051 : vector<1x56xf32> to vector<2x56xf32>
    %1061 = arith.addf %1059, %1060 : vector<2x56xf32>
    %cst_254 = arith.constant dense<0.000000e+00> : vector<2x56xf32>
    %1062 = tpu.matmul %690, %1045, %cst_254 {dimension_numbers = #tpu.dot_dimension_numbers<[1], [0], [0], [1], [0, 0, 1, 1], [], []>} : vector<2x14xf32>, vector<14x56xf32>, vector<2x56xf32> -> vector<2x56xf32>
    %cst_255 = arith.constant dense<0.000000e+00> : vector<2x56xf32>
    %1063 = tpu.matmul %989, %1047, %cst_255 {dimension_numbers = #tpu.dot_dimension_numbers<[1], [0], [0], [1], [0, 0, 1, 1], [], []>} : vector<2x14xf32>, vector<14x56xf32>, vector<2x56xf32> -> vector<2x56xf32>
    %1064 = arith.addf %1062, %1063 : vector<2x56xf32>
    %1065 = vector.broadcast %1051 : vector<1x56xf32> to vector<2x56xf32>
    %1066 = arith.addf %1064, %1065 : vector<2x56xf32>
    %cst_256 = arith.constant dense<0.000000e+00> : vector<2x56xf32>
    %1067 = tpu.matmul %717, %1045, %cst_256 {dimension_numbers = #tpu.dot_dimension_numbers<[1], [0], [0], [1], [0, 0, 1, 1], [], []>} : vector<2x14xf32>, vector<14x56xf32>, vector<2x56xf32> -> vector<2x56xf32>
    %cst_257 = arith.constant dense<0.000000e+00> : vector<2x56xf32>
    %1068 = tpu.matmul %962, %1047, %cst_257 {dimension_numbers = #tpu.dot_dimension_numbers<[1], [0], [0], [1], [0, 0, 1, 1], [], []>} : vector<2x14xf32>, vector<14x56xf32>, vector<2x56xf32> -> vector<2x56xf32>
    %1069 = arith.addf %1067, %1068 : vector<2x56xf32>
    %1070 = vector.broadcast %1051 : vector<1x56xf32> to vector<2x56xf32>
    %1071 = arith.addf %1069, %1070 : vector<2x56xf32>
    %cst_258 = arith.constant dense<0.000000e+00> : vector<2x56xf32>
    %1072 = tpu.matmul %744, %1045, %cst_258 {dimension_numbers = #tpu.dot_dimension_numbers<[1], [0], [0], [1], [0, 0, 1, 1], [], []>} : vector<2x14xf32>, vector<14x56xf32>, vector<2x56xf32> -> vector<2x56xf32>
    %cst_259 = arith.constant dense<0.000000e+00> : vector<2x56xf32>
    %1073 = tpu.matmul %935, %1047, %cst_259 {dimension_numbers = #tpu.dot_dimension_numbers<[1], [0], [0], [1], [0, 0, 1, 1], [], []>} : vector<2x14xf32>, vector<14x56xf32>, vector<2x56xf32> -> vector<2x56xf32>
    %1074 = arith.addf %1072, %1073 : vector<2x56xf32>
    %1075 = vector.broadcast %1051 : vector<1x56xf32> to vector<2x56xf32>
    %1076 = arith.addf %1074, %1075 : vector<2x56xf32>
    %cst_260 = arith.constant dense<0.000000e+00> : vector<2x56xf32>
    %1077 = tpu.matmul %771, %1045, %cst_260 {dimension_numbers = #tpu.dot_dimension_numbers<[1], [0], [0], [1], [0, 0, 1, 1], [], []>} : vector<2x14xf32>, vector<14x56xf32>, vector<2x56xf32> -> vector<2x56xf32>
    %cst_261 = arith.constant dense<0.000000e+00> : vector<2x56xf32>
    %1078 = tpu.matmul %908, %1047, %cst_261 {dimension_numbers = #tpu.dot_dimension_numbers<[1], [0], [0], [1], [0, 0, 1, 1], [], []>} : vector<2x14xf32>, vector<14x56xf32>, vector<2x56xf32> -> vector<2x56xf32>
    %1079 = arith.addf %1077, %1078 : vector<2x56xf32>
    %1080 = vector.broadcast %1051 : vector<1x56xf32> to vector<2x56xf32>
    %1081 = arith.addf %1079, %1080 : vector<2x56xf32>
    %cst_262 = arith.constant dense<0.000000e+00> : vector<2x56xf32>
    %1082 = tpu.matmul %798, %1045, %cst_262 {dimension_numbers = #tpu.dot_dimension_numbers<[1], [0], [0], [1], [0, 0, 1, 1], [], []>} : vector<2x14xf32>, vector<14x56xf32>, vector<2x56xf32> -> vector<2x56xf32>
    %cst_263 = arith.constant dense<0.000000e+00> : vector<2x56xf32>
    %1083 = tpu.matmul %881, %1047, %cst_263 {dimension_numbers = #tpu.dot_dimension_numbers<[1], [0], [0], [1], [0, 0, 1, 1], [], []>} : vector<2x14xf32>, vector<14x56xf32>, vector<2x56xf32> -> vector<2x56xf32>
    %1084 = arith.addf %1082, %1083 : vector<2x56xf32>
    %1085 = vector.broadcast %1051 : vector<1x56xf32> to vector<2x56xf32>
    %1086 = arith.addf %1084, %1085 : vector<2x56xf32>
    %cst_264 = arith.constant dense<0.000000e+00> : vector<2x56xf32>
    %1087 = tpu.matmul %825, %1045, %cst_264 {dimension_numbers = #tpu.dot_dimension_numbers<[1], [0], [0], [1], [0, 0, 1, 1], [], []>} : vector<2x14xf32>, vector<14x56xf32>, vector<2x56xf32> -> vector<2x56xf32>
    %cst_265 = arith.constant dense<0.000000e+00> : vector<2x56xf32>
    %1088 = tpu.matmul %854, %1047, %cst_265 {dimension_numbers = #tpu.dot_dimension_numbers<[1], [0], [0], [1], [0, 0, 1, 1], [], []>} : vector<2x14xf32>, vector<14x56xf32>, vector<2x56xf32> -> vector<2x56xf32>
    %1089 = arith.addf %1087, %1088 : vector<2x56xf32>
    %1090 = vector.broadcast %1051 : vector<1x56xf32> to vector<2x56xf32>
    %1091 = arith.addf %1089, %1090 : vector<2x56xf32>
    %cst_266 = arith.constant 0.000000e+00 : f32
    %1092 = vector.broadcast %cst_266 : f32 to vector<2x14xf32>
    %cst_267 = arith.constant 0.000000e+00 : f32
    %1093 = vector.broadcast %cst_267 : f32 to vector<2x14xf32>
    %cst_268 = arith.constant dense<0.000000e+00> : vector<2x56xf32>
    %1094 = tpu.matmul %1092, %1049, %cst_268 {dimension_numbers = #tpu.dot_dimension_numbers<[1], [0], [0], [1], [0, 0, 1, 1], [], []>} : vector<2x14xf32>, vector<14x56xf32>, vector<2x56xf32> -> vector<2x56xf32>
    %1095 = arith.addf %1094, %1056 : vector<2x56xf32>
    %1096 = vector.extract_strided_slice %1095 {offsets = [0, 0], sizes = [2, 14], strides = [1, 1]} : vector<2x56xf32> to vector<2x14xf32>
    %1097 = arith.negf %1096 : vector<2x14xf32>
    %1098 = math.exp %1097 : vector<2x14xf32>
    %cst_269 = arith.constant 1.000000e+00 : f32
    %1099 = vector.broadcast %cst_269 : f32 to vector<2x14xf32>
    %1100 = arith.addf %1099, %1098 : vector<2x14xf32>
    %1101 = arith.divf %1099, %1100 : vector<2x14xf32>
    %1102 = vector.extract_strided_slice %1095 {offsets = [0, 14], sizes = [2, 14], strides = [1, 1]} : vector<2x56xf32> to vector<2x14xf32>
    %1103 = arith.negf %1102 : vector<2x14xf32>
    %1104 = math.exp %1103 : vector<2x14xf32>
    %cst_270 = arith.constant 1.000000e+00 : f32
    %1105 = vector.broadcast %cst_270 : f32 to vector<2x14xf32>
    %1106 = arith.addf %1105, %1104 : vector<2x14xf32>
    %1107 = arith.divf %1105, %1106 : vector<2x14xf32>
    %1108 = vector.extract_strided_slice %1095 {offsets = [0, 28], sizes = [2, 14], strides = [1, 1]} : vector<2x56xf32> to vector<2x14xf32>
    %1109 = math.tanh %1108 : vector<2x14xf32>
    %1110 = vector.extract_strided_slice %1095 {offsets = [0, 42], sizes = [2, 14], strides = [1, 1]} : vector<2x56xf32> to vector<2x14xf32>
    %1111 = arith.negf %1110 : vector<2x14xf32>
    %1112 = math.exp %1111 : vector<2x14xf32>
    %cst_271 = arith.constant 1.000000e+00 : f32
    %1113 = vector.broadcast %cst_271 : f32 to vector<2x14xf32>
    %1114 = arith.addf %1113, %1112 : vector<2x14xf32>
    %1115 = arith.divf %1113, %1114 : vector<2x14xf32>
    %1116 = arith.mulf %1107, %1093 : vector<2x14xf32>
    %1117 = arith.mulf %1101, %1109 : vector<2x14xf32>
    %1118 = arith.addf %1116, %1117 : vector<2x14xf32>
    %1119 = math.tanh %1118 : vector<2x14xf32>
    %1120 = arith.mulf %1115, %1119 : vector<2x14xf32>
    %c0_272 = arith.constant 0 : index
    %c0_273 = arith.constant 0 : index
    %c0_274 = arith.constant 0 : index
    %1121 = vector.load %arg4[%c0_272, %c0_273, %c0_274] : memref<8x2x14xf32, #tpu.memory_space<vmem>>, vector<1x2x14xf32>
    %1122 = vector.shape_cast %1121 : vector<1x2x14xf32> to vector<2x14xf32>
    %1123 = vector.shape_cast %1120 : vector<2x14xf32> to vector<1x2x14xf32>
    tpu.vector_store %arg4[%c0_272, %c0_273, %c0_274], %1123 {strides = array<i32>} : memref<8x2x14xf32, #tpu.memory_space<vmem>>, vector<1x2x14xf32>,
    %cst_275 = arith.constant dense<0.000000e+00> : vector<2x56xf32>
    %1124 = tpu.matmul %1120, %1049, %cst_275 {dimension_numbers = #tpu.dot_dimension_numbers<[1], [0], [0], [1], [0, 0, 1, 1], [], []>} : vector<2x14xf32>, vector<14x56xf32>, vector<2x56xf32> -> vector<2x56xf32>
    %1125 = arith.addf %1124, %1061 : vector<2x56xf32>
    %1126 = vector.extract_strided_slice %1125 {offsets = [0, 0], sizes = [2, 14], strides = [1, 1]} : vector<2x56xf32> to vector<2x14xf32>
    %1127 = arith.negf %1126 : vector<2x14xf32>
    %1128 = math.exp %1127 : vector<2x14xf32>
    %cst_276 = arith.constant 1.000000e+00 : f32
    %1129 = vector.broadcast %cst_276 : f32 to vector<2x14xf32>
    %1130 = arith.addf %1129, %1128 : vector<2x14xf32>
    %1131 = arith.divf %1129, %1130 : vector<2x14xf32>
    %1132 = vector.extract_strided_slice %1125 {offsets = [0, 14], sizes = [2, 14], strides = [1, 1]} : vector<2x56xf32> to vector<2x14xf32>
    %1133 = arith.negf %1132 : vector<2x14xf32>
    %1134 = math.exp %1133 : vector<2x14xf32>
    %cst_277 = arith.constant 1.000000e+00 : f32
    %1135 = vector.broadcast %cst_277 : f32 to vector<2x14xf32>
    %1136 = arith.addf %1135, %1134 : vector<2x14xf32>
    %1137 = arith.divf %1135, %1136 : vector<2x14xf32>
    %1138 = vector.extract_strided_slice %1125 {offsets = [0, 28], sizes = [2, 14], strides = [1, 1]} : vector<2x56xf32> to vector<2x14xf32>
    %1139 = math.tanh %1138 : vector<2x14xf32>
    %1140 = vector.extract_strided_slice %1125 {offsets = [0, 42], sizes = [2, 14], strides = [1, 1]} : vector<2x56xf32> to vector<2x14xf32>
    %1141 = arith.negf %1140 : vector<2x14xf32>
    %1142 = math.exp %1141 : vector<2x14xf32>
    %cst_278 = arith.constant 1.000000e+00 : f32
    %1143 = vector.broadcast %cst_278 : f32 to vector<2x14xf32>
    %1144 = arith.addf %1143, %1142 : vector<2x14xf32>
    %1145 = arith.divf %1143, %1144 : vector<2x14xf32>
    %1146 = arith.mulf %1137, %1118 : vector<2x14xf32>
    %1147 = arith.mulf %1131, %1139 : vector<2x14xf32>
    %1148 = arith.addf %1146, %1147 : vector<2x14xf32>
    %1149 = math.tanh %1148 : vector<2x14xf32>
    %1150 = arith.mulf %1145, %1149 : vector<2x14xf32>
    %c1_279 = arith.constant 1 : index
    %c0_280 = arith.constant 0 : index
    %c0_281 = arith.constant 0 : index
    %1151 = vector.load %arg4[%c1_279, %c0_280, %c0_281] : memref<8x2x14xf32, #tpu.memory_space<vmem>>, vector<1x2x14xf32>
    %1152 = vector.shape_cast %1151 : vector<1x2x14xf32> to vector<2x14xf32>
    %1153 = vector.shape_cast %1150 : vector<2x14xf32> to vector<1x2x14xf32>
    tpu.vector_store %arg4[%c1_279, %c0_280, %c0_281], %1153 {strides = array<i32>} : memref<8x2x14xf32, #tpu.memory_space<vmem>>, vector<1x2x14xf32>,
    %cst_282 = arith.constant dense<0.000000e+00> : vector<2x56xf32>
    %1154 = tpu.matmul %1150, %1049, %cst_282 {dimension_numbers = #tpu.dot_dimension_numbers<[1], [0], [0], [1], [0, 0, 1, 1], [], []>} : vector<2x14xf32>, vector<14x56xf32>, vector<2x56xf32> -> vector<2x56xf32>
    %1155 = arith.addf %1154, %1066 : vector<2x56xf32>
    %1156 = vector.extract_strided_slice %1155 {offsets = [0, 0], sizes = [2, 14], strides = [1, 1]} : vector<2x56xf32> to vector<2x14xf32>
    %1157 = arith.negf %1156 : vector<2x14xf32>
    %1158 = math.exp %1157 : vector<2x14xf32>
    %cst_283 = arith.constant 1.000000e+00 : f32
    %1159 = vector.broadcast %cst_283 : f32 to vector<2x14xf32>
    %1160 = arith.addf %1159, %1158 : vector<2x14xf32>
    %1161 = arith.divf %1159, %1160 : vector<2x14xf32>
    %1162 = vector.extract_strided_slice %1155 {offsets = [0, 14], sizes = [2, 14], strides = [1, 1]} : vector<2x56xf32> to vector<2x14xf32>
    %1163 = arith.negf %1162 : vector<2x14xf32>
    %1164 = math.exp %1163 : vector<2x14xf32>
    %cst_284 = arith.constant 1.000000e+00 : f32
    %1165 = vector.broadcast %cst_284 : f32 to vector<2x14xf32>
    %1166 = arith.addf %1165, %1164 : vector<2x14xf32>
    %1167 = arith.divf %1165, %1166 : vector<2x14xf32>
    %1168 = vector.extract_strided_slice %1155 {offsets = [0, 28], sizes = [2, 14], strides = [1, 1]} : vector<2x56xf32> to vector<2x14xf32>
    %1169 = math.tanh %1168 : vector<2x14xf32>
    %1170 = vector.extract_strided_slice %1155 {offsets = [0, 42], sizes = [2, 14], strides = [1, 1]} : vector<2x56xf32> to vector<2x14xf32>
    %1171 = arith.negf %1170 : vector<2x14xf32>
    %1172 = math.exp %1171 : vector<2x14xf32>
    %cst_285 = arith.constant 1.000000e+00 : f32
    %1173 = vector.broadcast %cst_285 : f32 to vector<2x14xf32>
    %1174 = arith.addf %1173, %1172 : vector<2x14xf32>
    %1175 = arith.divf %1173, %1174 : vector<2x14xf32>
    %1176 = arith.mulf %1167, %1148 : vector<2x14xf32>
    %1177 = arith.mulf %1161, %1169 : vector<2x14xf32>
    %1178 = arith.addf %1176, %1177 : vector<2x14xf32>
    %1179 = math.tanh %1178 : vector<2x14xf32>
    %1180 = arith.mulf %1175, %1179 : vector<2x14xf32>
    %c2_286 = arith.constant 2 : index
    %c0_287 = arith.constant 0 : index
    %c0_288 = arith.constant 0 : index
    %1181 = vector.load %arg4[%c2_286, %c0_287, %c0_288] : memref<8x2x14xf32, #tpu.memory_space<vmem>>, vector<1x2x14xf32>
    %1182 = vector.shape_cast %1181 : vector<1x2x14xf32> to vector<2x14xf32>
    %1183 = vector.shape_cast %1180 : vector<2x14xf32> to vector<1x2x14xf32>
    tpu.vector_store %arg4[%c2_286, %c0_287, %c0_288], %1183 {strides = array<i32>} : memref<8x2x14xf32, #tpu.memory_space<vmem>>, vector<1x2x14xf32>,
    %cst_289 = arith.constant dense<0.000000e+00> : vector<2x56xf32>
    %1184 = tpu.matmul %1180, %1049, %cst_289 {dimension_numbers = #tpu.dot_dimension_numbers<[1], [0], [0], [1], [0, 0, 1, 1], [], []>} : vector<2x14xf32>, vector<14x56xf32>, vector<2x56xf32> -> vector<2x56xf32>
    %1185 = arith.addf %1184, %1071 : vector<2x56xf32>
    %1186 = vector.extract_strided_slice %1185 {offsets = [0, 0], sizes = [2, 14], strides = [1, 1]} : vector<2x56xf32> to vector<2x14xf32>
    %1187 = arith.negf %1186 : vector<2x14xf32>
    %1188 = math.exp %1187 : vector<2x14xf32>
    %cst_290 = arith.constant 1.000000e+00 : f32
    %1189 = vector.broadcast %cst_290 : f32 to vector<2x14xf32>
    %1190 = arith.addf %1189, %1188 : vector<2x14xf32>
    %1191 = arith.divf %1189, %1190 : vector<2x14xf32>
    %1192 = vector.extract_strided_slice %1185 {offsets = [0, 14], sizes = [2, 14], strides = [1, 1]} : vector<2x56xf32> to vector<2x14xf32>
    %1193 = arith.negf %1192 : vector<2x14xf32>
    %1194 = math.exp %1193 : vector<2x14xf32>
    %cst_291 = arith.constant 1.000000e+00 : f32
    %1195 = vector.broadcast %cst_291 : f32 to vector<2x14xf32>
    %1196 = arith.addf %1195, %1194 : vector<2x14xf32>
    %1197 = arith.divf %1195, %1196 : vector<2x14xf32>
    %1198 = vector.extract_strided_slice %1185 {offsets = [0, 28], sizes = [2, 14], strides = [1, 1]} : vector<2x56xf32> to vector<2x14xf32>
    %1199 = math.tanh %1198 : vector<2x14xf32>
    %1200 = vector.extract_strided_slice %1185 {offsets = [0, 42], sizes = [2, 14], strides = [1, 1]} : vector<2x56xf32> to vector<2x14xf32>
    %1201 = arith.negf %1200 : vector<2x14xf32>
    %1202 = math.exp %1201 : vector<2x14xf32>
    %cst_292 = arith.constant 1.000000e+00 : f32
    %1203 = vector.broadcast %cst_292 : f32 to vector<2x14xf32>
    %1204 = arith.addf %1203, %1202 : vector<2x14xf32>
    %1205 = arith.divf %1203, %1204 : vector<2x14xf32>
    %1206 = arith.mulf %1197, %1178 : vector<2x14xf32>
    %1207 = arith.mulf %1191, %1199 : vector<2x14xf32>
    %1208 = arith.addf %1206, %1207 : vector<2x14xf32>
    %1209 = math.tanh %1208 : vector<2x14xf32>
    %1210 = arith.mulf %1205, %1209 : vector<2x14xf32>
    %c3_293 = arith.constant 3 : index
    %c0_294 = arith.constant 0 : index
    %c0_295 = arith.constant 0 : index
    %1211 = vector.load %arg4[%c3_293, %c0_294, %c0_295] : memref<8x2x14xf32, #tpu.memory_space<vmem>>, vector<1x2x14xf32>
    %1212 = vector.shape_cast %1211 : vector<1x2x14xf32> to vector<2x14xf32>
    %1213 = vector.shape_cast %1210 : vector<2x14xf32> to vector<1x2x14xf32>
    tpu.vector_store %arg4[%c3_293, %c0_294, %c0_295], %1213 {strides = array<i32>} : memref<8x2x14xf32, #tpu.memory_space<vmem>>, vector<1x2x14xf32>,
    %cst_296 = arith.constant dense<0.000000e+00> : vector<2x56xf32>
    %1214 = tpu.matmul %1210, %1049, %cst_296 {dimension_numbers = #tpu.dot_dimension_numbers<[1], [0], [0], [1], [0, 0, 1, 1], [], []>} : vector<2x14xf32>, vector<14x56xf32>, vector<2x56xf32> -> vector<2x56xf32>
    %1215 = arith.addf %1214, %1076 : vector<2x56xf32>
    %1216 = vector.extract_strided_slice %1215 {offsets = [0, 0], sizes = [2, 14], strides = [1, 1]} : vector<2x56xf32> to vector<2x14xf32>
    %1217 = arith.negf %1216 : vector<2x14xf32>
    %1218 = math.exp %1217 : vector<2x14xf32>
    %cst_297 = arith.constant 1.000000e+00 : f32
    %1219 = vector.broadcast %cst_297 : f32 to vector<2x14xf32>
    %1220 = arith.addf %1219, %1218 : vector<2x14xf32>
    %1221 = arith.divf %1219, %1220 : vector<2x14xf32>
    %1222 = vector.extract_strided_slice %1215 {offsets = [0, 14], sizes = [2, 14], strides = [1, 1]} : vector<2x56xf32> to vector<2x14xf32>
    %1223 = arith.negf %1222 : vector<2x14xf32>
    %1224 = math.exp %1223 : vector<2x14xf32>
    %cst_298 = arith.constant 1.000000e+00 : f32
    %1225 = vector.broadcast %cst_298 : f32 to vector<2x14xf32>
    %1226 = arith.addf %1225, %1224 : vector<2x14xf32>
    %1227 = arith.divf %1225, %1226 : vector<2x14xf32>
    %1228 = vector.extract_strided_slice %1215 {offsets = [0, 28], sizes = [2, 14], strides = [1, 1]} : vector<2x56xf32> to vector<2x14xf32>
    %1229 = math.tanh %1228 : vector<2x14xf32>
    %1230 = vector.extract_strided_slice %1215 {offsets = [0, 42], sizes = [2, 14], strides = [1, 1]} : vector<2x56xf32> to vector<2x14xf32>
    %1231 = arith.negf %1230 : vector<2x14xf32>
    %1232 = math.exp %1231 : vector<2x14xf32>
    %cst_299 = arith.constant 1.000000e+00 : f32
    %1233 = vector.broadcast %cst_299 : f32 to vector<2x14xf32>
    %1234 = arith.addf %1233, %1232 : vector<2x14xf32>
    %1235 = arith.divf %1233, %1234 : vector<2x14xf32>
    %1236 = arith.mulf %1227, %1208 : vector<2x14xf32>
    %1237 = arith.mulf %1221, %1229 : vector<2x14xf32>
    %1238 = arith.addf %1236, %1237 : vector<2x14xf32>
    %1239 = math.tanh %1238 : vector<2x14xf32>
    %1240 = arith.mulf %1235, %1239 : vector<2x14xf32>
    %c4_300 = arith.constant 4 : index
    %c0_301 = arith.constant 0 : index
    %c0_302 = arith.constant 0 : index
    %1241 = vector.load %arg4[%c4_300, %c0_301, %c0_302] : memref<8x2x14xf32, #tpu.memory_space<vmem>>, vector<1x2x14xf32>
    %1242 = vector.shape_cast %1241 : vector<1x2x14xf32> to vector<2x14xf32>
    %1243 = vector.shape_cast %1240 : vector<2x14xf32> to vector<1x2x14xf32>
    tpu.vector_store %arg4[%c4_300, %c0_301, %c0_302], %1243 {strides = array<i32>} : memref<8x2x14xf32, #tpu.memory_space<vmem>>, vector<1x2x14xf32>,
    %cst_303 = arith.constant dense<0.000000e+00> : vector<2x56xf32>
    %1244 = tpu.matmul %1240, %1049, %cst_303 {dimension_numbers = #tpu.dot_dimension_numbers<[1], [0], [0], [1], [0, 0, 1, 1], [], []>} : vector<2x14xf32>, vector<14x56xf32>, vector<2x56xf32> -> vector<2x56xf32>
    %1245 = arith.addf %1244, %1081 : vector<2x56xf32>
    %1246 = vector.extract_strided_slice %1245 {offsets = [0, 0], sizes = [2, 14], strides = [1, 1]} : vector<2x56xf32> to vector<2x14xf32>
    %1247 = arith.negf %1246 : vector<2x14xf32>
    %1248 = math.exp %1247 : vector<2x14xf32>
    %cst_304 = arith.constant 1.000000e+00 : f32
    %1249 = vector.broadcast %cst_304 : f32 to vector<2x14xf32>
    %1250 = arith.addf %1249, %1248 : vector<2x14xf32>
    %1251 = arith.divf %1249, %1250 : vector<2x14xf32>
    %1252 = vector.extract_strided_slice %1245 {offsets = [0, 14], sizes = [2, 14], strides = [1, 1]} : vector<2x56xf32> to vector<2x14xf32>
    %1253 = arith.negf %1252 : vector<2x14xf32>
    %1254 = math.exp %1253 : vector<2x14xf32>
    %cst_305 = arith.constant 1.000000e+00 : f32
    %1255 = vector.broadcast %cst_305 : f32 to vector<2x14xf32>
    %1256 = arith.addf %1255, %1254 : vector<2x14xf32>
    %1257 = arith.divf %1255, %1256 : vector<2x14xf32>
    %1258 = vector.extract_strided_slice %1245 {offsets = [0, 28], sizes = [2, 14], strides = [1, 1]} : vector<2x56xf32> to vector<2x14xf32>
    %1259 = math.tanh %1258 : vector<2x14xf32>
    %1260 = vector.extract_strided_slice %1245 {offsets = [0, 42], sizes = [2, 14], strides = [1, 1]} : vector<2x56xf32> to vector<2x14xf32>
    %1261 = arith.negf %1260 : vector<2x14xf32>
    %1262 = math.exp %1261 : vector<2x14xf32>
    %cst_306 = arith.constant 1.000000e+00 : f32
    %1263 = vector.broadcast %cst_306 : f32 to vector<2x14xf32>
    %1264 = arith.addf %1263, %1262 : vector<2x14xf32>
    %1265 = arith.divf %1263, %1264 : vector<2x14xf32>
    %1266 = arith.mulf %1257, %1238 : vector<2x14xf32>
    %1267 = arith.mulf %1251, %1259 : vector<2x14xf32>
    %1268 = arith.addf %1266, %1267 : vector<2x14xf32>
    %1269 = math.tanh %1268 : vector<2x14xf32>
    %1270 = arith.mulf %1265, %1269 : vector<2x14xf32>
    %c5_307 = arith.constant 5 : index
    %c0_308 = arith.constant 0 : index
    %c0_309 = arith.constant 0 : index
    %1271 = vector.load %arg4[%c5_307, %c0_308, %c0_309] : memref<8x2x14xf32, #tpu.memory_space<vmem>>, vector<1x2x14xf32>
    %1272 = vector.shape_cast %1271 : vector<1x2x14xf32> to vector<2x14xf32>
    %1273 = vector.shape_cast %1270 : vector<2x14xf32> to vector<1x2x14xf32>
    tpu.vector_store %arg4[%c5_307, %c0_308, %c0_309], %1273 {strides = array<i32>} : memref<8x2x14xf32, #tpu.memory_space<vmem>>, vector<1x2x14xf32>,
    %cst_310 = arith.constant dense<0.000000e+00> : vector<2x56xf32>
    %1274 = tpu.matmul %1270, %1049, %cst_310 {dimension_numbers = #tpu.dot_dimension_numbers<[1], [0], [0], [1], [0, 0, 1, 1], [], []>} : vector<2x14xf32>, vector<14x56xf32>, vector<2x56xf32> -> vector<2x56xf32>
    %1275 = arith.addf %1274, %1086 : vector<2x56xf32>
    %1276 = vector.extract_strided_slice %1275 {offsets = [0, 0], sizes = [2, 14], strides = [1, 1]} : vector<2x56xf32> to vector<2x14xf32>
    %1277 = arith.negf %1276 : vector<2x14xf32>
    %1278 = math.exp %1277 : vector<2x14xf32>
    %cst_311 = arith.constant 1.000000e+00 : f32
    %1279 = vector.broadcast %cst_311 : f32 to vector<2x14xf32>
    %1280 = arith.addf %1279, %1278 : vector<2x14xf32>
    %1281 = arith.divf %1279, %1280 : vector<2x14xf32>
    %1282 = vector.extract_strided_slice %1275 {offsets = [0, 14], sizes = [2, 14], strides = [1, 1]} : vector<2x56xf32> to vector<2x14xf32>
    %1283 = arith.negf %1282 : vector<2x14xf32>
    %1284 = math.exp %1283 : vector<2x14xf32>
    %cst_312 = arith.constant 1.000000e+00 : f32
    %1285 = vector.broadcast %cst_312 : f32 to vector<2x14xf32>
    %1286 = arith.addf %1285, %1284 : vector<2x14xf32>
    %1287 = arith.divf %1285, %1286 : vector<2x14xf32>
    %1288 = vector.extract_strided_slice %1275 {offsets = [0, 28], sizes = [2, 14], strides = [1, 1]} : vector<2x56xf32> to vector<2x14xf32>
    %1289 = math.tanh %1288 : vector<2x14xf32>
    %1290 = vector.extract_strided_slice %1275 {offsets = [0, 42], sizes = [2, 14], strides = [1, 1]} : vector<2x56xf32> to vector<2x14xf32>
    %1291 = arith.negf %1290 : vector<2x14xf32>
    %1292 = math.exp %1291 : vector<2x14xf32>
    %cst_313 = arith.constant 1.000000e+00 : f32
    %1293 = vector.broadcast %cst_313 : f32 to vector<2x14xf32>
    %1294 = arith.addf %1293, %1292 : vector<2x14xf32>
    %1295 = arith.divf %1293, %1294 : vector<2x14xf32>
    %1296 = arith.mulf %1287, %1268 : vector<2x14xf32>
    %1297 = arith.mulf %1281, %1289 : vector<2x14xf32>
    %1298 = arith.addf %1296, %1297 : vector<2x14xf32>
    %1299 = math.tanh %1298 : vector<2x14xf32>
    %1300 = arith.mulf %1295, %1299 : vector<2x14xf32>
    %c6_314 = arith.constant 6 : index
    %c0_315 = arith.constant 0 : index
    %c0_316 = arith.constant 0 : index
    %1301 = vector.load %arg4[%c6_314, %c0_315, %c0_316] : memref<8x2x14xf32, #tpu.memory_space<vmem>>, vector<1x2x14xf32>
    %1302 = vector.shape_cast %1301 : vector<1x2x14xf32> to vector<2x14xf32>
    %1303 = vector.shape_cast %1300 : vector<2x14xf32> to vector<1x2x14xf32>
    tpu.vector_store %arg4[%c6_314, %c0_315, %c0_316], %1303 {strides = array<i32>} : memref<8x2x14xf32, #tpu.memory_space<vmem>>, vector<1x2x14xf32>,
    %cst_317 = arith.constant dense<0.000000e+00> : vector<2x56xf32>
    %1304 = tpu.matmul %1300, %1049, %cst_317 {dimension_numbers = #tpu.dot_dimension_numbers<[1], [0], [0], [1], [0, 0, 1, 1], [], []>} : vector<2x14xf32>, vector<14x56xf32>, vector<2x56xf32> -> vector<2x56xf32>
    %1305 = arith.addf %1304, %1091 : vector<2x56xf32>
    %1306 = vector.extract_strided_slice %1305 {offsets = [0, 0], sizes = [2, 14], strides = [1, 1]} : vector<2x56xf32> to vector<2x14xf32>
    %1307 = arith.negf %1306 : vector<2x14xf32>
    %1308 = math.exp %1307 : vector<2x14xf32>
    %cst_318 = arith.constant 1.000000e+00 : f32
    %1309 = vector.broadcast %cst_318 : f32 to vector<2x14xf32>
    %1310 = arith.addf %1309, %1308 : vector<2x14xf32>
    %1311 = arith.divf %1309, %1310 : vector<2x14xf32>
    %1312 = vector.extract_strided_slice %1305 {offsets = [0, 14], sizes = [2, 14], strides = [1, 1]} : vector<2x56xf32> to vector<2x14xf32>
    %1313 = arith.negf %1312 : vector<2x14xf32>
    %1314 = math.exp %1313 : vector<2x14xf32>
    %cst_319 = arith.constant 1.000000e+00 : f32
    %1315 = vector.broadcast %cst_319 : f32 to vector<2x14xf32>
    %1316 = arith.addf %1315, %1314 : vector<2x14xf32>
    %1317 = arith.divf %1315, %1316 : vector<2x14xf32>
    %1318 = vector.extract_strided_slice %1305 {offsets = [0, 28], sizes = [2, 14], strides = [1, 1]} : vector<2x56xf32> to vector<2x14xf32>
    %1319 = math.tanh %1318 : vector<2x14xf32>
    %1320 = vector.extract_strided_slice %1305 {offsets = [0, 42], sizes = [2, 14], strides = [1, 1]} : vector<2x56xf32> to vector<2x14xf32>
    %1321 = arith.negf %1320 : vector<2x14xf32>
    %1322 = math.exp %1321 : vector<2x14xf32>
    %cst_320 = arith.constant 1.000000e+00 : f32
    %1323 = vector.broadcast %cst_320 : f32 to vector<2x14xf32>
    %1324 = arith.addf %1323, %1322 : vector<2x14xf32>
    %1325 = arith.divf %1323, %1324 : vector<2x14xf32>
    %1326 = arith.mulf %1317, %1298 : vector<2x14xf32>
    %1327 = arith.mulf %1311, %1319 : vector<2x14xf32>
    %1328 = arith.addf %1326, %1327 : vector<2x14xf32>
    %1329 = math.tanh %1328 : vector<2x14xf32>
    %1330 = arith.mulf %1325, %1329 : vector<2x14xf32>
    %c7_321 = arith.constant 7 : index
    %c0_322 = arith.constant 0 : index
    %c0_323 = arith.constant 0 : index
    %1331 = vector.load %arg4[%c7_321, %c0_322, %c0_323] : memref<8x2x14xf32, #tpu.memory_space<vmem>>, vector<1x2x14xf32>
    %1332 = vector.shape_cast %1331 : vector<1x2x14xf32> to vector<2x14xf32>
    %1333 = vector.shape_cast %1330 : vector<2x14xf32> to vector<1x2x14xf32>
    tpu.vector_store %arg4[%c7_321, %c0_322, %c0_323], %1333 {strides = array<i32>} : memref<8x2x14xf32, #tpu.memory_space<vmem>>, vector<1x2x14xf32>,
    return
  }
}

</mosaic_0001>

<llo_original>
// kernel: encoder_forward.1
$region0: #{encoder_forward.1}
  #allocation0 [shape = 'u32[]', space=smem, size = 0x4, offset = 0x4, fixed_abs, tag = 'smem constant byte address 0x4 - core index']
  #allocation1 [shape = 'u32[144,128]{1,0:T(1,128)}', space=vmem, size = 0x12000, scoped, tag = 'internal scratch']
  %s0 = inlined_call_operand.vmem [shape: f32[8,2,6], index: 0, kind: input, shape index: {}]
  %s1 = inlined_call_operand.vmem [shape: f32[2,6,56], index: 1, kind: input, shape index: {}]
  %s2 = inlined_call_operand.vmem [shape: f32[11,14,56], index: 2, kind: input, shape index: {}]
  %s3 = inlined_call_operand.vmem [shape: f32[5,1,56], index: 3, kind: input, shape index: {}]
  %s4 = inlined_call_operand.vmem [shape: f32[8,2,14], index: 4, kind: output, shape index: {}]
  %s5 = sld [smem:[#allocation0]]
  $region26: #{encoder_forward.1} parent=0
    _
  %s7 = ssub.s32 1, %s5
  %s8 = scalar_select 0, %s7, %s5
  // Predicated region
  $region2: #{encoder_forward.1} parent=0 // pred_check
    _
  $region3: #{encoder_forward.1} parent=0 // pred_check_branch
    %10 = sbr.rel (0) target = $region5
  $region4: #{encoder_forward.1} parent=0 // pred_region
    _
  $region5: #{encoder_forward.1} parent=0 // pred_fallthru
    _
  // Predicated region
  $region6: #{encoder_forward.1} parent=0 // pred_check
    _
  $region7: #{encoder_forward.1} parent=0 // pred_check_branch
    %12 = sbr.rel (0) target = $region9
  $region8: #{encoder_forward.1} parent=0 // pred_region
    _
  $region9: #{encoder_forward.1} parent=0 // pred_fallthru
    _
  // Predicated region
  $region10: #{encoder_forward.1} parent=0 // pred_check
    _
  $region11: #{encoder_forward.1} parent=0 // pred_check_branch
    %14 = sbr.rel (0) target = $region13
  $region12: #{encoder_forward.1} parent=0 // pred_region
    _
  $region13: #{encoder_forward.1} parent=0 // pred_fallthru
    _
  // Predicated region
  $region14: #{encoder_forward.1} parent=0 // pred_check
    _
  $region15: #{encoder_forward.1} parent=0 // pred_check_branch
    %16 = sbr.rel (0) target = $region17
  $region16: #{encoder_forward.1} parent=0 // pred_region
    _
  $region17: #{encoder_forward.1} parent=0 // pred_fallthru
    _
  %v17 = vld [vmem:[%s1] sm:$0x3f]
  %s18 = scalar_lea.vmem %s1, 8
  %v19 = vld [vmem:[%s18] sm:$0x3f]
  %v20 = vld [vmem:[%s3] sm:$0x1]
  %s21 = scalar_lea.vmem %s3, 1
  %v22 = vld [vmem:[%s21] sm:$0x1]
  %v23 = vld [vmem:[%s0] sm:$0x3]
  %s24 = scalar_lea.vmem %s0, 2
  %v25 = vld [vmem:[%s24] sm:$0x3]
  %s26 = scalar_lea.vmem %s0, 4
  %v27 = vld [vmem:[%s26] sm:$0x3]
  %s28 = scalar_lea.vmem %s0, 6
  %v29 = vld [vmem:[%s28] sm:$0x3]
  %s30 = scalar_lea.vmem %s0, 8
  %v31 = vld [vmem:[%s30] sm:$0x3]
  %s32 = scalar_lea.vmem %s0, 10
  %v33 = vld [vmem:[%s32] sm:$0x3]
  %s34 = scalar_lea.vmem %s0, 12
  %v35 = vld [vmem:[%s34] sm:$0x3]
  %s36 = scalar_lea.vmem %s0, 14
  %v37 = vld [vmem:[%s36] sm:$0x3]
  %v39 = vlaneseq
  %v40 = vshrl.u32 %v39, 7
  %v41 = vsub.s32 0, %v40
  %v42 = vrot.slane %v20, %v41
  %vm44 = vcmask 48128
  %v46 = vsel %vm44, %v23, 0
  %vm48 = vcmask 1045504
  %v50 = vsel %vm48, %v17, 0
  %52 = vmatprep.subr.mxu0 0.0
  %53 = vmatpush1.msra.mxu0 %v50
  %54 = vmatprep.subr.mxu0 0.0
  %55 = vmatpush1.msra.mxu0 0.0
  %56 = vmatprep.subr.mxu0 0.0
  %57 = vmatpush1.msra.mxu0 0.0
  %58 = vmatprep.subr.mxu0 0.0
  %59 = vmatpush1.msra.mxu0 0.0
  %60 = vmatprep.subr.mxu0 0.0
  %61 = vmatpush1.msra.mxu0 0.0
  %62 = vmatprep.subr.mxu0 0.0
  %63 = vmatpush1.msra.mxu0 0.0
  %64 = vmatprep.subr.mxu0 0.0
  %65 = vmatpush1.msra.mxu0 0.0
  %66 = vmatprep.subr.mxu0 0.0
  %67 = vmatpush1.msra.mxu0 0.0
  %68 = vmatprep.subr.mxu0 0.0
  %69 = vmatpush1.msra.mxu0 0.0
  %70 = vmatprep.subr.mxu0 0.0
  %71 = vmatpush1.msra.mxu0 0.0
  %72 = vmatprep.subr.mxu0 0.0
  %73 = vmatpush1.msra.mxu0 0.0
  %74 = vmatprep.subr.mxu0 0.0
  %75 = vmatpush1.msra.mxu0 0.0
  %76 = vmatprep.subr.mxu0 0.0
  %77 = vmatpush1.msra.mxu0 0.0
  %78 = vmatprep.subr.mxu0 0.0
  %79 = vmatpush1.msra.mxu0 0.0
  %80 = vmatprep.subr.mxu0 0.0
  %81 = vmatpush1.msra.mxu0 0.0
  %82 = vmatprep.subr.mxu0 0.0
  %83 = vmatpush1.msra.mxu0 0.0
  %84 = vmatprep.subr.mxu0 0.0
  %85 = vmatpush1.msra.mxu0 0.0
  %86 = vmatprep.subr.mxu0 0.0
  %87 = vmatpush1.msra.mxu0 0.0
  %88 = vmatprep.subr.mxu0 0.0
  %89 = vmatpush1.msra.mxu0 0.0
  %90 = vmatprep.subr.mxu0 0.0
  %91 = vmatpush1.msra.mxu0 0.0
  %92 = vmatprep.subr.mxu0 0.0
  %93 = vmatpush1.msra.mxu0 0.0
  %94 = vmatprep.subr.mxu0 0.0
  %95 = vmatpush1.msra.mxu0 0.0
  %96 = vmatprep.subr.mxu0 0.0
  %97 = vmatpush1.msra.mxu0 0.0
  %98 = vmatprep.subr.mxu0 0.0
  %99 = vmatpush1.msra.mxu0 0.0
  %100 = vmatprep.subr.mxu0 0.0
  %101 = vmatpush1.msra.mxu0 0.0
  %102 = vmatprep.subr.mxu0 0.0
  %103 = vmatpush1.msra.mxu0 0.0
  %104 = vmatprep.subr.mxu0 0.0
  %105 = vmatpush1.msra.mxu0 0.0
  %106 = vmatprep.subr.mxu0 0.0
  %107 = vmatpush1.msra.mxu0 0.0
  %108 = vmatprep.subr.mxu0 0.0
  %109 = vmatpush1.msra.mxu0 0.0
  %110 = vmatprep.subr.mxu0 0.0
  %111 = vmatpush1.msra.mxu0 0.0
  %112 = vmatprep.subr.mxu0 0.0
  %113 = vmatpush1.msra.mxu0 0.0
  %114 = vmatprep.subr.mxu0 0.0
  %115 = vmatpush1.msra.mxu0 0.0
  %116 = vmatprep.mubr.f32.mxu0 0.0
  %117 = vmatmul.mubr.f32.gmra.mrb[0].mxu0 %v46
  %v118 = vpop.f32.mrb[0].mxu0
  %v119 = vadd.f32 %v42, %v118
  %v120 = vpop.f32.mrb[0].mxu0
  %121 = vdwg.mxu0
  %v123 = vsel %vm44, %v25, 0
  %125 = vmatprep.subr.mxu0 0.0
  %126 = vmatpush1.msra.mxu0 %v50
  %127 = vmatprep.subr.mxu0 0.0
  %128 = vmatpush1.msra.mxu0 0.0
  %129 = vmatprep.subr.mxu0 0.0
  %130 = vmatpush1.msra.mxu0 0.0
  %131 = vmatprep.subr.mxu0 0.0
  %132 = vmatpush1.msra.mxu0 0.0
  %133 = vmatprep.subr.mxu0 0.0
  %134 = vmatpush1.msra.mxu0 0.0
  %135 = vmatprep.subr.mxu0 0.0
  %136 = vmatpush1.msra.mxu0 0.0
  %137 = vmatprep.subr.mxu0 0.0
  %138 = vmatpush1.msra.mxu0 0.0
  %139 = vmatprep.subr.mxu0 0.0
  %140 = vmatpush1.msra.mxu0 0.0
  %141 = vmatprep.subr.mxu0 0.0
  %142 = vmatpush1.msra.mxu0 0.0
  %143 = vmatprep.subr.mxu0 0.0
  %144 = vmatpush1.msra.mxu0 0.0
  %145 = vmatprep.subr.mxu0 0.0
  %146 = vmatpush1.msra.mxu0 0.0
  %147 = vmatprep.subr.mxu0 0.0
  %148 = vmatpush1.msra.mxu0 0.0
  %149 = vmatprep.subr.mxu0 0.0
  %150 = vmatpush1.msra.mxu0 0.0
  %151 = vmatprep.subr.mxu0 0.0
  %152 = vmatpush1.msra.mxu0 0.0
  %153 = vmatprep.subr.mxu0 0.0
  %154 = vmatpush1.msra.mxu0 0.0
  %155 = vmatprep.subr.mxu0 0.0
  %156 = vmatpush1.msra.mxu0 0.0
  %157 = vmatprep.subr.mxu0 0.0
  %158 = vmatpush1.msra.mxu0 0.0
  %159 = vmatprep.subr.mxu0 0.0
  %160 = vmatpush1.msra.mxu0 0.0
  %161 = vmatprep.subr.mxu0 0.0
  %162 = vmatpush1.msra.mxu0 0.0
  %163 = vmatprep.subr.mxu0 0.0
  %164 = vmatpush1.msra.mxu0 0.0
  %165 = vmatprep.subr.mxu0 0.0
  %166 = vmatpush1.msra.mxu0 0.0
  %167 = vmatprep.subr.mxu0 0.0
  %168 = vmatpush1.msra.mxu0 0.0
  %169 = vmatprep.subr.mxu0 0.0
  %170 = vmatpush1.msra.mxu0 0.0
  %171 = vmatprep.subr.mxu0 0.0
  %172 = vmatpush1.msra.mxu0 0.0
  %173 = vmatprep.subr.mxu0 0.0
  %174 = vmatpush1.msra.mxu0 0.0
  %175 = vmatprep.subr.mxu0 0.0
  %176 = vmatpush1.msra.mxu0 0.0
  %177 = vmatprep.subr.mxu0 0.0
  %178 = vmatpush1.msra.mxu0 0.0
  %179 = vmatprep.subr.mxu0 0.0
  %180 = vmatpush1.msra.mxu0 0.0
  %181 = vmatprep.subr.mxu0 0.0
  %182 = vmatpush1.msra.mxu0 0.0
  %183 = vmatprep.subr.mxu0 0.0
  %184 = vmatpush1.msra.mxu0 0.0
  %185 = vmatprep.subr.mxu0 0.0
  %186 = vmatpush1.msra.mxu0 0.0
  %187 = vmatprep.subr.mxu0 0.0
  %188 = vmatpush1.msra.mxu0 0.0
  %189 = vmatprep.mubr.f32.mxu0 0.0
  %190 = vmatmul.mubr.f32.gmra.mrb[0].mxu0 %v123
  %v191 = vpop.f32.mrb[0].mxu0
  %v192 = vadd.f32 %v42, %v191
  %v193 = vpop.f32.mrb[0].mxu0
  %194 = vdwg.mxu0
  %v196 = vsel %vm44, %v27, 0
  %198 = vmatprep.subr.mxu0 0.0
  %199 = vmatpush1.msra.mxu0 %v50
  %200 = vmatprep.subr.mxu0 0.0
  %201 = vmatpush1.msra.mxu0 0.0
  %202 = vmatprep.subr.mxu0 0.0
  %203 = vmatpush1.msra.mxu0 0.0
  %204 = vmatprep.subr.mxu0 0.0
  %205 = vmatpush1.msra.mxu0 0.0
  %206 = vmatprep.subr.mxu0 0.0
  %207 = vmatpush1.msra.mxu0 0.0
  %208 = vmatprep.subr.mxu0 0.0
  %209 = vmatpush1.msra.mxu0 0.0
  %210 = vmatprep.subr.mxu0 0.0
  %211 = vmatpush1.msra.mxu0 0.0
  %212 = vmatprep.subr.mxu0 0.0
  %213 = vmatpush1.msra.mxu0 0.0
  %214 = vmatprep.subr.mxu0 0.0
  %215 = vmatpush1.msra.mxu0 0.0
  %216 = vmatprep.subr.mxu0 0.0
  %217 = vmatpush1.msra.mxu0 0.0
  %218 = vmatprep.subr.mxu0 0.0
  %219 = vmatpush1.msra.mxu0 0.0
  %220 = vmatprep.subr.mxu0 0.0
  %221 = vmatpush1.msra.mxu0 0.0
  %222 = vmatprep.subr.mxu0 0.0
  %223 = vmatpush1.msra.mxu0 0.0
  %224 = vmatprep.subr.mxu0 0.0
  %225 = vmatpush1.msra.mxu0 0.0
  %226 = vmatprep.subr.mxu0 0.0
  %227 = vmatpush1.msra.mxu0 0.0
  %228 = vmatprep.subr.mxu0 0.0
  %229 = vmatpush1.msra.mxu0 0.0
  %230 = vmatprep.subr.mxu0 0.0
  %231 = vmatpush1.msra.mxu0 0.0
  %232 = vmatprep.subr.mxu0 0.0
  %233 = vmatpush1.msra.mxu0 0.0
  %234 = vmatprep.subr.mxu0 0.0
  %235 = vmatpush1.msra.mxu0 0.0
  %236 = vmatprep.subr.mxu0 0.0
  %237 = vmatpush1.msra.mxu0 0.0
  %238 = vmatprep.subr.mxu0 0.0
  %239 = vmatpush1.msra.mxu0 0.0
  %240 = vmatprep.subr.mxu0 0.0
  %241 = vmatpush1.msra.mxu0 0.0
  %242 = vmatprep.subr.mxu0 0.0
  %243 = vmatpush1.msra.mxu0 0.0
  %244 = vmatprep.subr.mxu0 0.0
  %245 = vmatpush1.msra.mxu0 0.0
  %246 = vmatprep.subr.mxu0 0.0
  %247 = vmatpush1.msra.mxu0 0.0
  %248 = vmatprep.subr.mxu0 0.0
  %249 = vmatpush1.msra.mxu0 0.0
  %250 = vmatprep.subr.mxu0 0.0
  %251 = vmatpush1.msra.mxu0 0.0
  %252 = vmatprep.subr.mxu0 0.0
  %253 = vmatpush1.msra.mxu0 0.0
  %254 = vmatprep.subr.mxu0 0.0
  %255 = vmatpush1.msra.mxu0 0.0
  %256 = vmatprep.subr.mxu0 0.0
  %257 = vmatpush1.msra.mxu0 0.0
  %258 = vmatprep.subr.mxu0 0.0
  %259 = vmatpush1.msra.mxu0 0.0
  %260 = vmatprep.subr.mxu0 0.0
  %261 = vmatpush1.msra.mxu0 0.0
  %262 = vmatprep.mubr.f32.mxu0 0.0
  %263 = vmatmul.mubr.f32.gmra.mrb[0].mxu0 %v196
  %v264 = vpop.f32.mrb[0].mxu0
  %v265 = vadd.f32 %v42, %v264
  %v266 = vpop.f32.mrb[0].mxu0
  %267 = vdwg.mxu0
  %v269 = vsel %vm44, %v29, 0
  %271 = vmatprep.subr.mxu0 0.0
  %272 = vmatpush1.msra.mxu0 %v50
  %273 = vmatprep.subr.mxu0 0.0
  %274 = vmatpush1.msra.mxu0 0.0
  %275 = vmatprep.subr.mxu0 0.0
  %276 = vmatpush1.msra.mxu0 0.0
  %277 = vmatprep.subr.mxu0 0.0
  %278 = vmatpush1.msra.mxu0 0.0
  %279 = vmatprep.subr.mxu0 0.0
  %280 = vmatpush1.msra.mxu0 0.0
  %281 = vmatprep.subr.mxu0 0.0
  %282 = vmatpush1.msra.mxu0 0.0
  %283 = vmatprep.subr.mxu0 0.0
  %284 = vmatpush1.msra.mxu0 0.0
  %285 = vmatprep.subr.mxu0 0.0
  %286 = vmatpush1.msra.mxu0 0.0
  %287 = vmatprep.subr.mxu0 0.0
  %288 = vmatpush1.msra.mxu0 0.0
  %289 = vmatprep.subr.mxu0 0.0
  %290 = vmatpush1.msra.mxu0 0.0
  %291 = vmatprep.subr.mxu0 0.0
  %292 = vmatpush1.msra.mxu0 0.0
  %293 = vmatprep.subr.mxu0 0.0
  %294 = vmatpush1.msra.mxu0 0.0
  %295 = vmatprep.subr.mxu0 0.0
  %296 = vmatpush1.msra.mxu0 0.0
  %297 = vmatprep.subr.mxu0 0.0
  %298 = vmatpush1.msra.mxu0 0.0
  %299 = vmatprep.subr.mxu0 0.0
  %300 = vmatpush1.msra.mxu0 0.0
  %301 = vmatprep.subr.mxu0 0.0
  %302 = vmatpush1.msra.mxu0 0.0
  %303 = vmatprep.subr.mxu0 0.0
  %304 = vmatpush1.msra.mxu0 0.0
  %305 = vmatprep.subr.mxu0 0.0
  %306 = vmatpush1.msra.mxu0 0.0
  %307 = vmatprep.subr.mxu0 0.0
  %308 = vmatpush1.msra.mxu0 0.0
  %309 = vmatprep.subr.mxu0 0.0
  %310 = vmatpush1.msra.mxu0 0.0
  %311 = vmatprep.subr.mxu0 0.0
  %312 = vmatpush1.msra.mxu0 0.0
  %313 = vmatprep.subr.mxu0 0.0
  %314 = vmatpush1.msra.mxu0 0.0
  %315 = vmatprep.subr.mxu0 0.0
  %316 = vmatpush1.msra.mxu0 0.0
  %317 = vmatprep.subr.mxu0 0.0
  %318 = vmatpush1.msra.mxu0 0.0
  %319 = vmatprep.subr.mxu0 0.0
  %320 = vmatpush1.msra.mxu0 0.0
  %321 = vmatprep.subr.mxu0 0.0
  %322 = vmatpush1.msra.mxu0 0.0
  %323 = vmatprep.subr.mxu0 0.0
  %324 = vmatpush1.msra.mxu0 0.0
  %325 = vmatprep.subr.mxu0 0.0
  %326 = vmatpush1.msra.mxu0 0.0
  %327 = vmatprep.subr.mxu0 0.0
  %328 = vmatpush1.msra.mxu0 0.0
  %329 = vmatprep.subr.mxu0 0.0
  %330 = vmatpush1.msra.mxu0 0.0
  %331 = vmatprep.subr.mxu0 0.0
  %332 = vmatpush1.msra.mxu0 0.0
  %333 = vmatprep.subr.mxu0 0.0
  %334 = vmatpush1.msra.mxu0 0.0
  %335 = vmatprep.mubr.f32.mxu0 0.0
  %336 = vmatmul.mubr.f32.gmra.mrb[0].mxu0 %v269
  %v337 = vpop.f32.mrb[0].mxu0
  %v338 = vadd.f32 %v42, %v337
  %v339 = vpop.f32.mrb[0].mxu0
  %340 = vdwg.mxu0
  %v342 = vsel %vm44, %v31, 0
  %344 = vmatprep.subr.mxu0 0.0
  %345 = vmatpush1.msra.mxu0 %v50
  %346 = vmatprep.subr.mxu0 0.0
  %347 = vmatpush1.msra.mxu0 0.0
  %348 = vmatprep.subr.mxu0 0.0
  %349 = vmatpush1.msra.mxu0 0.0
  %350 = vmatprep.subr.mxu0 0.0
  %351 = vmatpush1.msra.mxu0 0.0
  %352 = vmatprep.subr.mxu0 0.0
  %353 = vmatpush1.msra.mxu0 0.0
  %354 = vmatprep.subr.mxu0 0.0
  %355 = vmatpush1.msra.mxu0 0.0
  %356 = vmatprep.subr.mxu0 0.0
  %357 = vmatpush1.msra.mxu0 0.0
  %358 = vmatprep.subr.mxu0 0.0
  %359 = vmatpush1.msra.mxu0 0.0
  %360 = vmatprep.subr.mxu0 0.0
  %361 = vmatpush1.msra.mxu0 0.0
  %362 = vmatprep.subr.mxu0 0.0
  %363 = vmatpush1.msra.mxu0 0.0
  %364 = vmatprep.subr.mxu0 0.0
  %365 = vmatpush1.msra.mxu0 0.0
  %366 = vmatprep.subr.mxu0 0.0
  %367 = vmatpush1.msra.mxu0 0.0
  %368 = vmatprep.subr.mxu0 0.0
  %369 = vmatpush1.msra.mxu0 0.0
  %370 = vmatprep.subr.mxu0 0.0
  %371 = vmatpush1.msra.mxu0 0.0
  %372 = vmatprep.subr.mxu0 0.0
  %373 = vmatpush1.msra.mxu0 0.0
  %374 = vmatprep.subr.mxu0 0.0
  %375 = vmatpush1.msra.mxu0 0.0
  %376 = vmatprep.subr.mxu0 0.0
  %377 = vmatpush1.msra.mxu0 0.0
  %378 = vmatprep.subr.mxu0 0.0
  %379 = vmatpush1.msra.mxu0 0.0
  %380 = vmatprep.subr.mxu0 0.0
  %381 = vmatpush1.msra.mxu0 0.0
  %382 = vmatprep.subr.mxu0 0.0
  %383 = vmatpush1.msra.mxu0 0.0
  %384 = vmatprep.subr.mxu0 0.0
  %385 = vmatpush1.msra.mxu0 0.0
  %386 = vmatprep.subr.mxu0 0.0
  %387 = vmatpush1.msra.mxu0 0.0
  %388 = vmatprep.subr.mxu0 0.0
  %389 = vmatpush1.msra.mxu0 0.0
  %390 = vmatprep.subr.mxu0 0.0
  %391 = vmatpush1.msra.mxu0 0.0
  %392 = vmatprep.subr.mxu0 0.0
  %393 = vmatpush1.msra.mxu0 0.0
  %394 = vmatprep.subr.mxu0 0.0
  %395 = vmatpush1.msra.mxu0 0.0
  %396 = vmatprep.subr.mxu0 0.0
  %397 = vmatpush1.msra.mxu0 0.0
  %398 = vmatprep.subr.mxu0 0.0
  %399 = vmatpush1.msra.mxu0 0.0
  %400 = vmatprep.subr.mxu0 0.0
  %401 = vmatpush1.msra.mxu0 0.0
  %402 = vmatprep.subr.mxu0 0.0
  %403 = vmatpush1.msra.mxu0 0.0
  %404 = vmatprep.subr.mxu0 0.0
  %405 = vmatpush1.msra.mxu0 0.0
  %406 = vmatprep.subr.mxu0 0.0
  %407 = vmatpush1.msra.mxu0 0.0
  %408 = vmatprep.mubr.f32.mxu0 0.0
  %409 = vmatmul.mubr.f32.gmra.mrb[0].mxu0 %v342
  %v410 = vpop.f32.mrb[0].mxu0
  %v411 = vadd.f32 %v42, %v410
  %v412 = vpop.f32.mrb[0].mxu0
  %413 = vdwg.mxu0
  %v415 = vsel %vm44, %v33, 0
  %417 = vmatprep.subr.mxu0 0.0
  %418 = vmatpush1.msra.mxu0 %v50
  %419 = vmatprep.subr.mxu0 0.0
  %420 = vmatpush1.msra.mxu0 0.0
  %421 = vmatprep.subr.mxu0 0.0
  %422 = vmatpush1.msra.mxu0 0.0
  %423 = vmatprep.subr.mxu0 0.0
  %424 = vmatpush1.msra.mxu0 0.0
  %425 = vmatprep.subr.mxu0 0.0
  %426 = vmatpush1.msra.mxu0 0.0
  %427 = vmatprep.subr.mxu0 0.0
  %428 = vmatpush1.msra.mxu0 0.0
  %429 = vmatprep.subr.mxu0 0.0
  %430 = vmatpush1.msra.mxu0 0.0
  %431 = vmatprep.subr.mxu0 0.0
  %432 = vmatpush1.msra.mxu0 0.0
  %433 = vmatprep.subr.mxu0 0.0
  %434 = vmatpush1.msra.mxu0 0.0
  %435 = vmatprep.subr.mxu0 0.0
  %436 = vmatpush1.msra.mxu0 0.0
  %437 = vmatprep.subr.mxu0 0.0
  %438 = vmatpush1.msra.mxu0 0.0
  %439 = vmatprep.subr.mxu0 0.0
  %440 = vmatpush1.msra.mxu0 0.0
  %441 = vmatprep.subr.mxu0 0.0
  %442 = vmatpush1.msra.mxu0 0.0
  %443 = vmatprep.subr.mxu0 0.0
  %444 = vmatpush1.msra.mxu0 0.0
  %445 = vmatprep.subr.mxu0 0.0
  %446 = vmatpush1.msra.mxu0 0.0
  %447 = vmatprep.subr.mxu0 0.0
  %448 = vmatpush1.msra.mxu0 0.0
  %449 = vmatprep.subr.mxu0 0.0
  %450 = vmatpush1.msra.mxu0 0.0
  %451 = vmatprep.subr.mxu0 0.0
  %452 = vmatpush1.msra.mxu0 0.0
  %453 = vmatprep.subr.mxu0 0.0
  %454 = vmatpush1.msra.mxu0 0.0
  %455 = vmatprep.subr.mxu0 0.0
  %456 = vmatpush1.msra.mxu0 0.0
  %457 = vmatprep.subr.mxu0 0.0
  %458 = vmatpush1.msra.mxu0 0.0
  %459 = vmatprep.subr.mxu0 0.0
  %460 = vmatpush1.msra.mxu0 0.0
  %461 = vmatprep.subr.mxu0 0.0
  %462 = vmatpush1.msra.mxu0 0.0
  %463 = vmatprep.subr.mxu0 0.0
  %464 = vmatpush1.msra.mxu0 0.0
  %465 = vmatprep.subr.mxu0 0.0
  %466 = vmatpush1.msra.mxu0 0.0
  %467 = vmatprep.subr.mxu0 0.0
  %468 = vmatpush1.msra.mxu0 0.0
  %469 = vmatprep.subr.mxu0 0.0
  %470 = vmatpush1.msra.mxu0 0.0
  %471 = vmatprep.subr.mxu0 0.0
  %472 = vmatpush1.msra.mxu0 0.0
  %473 = vmatprep.subr.mxu0 0.0
  %474 = vmatpush1.msra.mxu0 0.0
  %475 = vmatprep.subr.mxu0 0.0
  %476 = vmatpush1.msra.mxu0 0.0
  %477 = vmatprep.subr.mxu0 0.0
  %478 = vmatpush1.msra.mxu0 0.0
  %479 = vmatprep.subr.mxu0 0.0
  %480 = vmatpush1.msra.mxu0 0.0
  %481 = vmatprep.mubr.f32.mxu0 0.0
  %482 = vmatmul.mubr.f32.gmra.mrb[0].mxu0 %v415
  %v483 = vpop.f32.mrb[0].mxu0
  %v484 = vadd.f32 %v42, %v483
  %v485 = vpop.f32.mrb[0].mxu0
  %486 = vdwg.mxu0
  %v488 = vsel %vm44, %v35, 0
  %490 = vmatprep.subr.mxu0 0.0
  %491 = vmatpush1.msra.mxu0 %v50
  %492 = vmatprep.subr.mxu0 0.0
  %493 = vmatpush1.msra.mxu0 0.0
  %494 = vmatprep.subr.mxu0 0.0
  %495 = vmatpush1.msra.mxu0 0.0
  %496 = vmatprep.subr.mxu0 0.0
  %497 = vmatpush1.msra.mxu0 0.0
  %498 = vmatprep.subr.mxu0 0.0
  %499 = vmatpush1.msra.mxu0 0.0
  %500 = vmatprep.subr.mxu0 0.0
  %501 = vmatpush1.msra.mxu0 0.0
  %502 = vmatprep.subr.mxu0 0.0
  %503 = vmatpush1.msra.mxu0 0.0
  %504 = vmatprep.subr.mxu0 0.0
  %505 = vmatpush1.msra.mxu0 0.0
  %506 = vmatprep.subr.mxu0 0.0
  %507 = vmatpush1.msra.mxu0 0.0
  %508 = vmatprep.subr.mxu0 0.0
  %509 = vmatpush1.msra.mxu0 0.0
  %510 = vmatprep.subr.mxu0 0.0
  %511 = vmatpush1.msra.mxu0 0.0
  %512 = vmatprep.subr.mxu0 0.0
  %513 = vmatpush1.msra.mxu0 0.0
  %514 = vmatprep.subr.mxu0 0.0
  %515 = vmatpush1.msra.mxu0 0.0
  %516 = vmatprep.subr.mxu0 0.0
  %517 = vmatpush1.msra.mxu0 0.0
  %518 = vmatprep.subr.mxu0 0.0
  %519 = vmatpush1.msra.mxu0 0.0
  %520 = vmatprep.subr.mxu0 0.0
  %521 = vmatpush1.msra.mxu0 0.0
  %522 = vmatprep.subr.mxu0 0.0
  %523 = vmatpush1.msra.mxu0 0.0
  %524 = vmatprep.subr.mxu0 0.0
  %525 = vmatpush1.msra.mxu0 0.0
  %526 = vmatprep.subr.mxu0 0.0
  %527 = vmatpush1.msra.mxu0 0.0
  %528 = vmatprep.subr.mxu0 0.0
  %529 = vmatpush1.msra.mxu0 0.0
  %530 = vmatprep.subr.mxu0 0.0
  %531 = vmatpush1.msra.mxu0 0.0
  %532 = vmatprep.subr.mxu0 0.0
  %533 = vmatpush1.msra.mxu0 0.0
  %534 = vmatprep.subr.mxu0 0.0
  %535 = vmatpush1.msra.mxu0 0.0
  %536 = vmatprep.subr.mxu0 0.0
  %537 = vmatpush1.msra.mxu0 0.0
  %538 = vmatprep.subr.mxu0 0.0
  %539 = vmatpush1.msra.mxu0 0.0
  %540 = vmatprep.subr.mxu0 0.0
  %541 = vmatpush1.msra.mxu0 0.0
  %542 = vmatprep.subr.mxu0 0.0
  %543 = vmatpush1.msra.mxu0 0.0
  %544 = vmatprep.subr.mxu0 0.0
  %545 = vmatpush1.msra.mxu0 0.0
  %546 = vmatprep.subr.mxu0 0.0
  %547 = vmatpush1.msra.mxu0 0.0
  %548 = vmatprep.subr.mxu0 0.0
  %549 = vmatpush1.msra.mxu0 0.0
  %550 = vmatprep.subr.mxu0 0.0
  %551 = vmatpush1.msra.mxu0 0.0
  %552 = vmatprep.subr.mxu0 0.0
  %553 = vmatpush1.msra.mxu0 0.0
  %554 = vmatprep.mubr.f32.mxu0 0.0
  %555 = vmatmul.mubr.f32.gmra.mrb[0].mxu0 %v488
  %v556 = vpop.f32.mrb[0].mxu0
  %v557 = vadd.f32 %v42, %v556
  %v558 = vpop.f32.mrb[0].mxu0
  %559 = vdwg.mxu0
  %v561 = vsel %vm44, %v37, 0
  %563 = vmatprep.subr.mxu0 0.0
  %564 = vmatpush1.msra.mxu0 %v50
  %565 = vmatprep.subr.mxu0 0.0
  %566 = vmatpush1.msra.mxu0 0.0
  %567 = vmatprep.subr.mxu0 0.0
  %568 = vmatpush1.msra.mxu0 0.0
  %569 = vmatprep.subr.mxu0 0.0
  %570 = vmatpush1.msra.mxu0 0.0
  %571 = vmatprep.subr.mxu0 0.0
  %572 = vmatpush1.msra.mxu0 0.0
  %573 = vmatprep.subr.mxu0 0.0
  %574 = vmatpush1.msra.mxu0 0.0
  %575 = vmatprep.subr.mxu0 0.0
  %576 = vmatpush1.msra.mxu0 0.0
  %577 = vmatprep.subr.mxu0 0.0
  %578 = vmatpush1.msra.mxu0 0.0
  %579 = vmatprep.subr.mxu0 0.0
  %580 = vmatpush1.msra.mxu0 0.0
  %581 = vmatprep.subr.mxu0 0.0
  %582 = vmatpush1.msra.mxu0 0.0
  %583 = vmatprep.subr.mxu0 0.0
  %584 = vmatpush1.msra.mxu0 0.0
  %585 = vmatprep.subr.mxu0 0.0
  %586 = vmatpush1.msra.mxu0 0.0
  %587 = vmatprep.subr.mxu0 0.0
  %588 = vmatpush1.msra.mxu0 0.0
  %589 = vmatprep.subr.mxu0 0.0
  %590 = vmatpush1.msra.mxu0 0.0
  %591 = vmatprep.subr.mxu0 0.0
  %592 = vmatpush1.msra.mxu0 0.0
  %593 = vmatprep.subr.mxu0 0.0
  %594 = vmatpush1.msra.mxu0 0.0
  %595 = vmatprep.subr.mxu0 0.0
  %596 = vmatpush1.msra.mxu0 0.0
  %597 = vmatprep.subr.mxu0 0.0
  %598 = vmatpush1.msra.mxu0 0.0
  %599 = vmatprep.subr.mxu0 0.0
  %600 = vmatpush1.msra.mxu0 0.0
  %601 = vmatprep.subr.mxu0 0.0
  %602 = vmatpush1.msra.mxu0 0.0
  %603 = vmatprep.subr.mxu0 0.0
  %604 = vmatpush1.msra.mxu0 0.0
  %605 = vmatprep.subr.mxu0 0.0
  %606 = vmatpush1.msra.mxu0 0.0
  %607 = vmatprep.subr.mxu0 0.0
  %608 = vmatpush1.msra.mxu0 0.0
  %609 = vmatprep.subr.mxu0 0.0
  %610 = vmatpush1.msra.mxu0 0.0
  %611 = vmatprep.subr.mxu0 0.0
  %612 = vmatpush1.msra.mxu0 0.0
  %613 = vmatprep.subr.mxu0 0.0
  %614 = vmatpush1.msra.mxu0 0.0
  %615 = vmatprep.subr.mxu0 0.0
  %616 = vmatpush1.msra.mxu0 0.0
  %617 = vmatprep.subr.mxu0 0.0
  %618 = vmatpush1.msra.mxu0 0.0
  %619 = vmatprep.subr.mxu0 0.0
  %620 = vmatpush1.msra.mxu0 0.0
  %621 = vmatprep.subr.mxu0 0.0
  %622 = vmatpush1.msra.mxu0 0.0
  %623 = vmatprep.subr.mxu0 0.0
  %624 = vmatpush1.msra.mxu0 0.0
  %625 = vmatprep.subr.mxu0 0.0
  %626 = vmatpush1.msra.mxu0 0.0
  %627 = vmatprep.mubr.f32.mxu0 0.0
  %628 = vmatmul.mubr.f32.gmra.mrb[0].mxu0 %v561
  %v629 = vpop.f32.mrb[0].mxu0
  %v630 = vadd.f32 %v42, %v629
  %v631 = vpop.f32.mrb[0].mxu0
  %632 = vdwg.mxu0
  %v634 = vlaneseq
  %v635 = vshrl.u32 %v634, 7
  %v636 = vsub.s32 0, %v635
  %v637 = vrot.slane %v22, %v636
  %v640 = vsel %vm48, %v19, 0
  %642 = vmatprep.subr.mxu0 0.0
  %643 = vmatpush1.msra.mxu0 %v640
  %644 = vmatprep.subr.mxu0 0.0
  %645 = vmatpush1.msra.mxu0 0.0
  %646 = vmatprep.subr.mxu0 0.0
  %647 = vmatpush1.msra.mxu0 0.0
  %648 = vmatprep.subr.mxu0 0.0
  %649 = vmatpush1.msra.mxu0 0.0
  %650 = vmatprep.subr.mxu0 0.0
  %651 = vmatpush1.msra.mxu0 0.0
  %652 = vmatprep.subr.mxu0 0.0
  %653 = vmatpush1.msra.mxu0 0.0
  %654 = vmatprep.subr.mxu0 0.0
  %655 = vmatpush1.msra.mxu0 0.0
  %656 = vmatprep.subr.mxu0 0.0
  %657 = vmatpush1.msra.mxu0 0.0
  %658 = vmatprep.subr.mxu0 0.0
  %659 = vmatpush1.msra.mxu0 0.0
  %660 = vmatprep.subr.mxu0 0.0
  %661 = vmatpush1.msra.mxu0 0.0
  %662 = vmatprep.subr.mxu0 0.0
  %663 = vmatpush1.msra.mxu0 0.0
  %664 = vmatprep.subr.mxu0 0.0
  %665 = vmatpush1.msra.mxu0 0.0
  %666 = vmatprep.subr.mxu0 0.0
  %667 = vmatpush1.msra.mxu0 0.0
  %668 = vmatprep.subr.mxu0 0.0
  %669 = vmatpush1.msra.mxu0 0.0
  %670 = vmatprep.subr.mxu0 0.0
  %671 = vmatpush1.msra.mxu0 0.0
  %672 = vmatprep.subr.mxu0 0.0
  %673 = vmatpush1.msra.mxu0 0.0
  %674 = vmatprep.subr.mxu0 0.0
  %675 = vmatpush1.msra.mxu0 0.0
  %676 = vmatprep.subr.mxu0 0.0
  %677 = vmatpush1.msra.mxu0 0.0
  %678 = vmatprep.subr.mxu0 0.0
  %679 = vmatpush1.msra.mxu0 0.0
  %680 = vmatprep.subr.mxu0 0.0
  %681 = vmatpush1.msra.mxu0 0.0
  %682 = vmatprep.subr.mxu0 0.0
  %683 = vmatpush1.msra.mxu0 0.0
  %684 = vmatprep.subr.mxu0 0.0
  %685 = vmatpush1.msra.mxu0 0.0
  %686 = vmatprep.subr.mxu0 0.0
  %687 = vmatpush1.msra.mxu0 0.0
  %688 = vmatprep.subr.mxu0 0.0
  %689 = vmatpush1.msra.mxu0 0.0
  %690 = vmatprep.subr.mxu0 0.0
  %691 = vmatpush1.msra.mxu0 0.0
  %692 = vmatprep.subr.mxu0 0.0
  %693 = vmatpush1.msra.mxu0 0.0
  %694 = vmatprep.subr.mxu0 0.0
  %695 = vmatpush1.msra.mxu0 0.0
  %696 = vmatprep.subr.mxu0 0.0
  %697 = vmatpush1.msra.mxu0 0.0
  %698 = vmatprep.subr.mxu0 0.0
  %699 = vmatpush1.msra.mxu0 0.0
  %700 = vmatprep.subr.mxu0 0.0
  %701 = vmatpush1.msra.mxu0 0.0
  %702 = vmatprep.subr.mxu0 0.0
  %703 = vmatpush1.msra.mxu0 0.0
  %704 = vmatprep.subr.mxu0 0.0
  %705 = vmatpush1.msra.mxu0 0.0
  %706 = vmatprep.mubr.f32.mxu0 0.0
  %707 = vmatmul.mubr.f32.gmra.mrb[0].mxu0 %v46
  %v708 = vpop.f32.mrb[0].mxu0
  %v709 = vadd.f32 %v637, %v708
  %v710 = vpop.f32.mrb[0].mxu0
  %711 = vdwg.mxu0
  %712 = vmatprep.subr.mxu0 0.0
  %713 = vmatpush1.msra.mxu0 %v640
  %714 = vmatprep.subr.mxu0 0.0
  %715 = vmatpush1.msra.mxu0 0.0
  %716 = vmatprep.subr.mxu0 0.0
  %717 = vmatpush1.msra.mxu0 0.0
  %718 = vmatprep.subr.mxu0 0.0
  %719 = vmatpush1.msra.mxu0 0.0
  %720 = vmatprep.subr.mxu0 0.0
  %721 = vmatpush1.msra.mxu0 0.0
  %722 = vmatprep.subr.mxu0 0.0
  %723 = vmatpush1.msra.mxu0 0.0
  %724 = vmatprep.subr.mxu0 0.0
  %725 = vmatpush1.msra.mxu0 0.0
  %726 = vmatprep.subr.mxu0 0.0
  %727 = vmatpush1.msra.mxu0 0.0
  %728 = vmatprep.subr.mxu0 0.0
  %729 = vmatpush1.msra.mxu0 0.0
  %730 = vmatprep.subr.mxu0 0.0
  %731 = vmatpush1.msra.mxu0 0.0
  %732 = vmatprep.subr.mxu0 0.0
  %733 = vmatpush1.msra.mxu0 0.0
  %734 = vmatprep.subr.mxu0 0.0
  %735 = vmatpush1.msra.mxu0 0.0
  %736 = vmatprep.subr.mxu0 0.0
  %737 = vmatpush1.msra.mxu0 0.0
  %738 = vmatprep.subr.mxu0 0.0
  %739 = vmatpush1.msra.mxu0 0.0
  %740 = vmatprep.subr.mxu0 0.0
  %741 = vmatpush1.msra.mxu0 0.0
  %742 = vmatprep.subr.mxu0 0.0
  %743 = vmatpush1.msra.mxu0 0.0
  %744 = vmatprep.subr.mxu0 0.0
  %745 = vmatpush1.msra.mxu0 0.0
  %746 = vmatprep.subr.mxu0 0.0
  %747 = vmatpush1.msra.mxu0 0.0
  %748 = vmatprep.subr.mxu0 0.0
  %749 = vmatpush1.msra.mxu0 0.0
  %750 = vmatprep.subr.mxu0 0.0
  %751 = vmatpush1.msra.mxu0 0.0
  %752 = vmatprep.subr.mxu0 0.0
  %753 = vmatpush1.msra.mxu0 0.0
  %754 = vmatprep.subr.mxu0 0.0
  %755 = vmatpush1.msra.mxu0 0.0
  %756 = vmatprep.subr.mxu0 0.0
  %757 = vmatpush1.msra.mxu0 0.0
  %758 = vmatprep.subr.mxu0 0.0
  %759 = vmatpush1.msra.mxu0 0.0
  %760 = vmatprep.subr.mxu0 0.0
  %761 = vmatpush1.msra.mxu0 0.0
  %762 = vmatprep.subr.mxu0 0.0
  %763 = vmatpush1.msra.mxu0 0.0
  %764 = vmatprep.subr.mxu0 0.0
  %765 = vmatpush1.msra.mxu0 0.0
  %766 = vmatprep.subr.mxu0 0.0
  %767 = vmatpush1.msra.mxu0 0.0
  %768 = vmatprep.subr.mxu0 0.0
  %769 = vmatpush1.msra.mxu0 0.0
  %770 = vmatprep.subr.mxu0 0.0
  %771 = vmatpush1.msra.mxu0 0.0
  %772 = vmatprep.subr.mxu0 0.0
  %773 = vmatpush1.msra.mxu0 0.0
  %774 = vmatprep.subr.mxu0 0.0
  %775 = vmatpush1.msra.mxu0 0.0
  %776 = vmatprep.mubr.f32.mxu0 0.0
  %777 = vmatmul.mubr.f32.gmra.mrb[0].mxu0 %v123
  %v778 = vpop.f32.mrb[0].mxu0
  %v779 = vadd.f32 %v637, %v778
  %v780 = vpop.f32.mrb[0].mxu0
  %781 = vdwg.mxu0
  %782 = vmatprep.subr.mxu0 0.0
  %783 = vmatpush1.msra.mxu0 %v640
  %784 = vmatprep.subr.mxu0 0.0
  %785 = vmatpush1.msra.mxu0 0.0
  %786 = vmatprep.subr.mxu0 0.0
  %787 = vmatpush1.msra.mxu0 0.0
  %788 = vmatprep.subr.mxu0 0.0
  %789 = vmatpush1.msra.mxu0 0.0
  %790 = vmatprep.subr.mxu0 0.0
  %791 = vmatpush1.msra.mxu0 0.0
  %792 = vmatprep.subr.mxu0 0.0
  %793 = vmatpush1.msra.mxu0 0.0
  %794 = vmatprep.subr.mxu0 0.0
  %795 = vmatpush1.msra.mxu0 0.0
  %796 = vmatprep.subr.mxu0 0.0
  %797 = vmatpush1.msra.mxu0 0.0
  %798 = vmatprep.subr.mxu0 0.0
  %799 = vmatpush1.msra.mxu0 0.0
  %800 = vmatprep.subr.mxu0 0.0
  %801 = vmatpush1.msra.mxu0 0.0
  %802 = vmatprep.subr.mxu0 0.0
  %803 = vmatpush1.msra.mxu0 0.0
  %804 = vmatprep.subr.mxu0 0.0
  %805 = vmatpush1.msra.mxu0 0.0
  %806 = vmatprep.subr.mxu0 0.0
  %807 = vmatpush1.msra.mxu0 0.0
  %808 = vmatprep.subr.mxu0 0.0
  %809 = vmatpush1.msra.mxu0 0.0
  %810 = vmatprep.subr.mxu0 0.0
  %811 = vmatpush1.msra.mxu0 0.0
  %812 = vmatprep.subr.mxu0 0.0
  %813 = vmatpush1.msra.mxu0 0.0
  %814 = vmatprep.subr.mxu0 0.0
  %815 = vmatpush1.msra.mxu0 0.0
  %816 = vmatprep.subr.mxu0 0.0
  %817 = vmatpush1.msra.mxu0 0.0
  %818 = vmatprep.subr.mxu0 0.0
  %819 = vmatpush1.msra.mxu0 0.0
  %820 = vmatprep.subr.mxu0 0.0
  %821 = vmatpush1.msra.mxu0 0.0
  %822 = vmatprep.subr.mxu0 0.0
  %823 = vmatpush1.msra.mxu0 0.0
  %824 = vmatprep.subr.mxu0 0.0
  %825 = vmatpush1.msra.mxu0 0.0
  %826 = vmatprep.subr.mxu0 0.0
  %827 = vmatpush1.msra.mxu0 0.0
  %828 = vmatprep.subr.mxu0 0.0
  %829 = vmatpush1.msra.mxu0 0.0
  %830 = vmatprep.subr.mxu0 0.0
  %831 = vmatpush1.msra.mxu0 0.0
  %832 = vmatprep.subr.mxu0 0.0
  %833 = vmatpush1.msra.mxu0 0.0
  %834 = vmatprep.subr.mxu0 0.0
  %835 = vmatpush1.msra.mxu0 0.0
  %836 = vmatprep.subr.mxu0 0.0
  %837 = vmatpush1.msra.mxu0 0.0
  %838 = vmatprep.subr.mxu0 0.0
  %839 = vmatpush1.msra.mxu0 0.0
  %840 = vmatprep.subr.mxu0 0.0
  %841 = vmatpush1.msra.mxu0 0.0
  %842 = vmatprep.subr.mxu0 0.0
  %843 = vmatpush1.msra.mxu0 0.0
  %844 = vmatprep.subr.mxu0 0.0
  %845 = vmatpush1.msra.mxu0 0.0
  %846 = vmatprep.mubr.f32.mxu0 0.0
  %847 = vmatmul.mubr.f32.gmra.mrb[0].mxu0 %v196
  %v848 = vpop.f32.mrb[0].mxu0
  %v849 = vadd.f32 %v637, %v848
  %v850 = vpop.f32.mrb[0].mxu0
  %851 = vdwg.mxu0
  %852 = vmatprep.subr.mxu0 0.0
  %853 = vmatpush1.msra.mxu0 %v640
  %854 = vmatprep.subr.mxu0 0.0
  %855 = vmatpush1.msra.mxu0 0.0
  %856 = vmatprep.subr.mxu0 0.0
  %857 = vmatpush1.msra.mxu0 0.0
  %858 = vmatprep.subr.mxu0 0.0
  %859 = vmatpush1.msra.mxu0 0.0
  %860 = vmatprep.subr.mxu0 0.0
  %861 = vmatpush1.msra.mxu0 0.0
  %862 = vmatprep.subr.mxu0 0.0
  %863 = vmatpush1.msra.mxu0 0.0
  %864 = vmatprep.subr.mxu0 0.0
  %865 = vmatpush1.msra.mxu0 0.0
  %866 = vmatprep.subr.mxu0 0.0
  %867 = vmatpush1.msra.mxu0 0.0
  %868 = vmatprep.subr.mxu0 0.0
  %869 = vmatpush1.msra.mxu0 0.0
  %870 = vmatprep.subr.mxu0 0.0
  %871 = vmatpush1.msra.mxu0 0.0
  %872 = vmatprep.subr.mxu0 0.0
  %873 = vmatpush1.msra.mxu0 0.0
  %874 = vmatprep.subr.mxu0 0.0
  %875 = vmatpush1.msra.mxu0 0.0
  %876 = vmatprep.subr.mxu0 0.0
  %877 = vmatpush1.msra.mxu0 0.0
  %878 = vmatprep.subr.mxu0 0.0
  %879 = vmatpush1.msra.mxu0 0.0
  %880 = vmatprep.subr.mxu0 0.0
  %881 = vmatpush1.msra.mxu0 0.0
  %882 = vmatprep.subr.mxu0 0.0
  %883 = vmatpush1.msra.mxu0 0.0
  %884 = vmatprep.subr.mxu0 0.0
  %885 = vmatpush1.msra.mxu0 0.0
  %886 = vmatprep.subr.mxu0 0.0
  %887 = vmatpush1.msra.mxu0 0.0
  %888 = vmatprep.subr.mxu0 0.0
  %889 = vmatpush1.msra.mxu0 0.0
  %890 = vmatprep.subr.mxu0 0.0
  %891 = vmatpush1.msra.mxu0 0.0
  %892 = vmatprep.subr.mxu0 0.0
  %893 = vmatpush1.msra.mxu0 0.0
  %894 = vmatprep.subr.mxu0 0.0
  %895 = vmatpush1.msra.mxu0 0.0
  %896 = vmatprep.subr.mxu0 0.0
  %897 = vmatpush1.msra.mxu0 0.0
  %898 = vmatprep.subr.mxu0 0.0
  %899 = vmatpush1.msra.mxu0 0.0
  %900 = vmatprep.subr.mxu0 0.0
  %901 = vmatpush1.msra.mxu0 0.0
  %902 = vmatprep.subr.mxu0 0.0
  %903 = vmatpush1.msra.mxu0 0.0
  %904 = vmatprep.subr.mxu0 0.0
  %905 = vmatpush1.msra.mxu0 0.0
  %906 = vmatprep.subr.mxu0 0.0
  %907 = vmatpush1.msra.mxu0 0.0
  %908 = vmatprep.subr.mxu0 0.0
  %909 = vmatpush1.msra.mxu0 0.0
  %910 = vmatprep.subr.mxu0 0.0
  %911 = vmatpush1.msra.mxu0 0.0
  %912 = vmatprep.subr.mxu0 0.0
  %913 = vmatpush1.msra.mxu0 0.0
  %914 = vmatprep.subr.mxu0 0.0
  %915 = vmatpush1.msra.mxu0 0.0
  %916 = vmatprep.mubr.f32.mxu0 0.0
  %917 = vmatmul.mubr.f32.gmra.mrb[0].mxu0 %v269
  %v918 = vpop.f32.mrb[0].mxu0
  %v919 = vadd.f32 %v637, %v918
  %v920 = vpop.f32.mrb[0].mxu0
  %921 = vdwg.mxu0
  %922 = vmatprep.subr.mxu0 0.0
  %923 = vmatpush1.msra.mxu0 %v640
  %924 = vmatprep.subr.mxu0 0.0
  %925 = vmatpush1.msra.mxu0 0.0
  %926 = vmatprep.subr.mxu0 0.0
  %927 = vmatpush1.msra.mxu0 0.0
  %928 = vmatprep.subr.mxu0 0.0
  %929 = vmatpush1.msra.mxu0 0.0
  %930 = vmatprep.subr.mxu0 0.0
  %931 = vmatpush1.msra.mxu0 0.0
  %932 = vmatprep.subr.mxu0 0.0
  %933 = vmatpush1.msra.mxu0 0.0
  %934 = vmatprep.subr.mxu0 0.0
  %935 = vmatpush1.msra.mxu0 0.0
  %936 = vmatprep.subr.mxu0 0.0
  %937 = vmatpush1.msra.mxu0 0.0
  %938 = vmatprep.subr.mxu0 0.0
  %939 = vmatpush1.msra.mxu0 0.0
  %940 = vmatprep.subr.mxu0 0.0
  %941 = vmatpush1.msra.mxu0 0.0
  %942 = vmatprep.subr.mxu0 0.0
  %943 = vmatpush1.msra.mxu0 0.0
  %944 = vmatprep.subr.mxu0 0.0
  %945 = vmatpush1.msra.mxu0 0.0
  %946 = vmatprep.subr.mxu0 0.0
  %947 = vmatpush1.msra.mxu0 0.0
  %948 = vmatprep.subr.mxu0 0.0
  %949 = vmatpush1.msra.mxu0 0.0
  %950 = vmatprep.subr.mxu0 0.0
  %951 = vmatpush1.msra.mxu0 0.0
  %952 = vmatprep.subr.mxu0 0.0
  %953 = vmatpush1.msra.mxu0 0.0
  %954 = vmatprep.subr.mxu0 0.0
  %955 = vmatpush1.msra.mxu0 0.0
  %956 = vmatprep.subr.mxu0 0.0
  %957 = vmatpush1.msra.mxu0 0.0
  %958 = vmatprep.subr.mxu0 0.0
  %959 = vmatpush1.msra.mxu0 0.0
  %960 = vmatprep.subr.mxu0 0.0
  %961 = vmatpush1.msra.mxu0 0.0
  %962 = vmatprep.subr.mxu0 0.0
  %963 = vmatpush1.msra.mxu0 0.0
  %964 = vmatprep.subr.mxu0 0.0
  %965 = vmatpush1.msra.mxu0 0.0
  %966 = vmatprep.subr.mxu0 0.0
  %967 = vmatpush1.msra.mxu0 0.0
  %968 = vmatprep.subr.mxu0 0.0
  %969 = vmatpush1.msra.mxu0 0.0
  %970 = vmatprep.subr.mxu0 0.0
  %971 = vmatpush1.msra.mxu0 0.0
  %972 = vmatprep.subr.mxu0 0.0
  %973 = vmatpush1.msra.mxu0 0.0
  %974 = vmatprep.subr.mxu0 0.0
  %975 = vmatpush1.msra.mxu0 0.0
  %976 = vmatprep.subr.mxu0 0.0
  %977 = vmatpush1.msra.mxu0 0.0
  %978 = vmatprep.subr.mxu0 0.0
  %979 = vmatpush1.msra.mxu0 0.0
  %980 = vmatprep.subr.mxu0 0.0
  %981 = vmatpush1.msra.mxu0 0.0
  %982 = vmatprep.subr.mxu0 0.0
  %983 = vmatpush1.msra.mxu0 0.0
  %984 = vmatprep.subr.mxu0 0.0
  %985 = vmatpush1.msra.mxu0 0.0
  %986 = vmatprep.mubr.f32.mxu0 0.0
  %987 = vmatmul.mubr.f32.gmra.mrb[0].mxu0 %v342
  %v988 = vpop.f32.mrb[0].mxu0
  %v989 = vadd.f32 %v637, %v988
  %v990 = vpop.f32.mrb[0].mxu0
  %991 = vdwg.mxu0
  %992 = vmatprep.subr.mxu0 0.0
  %993 = vmatpush1.msra.mxu0 %v640
  %994 = vmatprep.subr.mxu0 0.0
  %995 = vmatpush1.msra.mxu0 0.0
  %996 = vmatprep.subr.mxu0 0.0
  %997 = vmatpush1.msra.mxu0 0.0
  %998 = vmatprep.subr.mxu0 0.0
  %999 = vmatpush1.msra.mxu0 0.0
  %1000 = vmatprep.subr.mxu0 0.0
  %1001 = vmatpush1.msra.mxu0 0.0
  %1002 = vmatprep.subr.mxu0 0.0
  %1003 = vmatpush1.msra.mxu0 0.0
  %1004 = vmatprep.subr.mxu0 0.0
  %1005 = vmatpush1.msra.mxu0 0.0
  %1006 = vmatprep.subr.mxu0 0.0
  %1007 = vmatpush1.msra.mxu0 0.0
  %1008 = vmatprep.subr.mxu0 0.0
  %1009 = vmatpush1.msra.mxu0 0.0
  %1010 = vmatprep.subr.mxu0 0.0
  %1011 = vmatpush1.msra.mxu0 0.0
  %1012 = vmatprep.subr.mxu0 0.0
  %1013 = vmatpush1.msra.mxu0 0.0
  %1014 = vmatprep.subr.mxu0 0.0
  %1015 = vmatpush1.msra.mxu0 0.0
  %1016 = vmatprep.subr.mxu0 0.0
  %1017 = vmatpush1.msra.mxu0 0.0
  %1018 = vmatprep.subr.mxu0 0.0
  %1019 = vmatpush1.msra.mxu0 0.0
  %1020 = vmatprep.subr.mxu0 0.0
  %1021 = vmatpush1.msra.mxu0 0.0
  %1022 = vmatprep.subr.mxu0 0.0
  %1023 = vmatpush1.msra.mxu0 0.0
  %1024 = vmatprep.subr.mxu0 0.0
  %1025 = vmatpush1.msra.mxu0 0.0
  %1026 = vmatprep.subr.mxu0 0.0
  %1027 = vmatpush1.msra.mxu0 0.0
  %1028 = vmatprep.subr.mxu0 0.0
  %1029 = vmatpush1.msra.mxu0 0.0
  %1030 = vmatprep.subr.mxu0 0.0
  %1031 = vmatpush1.msra.mxu0 0.0
  %1032 = vmatprep.subr.mxu0 0.0
  %1033 = vmatpush1.msra.mxu0 0.0
  %1034 = vmatprep.subr.mxu0 0.0
  %1035 = vmatpush1.msra.mxu0 0.0
  %1036 = vmatprep.subr.mxu0 0.0
  %1037 = vmatpush1.msra.mxu0 0.0
  %1038 = vmatprep.subr.mxu0 0.0
  %1039 = vmatpush1.msra.mxu0 0.0
  %1040 = vmatprep.subr.mxu0 0.0
  %1041 = vmatpush1.msra.mxu0 0.0
  %1042 = vmatprep.subr.mxu0 0.0
  %1043 = vmatpush1.msra.mxu0 0.0
  %1044 = vmatprep.subr.mxu0 0.0
  %1045 = vmatpush1.msra.mxu0 0.0
  %1046 = vmatprep.subr.mxu0 0.0
  %1047 = vmatpush1.msra.mxu0 0.0
  %1048 = vmatprep.subr.mxu0 0.0
  %1049 = vmatpush1.msra.mxu0 0.0
  %1050 = vmatprep.subr.mxu0 0.0
  %1051 = vmatpush1.msra.mxu0 0.0
  %1052 = vmatprep.subr.mxu0 0.0
  %1053 = vmatpush1.msra.mxu0 0.0
  %1054 = vmatprep.subr.mxu0 0.0
  %1055 = vmatpush1.msra.mxu0 0.0
  %1056 = vmatprep.mubr.f32.mxu0 0.0
  %1057 = vmatmul.mubr.f32.gmra.mrb[0].mxu0 %v415
  %v1058 = vpop.f32.mrb[0].mxu0
  %v1059 = vadd.f32 %v637, %v1058
  %v1060 = vpop.f32.mrb[0].mxu0
  %1061 = vdwg.mxu0
  %1062 = vmatprep.subr.mxu0 0.0
  %1063 = vmatpush1.msra.mxu0 %v640
  %1064 = vmatprep.subr.mxu0 0.0
  %1065 = vmatpush1.msra.mxu0 0.0
  %1066 = vmatprep.subr.mxu0 0.0
  %1067 = vmatpush1.msra.mxu0 0.0
  %1068 = vmatprep.subr.mxu0 0.0
  %1069 = vmatpush1.msra.mxu0 0.0
  %1070 = vmatprep.subr.mxu0 0.0
  %1071 = vmatpush1.msra.mxu0 0.0
  %1072 = vmatprep.subr.mxu0 0.0
  %1073 = vmatpush1.msra.mxu0 0.0
  %1074 = vmatprep.subr.mxu0 0.0
  %1075 = vmatpush1.msra.mxu0 0.0
  %1076 = vmatprep.subr.mxu0 0.0
  %1077 = vmatpush1.msra.mxu0 0.0
  %1078 = vmatprep.subr.mxu0 0.0
  %1079 = vmatpush1.msra.mxu0 0.0
  %1080 = vmatprep.subr.mxu0 0.0
  %1081 = vmatpush1.msra.mxu0 0.0
  %1082 = vmatprep.subr.mxu0 0.0
  %1083 = vmatpush1.msra.mxu0 0.0
  %1084 = vmatprep.subr.mxu0 0.0
  %1085 = vmatpush1.msra.mxu0 0.0
  %1086 = vmatprep.subr.mxu0 0.0
  %1087 = vmatpush1.msra.mxu0 0.0
  %1088 = vmatprep.subr.mxu0 0.0
  %1089 = vmatpush1.msra.mxu0 0.0
  %1090 = vmatprep.subr.mxu0 0.0
  %1091 = vmatpush1.msra.mxu0 0.0
  %1092 = vmatprep.subr.mxu0 0.0
  %1093 = vmatpush1.msra.mxu0 0.0
  %1094 = vmatprep.subr.mxu0 0.0
  %1095 = vmatpush1.msra.mxu0 0.0
  %1096 = vmatprep.subr.mxu0 0.0
  %1097 = vmatpush1.msra.mxu0 0.0
  %1098 = vmatprep.subr.mxu0 0.0
  %1099 = vmatpush1.msra.mxu0 0.0
  %1100 = vmatprep.subr.mxu0 0.0
  %1101 = vmatpush1.msra.mxu0 0.0
  %1102 = vmatprep.subr.mxu0 0.0
  %1103 = vmatpush1.msra.mxu0 0.0
  %1104 = vmatprep.subr.mxu0 0.0
  %1105 = vmatpush1.msra.mxu0 0.0
  %1106 = vmatprep.subr.mxu0 0.0
  %1107 = vmatpush1.msra.mxu0 0.0
  %1108 = vmatprep.subr.mxu0 0.0
  %1109 = vmatpush1.msra.mxu0 0.0
  %1110 = vmatprep.subr.mxu0 0.0
  %1111 = vmatpush1.msra.mxu0 0.0
  %1112 = vmatprep.subr.mxu0 0.0
  %1113 = vmatpush1.msra.mxu0 0.0
  %1114 = vmatprep.subr.mxu0 0.0
  %1115 = vmatpush1.msra.mxu0 0.0
  %1116 = vmatprep.subr.mxu0 0.0
  %1117 = vmatpush1.msra.mxu0 0.0
  %1118 = vmatprep.subr.mxu0 0.0
  %1119 = vmatpush1.msra.mxu0 0.0
  %1120 = vmatprep.subr.mxu0 0.0
  %1121 = vmatpush1.msra.mxu0 0.0
  %1122 = vmatprep.subr.mxu0 0.0
  %1123 = vmatpush1.msra.mxu0 0.0
  %1124 = vmatprep.subr.mxu0 0.0
  %1125 = vmatpush1.msra.mxu0 0.0
  %1126 = vmatprep.mubr.f32.mxu0 0.0
  %1127 = vmatmul.mubr.f32.gmra.mrb[0].mxu0 %v488
  %v1128 = vpop.f32.mrb[0].mxu0
  %v1129 = vadd.f32 %v637, %v1128
  %v1130 = vpop.f32.mrb[0].mxu0
  %1131 = vdwg.mxu0
  %1132 = vmatprep.subr.mxu0 0.0
  %1133 = vmatpush1.msra.mxu0 %v640
  %1134 = vmatprep.subr.mxu0 0.0
  %1135 = vmatpush1.msra.mxu0 0.0
  %1136 = vmatprep.subr.mxu0 0.0
  %1137 = vmatpush1.msra.mxu0 0.0
  %1138 = vmatprep.subr.mxu0 0.0
  %1139 = vmatpush1.msra.mxu0 0.0
  %1140 = vmatprep.subr.mxu0 0.0
  %1141 = vmatpush1.msra.mxu0 0.0
  %1142 = vmatprep.subr.mxu0 0.0
  %1143 = vmatpush1.msra.mxu0 0.0
  %1144 = vmatprep.subr.mxu0 0.0
  %1145 = vmatpush1.msra.mxu0 0.0
  %1146 = vmatprep.subr.mxu0 0.0
  %1147 = vmatpush1.msra.mxu0 0.0
  %1148 = vmatprep.subr.mxu0 0.0
  %1149 = vmatpush1.msra.mxu0 0.0
  %1150 = vmatprep.subr.mxu0 0.0
  %1151 = vmatpush1.msra.mxu0 0.0
  %1152 = vmatprep.subr.mxu0 0.0
  %1153 = vmatpush1.msra.mxu0 0.0
  %1154 = vmatprep.subr.mxu0 0.0
  %1155 = vmatpush1.msra.mxu0 0.0
  %1156 = vmatprep.subr.mxu0 0.0
  %1157 = vmatpush1.msra.mxu0 0.0
  %1158 = vmatprep.subr.mxu0 0.0
  %1159 = vmatpush1.msra.mxu0 0.0
  %1160 = vmatprep.subr.mxu0 0.0
  %1161 = vmatpush1.msra.mxu0 0.0
  %1162 = vmatprep.subr.mxu0 0.0
  %1163 = vmatpush1.msra.mxu0 0.0
  %1164 = vmatprep.subr.mxu0 0.0
  %1165 = vmatpush1.msra.mxu0 0.0
  %1166 = vmatprep.subr.mxu0 0.0
  %1167 = vmatpush1.msra.mxu0 0.0
  %1168 = vmatprep.subr.mxu0 0.0
  %1169 = vmatpush1.msra.mxu0 0.0
  %1170 = vmatprep.subr.mxu0 0.0
  %1171 = vmatpush1.msra.mxu0 0.0
  %1172 = vmatprep.subr.mxu0 0.0
  %1173 = vmatpush1.msra.mxu0 0.0
  %1174 = vmatprep.subr.mxu0 0.0
  %1175 = vmatpush1.msra.mxu0 0.0
  %1176 = vmatprep.subr.mxu0 0.0
  %1177 = vmatpush1.msra.mxu0 0.0
  %1178 = vmatprep.subr.mxu0 0.0
  %1179 = vmatpush1.msra.mxu0 0.0
  %1180 = vmatprep.subr.mxu0 0.0
  %1181 = vmatpush1.msra.mxu0 0.0
  %1182 = vmatprep.subr.mxu0 0.0
  %1183 = vmatpush1.msra.mxu0 0.0
  %1184 = vmatprep.subr.mxu0 0.0
  %1185 = vmatpush1.msra.mxu0 0.0
  %1186 = vmatprep.subr.mxu0 0.0
  %1187 = vmatpush1.msra.mxu0 0.0
  %1188 = vmatprep.subr.mxu0 0.0
  %1189 = vmatpush1.msra.mxu0 0.0
  %1190 = vmatprep.subr.mxu0 0.0
  %1191 = vmatpush1.msra.mxu0 0.0
  %1192 = vmatprep.subr.mxu0 0.0
  %1193 = vmatpush1.msra.mxu0 0.0
  %1194 = vmatprep.subr.mxu0 0.0
  %1195 = vmatpush1.msra.mxu0 0.0
  %1196 = vmatprep.mubr.f32.mxu0 0.0
  %1197 = vmatmul.mubr.f32.gmra.mrb[0].mxu0 %v561
  %v1198 = vpop.f32.mrb[0].mxu0
  %v1199 = vadd.f32 %v637, %v1198
  %v1200 = vpop.f32.mrb[0].mxu0
  %1201 = vdwg.mxu0
  %v1202 = vld [vmem:[%s2] sm:$0xff]
  %v1203 = vld [vmem:[%s2 + $0x8] sm:$0x3f]
  %vm1204 = vcmask 113664
  %v1206 = vsel %vm1204, 0.0, 0
  %v1209 = vsel %vm48, %v1203, 0
  %1211 = vmatprep.subr.mxu0 0.0
  %1212 = vmatpush1.msra.mxu0 %v1202
  %1213 = vmatprep.subr.mxu0 0.0
  %1214 = vmatpush1.msra.mxu0 %v1209
  %1215 = vmatprep.subr.mxu0 0.0
  %1216 = vmatpush1.msra.mxu0 0.0
  %1217 = vmatprep.subr.mxu0 0.0
  %1218 = vmatpush1.msra.mxu0 0.0
  %1219 = vmatprep.subr.mxu0 0.0
  %1220 = vmatpush1.msra.mxu0 0.0
  %1221 = vmatprep.subr.mxu0 0.0
  %1222 = vmatpush1.msra.mxu0 0.0
  %1223 = vmatprep.subr.mxu0 0.0
  %1224 = vmatpush1.msra.mxu0 0.0
  %1225 = vmatprep.subr.mxu0 0.0
  %1226 = vmatpush1.msra.mxu0 0.0
  %1227 = vmatprep.subr.mxu0 0.0
  %1228 = vmatpush1.msra.mxu0 0.0
  %1229 = vmatprep.subr.mxu0 0.0
  %1230 = vmatpush1.msra.mxu0 0.0
  %1231 = vmatprep.subr.mxu0 0.0
  %1232 = vmatpush1.msra.mxu0 0.0
  %1233 = vmatprep.subr.mxu0 0.0
  %1234 = vmatpush1.msra.mxu0 0.0
  %1235 = vmatprep.subr.mxu0 0.0
  %1236 = vmatpush1.msra.mxu0 0.0
  %1237 = vmatprep.subr.mxu0 0.0
  %1238 = vmatpush1.msra.mxu0 0.0
  %1239 = vmatprep.subr.mxu0 0.0
  %1240 = vmatpush1.msra.mxu0 0.0
  %1241 = vmatprep.subr.mxu0 0.0
  %1242 = vmatpush1.msra.mxu0 0.0
  %1243 = vmatprep.subr.mxu0 0.0
  %1244 = vmatpush1.msra.mxu0 0.0
  %1245 = vmatprep.subr.mxu0 0.0
  %1246 = vmatpush1.msra.mxu0 0.0
  %1247 = vmatprep.subr.mxu0 0.0
  %1248 = vmatpush1.msra.mxu0 0.0
  %1249 = vmatprep.subr.mxu0 0.0
  %1250 = vmatpush1.msra.mxu0 0.0
  %1251 = vmatprep.subr.mxu0 0.0
  %1252 = vmatpush1.msra.mxu0 0.0
  %1253 = vmatprep.subr.mxu0 0.0
  %1254 = vmatpush1.msra.mxu0 0.0
  %1255 = vmatprep.subr.mxu0 0.0
  %1256 = vmatpush1.msra.mxu0 0.0
  %1257 = vmatprep.subr.mxu0 0.0
  %1258 = vmatpush1.msra.mxu0 0.0
  %1259 = vmatprep.subr.mxu0 0.0
  %1260 = vmatpush1.msra.mxu0 0.0
  %1261 = vmatprep.subr.mxu0 0.0
  %1262 = vmatpush1.msra.mxu0 0.0
  %1263 = vmatprep.subr.mxu0 0.0
  %1264 = vmatpush1.msra.mxu0 0.0
  %1265 = vmatprep.subr.mxu0 0.0
  %1266 = vmatpush1.msra.mxu0 0.0
  %1267 = vmatprep.subr.mxu0 0.0
  %1268 = vmatpush1.msra.mxu0 0.0
  %1269 = vmatprep.subr.mxu0 0.0
  %1270 = vmatpush1.msra.mxu0 0.0
  %1271 = vmatprep.subr.mxu0 0.0
  %1272 = vmatpush1.msra.mxu0 0.0
  %1273 = vmatprep.subr.mxu0 0.0
  %1274 = vmatpush1.msra.mxu0 0.0
  %1275 = vmatprep.mubr.f32.mxu0 0.0
  %1276 = vmatmul.mubr.f32.gmra.mrb[0].mxu0 %v1206
  %v1277 = vpop.f32.mrb[0].mxu0
  %v1278 = vadd.f32 %v119, %v1277
  %v1279 = vpop.f32.mrb[0].mxu0
  %1280 = vdwg.mxu0
  %v1281 = vxor.u32 %v1278, 2147483648
  %v1282 = vmul.f32 %v1281, 1.442695
  %v1283 = vpow.pop %v1282
  %v1284 = vadd.f32 %v1283, 1.0
  %v1285 = vrcp.pop %v1284
  %v1286 = vmul.f32 1.0, %v1285
  %v1287 = vtanh.pop %v1278
  %v1288 = vmul.f32 %v1286, 0.0
  %1290 = vrot.lane.b32.xlu0 %v1287, 100
  %v1291 = vpop.permute.xlu0 %1290
  %v1293 = vmul.f32 %v1286, %v1291
  %1295 = vrot.lane.b32.xlu0 %v1293, 14
  %v1296 = vpop.permute.xlu0 %1295
  %v1298 = vadd.f32 %v1288, %v1296
  %v1299 = vtanh.pop %v1298
  %1301 = vrot.lane.b32.xlu0 %v1299, 28
  %v1302 = vpop.permute.xlu0 %1301
  %v1304 = vmul.f32 %v1286, %v1302
  %1306 = vrot.lane.b32.xlu0 %v1304, 86
  %v1307 = vpop.permute.xlu0 %1306
  %v1308 = vsel %vm1204, %v1307, 0
  %1310 = vmatprep.subr.mxu0 0.0
  %1311 = vmatpush1.msra.mxu0 %v1202
  %1312 = vmatprep.subr.mxu0 0.0
  %1313 = vmatpush1.msra.mxu0 %v1209
  %1314 = vmatprep.subr.mxu0 0.0
  %1315 = vmatpush1.msra.mxu0 0.0
  %1316 = vmatprep.subr.mxu0 0.0
  %1317 = vmatpush1.msra.mxu0 0.0
  %1318 = vmatprep.subr.mxu0 0.0
  %1319 = vmatpush1.msra.mxu0 0.0
  %1320 = vmatprep.subr.mxu0 0.0
  %1321 = vmatpush1.msra.mxu0 0.0
  %1322 = vmatprep.subr.mxu0 0.0
  %1323 = vmatpush1.msra.mxu0 0.0
  %1324 = vmatprep.subr.mxu0 0.0
  %1325 = vmatpush1.msra.mxu0 0.0
  %1326 = vmatprep.subr.mxu0 0.0
  %1327 = vmatpush1.msra.mxu0 0.0
  %1328 = vmatprep.subr.mxu0 0.0
  %1329 = vmatpush1.msra.mxu0 0.0
  %1330 = vmatprep.subr.mxu0 0.0
  %1331 = vmatpush1.msra.mxu0 0.0
  %1332 = vmatprep.subr.mxu0 0.0
  %1333 = vmatpush1.msra.mxu0 0.0
  %1334 = vmatprep.subr.mxu0 0.0
  %1335 = vmatpush1.msra.mxu0 0.0
  %1336 = vmatprep.subr.mxu0 0.0
  %1337 = vmatpush1.msra.mxu0 0.0
  %1338 = vmatprep.subr.mxu0 0.0
  %1339 = vmatpush1.msra.mxu0 0.0
  %1340 = vmatprep.subr.mxu0 0.0
  %1341 = vmatpush1.msra.mxu0 0.0
  %1342 = vmatprep.subr.mxu0 0.0
  %1343 = vmatpush1.msra.mxu0 0.0
  %1344 = vmatprep.subr.mxu0 0.0
  %1345 = vmatpush1.msra.mxu0 0.0
  %1346 = vmatprep.subr.mxu0 0.0
  %1347 = vmatpush1.msra.mxu0 0.0
  %1348 = vmatprep.subr.mxu0 0.0
  %1349 = vmatpush1.msra.mxu0 0.0
  %1350 = vmatprep.subr.mxu0 0.0
  %1351 = vmatpush1.msra.mxu0 0.0
  %1352 = vmatprep.subr.mxu0 0.0
  %1353 = vmatpush1.msra.mxu0 0.0
  %1354 = vmatprep.subr.mxu0 0.0
  %1355 = vmatpush1.msra.mxu0 0.0
  %1356 = vmatprep.subr.mxu0 0.0
  %1357 = vmatpush1.msra.mxu0 0.0
  %1358 = vmatprep.subr.mxu0 0.0
  %1359 = vmatpush1.msra.mxu0 0.0
  %1360 = vmatprep.subr.mxu0 0.0
  %1361 = vmatpush1.msra.mxu0 0.0
  %1362 = vmatprep.subr.mxu0 0.0
  %1363 = vmatpush1.msra.mxu0 0.0
  %1364 = vmatprep.subr.mxu0 0.0
  %1365 = vmatpush1.msra.mxu0 0.0
  %1366 = vmatprep.subr.mxu0 0.0
  %1367 = vmatpush1.msra.mxu0 0.0
  %1368 = vmatprep.subr.mxu0 0.0
  %1369 = vmatpush1.msra.mxu0 0.0
  %1370 = vmatprep.subr.mxu0 0.0
  %1371 = vmatpush1.msra.mxu0 0.0
  %1372 = vmatprep.subr.mxu0 0.0
  %1373 = vmatpush1.msra.mxu0 0.0
  %1374 = vmatprep.mubr.f32.mxu0 0.0
  %1375 = vmatmul.mubr.f32.gmra.mrb[0].mxu0 %v1308
  %v1376 = vpop.f32.mrb[0].mxu0
  %v1377 = vadd.f32 %v192, %v1376
  %v1378 = vpop.f32.mrb[0].mxu0
  %1379 = vdwg.mxu0
  %v1380 = vxor.u32 %v1377, 2147483648
  %v1381 = vmul.f32 %v1380, 1.442695
  %v1382 = vpow.pop %v1381
  %v1383 = vadd.f32 %v1382, 1.0
  %v1384 = vrcp.pop %v1383
  %v1385 = vmul.f32 1.0, %v1384
  %v1386 = vtanh.pop %v1377
  %v1387 = vmul.f32 %v1385, %v1298
  %1389 = vrot.lane.b32.xlu0 %v1386, 100
  %v1390 = vpop.permute.xlu0 %1389
  %v1392 = vmul.f32 %v1385, %v1390
  %1394 = vrot.lane.b32.xlu0 %v1392, 14
  %v1395 = vpop.permute.xlu0 %1394
  %v1397 = vadd.f32 %v1387, %v1395
  %v1398 = vtanh.pop %v1397
  %1400 = vrot.lane.b32.xlu0 %v1398, 28
  %v1401 = vpop.permute.xlu0 %1400
  %v1403 = vmul.f32 %v1385, %v1401
  %1405 = vrot.lane.b32.xlu0 %v1403, 86
  %v1406 = vpop.permute.xlu0 %1405
  %v1407 = vsel %vm1204, %v1406, 0
  %1409 = vmatprep.subr.mxu0 0.0
  %1410 = vmatpush1.msra.mxu0 %v1202
  %1411 = vmatprep.subr.mxu0 0.0
  %1412 = vmatpush1.msra.mxu0 %v1209
  %1413 = vmatprep.subr.mxu0 0.0
  %1414 = vmatpush1.msra.mxu0 0.0
  %1415 = vmatprep.subr.mxu0 0.0
  %1416 = vmatpush1.msra.mxu0 0.0
  %1417 = vmatprep.subr.mxu0 0.0
  %1418 = vmatpush1.msra.mxu0 0.0
  %1419 = vmatprep.subr.mxu0 0.0
  %1420 = vmatpush1.msra.mxu0 0.0
  %1421 = vmatprep.subr.mxu0 0.0
  %1422 = vmatpush1.msra.mxu0 0.0
  %1423 = vmatprep.subr.mxu0 0.0
  %1424 = vmatpush1.msra.mxu0 0.0
  %1425 = vmatprep.subr.mxu0 0.0
  %1426 = vmatpush1.msra.mxu0 0.0
  %1427 = vmatprep.subr.mxu0 0.0
  %1428 = vmatpush1.msra.mxu0 0.0
  %1429 = vmatprep.subr.mxu0 0.0
  %1430 = vmatpush1.msra.mxu0 0.0
  %1431 = vmatprep.subr.mxu0 0.0
  %1432 = vmatpush1.msra.mxu0 0.0
  %1433 = vmatprep.subr.mxu0 0.0
  %1434 = vmatpush1.msra.mxu0 0.0
  %1435 = vmatprep.subr.mxu0 0.0
  %1436 = vmatpush1.msra.mxu0 0.0
  %1437 = vmatprep.subr.mxu0 0.0
  %1438 = vmatpush1.msra.mxu0 0.0
  %1439 = vmatprep.subr.mxu0 0.0
  %1440 = vmatpush1.msra.mxu0 0.0
  %1441 = vmatprep.subr.mxu0 0.0
  %1442 = vmatpush1.msra.mxu0 0.0
  %1443 = vmatprep.subr.mxu0 0.0
  %1444 = vmatpush1.msra.mxu0 0.0
  %1445 = vmatprep.subr.mxu0 0.0
  %1446 = vmatpush1.msra.mxu0 0.0
  %1447 = vmatprep.subr.mxu0 0.0
  %1448 = vmatpush1.msra.mxu0 0.0
  %1449 = vmatprep.subr.mxu0 0.0
  %1450 = vmatpush1.msra.mxu0 0.0
  %1451 = vmatprep.subr.mxu0 0.0
  %1452 = vmatpush1.msra.mxu0 0.0
  %1453 = vmatprep.subr.mxu0 0.0
  %1454 = vmatpush1.msra.mxu0 0.0
  %1455 = vmatprep.subr.mxu0 0.0
  %1456 = vmatpush1.msra.mxu0 0.0
  %1457 = vmatprep.subr.mxu0 0.0
  %1458 = vmatpush1.msra.mxu0 0.0
  %1459 = vmatprep.subr.mxu0 0.0
  %1460 = vmatpush1.msra.mxu0 0.0
  %1461 = vmatprep.subr.mxu0 0.0
  %1462 = vmatpush1.msra.mxu0 0.0
  %1463 = vmatprep.subr.mxu0 0.0
  %1464 = vmatpush1.msra.mxu0 0.0
  %1465 = vmatprep.subr.mxu0 0.0
  %1466 = vmatpush1.msra.mxu0 0.0
  %1467 = vmatprep.subr.mxu0 0.0
  %1468 = vmatpush1.msra.mxu0 0.0
  %1469 = vmatprep.subr.mxu0 0.0
  %1470 = vmatpush1.msra.mxu0 0.0
  %1471 = vmatprep.subr.mxu0 0.0
  %1472 = vmatpush1.msra.mxu0 0.0
  %1473 = vmatprep.mubr.f32.mxu0 0.0
  %1474 = vmatmul.mubr.f32.gmra.mrb[0].mxu0 %v1407
  %v1475 = vpop.f32.mrb[0].mxu0
  %v1476 = vadd.f32 %v265, %v1475
  %v1477 = vpop.f32.mrb[0].mxu0
  %1478 = vdwg.mxu0
  %v1479 = vxor.u32 %v1476, 2147483648
  %v1480 = vmul.f32 %v1479, 1.442695
  %v1481 = vpow.pop %v1480
  %v1482 = vadd.f32 %v1481, 1.0
  %v1483 = vrcp.pop %v1482
  %v1484 = vmul.f32 1.0, %v1483
  %v1485 = vtanh.pop %v1476
  %v1486 = vmul.f32 %v1484, %v1397
  %1488 = vrot.lane.b32.xlu0 %v1485, 100
  %v1489 = vpop.permute.xlu0 %1488
  %v1491 = vmul.f32 %v1484, %v1489
  %1493 = vrot.lane.b32.xlu0 %v1491, 14
  %v1494 = vpop.permute.xlu0 %1493
  %v1496 = vadd.f32 %v1486, %v1494
  %v1497 = vtanh.pop %v1496
  %1499 = vrot.lane.b32.xlu0 %v1497, 28
  %v1500 = vpop.permute.xlu0 %1499
  %v1502 = vmul.f32 %v1484, %v1500
  %1504 = vrot.lane.b32.xlu0 %v1502, 86
  %v1505 = vpop.permute.xlu0 %1504
  %v1506 = vsel %vm1204, %v1505, 0
  %1508 = vmatprep.subr.mxu0 0.0
  %1509 = vmatpush1.msra.mxu0 %v1202
  %1510 = vmatprep.subr.mxu0 0.0
  %1511 = vmatpush1.msra.mxu0 %v1209
  %1512 = vmatprep.subr.mxu0 0.0
  %1513 = vmatpush1.msra.mxu0 0.0
  %1514 = vmatprep.subr.mxu0 0.0
  %1515 = vmatpush1.msra.mxu0 0.0
  %1516 = vmatprep.subr.mxu0 0.0
  %1517 = vmatpush1.msra.mxu0 0.0
  %1518 = vmatprep.subr.mxu0 0.0
  %1519 = vmatpush1.msra.mxu0 0.0
  %1520 = vmatprep.subr.mxu0 0.0
  %1521 = vmatpush1.msra.mxu0 0.0
  %1522 = vmatprep.subr.mxu0 0.0
  %1523 = vmatpush1.msra.mxu0 0.0
  %1524 = vmatprep.subr.mxu0 0.0
  %1525 = vmatpush1.msra.mxu0 0.0
  %1526 = vmatprep.subr.mxu0 0.0
  %1527 = vmatpush1.msra.mxu0 0.0
  %1528 = vmatprep.subr.mxu0 0.0
  %1529 = vmatpush1.msra.mxu0 0.0
  %1530 = vmatprep.subr.mxu0 0.0
  %1531 = vmatpush1.msra.mxu0 0.0
  %1532 = vmatprep.subr.mxu0 0.0
  %1533 = vmatpush1.msra.mxu0 0.0
  %1534 = vmatprep.subr.mxu0 0.0
  %1535 = vmatpush1.msra.mxu0 0.0
  %1536 = vmatprep.subr.mxu0 0.0
  %1537 = vmatpush1.msra.mxu0 0.0
  %1538 = vmatprep.subr.mxu0 0.0
  %1539 = vmatpush1.msra.mxu0 0.0
  %1540 = vmatprep.subr.mxu0 0.0
  %1541 = vmatpush1.msra.mxu0 0.0
  %1542 = vmatprep.subr.mxu0 0.0
  %1543 = vmatpush1.msra.mxu0 0.0
  %1544 = vmatprep.subr.mxu0 0.0
  %1545 = vmatpush1.msra.mxu0 0.0
  %1546 = vmatprep.subr.mxu0 0.0
  %1547 = vmatpush1.msra.mxu0 0.0
  %1548 = vmatprep.subr.mxu0 0.0
  %1549 = vmatpush1.msra.mxu0 0.0
  %1550 = vmatprep.subr.mxu0 0.0
  %1551 = vmatpush1.msra.mxu0 0.0
  %1552 = vmatprep.subr.mxu0 0.0
  %1553 = vmatpush1.msra.mxu0 0.0
  %1554 = vmatprep.subr.mxu0 0.0
  %1555 = vmatpush1.msra.mxu0 0.0
  %1556 = vmatprep.subr.mxu0 0.0
  %1557 = vmatpush1.msra.mxu0 0.0
  %1558 = vmatprep.subr.mxu0 0.0
  %1559 = vmatpush1.msra.mxu0 0.0
  %1560 = vmatprep.subr.mxu0 0.0
  %1561 = vmatpush1.msra.mxu0 0.0
  %1562 = vmatprep.subr.mxu0 0.0
  %1563 = vmatpush1.msra.mxu0 0.0
  %1564 = vmatprep.subr.mxu0 0.0
  %1565 = vmatpush1.msra.mxu0 0.0
  %1566 = vmatprep.subr.mxu0 0.0
  %1567 = vmatpush1.msra.mxu0 0.0
  %1568 = vmatprep.subr.mxu0 0.0
  %1569 = vmatpush1.msra.mxu0 0.0
  %1570 = vmatprep.subr.mxu0 0.0
  %1571 = vmatpush1.msra.mxu0 0.0
  %1572 = vmatprep.mubr.f32.mxu0 0.0
  %1573 = vmatmul.mubr.f32.gmra.mrb[0].mxu0 %v1506
  %v1574 = vpop.f32.mrb[0].mxu0
  %v1575 = vadd.f32 %v338, %v1574
  %v1576 = vpop.f32.mrb[0].mxu0
  %1577 = vdwg.mxu0
  %v1578 = vxor.u32 %v1575, 2147483648
  %v1579 = vmul.f32 %v1578, 1.442695
  %v1580 = vpow.pop %v1579
  %v1581 = vadd.f32 %v1580, 1.0
  %v1582 = vrcp.pop %v1581
  %v1583 = vmul.f32 1.0, %v1582
  %v1584 = vtanh.pop %v1575
  %v1585 = vmul.f32 %v1583, %v1496
  %1587 = vrot.lane.b32.xlu0 %v1584, 100
  %v1588 = vpop.permute.xlu0 %1587
  %v1590 = vmul.f32 %v1583, %v1588
  %1592 = vrot.lane.b32.xlu0 %v1590, 14
  %v1593 = vpop.permute.xlu0 %1592
  %v1595 = vadd.f32 %v1585, %v1593
  %v1596 = vtanh.pop %v1595
  %1598 = vrot.lane.b32.xlu0 %v1596, 28
  %v1599 = vpop.permute.xlu0 %1598
  %v1601 = vmul.f32 %v1583, %v1599
  %1603 = vrot.lane.b32.xlu0 %v1601, 86
  %v1604 = vpop.permute.xlu0 %1603
  %v1605 = vsel %vm1204, %v1604, 0
  %1607 = vmatprep.subr.mxu0 0.0
  %1608 = vmatpush1.msra.mxu0 %v1202
  %1609 = vmatprep.subr.mxu0 0.0
  %1610 = vmatpush1.msra.mxu0 %v1209
  %1611 = vmatprep.subr.mxu0 0.0
  %1612 = vmatpush1.msra.mxu0 0.0
  %1613 = vmatprep.subr.mxu0 0.0
  %1614 = vmatpush1.msra.mxu0 0.0
  %1615 = vmatprep.subr.mxu0 0.0
  %1616 = vmatpush1.msra.mxu0 0.0
  %1617 = vmatprep.subr.mxu0 0.0
  %1618 = vmatpush1.msra.mxu0 0.0
  %1619 = vmatprep.subr.mxu0 0.0
  %1620 = vmatpush1.msra.mxu0 0.0
  %1621 = vmatprep.subr.mxu0 0.0
  %1622 = vmatpush1.msra.mxu0 0.0
  %1623 = vmatprep.subr.mxu0 0.0
  %1624 = vmatpush1.msra.mxu0 0.0
  %1625 = vmatprep.subr.mxu0 0.0
  %1626 = vmatpush1.msra.mxu0 0.0
  %1627 = vmatprep.subr.mxu0 0.0
  %1628 = vmatpush1.msra.mxu0 0.0
  %1629 = vmatprep.subr.mxu0 0.0
  %1630 = vmatpush1.msra.mxu0 0.0
  %1631 = vmatprep.subr.mxu0 0.0
  %1632 = vmatpush1.msra.mxu0 0.0
  %1633 = vmatprep.subr.mxu0 0.0
  %1634 = vmatpush1.msra.mxu0 0.0
  %1635 = vmatprep.subr.mxu0 0.0
  %1636 = vmatpush1.msra.mxu0 0.0
  %1637 = vmatprep.subr.mxu0 0.0
  %1638 = vmatpush1.msra.mxu0 0.0
  %1639 = vmatprep.subr.mxu0 0.0
  %1640 = vmatpush1.msra.mxu0 0.0
  %1641 = vmatprep.subr.mxu0 0.0
  %1642 = vmatpush1.msra.mxu0 0.0
  %1643 = vmatprep.subr.mxu0 0.0
  %1644 = vmatpush1.msra.mxu0 0.0
  %1645 = vmatprep.subr.mxu0 0.0
  %1646 = vmatpush1.msra.mxu0 0.0
  %1647 = vmatprep.subr.mxu0 0.0
  %1648 = vmatpush1.msra.mxu0 0.0
  %1649 = vmatprep.subr.mxu0 0.0
  %1650 = vmatpush1.msra.mxu0 0.0
  %1651 = vmatprep.subr.mxu0 0.0
  %1652 = vmatpush1.msra.mxu0 0.0
  %1653 = vmatprep.subr.mxu0 0.0
  %1654 = vmatpush1.msra.mxu0 0.0
  %1655 = vmatprep.subr.mxu0 0.0
  %1656 = vmatpush1.msra.mxu0 0.0
  %1657 = vmatprep.subr.mxu0 0.0
  %1658 = vmatpush1.msra.mxu0 0.0
  %1659 = vmatprep.subr.mxu0 0.0
  %1660 = vmatpush1.msra.mxu0 0.0
  %1661 = vmatprep.subr.mxu0 0.0
  %1662 = vmatpush1.msra.mxu0 0.0
  %1663 = vmatprep.subr.mxu0 0.0
  %1664 = vmatpush1.msra.mxu0 0.0
  %1665 = vmatprep.subr.mxu0 0.0
  %1666 = vmatpush1.msra.mxu0 0.0
  %1667 = vmatprep.subr.mxu0 0.0
  %1668 = vmatpush1.msra.mxu0 0.0
  %1669 = vmatprep.subr.mxu0 0.0
  %1670 = vmatpush1.msra.mxu0 0.0
  %1671 = vmatprep.mubr.f32.mxu0 0.0
  %1672 = vmatmul.mubr.f32.gmra.mrb[0].mxu0 %v1605
  %v1673 = vpop.f32.mrb[0].mxu0
  %v1674 = vadd.f32 %v411, %v1673
  %v1675 = vpop.f32.mrb[0].mxu0
  %1676 = vdwg.mxu0
  %v1677 = vxor.u32 %v1674, 2147483648
  %v1678 = vmul.f32 %v1677, 1.442695
  %v1679 = vpow.pop %v1678
  %v1680 = vadd.f32 %v1679, 1.0
  %v1681 = vrcp.pop %v1680
  %v1682 = vmul.f32 1.0, %v1681
  %v1683 = vtanh.pop %v1674
  %v1684 = vmul.f32 %v1682, %v1595
  %1686 = vrot.lane.b32.xlu0 %v1683, 100
  %v1687 = vpop.permute.xlu0 %1686
  %v1689 = vmul.f32 %v1682, %v1687
  %1691 = vrot.lane.b32.xlu0 %v1689, 14
  %v1692 = vpop.permute.xlu0 %1691
  %v1694 = vadd.f32 %v1684, %v1692
  %v1695 = vtanh.pop %v1694
  %1697 = vrot.lane.b32.xlu0 %v1695, 28
  %v1698 = vpop.permute.xlu0 %1697
  %v1700 = vmul.f32 %v1682, %v1698
  %1702 = vrot.lane.b32.xlu0 %v1700, 86
  %v1703 = vpop.permute.xlu0 %1702
  %v1704 = vsel %vm1204, %v1703, 0
  %1706 = vmatprep.subr.mxu0 0.0
  %1707 = vmatpush1.msra.mxu0 %v1202
  %1708 = vmatprep.subr.mxu0 0.0
  %1709 = vmatpush1.msra.mxu0 %v1209
  %1710 = vmatprep.subr.mxu0 0.0
  %1711 = vmatpush1.msra.mxu0 0.0
  %1712 = vmatprep.subr.mxu0 0.0
  %1713 = vmatpush1.msra.mxu0 0.0
  %1714 = vmatprep.subr.mxu0 0.0
  %1715 = vmatpush1.msra.mxu0 0.0
  %1716 = vmatprep.subr.mxu0 0.0
  %1717 = vmatpush1.msra.mxu0 0.0
  %1718 = vmatprep.subr.mxu0 0.0
  %1719 = vmatpush1.msra.mxu0 0.0
  %1720 = vmatprep.subr.mxu0 0.0
  %1721 = vmatpush1.msra.mxu0 0.0
  %1722 = vmatprep.subr.mxu0 0.0
  %1723 = vmatpush1.msra.mxu0 0.0
  %1724 = vmatprep.subr.mxu0 0.0
  %1725 = vmatpush1.msra.mxu0 0.0
  %1726 = vmatprep.subr.mxu0 0.0
  %1727 = vmatpush1.msra.mxu0 0.0
  %1728 = vmatprep.subr.mxu0 0.0
  %1729 = vmatpush1.msra.mxu0 0.0
  %1730 = vmatprep.subr.mxu0 0.0
  %1731 = vmatpush1.msra.mxu0 0.0
  %1732 = vmatprep.subr.mxu0 0.0
  %1733 = vmatpush1.msra.mxu0 0.0
  %1734 = vmatprep.subr.mxu0 0.0
  %1735 = vmatpush1.msra.mxu0 0.0
  %1736 = vmatprep.subr.mxu0 0.0
  %1737 = vmatpush1.msra.mxu0 0.0
  %1738 = vmatprep.subr.mxu0 0.0
  %1739 = vmatpush1.msra.mxu0 0.0
  %1740 = vmatprep.subr.mxu0 0.0
  %1741 = vmatpush1.msra.mxu0 0.0
  %1742 = vmatprep.subr.mxu0 0.0
  %1743 = vmatpush1.msra.mxu0 0.0
  %1744 = vmatprep.subr.mxu0 0.0
  %1745 = vmatpush1.msra.mxu0 0.0
  %1746 = vmatprep.subr.mxu0 0.0
  %1747 = vmatpush1.msra.mxu0 0.0
  %1748 = vmatprep.subr.mxu0 0.0
  %1749 = vmatpush1.msra.mxu0 0.0
  %1750 = vmatprep.subr.mxu0 0.0
  %1751 = vmatpush1.msra.mxu0 0.0
  %1752 = vmatprep.subr.mxu0 0.0
  %1753 = vmatpush1.msra.mxu0 0.0
  %1754 = vmatprep.subr.mxu0 0.0
  %1755 = vmatpush1.msra.mxu0 0.0
  %1756 = vmatprep.subr.mxu0 0.0
  %1757 = vmatpush1.msra.mxu0 0.0
  %1758 = vmatprep.subr.mxu0 0.0
  %1759 = vmatpush1.msra.mxu0 0.0
  %1760 = vmatprep.subr.mxu0 0.0
  %1761 = vmatpush1.msra.mxu0 0.0
  %1762 = vmatprep.subr.mxu0 0.0
  %1763 = vmatpush1.msra.mxu0 0.0
  %1764 = vmatprep.subr.mxu0 0.0
  %1765 = vmatpush1.msra.mxu0 0.0
  %1766 = vmatprep.subr.mxu0 0.0
  %1767 = vmatpush1.msra.mxu0 0.0
  %1768 = vmatprep.subr.mxu0 0.0
  %1769 = vmatpush1.msra.mxu0 0.0
  %1770 = vmatprep.mubr.f32.mxu0 0.0
  %1771 = vmatmul.mubr.f32.gmra.mrb[0].mxu0 %v1704
  %v1772 = vpop.f32.mrb[0].mxu0
  %v1773 = vadd.f32 %v484, %v1772
  %v1774 = vpop.f32.mrb[0].mxu0
  %1775 = vdwg.mxu0
  %v1776 = vxor.u32 %v1773, 2147483648
  %v1777 = vmul.f32 %v1776, 1.442695
  %v1778 = vpow.pop %v1777
  %v1779 = vadd.f32 %v1778, 1.0
  %v1780 = vrcp.pop %v1779
  %v1781 = vmul.f32 1.0, %v1780
  %v1782 = vtanh.pop %v1773
  %v1783 = vmul.f32 %v1781, %v1694
  %1785 = vrot.lane.b32.xlu0 %v1782, 100
  %v1786 = vpop.permute.xlu0 %1785
  %v1788 = vmul.f32 %v1781, %v1786
  %1790 = vrot.lane.b32.xlu0 %v1788, 14
  %v1791 = vpop.permute.xlu0 %1790
  %v1793 = vadd.f32 %v1783, %v1791
  %v1794 = vtanh.pop %v1793
  %1796 = vrot.lane.b32.xlu0 %v1794, 28
  %v1797 = vpop.permute.xlu0 %1796
  %v1799 = vmul.f32 %v1781, %v1797
  %1801 = vrot.lane.b32.xlu0 %v1799, 86
  %v1802 = vpop.permute.xlu0 %1801
  %v1803 = vsel %vm1204, %v1802, 0
  %1805 = vmatprep.subr.mxu0 0.0
  %1806 = vmatpush1.msra.mxu0 %v1202
  %1807 = vmatprep.subr.mxu0 0.0
  %1808 = vmatpush1.msra.mxu0 %v1209
  %1809 = vmatprep.subr.mxu0 0.0
  %1810 = vmatpush1.msra.mxu0 0.0
  %1811 = vmatprep.subr.mxu0 0.0
  %1812 = vmatpush1.msra.mxu0 0.0
  %1813 = vmatprep.subr.mxu0 0.0
  %1814 = vmatpush1.msra.mxu0 0.0
  %1815 = vmatprep.subr.mxu0 0.0
  %1816 = vmatpush1.msra.mxu0 0.0
  %1817 = vmatprep.subr.mxu0 0.0
  %1818 = vmatpush1.msra.mxu0 0.0
  %1819 = vmatprep.subr.mxu0 0.0
  %1820 = vmatpush1.msra.mxu0 0.0
  %1821 = vmatprep.subr.mxu0 0.0
  %1822 = vmatpush1.msra.mxu0 0.0
  %1823 = vmatprep.subr.mxu0 0.0
  %1824 = vmatpush1.msra.mxu0 0.0
  %1825 = vmatprep.subr.mxu0 0.0
  %1826 = vmatpush1.msra.mxu0 0.0
  %1827 = vmatprep.subr.mxu0 0.0
  %1828 = vmatpush1.msra.mxu0 0.0
  %1829 = vmatprep.subr.mxu0 0.0
  %1830 = vmatpush1.msra.mxu0 0.0
  %1831 = vmatprep.subr.mxu0 0.0
  %1832 = vmatpush1.msra.mxu0 0.0
  %1833 = vmatprep.subr.mxu0 0.0
  %1834 = vmatpush1.msra.mxu0 0.0
  %1835 = vmatprep.subr.mxu0 0.0
  %1836 = vmatpush1.msra.mxu0 0.0
  %1837 = vmatprep.subr.mxu0 0.0
  %1838 = vmatpush1.msra.mxu0 0.0
  %1839 = vmatprep.subr.mxu0 0.0
  %1840 = vmatpush1.msra.mxu0 0.0
  %1841 = vmatprep.subr.mxu0 0.0
  %1842 = vmatpush1.msra.mxu0 0.0
  %1843 = vmatprep.subr.mxu0 0.0
  %1844 = vmatpush1.msra.mxu0 0.0
  %1845 = vmatprep.subr.mxu0 0.0
  %1846 = vmatpush1.msra.mxu0 0.0
  %1847 = vmatprep.subr.mxu0 0.0
  %1848 = vmatpush1.msra.mxu0 0.0
  %1849 = vmatprep.subr.mxu0 0.0
  %1850 = vmatpush1.msra.mxu0 0.0
  %1851 = vmatprep.subr.mxu0 0.0
  %1852 = vmatpush1.msra.mxu0 0.0
  %1853 = vmatprep.subr.mxu0 0.0
  %1854 = vmatpush1.msra.mxu0 0.0
  %1855 = vmatprep.subr.mxu0 0.0
  %1856 = vmatpush1.msra.mxu0 0.0
  %1857 = vmatprep.subr.mxu0 0.0
  %1858 = vmatpush1.msra.mxu0 0.0
  %1859 = vmatprep.subr.mxu0 0.0
  %1860 = vmatpush1.msra.mxu0 0.0
  %1861 = vmatprep.subr.mxu0 0.0
  %1862 = vmatpush1.msra.mxu0 0.0
  %1863 = vmatprep.subr.mxu0 0.0
  %1864 = vmatpush1.msra.mxu0 0.0
  %1865 = vmatprep.subr.mxu0 0.0
  %1866 = vmatpush1.msra.mxu0 0.0
  %1867 = vmatprep.subr.mxu0 0.0
  %1868 = vmatpush1.msra.mxu0 0.0
  %1869 = vmatprep.mubr.f32.mxu0 0.0
  %1870 = vmatmul.mubr.f32.gmra.mrb[0].mxu0 %v1803
  %v1871 = vpop.f32.mrb[0].mxu0
  %v1872 = vadd.f32 %v557, %v1871
  %v1873 = vpop.f32.mrb[0].mxu0
  %1874 = vdwg.mxu0
  %v1875 = vxor.u32 %v1872, 2147483648
  %v1876 = vmul.f32 %v1875, 1.442695
  %v1877 = vpow.pop %v1876
  %v1878 = vadd.f32 %v1877, 1.0
  %v1879 = vrcp.pop %v1878
  %v1880 = vmul.f32 1.0, %v1879
  %v1881 = vtanh.pop %v1872
  %v1882 = vmul.f32 %v1880, %v1793
  %1884 = vrot.lane.b32.xlu0 %v1881, 100
  %v1885 = vpop.permute.xlu0 %1884
  %v1887 = vmul.f32 %v1880, %v1885
  %1889 = vrot.lane.b32.xlu0 %v1887, 14
  %v1890 = vpop.permute.xlu0 %1889
  %v1892 = vadd.f32 %v1882, %v1890
  %v1893 = vtanh.pop %v1892
  %1895 = vrot.lane.b32.xlu0 %v1893, 28
  %v1896 = vpop.permute.xlu0 %1895
  %v1898 = vmul.f32 %v1880, %v1896
  %1900 = vrot.lane.b32.xlu0 %v1898, 86
  %v1901 = vpop.permute.xlu0 %1900
  %v1902 = vsel %vm1204, %v1901, 0
  %1904 = vmatprep.subr.mxu0 0.0
  %1905 = vmatpush1.msra.mxu0 %v1202
  %1906 = vmatprep.subr.mxu0 0.0
  %1907 = vmatpush1.msra.mxu0 %v1209
  %1908 = vmatprep.subr.mxu0 0.0
  %1909 = vmatpush1.msra.mxu0 0.0
  %1910 = vmatprep.subr.mxu0 0.0
  %1911 = vmatpush1.msra.mxu0 0.0
  %1912 = vmatprep.subr.mxu0 0.0
  %1913 = vmatpush1.msra.mxu0 0.0
  %1914 = vmatprep.subr.mxu0 0.0
  %1915 = vmatpush1.msra.mxu0 0.0
  %1916 = vmatprep.subr.mxu0 0.0
  %1917 = vmatpush1.msra.mxu0 0.0
  %1918 = vmatprep.subr.mxu0 0.0
  %1919 = vmatpush1.msra.mxu0 0.0
  %1920 = vmatprep.subr.mxu0 0.0
  %1921 = vmatpush1.msra.mxu0 0.0
  %1922 = vmatprep.subr.mxu0 0.0
  %1923 = vmatpush1.msra.mxu0 0.0
  %1924 = vmatprep.subr.mxu0 0.0
  %1925 = vmatpush1.msra.mxu0 0.0
  %1926 = vmatprep.subr.mxu0 0.0
  %1927 = vmatpush1.msra.mxu0 0.0
  %1928 = vmatprep.subr.mxu0 0.0
  %1929 = vmatpush1.msra.mxu0 0.0
  %1930 = vmatprep.subr.mxu0 0.0
  %1931 = vmatpush1.msra.mxu0 0.0
  %1932 = vmatprep.subr.mxu0 0.0
  %1933 = vmatpush1.msra.mxu0 0.0
  %1934 = vmatprep.subr.mxu0 0.0
  %1935 = vmatpush1.msra.mxu0 0.0
  %1936 = vmatprep.subr.mxu0 0.0
  %1937 = vmatpush1.msra.mxu0 0.0
  %1938 = vmatprep.subr.mxu0 0.0
  %1939 = vmatpush1.msra.mxu0 0.0
  %1940 = vmatprep.subr.mxu0 0.0
  %1941 = vmatpush1.msra.mxu0 0.0
  %1942 = vmatprep.subr.mxu0 0.0
  %1943 = vmatpush1.msra.mxu0 0.0
  %1944 = vmatprep.subr.mxu0 0.0
  %1945 = vmatpush1.msra.mxu0 0.0
  %1946 = vmatprep.subr.mxu0 0.0
  %1947 = vmatpush1.msra.mxu0 0.0
  %1948 = vmatprep.subr.mxu0 0.0
  %1949 = vmatpush1.msra.mxu0 0.0
  %1950 = vmatprep.subr.mxu0 0.0
  %1951 = vmatpush1.msra.mxu0 0.0
  %1952 = vmatprep.subr.mxu0 0.0
  %1953 = vmatpush1.msra.mxu0 0.0
  %1954 = vmatprep.subr.mxu0 0.0
  %1955 = vmatpush1.msra.mxu0 0.0
  %1956 = vmatprep.subr.mxu0 0.0
  %1957 = vmatpush1.msra.mxu0 0.0
  %1958 = vmatprep.subr.mxu0 0.0
  %1959 = vmatpush1.msra.mxu0 0.0
  %1960 = vmatprep.subr.mxu0 0.0
  %1961 = vmatpush1.msra.mxu0 0.0
  %1962 = vmatprep.subr.mxu0 0.0
  %1963 = vmatpush1.msra.mxu0 0.0
  %1964 = vmatprep.subr.mxu0 0.0
  %1965 = vmatpush1.msra.mxu0 0.0
  %1966 = vmatprep.subr.mxu0 0.0
  %1967 = vmatpush1.msra.mxu0 0.0
  %1968 = vmatprep.mubr.f32.mxu0 0.0
  %1969 = vmatmul.mubr.f32.gmra.mrb[0].mxu0 %v1902
  %v1970 = vpop.f32.mrb[0].mxu0
  %v1971 = vadd.f32 %v630, %v1970
  %v1972 = vpop.f32.mrb[0].mxu0
  %1973 = vdwg.mxu0
  %v1974 = vxor.u32 %v1971, 2147483648
  %v1975 = vmul.f32 %v1974, 1.442695
  %v1976 = vpow.pop %v1975
  %v1977 = vadd.f32 %v1976, 1.0
  %v1978 = vrcp.pop %v1977
  %v1979 = vmul.f32 1.0, %v1978
  %v1980 = vtanh.pop %v1971
  %v1981 = vmul.f32 %v1979, %v1892
  %1983 = vrot.lane.b32.xlu0 %v1980, 100
  %v1984 = vpop.permute.xlu0 %1983
  %v1986 = vmul.f32 %v1979, %v1984
  %1988 = vrot.lane.b32.xlu0 %v1986, 14
  %v1989 = vpop.permute.xlu0 %1988
  %v1991 = vadd.f32 %v1981, %v1989
  %v1992 = vtanh.pop %v1991
  %1994 = vrot.lane.b32.xlu0 %v1992, 28
  %v1995 = vpop.permute.xlu0 %1994
  %v1997 = vmul.f32 %v1979, %v1995
  %s1998 = scalar_lea.vmem %s2, 16
  %v1999 = vld [vmem:[%s1998] sm:$0xff]
  %v2000 = vld [vmem:[%s1998 + $0x8] sm:$0x3f]
  %v2002 = vsel %vm48, %v2000, 0
  %2004 = vmatprep.subr.mxu0 0.0
  %2005 = vmatpush1.msra.mxu0 %v1999
  %2006 = vmatprep.subr.mxu0 0.0
  %2007 = vmatpush1.msra.mxu0 %v2002
  %2008 = vmatprep.subr.mxu0 0.0
  %2009 = vmatpush1.msra.mxu0 0.0
  %2010 = vmatprep.subr.mxu0 0.0
  %2011 = vmatpush1.msra.mxu0 0.0
  %2012 = vmatprep.subr.mxu0 0.0
  %2013 = vmatpush1.msra.mxu0 0.0
  %2014 = vmatprep.subr.mxu0 0.0
  %2015 = vmatpush1.msra.mxu0 0.0
  %2016 = vmatprep.subr.mxu0 0.0
  %2017 = vmatpush1.msra.mxu0 0.0
  %2018 = vmatprep.subr.mxu0 0.0
  %2019 = vmatpush1.msra.mxu0 0.0
  %2020 = vmatprep.subr.mxu0 0.0
  %2021 = vmatpush1.msra.mxu0 0.0
  %2022 = vmatprep.subr.mxu0 0.0
  %2023 = vmatpush1.msra.mxu0 0.0
  %2024 = vmatprep.subr.mxu0 0.0
  %2025 = vmatpush1.msra.mxu0 0.0
  %2026 = vmatprep.subr.mxu0 0.0
  %2027 = vmatpush1.msra.mxu0 0.0
  %2028 = vmatprep.subr.mxu0 0.0
  %2029 = vmatpush1.msra.mxu0 0.0
  %2030 = vmatprep.subr.mxu0 0.0
  %2031 = vmatpush1.msra.mxu0 0.0
  %2032 = vmatprep.subr.mxu0 0.0
  %2033 = vmatpush1.msra.mxu0 0.0
  %2034 = vmatprep.subr.mxu0 0.0
  %2035 = vmatpush1.msra.mxu0 0.0
  %2036 = vmatprep.subr.mxu0 0.0
  %2037 = vmatpush1.msra.mxu0 0.0
  %2038 = vmatprep.subr.mxu0 0.0
  %2039 = vmatpush1.msra.mxu0 0.0
  %2040 = vmatprep.subr.mxu0 0.0
  %2041 = vmatpush1.msra.mxu0 0.0
  %2042 = vmatprep.subr.mxu0 0.0
  %2043 = vmatpush1.msra.mxu0 0.0
  %2044 = vmatprep.subr.mxu0 0.0
  %2045 = vmatpush1.msra.mxu0 0.0
  %2046 = vmatprep.subr.mxu0 0.0
  %2047 = vmatpush1.msra.mxu0 0.0
  %2048 = vmatprep.subr.mxu0 0.0
  %2049 = vmatpush1.msra.mxu0 0.0
  %2050 = vmatprep.subr.mxu0 0.0
  %2051 = vmatpush1.msra.mxu0 0.0
  %2052 = vmatprep.subr.mxu0 0.0
  %2053 = vmatpush1.msra.mxu0 0.0
  %2054 = vmatprep.subr.mxu0 0.0
  %2055 = vmatpush1.msra.mxu0 0.0
  %2056 = vmatprep.subr.mxu0 0.0
  %2057 = vmatpush1.msra.mxu0 0.0
  %2058 = vmatprep.subr.mxu0 0.0
  %2059 = vmatpush1.msra.mxu0 0.0
  %2060 = vmatprep.subr.mxu0 0.0
  %2061 = vmatpush1.msra.mxu0 0.0
  %2062 = vmatprep.subr.mxu0 0.0
  %2063 = vmatpush1.msra.mxu0 0.0
  %2064 = vmatprep.subr.mxu0 0.0
  %2065 = vmatpush1.msra.mxu0 0.0
  %2066 = vmatprep.subr.mxu0 0.0
  %2067 = vmatpush1.msra.mxu0 0.0
  %2068 = vmatprep.mubr.f32.mxu0 0.0
  %2069 = vmatmul.mubr.f32.gmra.mrb[0].mxu0 %v1206
  %v2070 = vpop.f32.mrb[0].mxu0
  %v2071 = vadd.f32 %v1199, %v2070
  %v2072 = vpop.f32.mrb[0].mxu0
  %2073 = vdwg.mxu0
  %v2074 = vxor.u32 %v2071, 2147483648
  %v2075 = vmul.f32 %v2074, 1.442695
  %v2076 = vpow.pop %v2075
  %v2077 = vadd.f32 %v2076, 1.0
  %v2078 = vrcp.pop %v2077
  %v2079 = vmul.f32 1.0, %v2078
  %v2080 = vtanh.pop %v2071
  %v2081 = vmul.f32 %v2079, 0.0
  %2083 = vrot.lane.b32.xlu0 %v2080, 100
  %v2084 = vpop.permute.xlu0 %2083
  %v2086 = vmul.f32 %v2079, %v2084
  %2088 = vrot.lane.b32.xlu0 %v2086, 14
  %v2089 = vpop.permute.xlu0 %2088
  %v2091 = vadd.f32 %v2081, %v2089
  %v2092 = vtanh.pop %v2091
  %2094 = vrot.lane.b32.xlu0 %v2092, 28
  %v2095 = vpop.permute.xlu0 %2094
  %v2097 = vmul.f32 %v2079, %v2095
  %2099 = vrot.lane.b32.xlu0 %v2097, 86
  %v2100 = vpop.permute.xlu0 %2099
  %v2101 = vsel %vm1204, %v2100, 0
  %2103 = vmatprep.subr.mxu0 0.0
  %2104 = vmatpush1.msra.mxu0 %v1999
  %2105 = vmatprep.subr.mxu0 0.0
  %2106 = vmatpush1.msra.mxu0 %v2002
  %2107 = vmatprep.subr.mxu0 0.0
  %2108 = vmatpush1.msra.mxu0 0.0
  %2109 = vmatprep.subr.mxu0 0.0
  %2110 = vmatpush1.msra.mxu0 0.0
  %2111 = vmatprep.subr.mxu0 0.0
  %2112 = vmatpush1.msra.mxu0 0.0
  %2113 = vmatprep.subr.mxu0 0.0
  %2114 = vmatpush1.msra.mxu0 0.0
  %2115 = vmatprep.subr.mxu0 0.0
  %2116 = vmatpush1.msra.mxu0 0.0
  %2117 = vmatprep.subr.mxu0 0.0
  %2118 = vmatpush1.msra.mxu0 0.0
  %2119 = vmatprep.subr.mxu0 0.0
  %2120 = vmatpush1.msra.mxu0 0.0
  %2121 = vmatprep.subr.mxu0 0.0
  %2122 = vmatpush1.msra.mxu0 0.0
  %2123 = vmatprep.subr.mxu0 0.0
  %2124 = vmatpush1.msra.mxu0 0.0
  %2125 = vmatprep.subr.mxu0 0.0
  %2126 = vmatpush1.msra.mxu0 0.0
  %2127 = vmatprep.subr.mxu0 0.0
  %2128 = vmatpush1.msra.mxu0 0.0
  %2129 = vmatprep.subr.mxu0 0.0
  %2130 = vmatpush1.msra.mxu0 0.0
  %2131 = vmatprep.subr.mxu0 0.0
  %2132 = vmatpush1.msra.mxu0 0.0
  %2133 = vmatprep.subr.mxu0 0.0
  %2134 = vmatpush1.msra.mxu0 0.0
  %2135 = vmatprep.subr.mxu0 0.0
  %2136 = vmatpush1.msra.mxu0 0.0
  %2137 = vmatprep.subr.mxu0 0.0
  %2138 = vmatpush1.msra.mxu0 0.0
  %2139 = vmatprep.subr.mxu0 0.0
  %2140 = vmatpush1.msra.mxu0 0.0
  %2141 = vmatprep.subr.mxu0 0.0
  %2142 = vmatpush1.msra.mxu0 0.0
  %2143 = vmatprep.subr.mxu0 0.0
  %2144 = vmatpush1.msra.mxu0 0.0
  %2145 = vmatprep.subr.mxu0 0.0
  %2146 = vmatpush1.msra.mxu0 0.0
  %2147 = vmatprep.subr.mxu0 0.0
  %2148 = vmatpush1.msra.mxu0 0.0
  %2149 = vmatprep.subr.mxu0 0.0
  %2150 = vmatpush1.msra.mxu0 0.0
  %2151 = vmatprep.subr.mxu0 0.0
  %2152 = vmatpush1.msra.mxu0 0.0
  %2153 = vmatprep.subr.mxu0 0.0
  %2154 = vmatpush1.msra.mxu0 0.0
  %2155 = vmatprep.subr.mxu0 0.0
  %2156 = vmatpush1.msra.mxu0 0.0
  %2157 = vmatprep.subr.mxu0 0.0
  %2158 = vmatpush1.msra.mxu0 0.0
  %2159 = vmatprep.subr.mxu0 0.0
  %2160 = vmatpush1.msra.mxu0 0.0
  %2161 = vmatprep.subr.mxu0 0.0
  %2162 = vmatpush1.msra.mxu0 0.0
  %2163 = vmatprep.subr.mxu0 0.0
  %2164 = vmatpush1.msra.mxu0 0.0
  %2165 = vmatprep.subr.mxu0 0.0
  %2166 = vmatpush1.msra.mxu0 0.0
  %2167 = vmatprep.mubr.f32.mxu0 0.0
  %2168 = vmatmul.mubr.f32.gmra.mrb[0].mxu0 %v2101
  %v2169 = vpop.f32.mrb[0].mxu0
  %v2170 = vadd.f32 %v1129, %v2169
  %v2171 = vpop.f32.mrb[0].mxu0
  %2172 = vdwg.mxu0
  %v2173 = vxor.u32 %v2170, 2147483648
  %v2174 = vmul.f32 %v2173, 1.442695
  %v2175 = vpow.pop %v2174
  %v2176 = vadd.f32 %v2175, 1.0
  %v2177 = vrcp.pop %v2176
  %v2178 = vmul.f32 1.0, %v2177
  %v2179 = vtanh.pop %v2170
  %v2180 = vmul.f32 %v2178, %v2091
  %2182 = vrot.lane.b32.xlu0 %v2179, 100
  %v2183 = vpop.permute.xlu0 %2182
  %v2185 = vmul.f32 %v2178, %v2183
  %2187 = vrot.lane.b32.xlu0 %v2185, 14
  %v2188 = vpop.permute.xlu0 %2187
  %v2190 = vadd.f32 %v2180, %v2188
  %v2191 = vtanh.pop %v2190
  %2193 = vrot.lane.b32.xlu0 %v2191, 28
  %v2194 = vpop.permute.xlu0 %2193
  %v2196 = vmul.f32 %v2178, %v2194
  %2198 = vrot.lane.b32.xlu0 %v2196, 86
  %v2199 = vpop.permute.xlu0 %2198
  %v2200 = vsel %vm1204, %v2199, 0
  %2202 = vmatprep.subr.mxu0 0.0
  %2203 = vmatpush1.msra.mxu0 %v1999
  %2204 = vmatprep.subr.mxu0 0.0
  %2205 = vmatpush1.msra.mxu0 %v2002
  %2206 = vmatprep.subr.mxu0 0.0
  %2207 = vmatpush1.msra.mxu0 0.0
  %2208 = vmatprep.subr.mxu0 0.0
  %2209 = vmatpush1.msra.mxu0 0.0
  %2210 = vmatprep.subr.mxu0 0.0
  %2211 = vmatpush1.msra.mxu0 0.0
  %2212 = vmatprep.subr.mxu0 0.0
  %2213 = vmatpush1.msra.mxu0 0.0
  %2214 = vmatprep.subr.mxu0 0.0
  %2215 = vmatpush1.msra.mxu0 0.0
  %2216 = vmatprep.subr.mxu0 0.0
  %2217 = vmatpush1.msra.mxu0 0.0
  %2218 = vmatprep.subr.mxu0 0.0
  %2219 = vmatpush1.msra.mxu0 0.0
  %2220 = vmatprep.subr.mxu0 0.0
  %2221 = vmatpush1.msra.mxu0 0.0
  %2222 = vmatprep.subr.mxu0 0.0
  %2223 = vmatpush1.msra.mxu0 0.0
  %2224 = vmatprep.subr.mxu0 0.0
  %2225 = vmatpush1.msra.mxu0 0.0
  %2226 = vmatprep.subr.mxu0 0.0
  %2227 = vmatpush1.msra.mxu0 0.0
  %2228 = vmatprep.subr.mxu0 0.0
  %2229 = vmatpush1.msra.mxu0 0.0
  %2230 = vmatprep.subr.mxu0 0.0
  %2231 = vmatpush1.msra.mxu0 0.0
  %2232 = vmatprep.subr.mxu0 0.0
  %2233 = vmatpush1.msra.mxu0 0.0
  %2234 = vmatprep.subr.mxu0 0.0
  %2235 = vmatpush1.msra.mxu0 0.0
  %2236 = vmatprep.subr.mxu0 0.0
  %2237 = vmatpush1.msra.mxu0 0.0
  %2238 = vmatprep.subr.mxu0 0.0
  %2239 = vmatpush1.msra.mxu0 0.0
  %2240 = vmatprep.subr.mxu0 0.0
  %2241 = vmatpush1.msra.mxu0 0.0
  %2242 = vmatprep.subr.mxu0 0.0
  %2243 = vmatpush1.msra.mxu0 0.0
  %2244 = vmatprep.subr.mxu0 0.0
  %2245 = vmatpush1.msra.mxu0 0.0
  %2246 = vmatprep.subr.mxu0 0.0
  %2247 = vmatpush1.msra.mxu0 0.0
  %2248 = vmatprep.subr.mxu0 0.0
  %2249 = vmatpush1.msra.mxu0 0.0
  %2250 = vmatprep.subr.mxu0 0.0
  %2251 = vmatpush1.msra.mxu0 0.0
  %2252 = vmatprep.subr.mxu0 0.0
  %2253 = vmatpush1.msra.mxu0 0.0
  %2254 = vmatprep.subr.mxu0 0.0
  %2255 = vmatpush1.msra.mxu0 0.0
  %2256 = vmatprep.subr.mxu0 0.0
  %2257 = vmatpush1.msra.mxu0 0.0
  %2258 = vmatprep.subr.mxu0 0.0
  %2259 = vmatpush1.msra.mxu0 0.0
  %2260 = vmatprep.subr.mxu0 0.0
  %2261 = vmatpush1.msra.mxu0 0.0
  %2262 = vmatprep.subr.mxu0 0.0
  %2263 = vmatpush1.msra.mxu0 0.0
  %2264 = vmatprep.subr.mxu0 0.0
  %2265 = vmatpush1.msra.mxu0 0.0
  %2266 = vmatprep.mubr.f32.mxu0 0.0
  %2267 = vmatmul.mubr.f32.gmra.mrb[0].mxu0 %v2200
  %v2268 = vpop.f32.mrb[0].mxu0
  %v2269 = vadd.f32 %v1059, %v2268
  %v2270 = vpop.f32.mrb[0].mxu0
  %2271 = vdwg.mxu0
  %v2272 = vxor.u32 %v2269, 2147483648
  %v2273 = vmul.f32 %v2272, 1.442695
  %v2274 = vpow.pop %v2273
  %v2275 = vadd.f32 %v2274, 1.0
  %v2276 = vrcp.pop %v2275
  %v2277 = vmul.f32 1.0, %v2276
  %v2278 = vtanh.pop %v2269
  %v2279 = vmul.f32 %v2277, %v2190
  %2281 = vrot.lane.b32.xlu0 %v2278, 100
  %v2282 = vpop.permute.xlu0 %2281
  %v2284 = vmul.f32 %v2277, %v2282
  %2286 = vrot.lane.b32.xlu0 %v2284, 14
  %v2287 = vpop.permute.xlu0 %2286
  %v2289 = vadd.f32 %v2279, %v2287
  %v2290 = vtanh.pop %v2289
  %2292 = vrot.lane.b32.xlu0 %v2290, 28
  %v2293 = vpop.permute.xlu0 %2292
  %v2295 = vmul.f32 %v2277, %v2293
  %2297 = vrot.lane.b32.xlu0 %v2295, 86
  %v2298 = vpop.permute.xlu0 %2297
  %v2299 = vsel %vm1204, %v2298, 0
  %2301 = vmatprep.subr.mxu0 0.0
  %2302 = vmatpush1.msra.mxu0 %v1999
  %2303 = vmatprep.subr.mxu0 0.0
  %2304 = vmatpush1.msra.mxu0 %v2002
  %2305 = vmatprep.subr.mxu0 0.0
  %2306 = vmatpush1.msra.mxu0 0.0
  %2307 = vmatprep.subr.mxu0 0.0
  %2308 = vmatpush1.msra.mxu0 0.0
  %2309 = vmatprep.subr.mxu0 0.0
  %2310 = vmatpush1.msra.mxu0 0.0
  %2311 = vmatprep.subr.mxu0 0.0
  %2312 = vmatpush1.msra.mxu0 0.0
  %2313 = vmatprep.subr.mxu0 0.0
  %2314 = vmatpush1.msra.mxu0 0.0
  %2315 = vmatprep.subr.mxu0 0.0
  %2316 = vmatpush1.msra.mxu0 0.0
  %2317 = vmatprep.subr.mxu0 0.0
  %2318 = vmatpush1.msra.mxu0 0.0
  %2319 = vmatprep.subr.mxu0 0.0
  %2320 = vmatpush1.msra.mxu0 0.0
  %2321 = vmatprep.subr.mxu0 0.0
  %2322 = vmatpush1.msra.mxu0 0.0
  %2323 = vmatprep.subr.mxu0 0.0
  %2324 = vmatpush1.msra.mxu0 0.0
  %2325 = vmatprep.subr.mxu0 0.0
  %2326 = vmatpush1.msra.mxu0 0.0
  %2327 = vmatprep.subr.mxu0 0.0
  %2328 = vmatpush1.msra.mxu0 0.0
  %2329 = vmatprep.subr.mxu0 0.0
  %2330 = vmatpush1.msra.mxu0 0.0
  %2331 = vmatprep.subr.mxu0 0.0
  %2332 = vmatpush1.msra.mxu0 0.0
  %2333 = vmatprep.subr.mxu0 0.0
  %2334 = vmatpush1.msra.mxu0 0.0
  %2335 = vmatprep.subr.mxu0 0.0
  %2336 = vmatpush1.msra.mxu0 0.0
  %2337 = vmatprep.subr.mxu0 0.0
  %2338 = vmatpush1.msra.mxu0 0.0
  %2339 = vmatprep.subr.mxu0 0.0
  %2340 = vmatpush1.msra.mxu0 0.0
  %2341 = vmatprep.subr.mxu0 0.0
  %2342 = vmatpush1.msra.mxu0 0.0
  %2343 = vmatprep.subr.mxu0 0.0
  %2344 = vmatpush1.msra.mxu0 0.0
  %2345 = vmatprep.subr.mxu0 0.0
  %2346 = vmatpush1.msra.mxu0 0.0
  %2347 = vmatprep.subr.mxu0 0.0
  %2348 = vmatpush1.msra.mxu0 0.0
  %2349 = vmatprep.subr.mxu0 0.0
  %2350 = vmatpush1.msra.mxu0 0.0
  %2351 = vmatprep.subr.mxu0 0.0
  %2352 = vmatpush1.msra.mxu0 0.0
  %2353 = vmatprep.subr.mxu0 0.0
  %2354 = vmatpush1.msra.mxu0 0.0
  %2355 = vmatprep.subr.mxu0 0.0
  %2356 = vmatpush1.msra.mxu0 0.0
  %2357 = vmatprep.subr.mxu0 0.0
  %2358 = vmatpush1.msra.mxu0 0.0
  %2359 = vmatprep.subr.mxu0 0.0
  %2360 = vmatpush1.msra.mxu0 0.0
  %2361 = vmatprep.subr.mxu0 0.0
  %2362 = vmatpush1.msra.mxu0 0.0
  %2363 = vmatprep.subr.mxu0 0.0
  %2364 = vmatpush1.msra.mxu0 0.0
  %2365 = vmatprep.mubr.f32.mxu0 0.0
  %2366 = vmatmul.mubr.f32.gmra.mrb[0].mxu0 %v2299
  %v2367 = vpop.f32.mrb[0].mxu0
  %v2368 = vadd.f32 %v989, %v2367
  %v2369 = vpop.f32.mrb[0].mxu0
  %2370 = vdwg.mxu0
  %v2371 = vxor.u32 %v2368, 2147483648
  %v2372 = vmul.f32 %v2371, 1.442695
  %v2373 = vpow.pop %v2372
  %v2374 = vadd.f32 %v2373, 1.0
  %v2375 = vrcp.pop %v2374
  %v2376 = vmul.f32 1.0, %v2375
  %v2377 = vtanh.pop %v2368
  %v2378 = vmul.f32 %v2376, %v2289
  %2380 = vrot.lane.b32.xlu0 %v2377, 100
  %v2381 = vpop.permute.xlu0 %2380
  %v2383 = vmul.f32 %v2376, %v2381
  %2385 = vrot.lane.b32.xlu0 %v2383, 14
  %v2386 = vpop.permute.xlu0 %2385
  %v2388 = vadd.f32 %v2378, %v2386
  %v2389 = vtanh.pop %v2388
  %2391 = vrot.lane.b32.xlu0 %v2389, 28
  %v2392 = vpop.permute.xlu0 %2391
  %v2394 = vmul.f32 %v2376, %v2392
  %2396 = vrot.lane.b32.xlu0 %v2394, 86
  %v2397 = vpop.permute.xlu0 %2396
  %v2398 = vsel %vm1204, %v2397, 0
  %2400 = vmatprep.subr.mxu0 0.0
  %2401 = vmatpush1.msra.mxu0 %v1999
  %2402 = vmatprep.subr.mxu0 0.0
  %2403 = vmatpush1.msra.mxu0 %v2002
  %2404 = vmatprep.subr.mxu0 0.0
  %2405 = vmatpush1.msra.mxu0 0.0
  %2406 = vmatprep.subr.mxu0 0.0
  %2407 = vmatpush1.msra.mxu0 0.0
  %2408 = vmatprep.subr.mxu0 0.0
  %2409 = vmatpush1.msra.mxu0 0.0
  %2410 = vmatprep.subr.mxu0 0.0
  %2411 = vmatpush1.msra.mxu0 0.0
  %2412 = vmatprep.subr.mxu0 0.0
  %2413 = vmatpush1.msra.mxu0 0.0
  %2414 = vmatprep.subr.mxu0 0.0
  %2415 = vmatpush1.msra.mxu0 0.0
  %2416 = vmatprep.subr.mxu0 0.0
  %2417 = vmatpush1.msra.mxu0 0.0
  %2418 = vmatprep.subr.mxu0 0.0
  %2419 = vmatpush1.msra.mxu0 0.0
  %2420 = vmatprep.subr.mxu0 0.0
  %2421 = vmatpush1.msra.mxu0 0.0
  %2422 = vmatprep.subr.mxu0 0.0
  %2423 = vmatpush1.msra.mxu0 0.0
  %2424 = vmatprep.subr.mxu0 0.0
  %2425 = vmatpush1.msra.mxu0 0.0
  %2426 = vmatprep.subr.mxu0 0.0
  %2427 = vmatpush1.msra.mxu0 0.0
  %2428 = vmatprep.subr.mxu0 0.0
  %2429 = vmatpush1.msra.mxu0 0.0
  %2430 = vmatprep.subr.mxu0 0.0
  %2431 = vmatpush1.msra.mxu0 0.0
  %2432 = vmatprep.subr.mxu0 0.0
  %2433 = vmatpush1.msra.mxu0 0.0
  %2434 = vmatprep.subr.mxu0 0.0
  %2435 = vmatpush1.msra.mxu0 0.0
  %2436 = vmatprep.subr.mxu0 0.0
  %2437 = vmatpush1.msra.mxu0 0.0
  %2438 = vmatprep.subr.mxu0 0.0
  %2439 = vmatpush1.msra.mxu0 0.0
  %2440 = vmatprep.subr.mxu0 0.0
  %2441 = vmatpush1.msra.mxu0 0.0
  %2442 = vmatprep.subr.mxu0 0.0
  %2443 = vmatpush1.msra.mxu0 0.0
  %2444 = vmatprep.subr.mxu0 0.0
  %2445 = vmatpush1.msra.mxu0 0.0
  %2446 = vmatprep.subr.mxu0 0.0
  %2447 = vmatpush1.msra.mxu0 0.0
  %2448 = vmatprep.subr.mxu0 0.0
  %2449 = vmatpush1.msra.mxu0 0.0
  %2450 = vmatprep.subr.mxu0 0.0
  %2451 = vmatpush1.msra.mxu0 0.0
  %2452 = vmatprep.subr.mxu0 0.0
  %2453 = vmatpush1.msra.mxu0 0.0
  %2454 = vmatprep.subr.mxu0 0.0
  %2455 = vmatpush1.msra.mxu0 0.0
  %2456 = vmatprep.subr.mxu0 0.0
  %2457 = vmatpush1.msra.mxu0 0.0
  %2458 = vmatprep.subr.mxu0 0.0
  %2459 = vmatpush1.msra.mxu0 0.0
  %2460 = vmatprep.subr.mxu0 0.0
  %2461 = vmatpush1.msra.mxu0 0.0
  %2462 = vmatprep.subr.mxu0 0.0
  %2463 = vmatpush1.msra.mxu0 0.0
  %2464 = vmatprep.mubr.f32.mxu0 0.0
  %2465 = vmatmul.mubr.f32.gmra.mrb[0].mxu0 %v2398
  %v2466 = vpop.f32.mrb[0].mxu0
  %v2467 = vadd.f32 %v919, %v2466
  %v2468 = vpop.f32.mrb[0].mxu0
  %2469 = vdwg.mxu0
  %v2470 = vxor.u32 %v2467, 2147483648
  %v2471 = vmul.f32 %v2470, 1.442695
  %v2472 = vpow.pop %v2471
  %v2473 = vadd.f32 %v2472, 1.0
  %v2474 = vrcp.pop %v2473
  %v2475 = vmul.f32 1.0, %v2474
  %v2476 = vtanh.pop %v2467
  %v2477 = vmul.f32 %v2475, %v2388
  %2479 = vrot.lane.b32.xlu0 %v2476, 100
  %v2480 = vpop.permute.xlu0 %2479
  %v2482 = vmul.f32 %v2475, %v2480
  %2484 = vrot.lane.b32.xlu0 %v2482, 14
  %v2485 = vpop.permute.xlu0 %2484
  %v2487 = vadd.f32 %v2477, %v2485
  %v2488 = vtanh.pop %v2487
  %2490 = vrot.lane.b32.xlu0 %v2488, 28
  %v2491 = vpop.permute.xlu0 %2490
  %v2493 = vmul.f32 %v2475, %v2491
  %2495 = vrot.lane.b32.xlu0 %v2493, 86
  %v2496 = vpop.permute.xlu0 %2495
  %v2497 = vsel %vm1204, %v2496, 0
  %2499 = vmatprep.subr.mxu0 0.0
  %2500 = vmatpush1.msra.mxu0 %v1999
  %2501 = vmatprep.subr.mxu0 0.0
  %2502 = vmatpush1.msra.mxu0 %v2002
  %2503 = vmatprep.subr.mxu0 0.0
  %2504 = vmatpush1.msra.mxu0 0.0
  %2505 = vmatprep.subr.mxu0 0.0
  %2506 = vmatpush1.msra.mxu0 0.0
  %2507 = vmatprep.subr.mxu0 0.0
  %2508 = vmatpush1.msra.mxu0 0.0
  %2509 = vmatprep.subr.mxu0 0.0
  %2510 = vmatpush1.msra.mxu0 0.0
  %2511 = vmatprep.subr.mxu0 0.0
  %2512 = vmatpush1.msra.mxu0 0.0
  %2513 = vmatprep.subr.mxu0 0.0
  %2514 = vmatpush1.msra.mxu0 0.0
  %2515 = vmatprep.subr.mxu0 0.0
  %2516 = vmatpush1.msra.mxu0 0.0
  %2517 = vmatprep.subr.mxu0 0.0
  %2518 = vmatpush1.msra.mxu0 0.0
  %2519 = vmatprep.subr.mxu0 0.0
  %2520 = vmatpush1.msra.mxu0 0.0
  %2521 = vmatprep.subr.mxu0 0.0
  %2522 = vmatpush1.msra.mxu0 0.0
  %2523 = vmatprep.subr.mxu0 0.0
  %2524 = vmatpush1.msra.mxu0 0.0
  %2525 = vmatprep.subr.mxu0 0.0
  %2526 = vmatpush1.msra.mxu0 0.0
  %2527 = vmatprep.subr.mxu0 0.0
  %2528 = vmatpush1.msra.mxu0 0.0
  %2529 = vmatprep.subr.mxu0 0.0
  %2530 = vmatpush1.msra.mxu0 0.0
  %2531 = vmatprep.subr.mxu0 0.0
  %2532 = vmatpush1.msra.mxu0 0.0
  %2533 = vmatprep.subr.mxu0 0.0
  %2534 = vmatpush1.msra.mxu0 0.0
  %2535 = vmatprep.subr.mxu0 0.0
  %2536 = vmatpush1.msra.mxu0 0.0
  %2537 = vmatprep.subr.mxu0 0.0
  %2538 = vmatpush1.msra.mxu0 0.0
  %2539 = vmatprep.subr.mxu0 0.0
  %2540 = vmatpush1.msra.mxu0 0.0
  %2541 = vmatprep.subr.mxu0 0.0
  %2542 = vmatpush1.msra.mxu0 0.0
  %2543 = vmatprep.subr.mxu0 0.0
  %2544 = vmatpush1.msra.mxu0 0.0
  %2545 = vmatprep.subr.mxu0 0.0
  %2546 = vmatpush1.msra.mxu0 0.0
  %2547 = vmatprep.subr.mxu0 0.0
  %2548 = vmatpush1.msra.mxu0 0.0
  %2549 = vmatprep.subr.mxu0 0.0
  %2550 = vmatpush1.msra.mxu0 0.0
  %2551 = vmatprep.subr.mxu0 0.0
  %2552 = vmatpush1.msra.mxu0 0.0
  %2553 = vmatprep.subr.mxu0 0.0
  %2554 = vmatpush1.msra.mxu0 0.0
  %2555 = vmatprep.subr.mxu0 0.0
  %2556 = vmatpush1.msra.mxu0 0.0
  %2557 = vmatprep.subr.mxu0 0.0
  %2558 = vmatpush1.msra.mxu0 0.0
  %2559 = vmatprep.subr.mxu0 0.0
  %2560 = vmatpush1.msra.mxu0 0.0
  %2561 = vmatprep.subr.mxu0 0.0
  %2562 = vmatpush1.msra.mxu0 0.0
  %2563 = vmatprep.mubr.f32.mxu0 0.0
  %2564 = vmatmul.mubr.f32.gmra.mrb[0].mxu0 %v2497
  %v2565 = vpop.f32.mrb[0].mxu0
  %v2566 = vadd.f32 %v849, %v2565
  %v2567 = vpop.f32.mrb[0].mxu0
  %2568 = vdwg.mxu0
  %v2569 = vxor.u32 %v2566, 2147483648
  %v2570 = vmul.f32 %v2569, 1.442695
  %v2571 = vpow.pop %v2570
  %v2572 = vadd.f32 %v2571, 1.0
  %v2573 = vrcp.pop %v2572
  %v2574 = vmul.f32 1.0, %v2573
  %v2575 = vtanh.pop %v2566
  %v2576 = vmul.f32 %v2574, %v2487
  %2578 = vrot.lane.b32.xlu0 %v2575, 100
  %v2579 = vpop.permute.xlu0 %2578
  %v2581 = vmul.f32 %v2574, %v2579
  %2583 = vrot.lane.b32.xlu0 %v2581, 14
  %v2584 = vpop.permute.xlu0 %2583
  %v2586 = vadd.f32 %v2576, %v2584
  %v2587 = vtanh.pop %v2586
  %2589 = vrot.lane.b32.xlu0 %v2587, 28
  %v2590 = vpop.permute.xlu0 %2589
  %v2592 = vmul.f32 %v2574, %v2590
  %2594 = vrot.lane.b32.xlu0 %v2592, 86
  %v2595 = vpop.permute.xlu0 %2594
  %v2596 = vsel %vm1204, %v2595, 0
  %2598 = vmatprep.subr.mxu0 0.0
  %2599 = vmatpush1.msra.mxu0 %v1999
  %2600 = vmatprep.subr.mxu0 0.0
  %2601 = vmatpush1.msra.mxu0 %v2002
  %2602 = vmatprep.subr.mxu0 0.0
  %2603 = vmatpush1.msra.mxu0 0.0
  %2604 = vmatprep.subr.mxu0 0.0
  %2605 = vmatpush1.msra.mxu0 0.0
  %2606 = vmatprep.subr.mxu0 0.0
  %2607 = vmatpush1.msra.mxu0 0.0
  %2608 = vmatprep.subr.mxu0 0.0
  %2609 = vmatpush1.msra.mxu0 0.0
  %2610 = vmatprep.subr.mxu0 0.0
  %2611 = vmatpush1.msra.mxu0 0.0
  %2612 = vmatprep.subr.mxu0 0.0
  %2613 = vmatpush1.msra.mxu0 0.0
  %2614 = vmatprep.subr.mxu0 0.0
  %2615 = vmatpush1.msra.mxu0 0.0
  %2616 = vmatprep.subr.mxu0 0.0
  %2617 = vmatpush1.msra.mxu0 0.0
  %2618 = vmatprep.subr.mxu0 0.0
  %2619 = vmatpush1.msra.mxu0 0.0
  %2620 = vmatprep.subr.mxu0 0.0
  %2621 = vmatpush1.msra.mxu0 0.0
  %2622 = vmatprep.subr.mxu0 0.0
  %2623 = vmatpush1.msra.mxu0 0.0
  %2624 = vmatprep.subr.mxu0 0.0
  %2625 = vmatpush1.msra.mxu0 0.0
  %2626 = vmatprep.subr.mxu0 0.0
  %2627 = vmatpush1.msra.mxu0 0.0
  %2628 = vmatprep.subr.mxu0 0.0
  %2629 = vmatpush1.msra.mxu0 0.0
  %2630 = vmatprep.subr.mxu0 0.0
  %2631 = vmatpush1.msra.mxu0 0.0
  %2632 = vmatprep.subr.mxu0 0.0
  %2633 = vmatpush1.msra.mxu0 0.0
  %2634 = vmatprep.subr.mxu0 0.0
  %2635 = vmatpush1.msra.mxu0 0.0
  %2636 = vmatprep.subr.mxu0 0.0
  %2637 = vmatpush1.msra.mxu0 0.0
  %2638 = vmatprep.subr.mxu0 0.0
  %2639 = vmatpush1.msra.mxu0 0.0
  %2640 = vmatprep.subr.mxu0 0.0
  %2641 = vmatpush1.msra.mxu0 0.0
  %2642 = vmatprep.subr.mxu0 0.0
  %2643 = vmatpush1.msra.mxu0 0.0
  %2644 = vmatprep.subr.mxu0 0.0
  %2645 = vmatpush1.msra.mxu0 0.0
  %2646 = vmatprep.subr.mxu0 0.0
  %2647 = vmatpush1.msra.mxu0 0.0
  %2648 = vmatprep.subr.mxu0 0.0
  %2649 = vmatpush1.msra.mxu0 0.0
  %2650 = vmatprep.subr.mxu0 0.0
  %2651 = vmatpush1.msra.mxu0 0.0
  %2652 = vmatprep.subr.mxu0 0.0
  %2653 = vmatpush1.msra.mxu0 0.0
  %2654 = vmatprep.subr.mxu0 0.0
  %2655 = vmatpush1.msra.mxu0 0.0
  %2656 = vmatprep.subr.mxu0 0.0
  %2657 = vmatpush1.msra.mxu0 0.0
  %2658 = vmatprep.subr.mxu0 0.0
  %2659 = vmatpush1.msra.mxu0 0.0
  %2660 = vmatprep.subr.mxu0 0.0
  %2661 = vmatpush1.msra.mxu0 0.0
  %2662 = vmatprep.mubr.f32.mxu0 0.0
  %2663 = vmatmul.mubr.f32.gmra.mrb[0].mxu0 %v2596
  %v2664 = vpop.f32.mrb[0].mxu0
  %v2665 = vadd.f32 %v779, %v2664
  %v2666 = vpop.f32.mrb[0].mxu0
  %2667 = vdwg.mxu0
  %v2668 = vxor.u32 %v2665, 2147483648
  %v2669 = vmul.f32 %v2668, 1.442695
  %v2670 = vpow.pop %v2669
  %v2671 = vadd.f32 %v2670, 1.0
  %v2672 = vrcp.pop %v2671
  %v2673 = vmul.f32 1.0, %v2672
  %v2674 = vtanh.pop %v2665
  %v2675 = vmul.f32 %v2673, %v2586
  %2677 = vrot.lane.b32.xlu0 %v2674, 100
  %v2678 = vpop.permute.xlu0 %2677
  %v2680 = vmul.f32 %v2673, %v2678
  %2682 = vrot.lane.b32.xlu0 %v2680, 14
  %v2683 = vpop.permute.xlu0 %2682
  %v2685 = vadd.f32 %v2675, %v2683
  %v2686 = vtanh.pop %v2685
  %2688 = vrot.lane.b32.xlu0 %v2686, 28
  %v2689 = vpop.permute.xlu0 %2688
  %v2691 = vmul.f32 %v2673, %v2689
  %2693 = vrot.lane.b32.xlu0 %v2691, 86
  %v2694 = vpop.permute.xlu0 %2693
  %v2695 = vsel %vm1204, %v2694, 0
  %2697 = vmatprep.subr.mxu0 0.0
  %2698 = vmatpush1.msra.mxu0 %v1999
  %2699 = vmatprep.subr.mxu0 0.0
  %2700 = vmatpush1.msra.mxu0 %v2002
  %2701 = vmatprep.subr.mxu0 0.0
  %2702 = vmatpush1.msra.mxu0 0.0
  %2703 = vmatprep.subr.mxu0 0.0
  %2704 = vmatpush1.msra.mxu0 0.0
  %2705 = vmatprep.subr.mxu0 0.0
  %2706 = vmatpush1.msra.mxu0 0.0
  %2707 = vmatprep.subr.mxu0 0.0
  %2708 = vmatpush1.msra.mxu0 0.0
  %2709 = vmatprep.subr.mxu0 0.0
  %2710 = vmatpush1.msra.mxu0 0.0
  %2711 = vmatprep.subr.mxu0 0.0
  %2712 = vmatpush1.msra.mxu0 0.0
  %2713 = vmatprep.subr.mxu0 0.0
  %2714 = vmatpush1.msra.mxu0 0.0
  %2715 = vmatprep.subr.mxu0 0.0
  %2716 = vmatpush1.msra.mxu0 0.0
  %2717 = vmatprep.subr.mxu0 0.0
  %2718 = vmatpush1.msra.mxu0 0.0
  %2719 = vmatprep.subr.mxu0 0.0
  %2720 = vmatpush1.msra.mxu0 0.0
  %2721 = vmatprep.subr.mxu0 0.0
  %2722 = vmatpush1.msra.mxu0 0.0
  %2723 = vmatprep.subr.mxu0 0.0
  %2724 = vmatpush1.msra.mxu0 0.0
  %2725 = vmatprep.subr.mxu0 0.0
  %2726 = vmatpush1.msra.mxu0 0.0
  %2727 = vmatprep.subr.mxu0 0.0
  %2728 = vmatpush1.msra.mxu0 0.0
  %2729 = vmatprep.subr.mxu0 0.0
  %2730 = vmatpush1.msra.mxu0 0.0
  %2731 = vmatprep.subr.mxu0 0.0
  %2732 = vmatpush1.msra.mxu0 0.0
  %2733 = vmatprep.subr.mxu0 0.0
  %2734 = vmatpush1.msra.mxu0 0.0
  %2735 = vmatprep.subr.mxu0 0.0
  %2736 = vmatpush1.msra.mxu0 0.0
  %2737 = vmatprep.subr.mxu0 0.0
  %2738 = vmatpush1.msra.mxu0 0.0
  %2739 = vmatprep.subr.mxu0 0.0
  %2740 = vmatpush1.msra.mxu0 0.0
  %2741 = vmatprep.subr.mxu0 0.0
  %2742 = vmatpush1.msra.mxu0 0.0
  %2743 = vmatprep.subr.mxu0 0.0
  %2744 = vmatpush1.msra.mxu0 0.0
  %2745 = vmatprep.subr.mxu0 0.0
  %2746 = vmatpush1.msra.mxu0 0.0
  %2747 = vmatprep.subr.mxu0 0.0
  %2748 = vmatpush1.msra.mxu0 0.0
  %2749 = vmatprep.subr.mxu0 0.0
  %2750 = vmatpush1.msra.mxu0 0.0
  %2751 = vmatprep.subr.mxu0 0.0
  %2752 = vmatpush1.msra.mxu0 0.0
  %2753 = vmatprep.subr.mxu0 0.0
  %2754 = vmatpush1.msra.mxu0 0.0
  %2755 = vmatprep.subr.mxu0 0.0
  %2756 = vmatpush1.msra.mxu0 0.0
  %2757 = vmatprep.subr.mxu0 0.0
  %2758 = vmatpush1.msra.mxu0 0.0
  %2759 = vmatprep.subr.mxu0 0.0
  %2760 = vmatpush1.msra.mxu0 0.0
  %2761 = vmatprep.mubr.f32.mxu0 0.0
  %2762 = vmatmul.mubr.f32.gmra.mrb[0].mxu0 %v2695
  %v2763 = vpop.f32.mrb[0].mxu0
  %v2764 = vadd.f32 %v709, %v2763
  %v2765 = vpop.f32.mrb[0].mxu0
  %2766 = vdwg.mxu0
  %v2767 = vxor.u32 %v2764, 2147483648
  %v2768 = vmul.f32 %v2767, 1.442695
  %v2769 = vpow.pop %v2768
  %v2770 = vadd.f32 %v2769, 1.0
  %v2771 = vrcp.pop %v2770
  %v2772 = vmul.f32 1.0, %v2771
  %v2773 = vtanh.pop %v2764
  %v2774 = vmul.f32 %v2772, %v2685
  %2776 = vrot.lane.b32.xlu0 %v2773, 100
  %v2777 = vpop.permute.xlu0 %2776
  %v2779 = vmul.f32 %v2772, %v2777
  %2781 = vrot.lane.b32.xlu0 %v2779, 14
  %v2782 = vpop.permute.xlu0 %2781
  %v2784 = vadd.f32 %v2774, %v2782
  %v2785 = vtanh.pop %v2784
  %2787 = vrot.lane.b32.xlu0 %v2785, 28
  %v2788 = vpop.permute.xlu0 %2787
  %v2790 = vmul.f32 %v2772, %v2788
  %s2791 = scalar_lea.vmem %s2, 32
  %v2792 = vld [vmem:[%s2791] sm:$0xff]
  %v2793 = vld [vmem:[%s2791 + $0x8] sm:$0x3f]
  %s2794 = scalar_lea.vmem %s2, 48
  %v2795 = vld [vmem:[%s2794] sm:$0xff]
  %v2796 = vld [vmem:[%s2794 + $0x8] sm:$0x3f]
  %s2797 = scalar_lea.vmem %s2, 64
  %v2798 = vld [vmem:[%s2797] sm:$0xff]
  %v2799 = vld [vmem:[%s2797 + $0x8] sm:$0x3f]
  %s2800 = scalar_lea.vmem %s2, 80
  %v2801 = vld [vmem:[%s2800] sm:$0xff]
  %v2802 = vld [vmem:[%s2800 + $0x8] sm:$0x3f]
  %s2803 = scalar_lea.vmem %s2, 96
  %v2804 = vld [vmem:[%s2803] sm:$0xff]
  %v2805 = vld [vmem:[%s2803 + $0x8] sm:$0x3f]
  %s2806 = scalar_lea.vmem %s2, 112
  %v2807 = vld [vmem:[%s2806] sm:$0xff]
  %v2808 = vld [vmem:[%s2806 + $0x8] sm:$0x3f]
  %s2809 = scalar_lea.vmem %s3, 2
  %v2810 = vld [vmem:[%s2809] sm:$0x1]
  %s2811 = scalar_lea.vmem %s3, 3
  %v2812 = vld [vmem:[%s2811] sm:$0x1]
  %2814 = vrot.lane.b32.xlu0 %v2790, 86
  %v2815 = vpop.permute.xlu0 %2814
  %v2816 = vsel %vm1204, %v2815, 0
  %v2819 = vsel %vm48, %v2796, 0
  %2821 = vmatprep.subr.mxu0 0.0
  %2822 = vmatpush1.msra.mxu0 %v2795
  %2823 = vmatprep.subr.mxu0 0.0
  %2824 = vmatpush1.msra.mxu0 %v2819
  %2825 = vmatprep.subr.mxu0 0.0
  %2826 = vmatpush1.msra.mxu0 0.0
  %2827 = vmatprep.subr.mxu0 0.0
  %2828 = vmatpush1.msra.mxu0 0.0
  %2829 = vmatprep.subr.mxu0 0.0
  %2830 = vmatpush1.msra.mxu0 0.0
  %2831 = vmatprep.subr.mxu0 0.0
  %2832 = vmatpush1.msra.mxu0 0.0
  %2833 = vmatprep.subr.mxu0 0.0
  %2834 = vmatpush1.msra.mxu0 0.0
  %2835 = vmatprep.subr.mxu0 0.0
  %2836 = vmatpush1.msra.mxu0 0.0
  %2837 = vmatprep.subr.mxu0 0.0
  %2838 = vmatpush1.msra.mxu0 0.0
  %2839 = vmatprep.subr.mxu0 0.0
  %2840 = vmatpush1.msra.mxu0 0.0
  %2841 = vmatprep.subr.mxu0 0.0
  %2842 = vmatpush1.msra.mxu0 0.0
  %2843 = vmatprep.subr.mxu0 0.0
  %2844 = vmatpush1.msra.mxu0 0.0
  %2845 = vmatprep.subr.mxu0 0.0
  %2846 = vmatpush1.msra.mxu0 0.0
  %2847 = vmatprep.subr.mxu0 0.0
  %2848 = vmatpush1.msra.mxu0 0.0
  %2849 = vmatprep.subr.mxu0 0.0
  %2850 = vmatpush1.msra.mxu0 0.0
  %2851 = vmatprep.subr.mxu0 0.0
  %2852 = vmatpush1.msra.mxu0 0.0
  %2853 = vmatprep.subr.mxu0 0.0
  %2854 = vmatpush1.msra.mxu0 0.0
  %2855 = vmatprep.subr.mxu0 0.0
  %2856 = vmatpush1.msra.mxu0 0.0
  %2857 = vmatprep.subr.mxu0 0.0
  %2858 = vmatpush1.msra.mxu0 0.0
  %2859 = vmatprep.subr.mxu0 0.0
  %2860 = vmatpush1.msra.mxu0 0.0
  %2861 = vmatprep.subr.mxu0 0.0
  %2862 = vmatpush1.msra.mxu0 0.0
  %2863 = vmatprep.subr.mxu0 0.0
  %2864 = vmatpush1.msra.mxu0 0.0
  %2865 = vmatprep.subr.mxu0 0.0
  %2866 = vmatpush1.msra.mxu0 0.0
  %2867 = vmatprep.subr.mxu0 0.0
  %2868 = vmatpush1.msra.mxu0 0.0
  %2869 = vmatprep.subr.mxu0 0.0
  %2870 = vmatpush1.msra.mxu0 0.0
  %2871 = vmatprep.subr.mxu0 0.0
  %2872 = vmatpush1.msra.mxu0 0.0
  %2873 = vmatprep.subr.mxu0 0.0
  %2874 = vmatpush1.msra.mxu0 0.0
  %2875 = vmatprep.subr.mxu0 0.0
  %2876 = vmatpush1.msra.mxu0 0.0
  %2877 = vmatprep.subr.mxu0 0.0
  %2878 = vmatpush1.msra.mxu0 0.0
  %2879 = vmatprep.subr.mxu0 0.0
  %2880 = vmatpush1.msra.mxu0 0.0
  %2881 = vmatprep.subr.mxu0 0.0
  %2882 = vmatpush1.msra.mxu0 0.0
  %2883 = vmatprep.subr.mxu0 0.0
  %2884 = vmatpush1.msra.mxu0 0.0
  %2885 = vmatprep.mubr.f32.mxu0 0.0
  %2886 = vmatmul.mubr.f32.gmra.mrb[0].mxu0 %v2816
  %v2887 = vpop.f32.mrb[0].mxu0
  %v2888 = vadd.f32 0.0, %v2887
  %v2889 = vpop.f32.mrb[0].mxu0
  %2890 = vdwg.mxu0
  %v2892 = vsel %vm48, %v2793, 0
  %2894 = vmatprep.subr.mxu0 0.0
  %2895 = vmatpush1.msra.mxu0 %v2792
  %2896 = vmatprep.subr.mxu0 0.0
  %2897 = vmatpush1.msra.mxu0 %v2892
  %2898 = vmatprep.subr.mxu0 0.0
  %2899 = vmatpush1.msra.mxu0 0.0
  %2900 = vmatprep.subr.mxu0 0.0
  %2901 = vmatpush1.msra.mxu0 0.0
  %2902 = vmatprep.subr.mxu0 0.0
  %2903 = vmatpush1.msra.mxu0 0.0
  %2904 = vmatprep.subr.mxu0 0.0
  %2905 = vmatpush1.msra.mxu0 0.0
  %2906 = vmatprep.subr.mxu0 0.0
  %2907 = vmatpush1.msra.mxu0 0.0
  %2908 = vmatprep.subr.mxu0 0.0
  %2909 = vmatpush1.msra.mxu0 0.0
  %2910 = vmatprep.subr.mxu0 0.0
  %2911 = vmatpush1.msra.mxu0 0.0
  %2912 = vmatprep.subr.mxu0 0.0
  %2913 = vmatpush1.msra.mxu0 0.0
  %2914 = vmatprep.subr.mxu0 0.0
  %2915 = vmatpush1.msra.mxu0 0.0
  %2916 = vmatprep.subr.mxu0 0.0
  %2917 = vmatpush1.msra.mxu0 0.0
  %2918 = vmatprep.subr.mxu0 0.0
  %2919 = vmatpush1.msra.mxu0 0.0
  %2920 = vmatprep.subr.mxu0 0.0
  %2921 = vmatpush1.msra.mxu0 0.0
  %2922 = vmatprep.subr.mxu0 0.0
  %2923 = vmatpush1.msra.mxu0 0.0
  %2924 = vmatprep.subr.mxu0 0.0
  %2925 = vmatpush1.msra.mxu0 0.0
  %2926 = vmatprep.subr.mxu0 0.0
  %2927 = vmatpush1.msra.mxu0 0.0
  %2928 = vmatprep.subr.mxu0 0.0
  %2929 = vmatpush1.msra.mxu0 0.0
  %2930 = vmatprep.subr.mxu0 0.0
  %2931 = vmatpush1.msra.mxu0 0.0
  %2932 = vmatprep.subr.mxu0 0.0
  %2933 = vmatpush1.msra.mxu0 0.0
  %2934 = vmatprep.subr.mxu0 0.0
  %2935 = vmatpush1.msra.mxu0 0.0
  %2936 = vmatprep.subr.mxu0 0.0
  %2937 = vmatpush1.msra.mxu0 0.0
  %2938 = vmatprep.subr.mxu0 0.0
  %2939 = vmatpush1.msra.mxu0 0.0
  %2940 = vmatprep.subr.mxu0 0.0
  %2941 = vmatpush1.msra.mxu0 0.0
  %2942 = vmatprep.subr.mxu0 0.0
  %2943 = vmatpush1.msra.mxu0 0.0
  %2944 = vmatprep.subr.mxu0 0.0
  %2945 = vmatpush1.msra.mxu0 0.0
  %2946 = vmatprep.subr.mxu0 0.0
  %2947 = vmatpush1.msra.mxu0 0.0
  %2948 = vmatprep.subr.mxu0 0.0
  %2949 = vmatpush1.msra.mxu0 0.0
  %2950 = vmatprep.subr.mxu0 0.0
  %2951 = vmatpush1.msra.mxu0 0.0
  %2952 = vmatprep.subr.mxu0 0.0
  %2953 = vmatpush1.msra.mxu0 0.0
  %2954 = vmatprep.subr.mxu0 0.0
  %2955 = vmatpush1.msra.mxu0 0.0
  %2956 = vmatprep.subr.mxu0 0.0
  %2957 = vmatpush1.msra.mxu0 0.0
  %2958 = vmatprep.mubr.f32.mxu0 0.0
  %2959 = vmatmul.mubr.f32.gmra.mrb[0].mxu0 %v1308
  %v2960 = vpop.f32.mrb[0].mxu0
  %v2961 = vadd.f32 %v2888, %v2960
  %v2962 = vpop.f32.mrb[0].mxu0
  %2963 = vdwg.mxu0
  %v2965 = vlaneseq
  %v2966 = vshrl.u32 %v2965, 7
  %v2967 = vsub.s32 0, %v2966
  %v2968 = vrot.slane %v2810, %v2967
  %v2970 = vadd.f32 %v2961, %v2968
  %2971 = vmatprep.subr.mxu0 0.0
  %2972 = vmatpush1.msra.mxu0 %v2795
  %2973 = vmatprep.subr.mxu0 0.0
  %2974 = vmatpush1.msra.mxu0 %v2819
  %2975 = vmatprep.subr.mxu0 0.0
  %2976 = vmatpush1.msra.mxu0 0.0
  %2977 = vmatprep.subr.mxu0 0.0
  %2978 = vmatpush1.msra.mxu0 0.0
  %2979 = vmatprep.subr.mxu0 0.0
  %2980 = vmatpush1.msra.mxu0 0.0
  %2981 = vmatprep.subr.mxu0 0.0
  %2982 = vmatpush1.msra.mxu0 0.0
  %2983 = vmatprep.subr.mxu0 0.0
  %2984 = vmatpush1.msra.mxu0 0.0
  %2985 = vmatprep.subr.mxu0 0.0
  %2986 = vmatpush1.msra.mxu0 0.0
  %2987 = vmatprep.subr.mxu0 0.0
  %2988 = vmatpush1.msra.mxu0 0.0
  %2989 = vmatprep.subr.mxu0 0.0
  %2990 = vmatpush1.msra.mxu0 0.0
  %2991 = vmatprep.subr.mxu0 0.0
  %2992 = vmatpush1.msra.mxu0 0.0
  %2993 = vmatprep.subr.mxu0 0.0
  %2994 = vmatpush1.msra.mxu0 0.0
  %2995 = vmatprep.subr.mxu0 0.0
  %2996 = vmatpush1.msra.mxu0 0.0
  %2997 = vmatprep.subr.mxu0 0.0
  %2998 = vmatpush1.msra.mxu0 0.0
  %2999 = vmatprep.subr.mxu0 0.0
  %3000 = vmatpush1.msra.mxu0 0.0
  %3001 = vmatprep.subr.mxu0 0.0
  %3002 = vmatpush1.msra.mxu0 0.0
  %3003 = vmatprep.subr.mxu0 0.0
  %3004 = vmatpush1.msra.mxu0 0.0
  %3005 = vmatprep.subr.mxu0 0.0
  %3006 = vmatpush1.msra.mxu0 0.0
  %3007 = vmatprep.subr.mxu0 0.0
  %3008 = vmatpush1.msra.mxu0 0.0
  %3009 = vmatprep.subr.mxu0 0.0
  %3010 = vmatpush1.msra.mxu0 0.0
  %3011 = vmatprep.subr.mxu0 0.0
  %3012 = vmatpush1.msra.mxu0 0.0
  %3013 = vmatprep.subr.mxu0 0.0
  %3014 = vmatpush1.msra.mxu0 0.0
  %3015 = vmatprep.subr.mxu0 0.0
  %3016 = vmatpush1.msra.mxu0 0.0
  %3017 = vmatprep.subr.mxu0 0.0
  %3018 = vmatpush1.msra.mxu0 0.0
  %3019 = vmatprep.subr.mxu0 0.0
  %3020 = vmatpush1.msra.mxu0 0.0
  %3021 = vmatprep.subr.mxu0 0.0
  %3022 = vmatpush1.msra.mxu0 0.0
  %3023 = vmatprep.subr.mxu0 0.0
  %3024 = vmatpush1.msra.mxu0 0.0
  %3025 = vmatprep.subr.mxu0 0.0
  %3026 = vmatpush1.msra.mxu0 0.0
  %3027 = vmatprep.subr.mxu0 0.0
  %3028 = vmatpush1.msra.mxu0 0.0
  %3029 = vmatprep.subr.mxu0 0.0
  %3030 = vmatpush1.msra.mxu0 0.0
  %3031 = vmatprep.subr.mxu0 0.0
  %3032 = vmatpush1.msra.mxu0 0.0
  %3033 = vmatprep.subr.mxu0 0.0
  %3034 = vmatpush1.msra.mxu0 0.0
  %3035 = vmatprep.mubr.f32.mxu0 0.0
  %3036 = vmatmul.mubr.f32.gmra.mrb[0].mxu0 %v2695
  %v3037 = vpop.f32.mrb[0].mxu0
  %v3038 = vadd.f32 0.0, %v3037
  %v3039 = vpop.f32.mrb[0].mxu0
  %3040 = vdwg.mxu0
  %3041 = vmatprep.subr.mxu0 0.0
  %3042 = vmatpush1.msra.mxu0 %v2792
  %3043 = vmatprep.subr.mxu0 0.0
  %3044 = vmatpush1.msra.mxu0 %v2892
  %3045 = vmatprep.subr.mxu0 0.0
  %3046 = vmatpush1.msra.mxu0 0.0
  %3047 = vmatprep.subr.mxu0 0.0
  %3048 = vmatpush1.msra.mxu0 0.0
  %3049 = vmatprep.subr.mxu0 0.0
  %3050 = vmatpush1.msra.mxu0 0.0
  %3051 = vmatprep.subr.mxu0 0.0
  %3052 = vmatpush1.msra.mxu0 0.0
  %3053 = vmatprep.subr.mxu0 0.0
  %3054 = vmatpush1.msra.mxu0 0.0
  %3055 = vmatprep.subr.mxu0 0.0
  %3056 = vmatpush1.msra.mxu0 0.0
  %3057 = vmatprep.subr.mxu0 0.0
  %3058 = vmatpush1.msra.mxu0 0.0
  %3059 = vmatprep.subr.mxu0 0.0
  %3060 = vmatpush1.msra.mxu0 0.0
  %3061 = vmatprep.subr.mxu0 0.0
  %3062 = vmatpush1.msra.mxu0 0.0
  %3063 = vmatprep.subr.mxu0 0.0
  %3064 = vmatpush1.msra.mxu0 0.0
  %3065 = vmatprep.subr.mxu0 0.0
  %3066 = vmatpush1.msra.mxu0 0.0
  %3067 = vmatprep.subr.mxu0 0.0
  %3068 = vmatpush1.msra.mxu0 0.0
  %3069 = vmatprep.subr.mxu0 0.0
  %3070 = vmatpush1.msra.mxu0 0.0
  %3071 = vmatprep.subr.mxu0 0.0
  %3072 = vmatpush1.msra.mxu0 0.0
  %3073 = vmatprep.subr.mxu0 0.0
  %3074 = vmatpush1.msra.mxu0 0.0
  %3075 = vmatprep.subr.mxu0 0.0
  %3076 = vmatpush1.msra.mxu0 0.0
  %3077 = vmatprep.subr.mxu0 0.0
  %3078 = vmatpush1.msra.mxu0 0.0
  %3079 = vmatprep.subr.mxu0 0.0
  %3080 = vmatpush1.msra.mxu0 0.0
  %3081 = vmatprep.subr.mxu0 0.0
  %3082 = vmatpush1.msra.mxu0 0.0
  %3083 = vmatprep.subr.mxu0 0.0
  %3084 = vmatpush1.msra.mxu0 0.0
  %3085 = vmatprep.subr.mxu0 0.0
  %3086 = vmatpush1.msra.mxu0 0.0
  %3087 = vmatprep.subr.mxu0 0.0
  %3088 = vmatpush1.msra.mxu0 0.0
  %3089 = vmatprep.subr.mxu0 0.0
  %3090 = vmatpush1.msra.mxu0 0.0
  %3091 = vmatprep.subr.mxu0 0.0
  %3092 = vmatpush1.msra.mxu0 0.0
  %3093 = vmatprep.subr.mxu0 0.0
  %3094 = vmatpush1.msra.mxu0 0.0
  %3095 = vmatprep.subr.mxu0 0.0
  %3096 = vmatpush1.msra.mxu0 0.0
  %3097 = vmatprep.subr.mxu0 0.0
  %3098 = vmatpush1.msra.mxu0 0.0
  %3099 = vmatprep.subr.mxu0 0.0
  %3100 = vmatpush1.msra.mxu0 0.0
  %3101 = vmatprep.subr.mxu0 0.0
  %3102 = vmatpush1.msra.mxu0 0.0
  %3103 = vmatprep.subr.mxu0 0.0
  %3104 = vmatpush1.msra.mxu0 0.0
  %3105 = vmatprep.mubr.f32.mxu0 0.0
  %3106 = vmatmul.mubr.f32.gmra.mrb[0].mxu0 %v1407
  %v3107 = vpop.f32.mrb[0].mxu0
  %v3108 = vadd.f32 %v3038, %v3107
  %v3109 = vpop.f32.mrb[0].mxu0
  %3110 = vdwg.mxu0
  %v3111 = vadd.f32 %v3108, %v2968
  %3112 = vmatprep.subr.mxu0 0.0
  %3113 = vmatpush1.msra.mxu0 %v2795
  %3114 = vmatprep.subr.mxu0 0.0
  %3115 = vmatpush1.msra.mxu0 %v2819
  %3116 = vmatprep.subr.mxu0 0.0
  %3117 = vmatpush1.msra.mxu0 0.0
  %3118 = vmatprep.subr.mxu0 0.0
  %3119 = vmatpush1.msra.mxu0 0.0
  %3120 = vmatprep.subr.mxu0 0.0
  %3121 = vmatpush1.msra.mxu0 0.0
  %3122 = vmatprep.subr.mxu0 0.0
  %3123 = vmatpush1.msra.mxu0 0.0
  %3124 = vmatprep.subr.mxu0 0.0
  %3125 = vmatpush1.msra.mxu0 0.0
  %3126 = vmatprep.subr.mxu0 0.0
  %3127 = vmatpush1.msra.mxu0 0.0
  %3128 = vmatprep.subr.mxu0 0.0
  %3129 = vmatpush1.msra.mxu0 0.0
  %3130 = vmatprep.subr.mxu0 0.0
  %3131 = vmatpush1.msra.mxu0 0.0
  %3132 = vmatprep.subr.mxu0 0.0
  %3133 = vmatpush1.msra.mxu0 0.0
  %3134 = vmatprep.subr.mxu0 0.0
  %3135 = vmatpush1.msra.mxu0 0.0
  %3136 = vmatprep.subr.mxu0 0.0
  %3137 = vmatpush1.msra.mxu0 0.0
  %3138 = vmatprep.subr.mxu0 0.0
  %3139 = vmatpush1.msra.mxu0 0.0
  %3140 = vmatprep.subr.mxu0 0.0
  %3141 = vmatpush1.msra.mxu0 0.0
  %3142 = vmatprep.subr.mxu0 0.0
  %3143 = vmatpush1.msra.mxu0 0.0
  %3144 = vmatprep.subr.mxu0 0.0
  %3145 = vmatpush1.msra.mxu0 0.0
  %3146 = vmatprep.subr.mxu0 0.0
  %3147 = vmatpush1.msra.mxu0 0.0
  %3148 = vmatprep.subr.mxu0 0.0
  %3149 = vmatpush1.msra.mxu0 0.0
  %3150 = vmatprep.subr.mxu0 0.0
  %3151 = vmatpush1.msra.mxu0 0.0
  %3152 = vmatprep.subr.mxu0 0.0
  %3153 = vmatpush1.msra.mxu0 0.0
  %3154 = vmatprep.subr.mxu0 0.0
  %3155 = vmatpush1.msra.mxu0 0.0
  %3156 = vmatprep.subr.mxu0 0.0
  %3157 = vmatpush1.msra.mxu0 0.0
  %3158 = vmatprep.subr.mxu0 0.0
  %3159 = vmatpush1.msra.mxu0 0.0
  %3160 = vmatprep.subr.mxu0 0.0
  %3161 = vmatpush1.msra.mxu0 0.0
  %3162 = vmatprep.subr.mxu0 0.0
  %3163 = vmatpush1.msra.mxu0 0.0
  %3164 = vmatprep.subr.mxu0 0.0
  %3165 = vmatpush1.msra.mxu0 0.0
  %3166 = vmatprep.subr.mxu0 0.0
  %3167 = vmatpush1.msra.mxu0 0.0
  %3168 = vmatprep.subr.mxu0 0.0
  %3169 = vmatpush1.msra.mxu0 0.0
  %3170 = vmatprep.subr.mxu0 0.0
  %3171 = vmatpush1.msra.mxu0 0.0
  %3172 = vmatprep.subr.mxu0 0.0
  %3173 = vmatpush1.msra.mxu0 0.0
  %3174 = vmatprep.subr.mxu0 0.0
  %3175 = vmatpush1.msra.mxu0 0.0
  %3176 = vmatprep.mubr.f32.mxu0 0.0
  %3177 = vmatmul.mubr.f32.gmra.mrb[0].mxu0 %v2596
  %v3178 = vpop.f32.mrb[0].mxu0
  %v3179 = vadd.f32 0.0, %v3178
  %v3180 = vpop.f32.mrb[0].mxu0
  %3181 = vdwg.mxu0
  %3182 = vmatprep.subr.mxu0 0.0
  %3183 = vmatpush1.msra.mxu0 %v2792
  %3184 = vmatprep.subr.mxu0 0.0
  %3185 = vmatpush1.msra.mxu0 %v2892
  %3186 = vmatprep.subr.mxu0 0.0
  %3187 = vmatpush1.msra.mxu0 0.0
  %3188 = vmatprep.subr.mxu0 0.0
  %3189 = vmatpush1.msra.mxu0 0.0
  %3190 = vmatprep.subr.mxu0 0.0
  %3191 = vmatpush1.msra.mxu0 0.0
  %3192 = vmatprep.subr.mxu0 0.0
  %3193 = vmatpush1.msra.mxu0 0.0
  %3194 = vmatprep.subr.mxu0 0.0
  %3195 = vmatpush1.msra.mxu0 0.0
  %3196 = vmatprep.subr.mxu0 0.0
  %3197 = vmatpush1.msra.mxu0 0.0
  %3198 = vmatprep.subr.mxu0 0.0
  %3199 = vmatpush1.msra.mxu0 0.0
  %3200 = vmatprep.subr.mxu0 0.0
  %3201 = vmatpush1.msra.mxu0 0.0
  %3202 = vmatprep.subr.mxu0 0.0
  %3203 = vmatpush1.msra.mxu0 0.0
  %3204 = vmatprep.subr.mxu0 0.0
  %3205 = vmatpush1.msra.mxu0 0.0
  %3206 = vmatprep.subr.mxu0 0.0
  %3207 = vmatpush1.msra.mxu0 0.0
  %3208 = vmatprep.subr.mxu0 0.0
  %3209 = vmatpush1.msra.mxu0 0.0
  %3210 = vmatprep.subr.mxu0 0.0
  %3211 = vmatpush1.msra.mxu0 0.0
  %3212 = vmatprep.subr.mxu0 0.0
  %3213 = vmatpush1.msra.mxu0 0.0
  %3214 = vmatprep.subr.mxu0 0.0
  %3215 = vmatpush1.msra.mxu0 0.0
  %3216 = vmatprep.subr.mxu0 0.0
  %3217 = vmatpush1.msra.mxu0 0.0
  %3218 = vmatprep.subr.mxu0 0.0
  %3219 = vmatpush1.msra.mxu0 0.0
  %3220 = vmatprep.subr.mxu0 0.0
  %3221 = vmatpush1.msra.mxu0 0.0
  %3222 = vmatprep.subr.mxu0 0.0
  %3223 = vmatpush1.msra.mxu0 0.0
  %3224 = vmatprep.subr.mxu0 0.0
  %3225 = vmatpush1.msra.mxu0 0.0
  %3226 = vmatprep.subr.mxu0 0.0
  %3227 = vmatpush1.msra.mxu0 0.0
  %3228 = vmatprep.subr.mxu0 0.0
  %3229 = vmatpush1.msra.mxu0 0.0
  %3230 = vmatprep.subr.mxu0 0.0
  %3231 = vmatpush1.msra.mxu0 0.0
  %3232 = vmatprep.subr.mxu0 0.0
  %3233 = vmatpush1.msra.mxu0 0.0
  %3234 = vmatprep.subr.mxu0 0.0
  %3235 = vmatpush1.msra.mxu0 0.0
  %3236 = vmatprep.subr.mxu0 0.0
  %3237 = vmatpush1.msra.mxu0 0.0
  %3238 = vmatprep.subr.mxu0 0.0
  %3239 = vmatpush1.msra.mxu0 0.0
  %3240 = vmatprep.subr.mxu0 0.0
  %3241 = vmatpush1.msra.mxu0 0.0
  %3242 = vmatprep.subr.mxu0 0.0
  %3243 = vmatpush1.msra.mxu0 0.0
  %3244 = vmatprep.subr.mxu0 0.0
  %3245 = vmatpush1.msra.mxu0 0.0
  %3246 = vmatprep.mubr.f32.mxu0 0.0
  %3247 = vmatmul.mubr.f32.gmra.mrb[0].mxu0 %v1506
  %v3248 = vpop.f32.mrb[0].mxu0
  %v3249 = vadd.f32 %v3179, %v3248
  %v3250 = vpop.f32.mrb[0].mxu0
  %3251 = vdwg.mxu0
  %v3252 = vadd.f32 %v3249, %v2968
  %3253 = vmatprep.subr.mxu0 0.0
  %3254 = vmatpush1.msra.mxu0 %v2795
  %3255 = vmatprep.subr.mxu0 0.0
  %3256 = vmatpush1.msra.mxu0 %v2819
  %3257 = vmatprep.subr.mxu0 0.0
  %3258 = vmatpush1.msra.mxu0 0.0
  %3259 = vmatprep.subr.mxu0 0.0
  %3260 = vmatpush1.msra.mxu0 0.0
  %3261 = vmatprep.subr.mxu0 0.0
  %3262 = vmatpush1.msra.mxu0 0.0
  %3263 = vmatprep.subr.mxu0 0.0
  %3264 = vmatpush1.msra.mxu0 0.0
  %3265 = vmatprep.subr.mxu0 0.0
  %3266 = vmatpush1.msra.mxu0 0.0
  %3267 = vmatprep.subr.mxu0 0.0
  %3268 = vmatpush1.msra.mxu0 0.0
  %3269 = vmatprep.subr.mxu0 0.0
  %3270 = vmatpush1.msra.mxu0 0.0
  %3271 = vmatprep.subr.mxu0 0.0
  %3272 = vmatpush1.msra.mxu0 0.0
  %3273 = vmatprep.subr.mxu0 0.0
  %3274 = vmatpush1.msra.mxu0 0.0
  %3275 = vmatprep.subr.mxu0 0.0
  %3276 = vmatpush1.msra.mxu0 0.0
  %3277 = vmatprep.subr.mxu0 0.0
  %3278 = vmatpush1.msra.mxu0 0.0
  %3279 = vmatprep.subr.mxu0 0.0
  %3280 = vmatpush1.msra.mxu0 0.0
  %3281 = vmatprep.subr.mxu0 0.0
  %3282 = vmatpush1.msra.mxu0 0.0
  %3283 = vmatprep.subr.mxu0 0.0
  %3284 = vmatpush1.msra.mxu0 0.0
  %3285 = vmatprep.subr.mxu0 0.0
  %3286 = vmatpush1.msra.mxu0 0.0
  %3287 = vmatprep.subr.mxu0 0.0
  %3288 = vmatpush1.msra.mxu0 0.0
  %3289 = vmatprep.subr.mxu0 0.0
  %3290 = vmatpush1.msra.mxu0 0.0
  %3291 = vmatprep.subr.mxu0 0.0
  %3292 = vmatpush1.msra.mxu0 0.0
  %3293 = vmatprep.subr.mxu0 0.0
  %3294 = vmatpush1.msra.mxu0 0.0
  %3295 = vmatprep.subr.mxu0 0.0
  %3296 = vmatpush1.msra.mxu0 0.0
  %3297 = vmatprep.subr.mxu0 0.0
  %3298 = vmatpush1.msra.mxu0 0.0
  %3299 = vmatprep.subr.mxu0 0.0
  %3300 = vmatpush1.msra.mxu0 0.0
  %3301 = vmatprep.subr.mxu0 0.0
  %3302 = vmatpush1.msra.mxu0 0.0
  %3303 = vmatprep.subr.mxu0 0.0
  %3304 = vmatpush1.msra.mxu0 0.0
  %3305 = vmatprep.subr.mxu0 0.0
  %3306 = vmatpush1.msra.mxu0 0.0
  %3307 = vmatprep.subr.mxu0 0.0
  %3308 = vmatpush1.msra.mxu0 0.0
  %3309 = vmatprep.subr.mxu0 0.0
  %3310 = vmatpush1.msra.mxu0 0.0
  %3311 = vmatprep.subr.mxu0 0.0
  %3312 = vmatpush1.msra.mxu0 0.0
  %3313 = vmatprep.subr.mxu0 0.0
  %3314 = vmatpush1.msra.mxu0 0.0
  %3315 = vmatprep.subr.mxu0 0.0
  %3316 = vmatpush1.msra.mxu0 0.0
  %3317 = vmatprep.mubr.f32.mxu0 0.0
  %3318 = vmatmul.mubr.f32.gmra.mrb[0].mxu0 %v2497
  %v3319 = vpop.f32.mrb[0].mxu0
  %v3320 = vadd.f32 0.0, %v3319
  %v3321 = vpop.f32.mrb[0].mxu0
  %3322 = vdwg.mxu0
  %3323 = vmatprep.subr.mxu0 0.0
  %3324 = vmatpush1.msra.mxu0 %v2792
  %3325 = vmatprep.subr.mxu0 0.0
  %3326 = vmatpush1.msra.mxu0 %v2892
  %3327 = vmatprep.subr.mxu0 0.0
  %3328 = vmatpush1.msra.mxu0 0.0
  %3329 = vmatprep.subr.mxu0 0.0
  %3330 = vmatpush1.msra.mxu0 0.0
  %3331 = vmatprep.subr.mxu0 0.0
  %3332 = vmatpush1.msra.mxu0 0.0
  %3333 = vmatprep.subr.mxu0 0.0
  %3334 = vmatpush1.msra.mxu0 0.0
  %3335 = vmatprep.subr.mxu0 0.0
  %3336 = vmatpush1.msra.mxu0 0.0
  %3337 = vmatprep.subr.mxu0 0.0
  %3338 = vmatpush1.msra.mxu0 0.0
  %3339 = vmatprep.subr.mxu0 0.0
  %3340 = vmatpush1.msra.mxu0 0.0
  %3341 = vmatprep.subr.mxu0 0.0
  %3342 = vmatpush1.msra.mxu0 0.0
  %3343 = vmatprep.subr.mxu0 0.0
  %3344 = vmatpush1.msra.mxu0 0.0
  %3345 = vmatprep.subr.mxu0 0.0
  %3346 = vmatpush1.msra.mxu0 0.0
  %3347 = vmatprep.subr.mxu0 0.0
  %3348 = vmatpush1.msra.mxu0 0.0
  %3349 = vmatprep.subr.mxu0 0.0
  %3350 = vmatpush1.msra.mxu0 0.0
  %3351 = vmatprep.subr.mxu0 0.0
  %3352 = vmatpush1.msra.mxu0 0.0
  %3353 = vmatprep.subr.mxu0 0.0
  %3354 = vmatpush1.msra.mxu0 0.0
  %3355 = vmatprep.subr.mxu0 0.0
  %3356 = vmatpush1.msra.mxu0 0.0
  %3357 = vmatprep.subr.mxu0 0.0
  %3358 = vmatpush1.msra.mxu0 0.0
  %3359 = vmatprep.subr.mxu0 0.0
  %3360 = vmatpush1.msra.mxu0 0.0
  %3361 = vmatprep.subr.mxu0 0.0
  %3362 = vmatpush1.msra.mxu0 0.0
  %3363 = vmatprep.subr.mxu0 0.0
  %3364 = vmatpush1.msra.mxu0 0.0
  %3365 = vmatprep.subr.mxu0 0.0
  %3366 = vmatpush1.msra.mxu0 0.0
  %3367 = vmatprep.subr.mxu0 0.0
  %3368 = vmatpush1.msra.mxu0 0.0
  %3369 = vmatprep.subr.mxu0 0.0
  %3370 = vmatpush1.msra.mxu0 0.0
  %3371 = vmatprep.subr.mxu0 0.0
  %3372 = vmatpush1.msra.mxu0 0.0
  %3373 = vmatprep.subr.mxu0 0.0
  %3374 = vmatpush1.msra.mxu0 0.0
  %3375 = vmatprep.subr.mxu0 0.0
  %3376 = vmatpush1.msra.mxu0 0.0
  %3377 = vmatprep.subr.mxu0 0.0
  %3378 = vmatpush1.msra.mxu0 0.0
  %3379 = vmatprep.subr.mxu0 0.0
  %3380 = vmatpush1.msra.mxu0 0.0
  %3381 = vmatprep.subr.mxu0 0.0
  %3382 = vmatpush1.msra.mxu0 0.0
  %3383 = vmatprep.subr.mxu0 0.0
  %3384 = vmatpush1.msra.mxu0 0.0
  %3385 = vmatprep.subr.mxu0 0.0
  %3386 = vmatpush1.msra.mxu0 0.0
  %3387 = vmatprep.mubr.f32.mxu0 0.0
  %3388 = vmatmul.mubr.f32.gmra.mrb[0].mxu0 %v1605
  %v3389 = vpop.f32.mrb[0].mxu0
  %v3390 = vadd.f32 %v3320, %v3389
  %v3391 = vpop.f32.mrb[0].mxu0
  %3392 = vdwg.mxu0
  %v3393 = vadd.f32 %v3390, %v2968
  %3394 = vmatprep.subr.mxu0 0.0
  %3395 = vmatpush1.msra.mxu0 %v2795
  %3396 = vmatprep.subr.mxu0 0.0
  %3397 = vmatpush1.msra.mxu0 %v2819
  %3398 = vmatprep.subr.mxu0 0.0
  %3399 = vmatpush1.msra.mxu0 0.0
  %3400 = vmatprep.subr.mxu0 0.0
  %3401 = vmatpush1.msra.mxu0 0.0
  %3402 = vmatprep.subr.mxu0 0.0
  %3403 = vmatpush1.msra.mxu0 0.0
  %3404 = vmatprep.subr.mxu0 0.0
  %3405 = vmatpush1.msra.mxu0 0.0
  %3406 = vmatprep.subr.mxu0 0.0
  %3407 = vmatpush1.msra.mxu0 0.0
  %3408 = vmatprep.subr.mxu0 0.0
  %3409 = vmatpush1.msra.mxu0 0.0
  %3410 = vmatprep.subr.mxu0 0.0
  %3411 = vmatpush1.msra.mxu0 0.0
  %3412 = vmatprep.subr.mxu0 0.0
  %3413 = vmatpush1.msra.mxu0 0.0
  %3414 = vmatprep.subr.mxu0 0.0
  %3415 = vmatpush1.msra.mxu0 0.0
  %3416 = vmatprep.subr.mxu0 0.0
  %3417 = vmatpush1.msra.mxu0 0.0
  %3418 = vmatprep.subr.mxu0 0.0
  %3419 = vmatpush1.msra.mxu0 0.0
  %3420 = vmatprep.subr.mxu0 0.0
  %3421 = vmatpush1.msra.mxu0 0.0
  %3422 = vmatprep.subr.mxu0 0.0
  %3423 = vmatpush1.msra.mxu0 0.0
  %3424 = vmatprep.subr.mxu0 0.0
  %3425 = vmatpush1.msra.mxu0 0.0
  %3426 = vmatprep.subr.mxu0 0.0
  %3427 = vmatpush1.msra.mxu0 0.0
  %3428 = vmatprep.subr.mxu0 0.0
  %3429 = vmatpush1.msra.mxu0 0.0
  %3430 = vmatprep.subr.mxu0 0.0
  %3431 = vmatpush1.msra.mxu0 0.0
  %3432 = vmatprep.subr.mxu0 0.0
  %3433 = vmatpush1.msra.mxu0 0.0
  %3434 = vmatprep.subr.mxu0 0.0
  %3435 = vmatpush1.msra.mxu0 0.0
  %3436 = vmatprep.subr.mxu0 0.0
  %3437 = vmatpush1.msra.mxu0 0.0
  %3438 = vmatprep.subr.mxu0 0.0
  %3439 = vmatpush1.msra.mxu0 0.0
  %3440 = vmatprep.subr.mxu0 0.0
  %3441 = vmatpush1.msra.mxu0 0.0
  %3442 = vmatprep.subr.mxu0 0.0
  %3443 = vmatpush1.msra.mxu0 0.0
  %3444 = vmatprep.subr.mxu0 0.0
  %3445 = vmatpush1.msra.mxu0 0.0
  %3446 = vmatprep.subr.mxu0 0.0
  %3447 = vmatpush1.msra.mxu0 0.0
  %3448 = vmatprep.subr.mxu0 0.0
  %3449 = vmatpush1.msra.mxu0 0.0
  %3450 = vmatprep.subr.mxu0 0.0
  %3451 = vmatpush1.msra.mxu0 0.0
  %3452 = vmatprep.subr.mxu0 0.0
  %3453 = vmatpush1.msra.mxu0 0.0
  %3454 = vmatprep.subr.mxu0 0.0
  %3455 = vmatpush1.msra.mxu0 0.0
  %3456 = vmatprep.subr.mxu0 0.0
  %3457 = vmatpush1.msra.mxu0 0.0
  %3458 = vmatprep.mubr.f32.mxu0 0.0
  %3459 = vmatmul.mubr.f32.gmra.mrb[0].mxu0 %v2398
  %v3460 = vpop.f32.mrb[0].mxu0
  %v3461 = vadd.f32 0.0, %v3460
  %v3462 = vpop.f32.mrb[0].mxu0
  %3463 = vdwg.mxu0
  %3464 = vmatprep.subr.mxu0 0.0
  %3465 = vmatpush1.msra.mxu0 %v2792
  %3466 = vmatprep.subr.mxu0 0.0
  %3467 = vmatpush1.msra.mxu0 %v2892
  %3468 = vmatprep.subr.mxu0 0.0
  %3469 = vmatpush1.msra.mxu0 0.0
  %3470 = vmatprep.subr.mxu0 0.0
  %3471 = vmatpush1.msra.mxu0 0.0
  %3472 = vmatprep.subr.mxu0 0.0
  %3473 = vmatpush1.msra.mxu0 0.0
  %3474 = vmatprep.subr.mxu0 0.0
  %3475 = vmatpush1.msra.mxu0 0.0
  %3476 = vmatprep.subr.mxu0 0.0
  %3477 = vmatpush1.msra.mxu0 0.0
  %3478 = vmatprep.subr.mxu0 0.0
  %3479 = vmatpush1.msra.mxu0 0.0
  %3480 = vmatprep.subr.mxu0 0.0
  %3481 = vmatpush1.msra.mxu0 0.0
  %3482 = vmatprep.subr.mxu0 0.0
  %3483 = vmatpush1.msra.mxu0 0.0
  %3484 = vmatprep.subr.mxu0 0.0
  %3485 = vmatpush1.msra.mxu0 0.0
  %3486 = vmatprep.subr.mxu0 0.0
  %3487 = vmatpush1.msra.mxu0 0.0
  %3488 = vmatprep.subr.mxu0 0.0
  %3489 = vmatpush1.msra.mxu0 0.0
  %3490 = vmatprep.subr.mxu0 0.0
  %3491 = vmatpush1.msra.mxu0 0.0
  %3492 = vmatprep.subr.mxu0 0.0
  %3493 = vmatpush1.msra.mxu0 0.0
  %3494 = vmatprep.subr.mxu0 0.0
  %3495 = vmatpush1.msra.mxu0 0.0
  %3496 = vmatprep.subr.mxu0 0.0
  %3497 = vmatpush1.msra.mxu0 0.0
  %3498 = vmatprep.subr.mxu0 0.0
  %3499 = vmatpush1.msra.mxu0 0.0
  %3500 = vmatprep.subr.mxu0 0.0
  %3501 = vmatpush1.msra.mxu0 0.0
  %3502 = vmatprep.subr.mxu0 0.0
  %3503 = vmatpush1.msra.mxu0 0.0
  %3504 = vmatprep.subr.mxu0 0.0
  %3505 = vmatpush1.msra.mxu0 0.0
  %3506 = vmatprep.subr.mxu0 0.0
  %3507 = vmatpush1.msra.mxu0 0.0
  %3508 = vmatprep.subr.mxu0 0.0
  %3509 = vmatpush1.msra.mxu0 0.0
  %3510 = vmatprep.subr.mxu0 0.0
  %3511 = vmatpush1.msra.mxu0 0.0
  %3512 = vmatprep.subr.mxu0 0.0
  %3513 = vmatpush1.msra.mxu0 0.0
  %3514 = vmatprep.subr.mxu0 0.0
  %3515 = vmatpush1.msra.mxu0 0.0
  %3516 = vmatprep.subr.mxu0 0.0
  %3517 = vmatpush1.msra.mxu0 0.0
  %3518 = vmatprep.subr.mxu0 0.0
  %3519 = vmatpush1.msra.mxu0 0.0
  %3520 = vmatprep.subr.mxu0 0.0
  %3521 = vmatpush1.msra.mxu0 0.0
  %3522 = vmatprep.subr.mxu0 0.0
  %3523 = vmatpush1.msra.mxu0 0.0
  %3524 = vmatprep.subr.mxu0 0.0
  %3525 = vmatpush1.msra.mxu0 0.0
  %3526 = vmatprep.subr.mxu0 0.0
  %3527 = vmatpush1.msra.mxu0 0.0
  %3528 = vmatprep.mubr.f32.mxu0 0.0
  %3529 = vmatmul.mubr.f32.gmra.mrb[0].mxu0 %v1704
  %v3530 = vpop.f32.mrb[0].mxu0
  %v3531 = vadd.f32 %v3461, %v3530
  %v3532 = vpop.f32.mrb[0].mxu0
  %3533 = vdwg.mxu0
  %v3534 = vadd.f32 %v3531, %v2968
  %3535 = vmatprep.subr.mxu0 0.0
  %3536 = vmatpush1.msra.mxu0 %v2795
  %3537 = vmatprep.subr.mxu0 0.0
  %3538 = vmatpush1.msra.mxu0 %v2819
  %3539 = vmatprep.subr.mxu0 0.0
  %3540 = vmatpush1.msra.mxu0 0.0
  %3541 = vmatprep.subr.mxu0 0.0
  %3542 = vmatpush1.msra.mxu0 0.0
  %3543 = vmatprep.subr.mxu0 0.0
  %3544 = vmatpush1.msra.mxu0 0.0
  %3545 = vmatprep.subr.mxu0 0.0
  %3546 = vmatpush1.msra.mxu0 0.0
  %3547 = vmatprep.subr.mxu0 0.0
  %3548 = vmatpush1.msra.mxu0 0.0
  %3549 = vmatprep.subr.mxu0 0.0
  %3550 = vmatpush1.msra.mxu0 0.0
  %3551 = vmatprep.subr.mxu0 0.0
  %3552 = vmatpush1.msra.mxu0 0.0
  %3553 = vmatprep.subr.mxu0 0.0
  %3554 = vmatpush1.msra.mxu0 0.0
  %3555 = vmatprep.subr.mxu0 0.0
  %3556 = vmatpush1.msra.mxu0 0.0
  %3557 = vmatprep.subr.mxu0 0.0
  %3558 = vmatpush1.msra.mxu0 0.0
  %3559 = vmatprep.subr.mxu0 0.0
  %3560 = vmatpush1.msra.mxu0 0.0
  %3561 = vmatprep.subr.mxu0 0.0
  %3562 = vmatpush1.msra.mxu0 0.0
  %3563 = vmatprep.subr.mxu0 0.0
  %3564 = vmatpush1.msra.mxu0 0.0
  %3565 = vmatprep.subr.mxu0 0.0
  %3566 = vmatpush1.msra.mxu0 0.0
  %3567 = vmatprep.subr.mxu0 0.0
  %3568 = vmatpush1.msra.mxu0 0.0
  %3569 = vmatprep.subr.mxu0 0.0
  %3570 = vmatpush1.msra.mxu0 0.0
  %3571 = vmatprep.subr.mxu0 0.0
  %3572 = vmatpush1.msra.mxu0 0.0
  %3573 = vmatprep.subr.mxu0 0.0
  %3574 = vmatpush1.msra.mxu0 0.0
  %3575 = vmatprep.subr.mxu0 0.0
  %3576 = vmatpush1.msra.mxu0 0.0
  %3577 = vmatprep.subr.mxu0 0.0
  %3578 = vmatpush1.msra.mxu0 0.0
  %3579 = vmatprep.subr.mxu0 0.0
  %3580 = vmatpush1.msra.mxu0 0.0
  %3581 = vmatprep.subr.mxu0 0.0
  %3582 = vmatpush1.msra.mxu0 0.0
  %3583 = vmatprep.subr.mxu0 0.0
  %3584 = vmatpush1.msra.mxu0 0.0
  %3585 = vmatprep.subr.mxu0 0.0
  %3586 = vmatpush1.msra.mxu0 0.0
  %3587 = vmatprep.subr.mxu0 0.0
  %3588 = vmatpush1.msra.mxu0 0.0
  %3589 = vmatprep.subr.mxu0 0.0
  %3590 = vmatpush1.msra.mxu0 0.0
  %3591 = vmatprep.subr.mxu0 0.0
  %3592 = vmatpush1.msra.mxu0 0.0
  %3593 = vmatprep.subr.mxu0 0.0
  %3594 = vmatpush1.msra.mxu0 0.0
  %3595 = vmatprep.subr.mxu0 0.0
  %3596 = vmatpush1.msra.mxu0 0.0
  %3597 = vmatprep.subr.mxu0 0.0
  %3598 = vmatpush1.msra.mxu0 0.0
  %3599 = vmatprep.mubr.f32.mxu0 0.0
  %3600 = vmatmul.mubr.f32.gmra.mrb[0].mxu0 %v2299
  %v3601 = vpop.f32.mrb[0].mxu0
  %v3602 = vadd.f32 0.0, %v3601
  %v3603 = vpop.f32.mrb[0].mxu0
  %3604 = vdwg.mxu0
  %3605 = vmatprep.subr.mxu0 0.0
  %3606 = vmatpush1.msra.mxu0 %v2792
  %3607 = vmatprep.subr.mxu0 0.0
  %3608 = vmatpush1.msra.mxu0 %v2892
  %3609 = vmatprep.subr.mxu0 0.0
  %3610 = vmatpush1.msra.mxu0 0.0
  %3611 = vmatprep.subr.mxu0 0.0
  %3612 = vmatpush1.msra.mxu0 0.0
  %3613 = vmatprep.subr.mxu0 0.0
  %3614 = vmatpush1.msra.mxu0 0.0
  %3615 = vmatprep.subr.mxu0 0.0
  %3616 = vmatpush1.msra.mxu0 0.0
  %3617 = vmatprep.subr.mxu0 0.0
  %3618 = vmatpush1.msra.mxu0 0.0
  %3619 = vmatprep.subr.mxu0 0.0
  %3620 = vmatpush1.msra.mxu0 0.0
  %3621 = vmatprep.subr.mxu0 0.0
  %3622 = vmatpush1.msra.mxu0 0.0
  %3623 = vmatprep.subr.mxu0 0.0
  %3624 = vmatpush1.msra.mxu0 0.0
  %3625 = vmatprep.subr.mxu0 0.0
  %3626 = vmatpush1.msra.mxu0 0.0
  %3627 = vmatprep.subr.mxu0 0.0
  %3628 = vmatpush1.msra.mxu0 0.0
  %3629 = vmatprep.subr.mxu0 0.0
  %3630 = vmatpush1.msra.mxu0 0.0
  %3631 = vmatprep.subr.mxu0 0.0
  %3632 = vmatpush1.msra.mxu0 0.0
  %3633 = vmatprep.subr.mxu0 0.0
  %3634 = vmatpush1.msra.mxu0 0.0
  %3635 = vmatprep.subr.mxu0 0.0
  %3636 = vmatpush1.msra.mxu0 0.0
  %3637 = vmatprep.subr.mxu0 0.0
  %3638 = vmatpush1.msra.mxu0 0.0
  %3639 = vmatprep.subr.mxu0 0.0
  %3640 = vmatpush1.msra.mxu0 0.0
  %3641 = vmatprep.subr.mxu0 0.0
  %3642 = vmatpush1.msra.mxu0 0.0
  %3643 = vmatprep.subr.mxu0 0.0
  %3644 = vmatpush1.msra.mxu0 0.0
  %3645 = vmatprep.subr.mxu0 0.0
  %3646 = vmatpush1.msra.mxu0 0.0
  %3647 = vmatprep.subr.mxu0 0.0
  %3648 = vmatpush1.msra.mxu0 0.0
  %3649 = vmatprep.subr.mxu0 0.0
  %3650 = vmatpush1.msra.mxu0 0.0
  %3651 = vmatprep.subr.mxu0 0.0
  %3652 = vmatpush1.msra.mxu0 0.0
  %3653 = vmatprep.subr.mxu0 0.0
  %3654 = vmatpush1.msra.mxu0 0.0
  %3655 = vmatprep.subr.mxu0 0.0
  %3656 = vmatpush1.msra.mxu0 0.0
  %3657 = vmatprep.subr.mxu0 0.0
  %3658 = vmatpush1.msra.mxu0 0.0
  %3659 = vmatprep.subr.mxu0 0.0
  %3660 = vmatpush1.msra.mxu0 0.0
  %3661 = vmatprep.subr.mxu0 0.0
  %3662 = vmatpush1.msra.mxu0 0.0
  %3663 = vmatprep.subr.mxu0 0.0
  %3664 = vmatpush1.msra.mxu0 0.0
  %3665 = vmatprep.subr.mxu0 0.0
  %3666 = vmatpush1.msra.mxu0 0.0
  %3667 = vmatprep.subr.mxu0 0.0
  %3668 = vmatpush1.msra.mxu0 0.0
  %3669 = vmatprep.mubr.f32.mxu0 0.0
  %3670 = vmatmul.mubr.f32.gmra.mrb[0].mxu0 %v1803
  %v3671 = vpop.f32.mrb[0].mxu0
  %v3672 = vadd.f32 %v3602, %v3671
  %v3673 = vpop.f32.mrb[0].mxu0
  %3674 = vdwg.mxu0
  %v3675 = vadd.f32 %v3672, %v2968
  %3676 = vmatprep.subr.mxu0 0.0
  %3677 = vmatpush1.msra.mxu0 %v2795
  %3678 = vmatprep.subr.mxu0 0.0
  %3679 = vmatpush1.msra.mxu0 %v2819
  %3680 = vmatprep.subr.mxu0 0.0
  %3681 = vmatpush1.msra.mxu0 0.0
  %3682 = vmatprep.subr.mxu0 0.0
  %3683 = vmatpush1.msra.mxu0 0.0
  %3684 = vmatprep.subr.mxu0 0.0
  %3685 = vmatpush1.msra.mxu0 0.0
  %3686 = vmatprep.subr.mxu0 0.0
  %3687 = vmatpush1.msra.mxu0 0.0
  %3688 = vmatprep.subr.mxu0 0.0
  %3689 = vmatpush1.msra.mxu0 0.0
  %3690 = vmatprep.subr.mxu0 0.0
  %3691 = vmatpush1.msra.mxu0 0.0
  %3692 = vmatprep.subr.mxu0 0.0
  %3693 = vmatpush1.msra.mxu0 0.0
  %3694 = vmatprep.subr.mxu0 0.0
  %3695 = vmatpush1.msra.mxu0 0.0
  %3696 = vmatprep.subr.mxu0 0.0
  %3697 = vmatpush1.msra.mxu0 0.0
  %3698 = vmatprep.subr.mxu0 0.0
  %3699 = vmatpush1.msra.mxu0 0.0
  %3700 = vmatprep.subr.mxu0 0.0
  %3701 = vmatpush1.msra.mxu0 0.0
  %3702 = vmatprep.subr.mxu0 0.0
  %3703 = vmatpush1.msra.mxu0 0.0
  %3704 = vmatprep.subr.mxu0 0.0
  %3705 = vmatpush1.msra.mxu0 0.0
  %3706 = vmatprep.subr.mxu0 0.0
  %3707 = vmatpush1.msra.mxu0 0.0
  %3708 = vmatprep.subr.mxu0 0.0
  %3709 = vmatpush1.msra.mxu0 0.0
  %3710 = vmatprep.subr.mxu0 0.0
  %3711 = vmatpush1.msra.mxu0 0.0
  %3712 = vmatprep.subr.mxu0 0.0
  %3713 = vmatpush1.msra.mxu0 0.0
  %3714 = vmatprep.subr.mxu0 0.0
  %3715 = vmatpush1.msra.mxu0 0.0
  %3716 = vmatprep.subr.mxu0 0.0
  %3717 = vmatpush1.msra.mxu0 0.0
  %3718 = vmatprep.subr.mxu0 0.0
  %3719 = vmatpush1.msra.mxu0 0.0
  %3720 = vmatprep.subr.mxu0 0.0
  %3721 = vmatpush1.msra.mxu0 0.0
  %3722 = vmatprep.subr.mxu0 0.0
  %3723 = vmatpush1.msra.mxu0 0.0
  %3724 = vmatprep.subr.mxu0 0.0
  %3725 = vmatpush1.msra.mxu0 0.0
  %3726 = vmatprep.subr.mxu0 0.0
  %3727 = vmatpush1.msra.mxu0 0.0
  %3728 = vmatprep.subr.mxu0 0.0
  %3729 = vmatpush1.msra.mxu0 0.0
  %3730 = vmatprep.subr.mxu0 0.0
  %3731 = vmatpush1.msra.mxu0 0.0
  %3732 = vmatprep.subr.mxu0 0.0
  %3733 = vmatpush1.msra.mxu0 0.0
  %3734 = vmatprep.subr.mxu0 0.0
  %3735 = vmatpush1.msra.mxu0 0.0
  %3736 = vmatprep.subr.mxu0 0.0
  %3737 = vmatpush1.msra.mxu0 0.0
  %3738 = vmatprep.subr.mxu0 0.0
  %3739 = vmatpush1.msra.mxu0 0.0
  %3740 = vmatprep.mubr.f32.mxu0 0.0
  %3741 = vmatmul.mubr.f32.gmra.mrb[0].mxu0 %v2200
  %v3742 = vpop.f32.mrb[0].mxu0
  %v3743 = vadd.f32 0.0, %v3742
  %v3744 = vpop.f32.mrb[0].mxu0
  %3745 = vdwg.mxu0
  %3746 = vmatprep.subr.mxu0 0.0
  %3747 = vmatpush1.msra.mxu0 %v2792
  %3748 = vmatprep.subr.mxu0 0.0
  %3749 = vmatpush1.msra.mxu0 %v2892
  %3750 = vmatprep.subr.mxu0 0.0
  %3751 = vmatpush1.msra.mxu0 0.0
  %3752 = vmatprep.subr.mxu0 0.0
  %3753 = vmatpush1.msra.mxu0 0.0
  %3754 = vmatprep.subr.mxu0 0.0
  %3755 = vmatpush1.msra.mxu0 0.0
  %3756 = vmatprep.subr.mxu0 0.0
  %3757 = vmatpush1.msra.mxu0 0.0
  %3758 = vmatprep.subr.mxu0 0.0
  %3759 = vmatpush1.msra.mxu0 0.0
  %3760 = vmatprep.subr.mxu0 0.0
  %3761 = vmatpush1.msra.mxu0 0.0
  %3762 = vmatprep.subr.mxu0 0.0
  %3763 = vmatpush1.msra.mxu0 0.0
  %3764 = vmatprep.subr.mxu0 0.0
  %3765 = vmatpush1.msra.mxu0 0.0
  %3766 = vmatprep.subr.mxu0 0.0
  %3767 = vmatpush1.msra.mxu0 0.0
  %3768 = vmatprep.subr.mxu0 0.0
  %3769 = vmatpush1.msra.mxu0 0.0
  %3770 = vmatprep.subr.mxu0 0.0
  %3771 = vmatpush1.msra.mxu0 0.0
  %3772 = vmatprep.subr.mxu0 0.0
  %3773 = vmatpush1.msra.mxu0 0.0
  %3774 = vmatprep.subr.mxu0 0.0
  %3775 = vmatpush1.msra.mxu0 0.0
  %3776 = vmatprep.subr.mxu0 0.0
  %3777 = vmatpush1.msra.mxu0 0.0
  %3778 = vmatprep.subr.mxu0 0.0
  %3779 = vmatpush1.msra.mxu0 0.0
  %3780 = vmatprep.subr.mxu0 0.0
  %3781 = vmatpush1.msra.mxu0 0.0
  %3782 = vmatprep.subr.mxu0 0.0
  %3783 = vmatpush1.msra.mxu0 0.0
  %3784 = vmatprep.subr.mxu0 0.0
  %3785 = vmatpush1.msra.mxu0 0.0
  %3786 = vmatprep.subr.mxu0 0.0
  %3787 = vmatpush1.msra.mxu0 0.0
  %3788 = vmatprep.subr.mxu0 0.0
  %3789 = vmatpush1.msra.mxu0 0.0
  %3790 = vmatprep.subr.mxu0 0.0
  %3791 = vmatpush1.msra.mxu0 0.0
  %3792 = vmatprep.subr.mxu0 0.0
  %3793 = vmatpush1.msra.mxu0 0.0
  %3794 = vmatprep.subr.mxu0 0.0
  %3795 = vmatpush1.msra.mxu0 0.0
  %3796 = vmatprep.subr.mxu0 0.0
  %3797 = vmatpush1.msra.mxu0 0.0
  %3798 = vmatprep.subr.mxu0 0.0
  %3799 = vmatpush1.msra.mxu0 0.0
  %3800 = vmatprep.subr.mxu0 0.0
  %3801 = vmatpush1.msra.mxu0 0.0
  %3802 = vmatprep.subr.mxu0 0.0
  %3803 = vmatpush1.msra.mxu0 0.0
  %3804 = vmatprep.subr.mxu0 0.0
  %3805 = vmatpush1.msra.mxu0 0.0
  %3806 = vmatprep.subr.mxu0 0.0
  %3807 = vmatpush1.msra.mxu0 0.0
  %3808 = vmatprep.subr.mxu0 0.0
  %3809 = vmatpush1.msra.mxu0 0.0
  %3810 = vmatprep.mubr.f32.mxu0 0.0
  %3811 = vmatmul.mubr.f32.gmra.mrb[0].mxu0 %v1902
  %v3812 = vpop.f32.mrb[0].mxu0
  %v3813 = vadd.f32 %v3743, %v3812
  %v3814 = vpop.f32.mrb[0].mxu0
  %3815 = vdwg.mxu0
  %v3816 = vadd.f32 %v3813, %v2968
  %3817 = vmatprep.subr.mxu0 0.0
  %3818 = vmatpush1.msra.mxu0 %v2795
  %3819 = vmatprep.subr.mxu0 0.0
  %3820 = vmatpush1.msra.mxu0 %v2819
  %3821 = vmatprep.subr.mxu0 0.0
  %3822 = vmatpush1.msra.mxu0 0.0
  %3823 = vmatprep.subr.mxu0 0.0
  %3824 = vmatpush1.msra.mxu0 0.0
  %3825 = vmatprep.subr.mxu0 0.0
  %3826 = vmatpush1.msra.mxu0 0.0
  %3827 = vmatprep.subr.mxu0 0.0
  %3828 = vmatpush1.msra.mxu0 0.0
  %3829 = vmatprep.subr.mxu0 0.0
  %3830 = vmatpush1.msra.mxu0 0.0
  %3831 = vmatprep.subr.mxu0 0.0
  %3832 = vmatpush1.msra.mxu0 0.0
  %3833 = vmatprep.subr.mxu0 0.0
  %3834 = vmatpush1.msra.mxu0 0.0
  %3835 = vmatprep.subr.mxu0 0.0
  %3836 = vmatpush1.msra.mxu0 0.0
  %3837 = vmatprep.subr.mxu0 0.0
  %3838 = vmatpush1.msra.mxu0 0.0
  %3839 = vmatprep.subr.mxu0 0.0
  %3840 = vmatpush1.msra.mxu0 0.0
  %3841 = vmatprep.subr.mxu0 0.0
  %3842 = vmatpush1.msra.mxu0 0.0
  %3843 = vmatprep.subr.mxu0 0.0
  %3844 = vmatpush1.msra.mxu0 0.0
  %3845 = vmatprep.subr.mxu0 0.0
  %3846 = vmatpush1.msra.mxu0 0.0
  %3847 = vmatprep.subr.mxu0 0.0
  %3848 = vmatpush1.msra.mxu0 0.0
  %3849 = vmatprep.subr.mxu0 0.0
  %3850 = vmatpush1.msra.mxu0 0.0
  %3851 = vmatprep.subr.mxu0 0.0
  %3852 = vmatpush1.msra.mxu0 0.0
  %3853 = vmatprep.subr.mxu0 0.0
  %3854 = vmatpush1.msra.mxu0 0.0
  %3855 = vmatprep.subr.mxu0 0.0
  %3856 = vmatpush1.msra.mxu0 0.0
  %3857 = vmatprep.subr.mxu0 0.0
  %3858 = vmatpush1.msra.mxu0 0.0
  %3859 = vmatprep.subr.mxu0 0.0
  %3860 = vmatpush1.msra.mxu0 0.0
  %3861 = vmatprep.subr.mxu0 0.0
  %3862 = vmatpush1.msra.mxu0 0.0
  %3863 = vmatprep.subr.mxu0 0.0
  %3864 = vmatpush1.msra.mxu0 0.0
  %3865 = vmatprep.subr.mxu0 0.0
  %3866 = vmatpush1.msra.mxu0 0.0
  %3867 = vmatprep.subr.mxu0 0.0
  %3868 = vmatpush1.msra.mxu0 0.0
  %3869 = vmatprep.subr.mxu0 0.0
  %3870 = vmatpush1.msra.mxu0 0.0
  %3871 = vmatprep.subr.mxu0 0.0
  %3872 = vmatpush1.msra.mxu0 0.0
  %3873 = vmatprep.subr.mxu0 0.0
  %3874 = vmatpush1.msra.mxu0 0.0
  %3875 = vmatprep.subr.mxu0 0.0
  %3876 = vmatpush1.msra.mxu0 0.0
  %3877 = vmatprep.subr.mxu0 0.0
  %3878 = vmatpush1.msra.mxu0 0.0
  %3879 = vmatprep.subr.mxu0 0.0
  %3880 = vmatpush1.msra.mxu0 0.0
  %3881 = vmatprep.mubr.f32.mxu0 0.0
  %3882 = vmatmul.mubr.f32.gmra.mrb[0].mxu0 %v2101
  %v3883 = vpop.f32.mrb[0].mxu0
  %v3884 = vadd.f32 0.0, %v3883
  %v3885 = vpop.f32.mrb[0].mxu0
  %3886 = vdwg.mxu0
  %3888 = vrot.lane.b32.xlu0 %v1997, 86
  %v3889 = vpop.permute.xlu0 %3888
  %v3890 = vsel %vm1204, %v3889, 0
  %3892 = vmatprep.subr.mxu0 0.0
  %3893 = vmatpush1.msra.mxu0 %v2792
  %3894 = vmatprep.subr.mxu0 0.0
  %3895 = vmatpush1.msra.mxu0 %v2892
  %3896 = vmatprep.subr.mxu0 0.0
  %3897 = vmatpush1.msra.mxu0 0.0
  %3898 = vmatprep.subr.mxu0 0.0
  %3899 = vmatpush1.msra.mxu0 0.0
  %3900 = vmatprep.subr.mxu0 0.0
  %3901 = vmatpush1.msra.mxu0 0.0
  %3902 = vmatprep.subr.mxu0 0.0
  %3903 = vmatpush1.msra.mxu0 0.0
  %3904 = vmatprep.subr.mxu0 0.0
  %3905 = vmatpush1.msra.mxu0 0.0
  %3906 = vmatprep.subr.mxu0 0.0
  %3907 = vmatpush1.msra.mxu0 0.0
  %3908 = vmatprep.subr.mxu0 0.0
  %3909 = vmatpush1.msra.mxu0 0.0
  %3910 = vmatprep.subr.mxu0 0.0
  %3911 = vmatpush1.msra.mxu0 0.0
  %3912 = vmatprep.subr.mxu0 0.0
  %3913 = vmatpush1.msra.mxu0 0.0
  %3914 = vmatprep.subr.mxu0 0.0
  %3915 = vmatpush1.msra.mxu0 0.0
  %3916 = vmatprep.subr.mxu0 0.0
  %3917 = vmatpush1.msra.mxu0 0.0
  %3918 = vmatprep.subr.mxu0 0.0
  %3919 = vmatpush1.msra.mxu0 0.0
  %3920 = vmatprep.subr.mxu0 0.0
  %3921 = vmatpush1.msra.mxu0 0.0
  %3922 = vmatprep.subr.mxu0 0.0
  %3923 = vmatpush1.msra.mxu0 0.0
  %3924 = vmatprep.subr.mxu0 0.0
  %3925 = vmatpush1.msra.mxu0 0.0
  %3926 = vmatprep.subr.mxu0 0.0
  %3927 = vmatpush1.msra.mxu0 0.0
  %3928 = vmatprep.subr.mxu0 0.0
  %3929 = vmatpush1.msra.mxu0 0.0
  %3930 = vmatprep.subr.mxu0 0.0
  %3931 = vmatpush1.msra.mxu0 0.0
  %3932 = vmatprep.subr.mxu0 0.0
  %3933 = vmatpush1.msra.mxu0 0.0
  %3934 = vmatprep.subr.mxu0 0.0
  %3935 = vmatpush1.msra.mxu0 0.0
  %3936 = vmatprep.subr.mxu0 0.0
  %3937 = vmatpush1.msra.mxu0 0.0
  %3938 = vmatprep.subr.mxu0 0.0
  %3939 = vmatpush1.msra.mxu0 0.0
  %3940 = vmatprep.subr.mxu0 0.0
  %3941 = vmatpush1.msra.mxu0 0.0
  %3942 = vmatprep.subr.mxu0 0.0
  %3943 = vmatpush1.msra.mxu0 0.0
  %3944 = vmatprep.subr.mxu0 0.0
  %3945 = vmatpush1.msra.mxu0 0.0
  %3946 = vmatprep.subr.mxu0 0.0
  %3947 = vmatpush1.msra.mxu0 0.0
  %3948 = vmatprep.subr.mxu0 0.0
  %3949 = vmatpush1.msra.mxu0 0.0
  %3950 = vmatprep.subr.mxu0 0.0
  %3951 = vmatpush1.msra.mxu0 0.0
  %3952 = vmatprep.subr.mxu0 0.0
  %3953 = vmatpush1.msra.mxu0 0.0
  %3954 = vmatprep.subr.mxu0 0.0
  %3955 = vmatpush1.msra.mxu0 0.0
  %3956 = vmatprep.mubr.f32.mxu0 0.0
  %3957 = vmatmul.mubr.f32.gmra.mrb[0].mxu0 %v3890
  %v3958 = vpop.f32.mrb[0].mxu0
  %v3959 = vadd.f32 %v3884, %v3958
  %v3960 = vpop.f32.mrb[0].mxu0
  %3961 = vdwg.mxu0
  %v3962 = vadd.f32 %v3959, %v2968
  %v3964 = vsel %vm48, %v2805, 0
  %3966 = vmatprep.subr.mxu0 0.0
  %3967 = vmatpush1.msra.mxu0 %v2804
  %3968 = vmatprep.subr.mxu0 0.0
  %3969 = vmatpush1.msra.mxu0 %v3964
  %3970 = vmatprep.subr.mxu0 0.0
  %3971 = vmatpush1.msra.mxu0 0.0
  %3972 = vmatprep.subr.mxu0 0.0
  %3973 = vmatpush1.msra.mxu0 0.0
  %3974 = vmatprep.subr.mxu0 0.0
  %3975 = vmatpush1.msra.mxu0 0.0
  %3976 = vmatprep.subr.mxu0 0.0
  %3977 = vmatpush1.msra.mxu0 0.0
  %3978 = vmatprep.subr.mxu0 0.0
  %3979 = vmatpush1.msra.mxu0 0.0
  %3980 = vmatprep.subr.mxu0 0.0
  %3981 = vmatpush1.msra.mxu0 0.0
  %3982 = vmatprep.subr.mxu0 0.0
  %3983 = vmatpush1.msra.mxu0 0.0
  %3984 = vmatprep.subr.mxu0 0.0
  %3985 = vmatpush1.msra.mxu0 0.0
  %3986 = vmatprep.subr.mxu0 0.0
  %3987 = vmatpush1.msra.mxu0 0.0
  %3988 = vmatprep.subr.mxu0 0.0
  %3989 = vmatpush1.msra.mxu0 0.0
  %3990 = vmatprep.subr.mxu0 0.0
  %3991 = vmatpush1.msra.mxu0 0.0
  %3992 = vmatprep.subr.mxu0 0.0
  %3993 = vmatpush1.msra.mxu0 0.0
  %3994 = vmatprep.subr.mxu0 0.0
  %3995 = vmatpush1.msra.mxu0 0.0
  %3996 = vmatprep.subr.mxu0 0.0
  %3997 = vmatpush1.msra.mxu0 0.0
  %3998 = vmatprep.subr.mxu0 0.0
  %3999 = vmatpush1.msra.mxu0 0.0
  %4000 = vmatprep.subr.mxu0 0.0
  %4001 = vmatpush1.msra.mxu0 0.0
  %4002 = vmatprep.subr.mxu0 0.0
  %4003 = vmatpush1.msra.mxu0 0.0
  %4004 = vmatprep.subr.mxu0 0.0
  %4005 = vmatpush1.msra.mxu0 0.0
  %4006 = vmatprep.subr.mxu0 0.0
  %4007 = vmatpush1.msra.mxu0 0.0
  %4008 = vmatprep.subr.mxu0 0.0
  %4009 = vmatpush1.msra.mxu0 0.0
  %4010 = vmatprep.subr.mxu0 0.0
  %4011 = vmatpush1.msra.mxu0 0.0
  %4012 = vmatprep.subr.mxu0 0.0
  %4013 = vmatpush1.msra.mxu0 0.0
  %4014 = vmatprep.subr.mxu0 0.0
  %4015 = vmatpush1.msra.mxu0 0.0
  %4016 = vmatprep.subr.mxu0 0.0
  %4017 = vmatpush1.msra.mxu0 0.0
  %4018 = vmatprep.subr.mxu0 0.0
  %4019 = vmatpush1.msra.mxu0 0.0
  %4020 = vmatprep.subr.mxu0 0.0
  %4021 = vmatpush1.msra.mxu0 0.0
  %4022 = vmatprep.subr.mxu0 0.0
  %4023 = vmatpush1.msra.mxu0 0.0
  %4024 = vmatprep.subr.mxu0 0.0
  %4025 = vmatpush1.msra.mxu0 0.0
  %4026 = vmatprep.subr.mxu0 0.0
  %4027 = vmatpush1.msra.mxu0 0.0
  %4028 = vmatprep.subr.mxu0 0.0
  %4029 = vmatpush1.msra.mxu0 0.0
  %4030 = vmatprep.mubr.f32.mxu0 0.0
  %4031 = vmatmul.mubr.f32.gmra.mrb[0].mxu0 %v2816
  %v4032 = vpop.f32.mrb[0].mxu0
  %v4033 = vadd.f32 0.0, %v4032
  %v4034 = vpop.f32.mrb[0].mxu0
  %4035 = vdwg.mxu0
  %v4037 = vsel %vm48, %v2802, 0
  %4039 = vmatprep.subr.mxu0 0.0
  %4040 = vmatpush1.msra.mxu0 %v2801
  %4041 = vmatprep.subr.mxu0 0.0
  %4042 = vmatpush1.msra.mxu0 %v4037
  %4043 = vmatprep.subr.mxu0 0.0
  %4044 = vmatpush1.msra.mxu0 0.0
  %4045 = vmatprep.subr.mxu0 0.0
  %4046 = vmatpush1.msra.mxu0 0.0
  %4047 = vmatprep.subr.mxu0 0.0
  %4048 = vmatpush1.msra.mxu0 0.0
  %4049 = vmatprep.subr.mxu0 0.0
  %4050 = vmatpush1.msra.mxu0 0.0
  %4051 = vmatprep.subr.mxu0 0.0
  %4052 = vmatpush1.msra.mxu0 0.0
  %4053 = vmatprep.subr.mxu0 0.0
  %4054 = vmatpush1.msra.mxu0 0.0
  %4055 = vmatprep.subr.mxu0 0.0
  %4056 = vmatpush1.msra.mxu0 0.0
  %4057 = vmatprep.subr.mxu0 0.0
  %4058 = vmatpush1.msra.mxu0 0.0
  %4059 = vmatprep.subr.mxu0 0.0
  %4060 = vmatpush1.msra.mxu0 0.0
  %4061 = vmatprep.subr.mxu0 0.0
  %4062 = vmatpush1.msra.mxu0 0.0
  %4063 = vmatprep.subr.mxu0 0.0
  %4064 = vmatpush1.msra.mxu0 0.0
  %4065 = vmatprep.subr.mxu0 0.0
  %4066 = vmatpush1.msra.mxu0 0.0
  %4067 = vmatprep.subr.mxu0 0.0
  %4068 = vmatpush1.msra.mxu0 0.0
  %4069 = vmatprep.subr.mxu0 0.0
  %4070 = vmatpush1.msra.mxu0 0.0
  %4071 = vmatprep.subr.mxu0 0.0
  %4072 = vmatpush1.msra.mxu0 0.0
  %4073 = vmatprep.subr.mxu0 0.0
  %4074 = vmatpush1.msra.mxu0 0.0
  %4075 = vmatprep.subr.mxu0 0.0
  %4076 = vmatpush1.msra.mxu0 0.0
  %4077 = vmatprep.subr.mxu0 0.0
  %4078 = vmatpush1.msra.mxu0 0.0
  %4079 = vmatprep.subr.mxu0 0.0
  %4080 = vmatpush1.msra.mxu0 0.0
  %4081 = vmatprep.subr.mxu0 0.0
  %4082 = vmatpush1.msra.mxu0 0.0
  %4083 = vmatprep.subr.mxu0 0.0
  %4084 = vmatpush1.msra.mxu0 0.0
  %4085 = vmatprep.subr.mxu0 0.0
  %4086 = vmatpush1.msra.mxu0 0.0
  %4087 = vmatprep.subr.mxu0 0.0
  %4088 = vmatpush1.msra.mxu0 0.0
  %4089 = vmatprep.subr.mxu0 0.0
  %4090 = vmatpush1.msra.mxu0 0.0
  %4091 = vmatprep.subr.mxu0 0.0
  %4092 = vmatpush1.msra.mxu0 0.0
  %4093 = vmatprep.subr.mxu0 0.0
  %4094 = vmatpush1.msra.mxu0 0.0
  %4095 = vmatprep.subr.mxu0 0.0
  %4096 = vmatpush1.msra.mxu0 0.0
  %4097 = vmatprep.subr.mxu0 0.0
  %4098 = vmatpush1.msra.mxu0 0.0
  %4099 = vmatprep.subr.mxu0 0.0
  %4100 = vmatpush1.msra.mxu0 0.0
  %4101 = vmatprep.subr.mxu0 0.0
  %4102 = vmatpush1.msra.mxu0 0.0
  %4103 = vmatprep.mubr.f32.mxu0 0.0
  %4104 = vmatmul.mubr.f32.gmra.mrb[0].mxu0 %v1308
  %v4105 = vpop.f32.mrb[0].mxu0
  %v4106 = vadd.f32 %v4033, %v4105
  %v4107 = vpop.f32.mrb[0].mxu0
  %4108 = vdwg.mxu0
  %v4110 = vlaneseq
  %v4111 = vshrl.u32 %v4110, 7
  %v4112 = vsub.s32 0, %v4111
  %v4113 = vrot.slane %v2812, %v4112
  %v4115 = vadd.f32 %v4106, %v4113
  %4116 = vmatprep.subr.mxu0 0.0
  %4117 = vmatpush1.msra.mxu0 %v2804
  %4118 = vmatprep.subr.mxu0 0.0
  %4119 = vmatpush1.msra.mxu0 %v3964
  %4120 = vmatprep.subr.mxu0 0.0
  %4121 = vmatpush1.msra.mxu0 0.0
  %4122 = vmatprep.subr.mxu0 0.0
  %4123 = vmatpush1.msra.mxu0 0.0
  %4124 = vmatprep.subr.mxu0 0.0
  %4125 = vmatpush1.msra.mxu0 0.0
  %4126 = vmatprep.subr.mxu0 0.0
  %4127 = vmatpush1.msra.mxu0 0.0
  %4128 = vmatprep.subr.mxu0 0.0
  %4129 = vmatpush1.msra.mxu0 0.0
  %4130 = vmatprep.subr.mxu0 0.0
  %4131 = vmatpush1.msra.mxu0 0.0
  %4132 = vmatprep.subr.mxu0 0.0
  %4133 = vmatpush1.msra.mxu0 0.0
  %4134 = vmatprep.subr.mxu0 0.0
  %4135 = vmatpush1.msra.mxu0 0.0
  %4136 = vmatprep.subr.mxu0 0.0
  %4137 = vmatpush1.msra.mxu0 0.0
  %4138 = vmatprep.subr.mxu0 0.0
  %4139 = vmatpush1.msra.mxu0 0.0
  %4140 = vmatprep.subr.mxu0 0.0
  %4141 = vmatpush1.msra.mxu0 0.0
  %4142 = vmatprep.subr.mxu0 0.0
  %4143 = vmatpush1.msra.mxu0 0.0
  %4144 = vmatprep.subr.mxu0 0.0
  %4145 = vmatpush1.msra.mxu0 0.0
  %4146 = vmatprep.subr.mxu0 0.0
  %4147 = vmatpush1.msra.mxu0 0.0
  %4148 = vmatprep.subr.mxu0 0.0
  %4149 = vmatpush1.msra.mxu0 0.0
  %4150 = vmatprep.subr.mxu0 0.0
  %4151 = vmatpush1.msra.mxu0 0.0
  %4152 = vmatprep.subr.mxu0 0.0
  %4153 = vmatpush1.msra.mxu0 0.0
  %4154 = vmatprep.subr.mxu0 0.0
  %4155 = vmatpush1.msra.mxu0 0.0
  %4156 = vmatprep.subr.mxu0 0.0
  %4157 = vmatpush1.msra.mxu0 0.0
  %4158 = vmatprep.subr.mxu0 0.0
  %4159 = vmatpush1.msra.mxu0 0.0
  %4160 = vmatprep.subr.mxu0 0.0
  %4161 = vmatpush1.msra.mxu0 0.0
  %4162 = vmatprep.subr.mxu0 0.0
  %4163 = vmatpush1.msra.mxu0 0.0
  %4164 = vmatprep.subr.mxu0 0.0
  %4165 = vmatpush1.msra.mxu0 0.0
  %4166 = vmatprep.subr.mxu0 0.0
  %4167 = vmatpush1.msra.mxu0 0.0
  %4168 = vmatprep.subr.mxu0 0.0
  %4169 = vmatpush1.msra.mxu0 0.0
  %4170 = vmatprep.subr.mxu0 0.0
  %4171 = vmatpush1.msra.mxu0 0.0
  %4172 = vmatprep.subr.mxu0 0.0
  %4173 = vmatpush1.msra.mxu0 0.0
  %4174 = vmatprep.subr.mxu0 0.0
  %4175 = vmatpush1.msra.mxu0 0.0
  %4176 = vmatprep.subr.mxu0 0.0
  %4177 = vmatpush1.msra.mxu0 0.0
  %4178 = vmatprep.subr.mxu0 0.0
  %4179 = vmatpush1.msra.mxu0 0.0
  %4180 = vmatprep.mubr.f32.mxu0 0.0
  %4181 = vmatmul.mubr.f32.gmra.mrb[0].mxu0 %v2695
  %v4182 = vpop.f32.mrb[0].mxu0
  %v4183 = vadd.f32 0.0, %v4182
  %v4184 = vpop.f32.mrb[0].mxu0
  %4185 = vdwg.mxu0
  %4186 = vmatprep.subr.mxu0 0.0
  %4187 = vmatpush1.msra.mxu0 %v2801
  %4188 = vmatprep.subr.mxu0 0.0
  %4189 = vmatpush1.msra.mxu0 %v4037
  %4190 = vmatprep.subr.mxu0 0.0
  %4191 = vmatpush1.msra.mxu0 0.0
  %4192 = vmatprep.subr.mxu0 0.0
  %4193 = vmatpush1.msra.mxu0 0.0
  %4194 = vmatprep.subr.mxu0 0.0
  %4195 = vmatpush1.msra.mxu0 0.0
  %4196 = vmatprep.subr.mxu0 0.0
  %4197 = vmatpush1.msra.mxu0 0.0
  %4198 = vmatprep.subr.mxu0 0.0
  %4199 = vmatpush1.msra.mxu0 0.0
  %4200 = vmatprep.subr.mxu0 0.0
  %4201 = vmatpush1.msra.mxu0 0.0
  %4202 = vmatprep.subr.mxu0 0.0
  %4203 = vmatpush1.msra.mxu0 0.0
  %4204 = vmatprep.subr.mxu0 0.0
  %4205 = vmatpush1.msra.mxu0 0.0
  %4206 = vmatprep.subr.mxu0 0.0
  %4207 = vmatpush1.msra.mxu0 0.0
  %4208 = vmatprep.subr.mxu0 0.0
  %4209 = vmatpush1.msra.mxu0 0.0
  %4210 = vmatprep.subr.mxu0 0.0
  %4211 = vmatpush1.msra.mxu0 0.0
  %4212 = vmatprep.subr.mxu0 0.0
  %4213 = vmatpush1.msra.mxu0 0.0
  %4214 = vmatprep.subr.mxu0 0.0
  %4215 = vmatpush1.msra.mxu0 0.0
  %4216 = vmatprep.subr.mxu0 0.0
  %4217 = vmatpush1.msra.mxu0 0.0
  %4218 = vmatprep.subr.mxu0 0.0
  %4219 = vmatpush1.msra.mxu0 0.0
  %4220 = vmatprep.subr.mxu0 0.0
  %4221 = vmatpush1.msra.mxu0 0.0
  %4222 = vmatprep.subr.mxu0 0.0
  %4223 = vmatpush1.msra.mxu0 0.0
  %4224 = vmatprep.subr.mxu0 0.0
  %4225 = vmatpush1.msra.mxu0 0.0
  %4226 = vmatprep.subr.mxu0 0.0
  %4227 = vmatpush1.msra.mxu0 0.0
  %4228 = vmatprep.subr.mxu0 0.0
  %4229 = vmatpush1.msra.mxu0 0.0
  %4230 = vmatprep.subr.mxu0 0.0
  %4231 = vmatpush1.msra.mxu0 0.0
  %4232 = vmatprep.subr.mxu0 0.0
  %4233 = vmatpush1.msra.mxu0 0.0
  %4234 = vmatprep.subr.mxu0 0.0
  %4235 = vmatpush1.msra.mxu0 0.0
  %4236 = vmatprep.subr.mxu0 0.0
  %4237 = vmatpush1.msra.mxu0 0.0
  %4238 = vmatprep.subr.mxu0 0.0
  %4239 = vmatpush1.msra.mxu0 0.0
  %4240 = vmatprep.subr.mxu0 0.0
  %4241 = vmatpush1.msra.mxu0 0.0
  %4242 = vmatprep.subr.mxu0 0.0
  %4243 = vmatpush1.msra.mxu0 0.0
  %4244 = vmatprep.subr.mxu0 0.0
  %4245 = vmatpush1.msra.mxu0 0.0
  %4246 = vmatprep.subr.mxu0 0.0
  %4247 = vmatpush1.msra.mxu0 0.0
  %4248 = vmatprep.subr.mxu0 0.0
  %4249 = vmatpush1.msra.mxu0 0.0
  %4250 = vmatprep.mubr.f32.mxu0 0.0
  %4251 = vmatmul.mubr.f32.gmra.mrb[0].mxu0 %v1407
  %v4252 = vpop.f32.mrb[0].mxu0
  %v4253 = vadd.f32 %v4183, %v4252
  %v4254 = vpop.f32.mrb[0].mxu0
  %4255 = vdwg.mxu0
  %v4256 = vadd.f32 %v4253, %v4113
  %4257 = vmatprep.subr.mxu0 0.0
  %4258 = vmatpush1.msra.mxu0 %v2804
  %4259 = vmatprep.subr.mxu0 0.0
  %4260 = vmatpush1.msra.mxu0 %v3964
  %4261 = vmatprep.subr.mxu0 0.0
  %4262 = vmatpush1.msra.mxu0 0.0
  %4263 = vmatprep.subr.mxu0 0.0
  %4264 = vmatpush1.msra.mxu0 0.0
  %4265 = vmatprep.subr.mxu0 0.0
  %4266 = vmatpush1.msra.mxu0 0.0
  %4267 = vmatprep.subr.mxu0 0.0
  %4268 = vmatpush1.msra.mxu0 0.0
  %4269 = vmatprep.subr.mxu0 0.0
  %4270 = vmatpush1.msra.mxu0 0.0
  %4271 = vmatprep.subr.mxu0 0.0
  %4272 = vmatpush1.msra.mxu0 0.0
  %4273 = vmatprep.subr.mxu0 0.0
  %4274 = vmatpush1.msra.mxu0 0.0
  %4275 = vmatprep.subr.mxu0 0.0
  %4276 = vmatpush1.msra.mxu0 0.0
  %4277 = vmatprep.subr.mxu0 0.0
  %4278 = vmatpush1.msra.mxu0 0.0
  %4279 = vmatprep.subr.mxu0 0.0
  %4280 = vmatpush1.msra.mxu0 0.0
  %4281 = vmatprep.subr.mxu0 0.0
  %4282 = vmatpush1.msra.mxu0 0.0
  %4283 = vmatprep.subr.mxu0 0.0
  %4284 = vmatpush1.msra.mxu0 0.0
  %4285 = vmatprep.subr.mxu0 0.0
  %4286 = vmatpush1.msra.mxu0 0.0
  %4287 = vmatprep.subr.mxu0 0.0
  %4288 = vmatpush1.msra.mxu0 0.0
  %4289 = vmatprep.subr.mxu0 0.0
  %4290 = vmatpush1.msra.mxu0 0.0
  %4291 = vmatprep.subr.mxu0 0.0
  %4292 = vmatpush1.msra.mxu0 0.0
  %4293 = vmatprep.subr.mxu0 0.0
  %4294 = vmatpush1.msra.mxu0 0.0
  %4295 = vmatprep.subr.mxu0 0.0
  %4296 = vmatpush1.msra.mxu0 0.0
  %4297 = vmatprep.subr.mxu0 0.0
  %4298 = vmatpush1.msra.mxu0 0.0
  %4299 = vmatprep.subr.mxu0 0.0
  %4300 = vmatpush1.msra.mxu0 0.0
  %4301 = vmatprep.subr.mxu0 0.0
  %4302 = vmatpush1.msra.mxu0 0.0
  %4303 = vmatprep.subr.mxu0 0.0
  %4304 = vmatpush1.msra.mxu0 0.0
  %4305 = vmatprep.subr.mxu0 0.0
  %4306 = vmatpush1.msra.mxu0 0.0
  %4307 = vmatprep.subr.mxu0 0.0
  %4308 = vmatpush1.msra.mxu0 0.0
  %4309 = vmatprep.subr.mxu0 0.0
  %4310 = vmatpush1.msra.mxu0 0.0
  %4311 = vmatprep.subr.mxu0 0.0
  %4312 = vmatpush1.msra.mxu0 0.0
  %4313 = vmatprep.subr.mxu0 0.0
  %4314 = vmatpush1.msra.mxu0 0.0
  %4315 = vmatprep.subr.mxu0 0.0
  %4316 = vmatpush1.msra.mxu0 0.0
  %4317 = vmatprep.subr.mxu0 0.0
  %4318 = vmatpush1.msra.mxu0 0.0
  %4319 = vmatprep.subr.mxu0 0.0
  %4320 = vmatpush1.msra.mxu0 0.0
  %4321 = vmatprep.mubr.f32.mxu0 0.0
  %4322 = vmatmul.mubr.f32.gmra.mrb[0].mxu0 %v2596
  %v4323 = vpop.f32.mrb[0].mxu0
  %v4324 = vadd.f32 0.0, %v4323
  %v4325 = vpop.f32.mrb[0].mxu0
  %4326 = vdwg.mxu0
  %4327 = vmatprep.subr.mxu0 0.0
  %4328 = vmatpush1.msra.mxu0 %v2801
  %4329 = vmatprep.subr.mxu0 0.0
  %4330 = vmatpush1.msra.mxu0 %v4037
  %4331 = vmatprep.subr.mxu0 0.0
  %4332 = vmatpush1.msra.mxu0 0.0
  %4333 = vmatprep.subr.mxu0 0.0
  %4334 = vmatpush1.msra.mxu0 0.0
  %4335 = vmatprep.subr.mxu0 0.0
  %4336 = vmatpush1.msra.mxu0 0.0
  %4337 = vmatprep.subr.mxu0 0.0
  %4338 = vmatpush1.msra.mxu0 0.0
  %4339 = vmatprep.subr.mxu0 0.0
  %4340 = vmatpush1.msra.mxu0 0.0
  %4341 = vmatprep.subr.mxu0 0.0
  %4342 = vmatpush1.msra.mxu0 0.0
  %4343 = vmatprep.subr.mxu0 0.0
  %4344 = vmatpush1.msra.mxu0 0.0
  %4345 = vmatprep.subr.mxu0 0.0
  %4346 = vmatpush1.msra.mxu0 0.0
  %4347 = vmatprep.subr.mxu0 0.0
  %4348 = vmatpush1.msra.mxu0 0.0
  %4349 = vmatprep.subr.mxu0 0.0
  %4350 = vmatpush1.msra.mxu0 0.0
  %4351 = vmatprep.subr.mxu0 0.0
  %4352 = vmatpush1.msra.mxu0 0.0
  %4353 = vmatprep.subr.mxu0 0.0
  %4354 = vmatpush1.msra.mxu0 0.0
  %4355 = vmatprep.subr.mxu0 0.0
  %4356 = vmatpush1.msra.mxu0 0.0
  %4357 = vmatprep.subr.mxu0 0.0
  %4358 = vmatpush1.msra.mxu0 0.0
  %4359 = vmatprep.subr.mxu0 0.0
  %4360 = vmatpush1.msra.mxu0 0.0
  %4361 = vmatprep.subr.mxu0 0.0
  %4362 = vmatpush1.msra.mxu0 0.0
  %4363 = vmatprep.subr.mxu0 0.0
  %4364 = vmatpush1.msra.mxu0 0.0
  %4365 = vmatprep.subr.mxu0 0.0
  %4366 = vmatpush1.msra.mxu0 0.0
  %4367 = vmatprep.subr.mxu0 0.0
  %4368 = vmatpush1.msra.mxu0 0.0
  %4369 = vmatprep.subr.mxu0 0.0
  %4370 = vmatpush1.msra.mxu0 0.0
  %4371 = vmatprep.subr.mxu0 0.0
  %4372 = vmatpush1.msra.mxu0 0.0
  %4373 = vmatprep.subr.mxu0 0.0
  %4374 = vmatpush1.msra.mxu0 0.0
  %4375 = vmatprep.subr.mxu0 0.0
  %4376 = vmatpush1.msra.mxu0 0.0
  %4377 = vmatprep.subr.mxu0 0.0
  %4378 = vmatpush1.msra.mxu0 0.0
  %4379 = vmatprep.subr.mxu0 0.0
  %4380 = vmatpush1.msra.mxu0 0.0
  %4381 = vmatprep.subr.mxu0 0.0
  %4382 = vmatpush1.msra.mxu0 0.0
  %4383 = vmatprep.subr.mxu0 0.0
  %4384 = vmatpush1.msra.mxu0 0.0
  %4385 = vmatprep.subr.mxu0 0.0
  %4386 = vmatpush1.msra.mxu0 0.0
  %4387 = vmatprep.subr.mxu0 0.0
  %4388 = vmatpush1.msra.mxu0 0.0
  %4389 = vmatprep.subr.mxu0 0.0
  %4390 = vmatpush1.msra.mxu0 0.0
  %4391 = vmatprep.mubr.f32.mxu0 0.0
  %4392 = vmatmul.mubr.f32.gmra.mrb[0].mxu0 %v1506
  %v4393 = vpop.f32.mrb[0].mxu0
  %v4394 = vadd.f32 %v4324, %v4393
  %v4395 = vpop.f32.mrb[0].mxu0
  %4396 = vdwg.mxu0
  %v4397 = vadd.f32 %v4394, %v4113
  %4398 = vmatprep.subr.mxu0 0.0
  %4399 = vmatpush1.msra.mxu0 %v2804
  %4400 = vmatprep.subr.mxu0 0.0
  %4401 = vmatpush1.msra.mxu0 %v3964
  %4402 = vmatprep.subr.mxu0 0.0
  %4403 = vmatpush1.msra.mxu0 0.0
  %4404 = vmatprep.subr.mxu0 0.0
  %4405 = vmatpush1.msra.mxu0 0.0
  %4406 = vmatprep.subr.mxu0 0.0
  %4407 = vmatpush1.msra.mxu0 0.0
  %4408 = vmatprep.subr.mxu0 0.0
  %4409 = vmatpush1.msra.mxu0 0.0
  %4410 = vmatprep.subr.mxu0 0.0
  %4411 = vmatpush1.msra.mxu0 0.0
  %4412 = vmatprep.subr.mxu0 0.0
  %4413 = vmatpush1.msra.mxu0 0.0
  %4414 = vmatprep.subr.mxu0 0.0
  %4415 = vmatpush1.msra.mxu0 0.0
  %4416 = vmatprep.subr.mxu0 0.0
  %4417 = vmatpush1.msra.mxu0 0.0
  %4418 = vmatprep.subr.mxu0 0.0
  %4419 = vmatpush1.msra.mxu0 0.0
  %4420 = vmatprep.subr.mxu0 0.0
  %4421 = vmatpush1.msra.mxu0 0.0
  %4422 = vmatprep.subr.mxu0 0.0
  %4423 = vmatpush1.msra.mxu0 0.0
  %4424 = vmatprep.subr.mxu0 0.0
  %4425 = vmatpush1.msra.mxu0 0.0
  %4426 = vmatprep.subr.mxu0 0.0
  %4427 = vmatpush1.msra.mxu0 0.0
  %4428 = vmatprep.subr.mxu0 0.0
  %4429 = vmatpush1.msra.mxu0 0.0
  %4430 = vmatprep.subr.mxu0 0.0
  %4431 = vmatpush1.msra.mxu0 0.0
  %4432 = vmatprep.subr.mxu0 0.0
  %4433 = vmatpush1.msra.mxu0 0.0
  %4434 = vmatprep.subr.mxu0 0.0
  %4435 = vmatpush1.msra.mxu0 0.0
  %4436 = vmatprep.subr.mxu0 0.0
  %4437 = vmatpush1.msra.mxu0 0.0
  %4438 = vmatprep.subr.mxu0 0.0
  %4439 = vmatpush1.msra.mxu0 0.0
  %4440 = vmatprep.subr.mxu0 0.0
  %4441 = vmatpush1.msra.mxu0 0.0
  %4442 = vmatprep.subr.mxu0 0.0
  %4443 = vmatpush1.msra.mxu0 0.0
  %4444 = vmatprep.subr.mxu0 0.0
  %4445 = vmatpush1.msra.mxu0 0.0
  %4446 = vmatprep.subr.mxu0 0.0
  %4447 = vmatpush1.msra.mxu0 0.0
  %4448 = vmatprep.subr.mxu0 0.0
  %4449 = vmatpush1.msra.mxu0 0.0
  %4450 = vmatprep.subr.mxu0 0.0
  %4451 = vmatpush1.msra.mxu0 0.0
  %4452 = vmatprep.subr.mxu0 0.0
  %4453 = vmatpush1.msra.mxu0 0.0
  %4454 = vmatprep.subr.mxu0 0.0
  %4455 = vmatpush1.msra.mxu0 0.0
  %4456 = vmatprep.subr.mxu0 0.0
  %4457 = vmatpush1.msra.mxu0 0.0
  %4458 = vmatprep.subr.mxu0 0.0
  %4459 = vmatpush1.msra.mxu0 0.0
  %4460 = vmatprep.subr.mxu0 0.0
  %4461 = vmatpush1.msra.mxu0 0.0
  %4462 = vmatprep.mubr.f32.mxu0 0.0
  %4463 = vmatmul.mubr.f32.gmra.mrb[0].mxu0 %v2497
  %v4464 = vpop.f32.mrb[0].mxu0
  %v4465 = vadd.f32 0.0, %v4464
  %v4466 = vpop.f32.mrb[0].mxu0
  %4467 = vdwg.mxu0
  %4468 = vmatprep.subr.mxu0 0.0
  %4469 = vmatpush1.msra.mxu0 %v2801
  %4470 = vmatprep.subr.mxu0 0.0
  %4471 = vmatpush1.msra.mxu0 %v4037
  %4472 = vmatprep.subr.mxu0 0.0
  %4473 = vmatpush1.msra.mxu0 0.0
  %4474 = vmatprep.subr.mxu0 0.0
  %4475 = vmatpush1.msra.mxu0 0.0
  %4476 = vmatprep.subr.mxu0 0.0
  %4477 = vmatpush1.msra.mxu0 0.0
  %4478 = vmatprep.subr.mxu0 0.0
  %4479 = vmatpush1.msra.mxu0 0.0
  %4480 = vmatprep.subr.mxu0 0.0
  %4481 = vmatpush1.msra.mxu0 0.0
  %4482 = vmatprep.subr.mxu0 0.0
  %4483 = vmatpush1.msra.mxu0 0.0
  %4484 = vmatprep.subr.mxu0 0.0
  %4485 = vmatpush1.msra.mxu0 0.0
  %4486 = vmatprep.subr.mxu0 0.0
  %4487 = vmatpush1.msra.mxu0 0.0
  %4488 = vmatprep.subr.mxu0 0.0
  %4489 = vmatpush1.msra.mxu0 0.0
  %4490 = vmatprep.subr.mxu0 0.0
  %4491 = vmatpush1.msra.mxu0 0.0
  %4492 = vmatprep.subr.mxu0 0.0
  %4493 = vmatpush1.msra.mxu0 0.0
  %4494 = vmatprep.subr.mxu0 0.0
  %4495 = vmatpush1.msra.mxu0 0.0
  %4496 = vmatprep.subr.mxu0 0.0
  %4497 = vmatpush1.msra.mxu0 0.0
  %4498 = vmatprep.subr.mxu0 0.0
  %4499 = vmatpush1.msra.mxu0 0.0
  %4500 = vmatprep.subr.mxu0 0.0
  %4501 = vmatpush1.msra.mxu0 0.0
  %4502 = vmatprep.subr.mxu0 0.0
  %4503 = vmatpush1.msra.mxu0 0.0
  %4504 = vmatprep.subr.mxu0 0.0
  %4505 = vmatpush1.msra.mxu0 0.0
  %4506 = vmatprep.subr.mxu0 0.0
  %4507 = vmatpush1.msra.mxu0 0.0
  %4508 = vmatprep.subr.mxu0 0.0
  %4509 = vmatpush1.msra.mxu0 0.0
  %4510 = vmatprep.subr.mxu0 0.0
  %4511 = vmatpush1.msra.mxu0 0.0
  %4512 = vmatprep.subr.mxu0 0.0
  %4513 = vmatpush1.msra.mxu0 0.0
  %4514 = vmatprep.subr.mxu0 0.0
  %4515 = vmatpush1.msra.mxu0 0.0
  %4516 = vmatprep.subr.mxu0 0.0
  %4517 = vmatpush1.msra.mxu0 0.0
  %4518 = vmatprep.subr.mxu0 0.0
  %4519 = vmatpush1.msra.mxu0 0.0
  %4520 = vmatprep.subr.mxu0 0.0
  %4521 = vmatpush1.msra.mxu0 0.0
  %4522 = vmatprep.subr.mxu0 0.0
  %4523 = vmatpush1.msra.mxu0 0.0
  %4524 = vmatprep.subr.mxu0 0.0
  %4525 = vmatpush1.msra.mxu0 0.0
  %4526 = vmatprep.subr.mxu0 0.0
  %4527 = vmatpush1.msra.mxu0 0.0
  %4528 = vmatprep.subr.mxu0 0.0
  %4529 = vmatpush1.msra.mxu0 0.0
  %4530 = vmatprep.subr.mxu0 0.0
  %4531 = vmatpush1.msra.mxu0 0.0
  %4532 = vmatprep.mubr.f32.mxu0 0.0
  %4533 = vmatmul.mubr.f32.gmra.mrb[0].mxu0 %v1605
  %v4534 = vpop.f32.mrb[0].mxu0
  %v4535 = vadd.f32 %v4465, %v4534
  %v4536 = vpop.f32.mrb[0].mxu0
  %4537 = vdwg.mxu0
  %v4538 = vadd.f32 %v4535, %v4113
  %4539 = vmatprep.subr.mxu0 0.0
  %4540 = vmatpush1.msra.mxu0 %v2804
  %4541 = vmatprep.subr.mxu0 0.0
  %4542 = vmatpush1.msra.mxu0 %v3964
  %4543 = vmatprep.subr.mxu0 0.0
  %4544 = vmatpush1.msra.mxu0 0.0
  %4545 = vmatprep.subr.mxu0 0.0
  %4546 = vmatpush1.msra.mxu0 0.0
  %4547 = vmatprep.subr.mxu0 0.0
  %4548 = vmatpush1.msra.mxu0 0.0
  %4549 = vmatprep.subr.mxu0 0.0
  %4550 = vmatpush1.msra.mxu0 0.0
  %4551 = vmatprep.subr.mxu0 0.0
  %4552 = vmatpush1.msra.mxu0 0.0
  %4553 = vmatprep.subr.mxu0 0.0
  %4554 = vmatpush1.msra.mxu0 0.0
  %4555 = vmatprep.subr.mxu0 0.0
  %4556 = vmatpush1.msra.mxu0 0.0
  %4557 = vmatprep.subr.mxu0 0.0
  %4558 = vmatpush1.msra.mxu0 0.0
  %4559 = vmatprep.subr.mxu0 0.0
  %4560 = vmatpush1.msra.mxu0 0.0
  %4561 = vmatprep.subr.mxu0 0.0
  %4562 = vmatpush1.msra.mxu0 0.0
  %4563 = vmatprep.subr.mxu0 0.0
  %4564 = vmatpush1.msra.mxu0 0.0
  %4565 = vmatprep.subr.mxu0 0.0
  %4566 = vmatpush1.msra.mxu0 0.0
  %4567 = vmatprep.subr.mxu0 0.0
  %4568 = vmatpush1.msra.mxu0 0.0
  %4569 = vmatprep.subr.mxu0 0.0
  %4570 = vmatpush1.msra.mxu0 0.0
  %4571 = vmatprep.subr.mxu0 0.0
  %4572 = vmatpush1.msra.mxu0 0.0
  %4573 = vmatprep.subr.mxu0 0.0
  %4574 = vmatpush1.msra.mxu0 0.0
  %4575 = vmatprep.subr.mxu0 0.0
  %4576 = vmatpush1.msra.mxu0 0.0
  %4577 = vmatprep.subr.mxu0 0.0
  %4578 = vmatpush1.msra.mxu0 0.0
  %4579 = vmatprep.subr.mxu0 0.0
  %4580 = vmatpush1.msra.mxu0 0.0
  %4581 = vmatprep.subr.mxu0 0.0
  %4582 = vmatpush1.msra.mxu0 0.0
  %4583 = vmatprep.subr.mxu0 0.0
  %4584 = vmatpush1.msra.mxu0 0.0
  %4585 = vmatprep.subr.mxu0 0.0
  %4586 = vmatpush1.msra.mxu0 0.0
  %4587 = vmatprep.subr.mxu0 0.0
  %4588 = vmatpush1.msra.mxu0 0.0
  %4589 = vmatprep.subr.mxu0 0.0
  %4590 = vmatpush1.msra.mxu0 0.0
  %4591 = vmatprep.subr.mxu0 0.0
  %4592 = vmatpush1.msra.mxu0 0.0
  %4593 = vmatprep.subr.mxu0 0.0
  %4594 = vmatpush1.msra.mxu0 0.0
  %4595 = vmatprep.subr.mxu0 0.0
  %4596 = vmatpush1.msra.mxu0 0.0
  %4597 = vmatprep.subr.mxu0 0.0
  %4598 = vmatpush1.msra.mxu0 0.0
  %4599 = vmatprep.subr.mxu0 0.0
  %4600 = vmatpush1.msra.mxu0 0.0
  %4601 = vmatprep.subr.mxu0 0.0
  %4602 = vmatpush1.msra.mxu0 0.0
  %4603 = vmatprep.mubr.f32.mxu0 0.0
  %4604 = vmatmul.mubr.f32.gmra.mrb[0].mxu0 %v2398
  %v4605 = vpop.f32.mrb[0].mxu0
  %v4606 = vadd.f32 0.0, %v4605
  %v4607 = vpop.f32.mrb[0].mxu0
  %4608 = vdwg.mxu0
  %4609 = vmatprep.subr.mxu0 0.0
  %4610 = vmatpush1.msra.mxu0 %v2801
  %4611 = vmatprep.subr.mxu0 0.0
  %4612 = vmatpush1.msra.mxu0 %v4037
  %4613 = vmatprep.subr.mxu0 0.0
  %4614 = vmatpush1.msra.mxu0 0.0
  %4615 = vmatprep.subr.mxu0 0.0
  %4616 = vmatpush1.msra.mxu0 0.0
  %4617 = vmatprep.subr.mxu0 0.0
  %4618 = vmatpush1.msra.mxu0 0.0
  %4619 = vmatprep.subr.mxu0 0.0
  %4620 = vmatpush1.msra.mxu0 0.0
  %4621 = vmatprep.subr.mxu0 0.0
  %4622 = vmatpush1.msra.mxu0 0.0
  %4623 = vmatprep.subr.mxu0 0.0
  %4624 = vmatpush1.msra.mxu0 0.0
  %4625 = vmatprep.subr.mxu0 0.0
  %4626 = vmatpush1.msra.mxu0 0.0
  %4627 = vmatprep.subr.mxu0 0.0
  %4628 = vmatpush1.msra.mxu0 0.0
  %4629 = vmatprep.subr.mxu0 0.0
  %4630 = vmatpush1.msra.mxu0 0.0
  %4631 = vmatprep.subr.mxu0 0.0
  %4632 = vmatpush1.msra.mxu0 0.0
  %4633 = vmatprep.subr.mxu0 0.0
  %4634 = vmatpush1.msra.mxu0 0.0
  %4635 = vmatprep.subr.mxu0 0.0
  %4636 = vmatpush1.msra.mxu0 0.0
  %4637 = vmatprep.subr.mxu0 0.0
  %4638 = vmatpush1.msra.mxu0 0.0
  %4639 = vmatprep.subr.mxu0 0.0
  %4640 = vmatpush1.msra.mxu0 0.0
  %4641 = vmatprep.subr.mxu0 0.0
  %4642 = vmatpush1.msra.mxu0 0.0
  %4643 = vmatprep.subr.mxu0 0.0
  %4644 = vmatpush1.msra.mxu0 0.0
  %4645 = vmatprep.subr.mxu0 0.0
  %4646 = vmatpush1.msra.mxu0 0.0
  %4647 = vmatprep.subr.mxu0 0.0
  %4648 = vmatpush1.msra.mxu0 0.0
  %4649 = vmatprep.subr.mxu0 0.0
  %4650 = vmatpush1.msra.mxu0 0.0
  %4651 = vmatprep.subr.mxu0 0.0
  %4652 = vmatpush1.msra.mxu0 0.0
  %4653 = vmatprep.subr.mxu0 0.0
  %4654 = vmatpush1.msra.mxu0 0.0
  %4655 = vmatprep.subr.mxu0 0.0
  %4656 = vmatpush1.msra.mxu0 0.0
  %4657 = vmatprep.subr.mxu0 0.0
  %4658 = vmatpush1.msra.mxu0 0.0
  %4659 = vmatprep.subr.mxu0 0.0
  %4660 = vmatpush1.msra.mxu0 0.0
  %4661 = vmatprep.subr.mxu0 0.0
  %4662 = vmatpush1.msra.mxu0 0.0
  %4663 = vmatprep.subr.mxu0 0.0
  %4664 = vmatpush1.msra.mxu0 0.0
  %4665 = vmatprep.subr.mxu0 0.0
  %4666 = vmatpush1.msra.mxu0 0.0
  %4667 = vmatprep.subr.mxu0 0.0
  %4668 = vmatpush1.msra.mxu0 0.0
  %4669 = vmatprep.subr.mxu0 0.0
  %4670 = vmatpush1.msra.mxu0 0.0
  %4671 = vmatprep.subr.mxu0 0.0
  %4672 = vmatpush1.msra.mxu0 0.0
  %4673 = vmatprep.mubr.f32.mxu0 0.0
  %4674 = vmatmul.mubr.f32.gmra.mrb[0].mxu0 %v1704
  %v4675 = vpop.f32.mrb[0].mxu0
  %v4676 = vadd.f32 %v4606, %v4675
  %v4677 = vpop.f32.mrb[0].mxu0
  %4678 = vdwg.mxu0
  %v4679 = vadd.f32 %v4676, %v4113
  %4680 = vmatprep.subr.mxu0 0.0
  %4681 = vmatpush1.msra.mxu0 %v2804
  %4682 = vmatprep.subr.mxu0 0.0
  %4683 = vmatpush1.msra.mxu0 %v3964
  %4684 = vmatprep.subr.mxu0 0.0
  %4685 = vmatpush1.msra.mxu0 0.0
  %4686 = vmatprep.subr.mxu0 0.0
  %4687 = vmatpush1.msra.mxu0 0.0
  %4688 = vmatprep.subr.mxu0 0.0
  %4689 = vmatpush1.msra.mxu0 0.0
  %4690 = vmatprep.subr.mxu0 0.0
  %4691 = vmatpush1.msra.mxu0 0.0
  %4692 = vmatprep.subr.mxu0 0.0
  %4693 = vmatpush1.msra.mxu0 0.0
  %4694 = vmatprep.subr.mxu0 0.0
  %4695 = vmatpush1.msra.mxu0 0.0
  %4696 = vmatprep.subr.mxu0 0.0
  %4697 = vmatpush1.msra.mxu0 0.0
  %4698 = vmatprep.subr.mxu0 0.0
  %4699 = vmatpush1.msra.mxu0 0.0
  %4700 = vmatprep.subr.mxu0 0.0
  %4701 = vmatpush1.msra.mxu0 0.0
  %4702 = vmatprep.subr.mxu0 0.0
  %4703 = vmatpush1.msra.mxu0 0.0
  %4704 = vmatprep.subr.mxu0 0.0
  %4705 = vmatpush1.msra.mxu0 0.0
  %4706 = vmatprep.subr.mxu0 0.0
  %4707 = vmatpush1.msra.mxu0 0.0
  %4708 = vmatprep.subr.mxu0 0.0
  %4709 = vmatpush1.msra.mxu0 0.0
  %4710 = vmatprep.subr.mxu0 0.0
  %4711 = vmatpush1.msra.mxu0 0.0
  %4712 = vmatprep.subr.mxu0 0.0
  %4713 = vmatpush1.msra.mxu0 0.0
  %4714 = vmatprep.subr.mxu0 0.0
  %4715 = vmatpush1.msra.mxu0 0.0
  %4716 = vmatprep.subr.mxu0 0.0
  %4717 = vmatpush1.msra.mxu0 0.0
  %4718 = vmatprep.subr.mxu0 0.0
  %4719 = vmatpush1.msra.mxu0 0.0
  %4720 = vmatprep.subr.mxu0 0.0
  %4721 = vmatpush1.msra.mxu0 0.0
  %4722 = vmatprep.subr.mxu0 0.0
  %4723 = vmatpush1.msra.mxu0 0.0
  %4724 = vmatprep.subr.mxu0 0.0
  %4725 = vmatpush1.msra.mxu0 0.0
  %4726 = vmatprep.subr.mxu0 0.0
  %4727 = vmatpush1.msra.mxu0 0.0
  %4728 = vmatprep.subr.mxu0 0.0
  %4729 = vmatpush1.msra.mxu0 0.0
  %4730 = vmatprep.subr.mxu0 0.0
  %4731 = vmatpush1.msra.mxu0 0.0
  %4732 = vmatprep.subr.mxu0 0.0
  %4733 = vmatpush1.msra.mxu0 0.0
  %4734 = vmatprep.subr.mxu0 0.0
  %4735 = vmatpush1.msra.mxu0 0.0
  %4736 = vmatprep.subr.mxu0 0.0
  %4737 = vmatpush1.msra.mxu0 0.0
  %4738 = vmatprep.subr.mxu0 0.0
  %4739 = vmatpush1.msra.mxu0 0.0
  %4740 = vmatprep.subr.mxu0 0.0
  %4741 = vmatpush1.msra.mxu0 0.0
  %4742 = vmatprep.subr.mxu0 0.0
  %4743 = vmatpush1.msra.mxu0 0.0
  %4744 = vmatprep.mubr.f32.mxu0 0.0
  %4745 = vmatmul.mubr.f32.gmra.mrb[0].mxu0 %v2299
  %v4746 = vpop.f32.mrb[0].mxu0
  %v4747 = vadd.f32 0.0, %v4746
  %v4748 = vpop.f32.mrb[0].mxu0
  %4749 = vdwg.mxu0
  %4750 = vmatprep.subr.mxu0 0.0
  %4751 = vmatpush1.msra.mxu0 %v2801
  %4752 = vmatprep.subr.mxu0 0.0
  %4753 = vmatpush1.msra.mxu0 %v4037
  %4754 = vmatprep.subr.mxu0 0.0
  %4755 = vmatpush1.msra.mxu0 0.0
  %4756 = vmatprep.subr.mxu0 0.0
  %4757 = vmatpush1.msra.mxu0 0.0
  %4758 = vmatprep.subr.mxu0 0.0
  %4759 = vmatpush1.msra.mxu0 0.0
  %4760 = vmatprep.subr.mxu0 0.0
  %4761 = vmatpush1.msra.mxu0 0.0
  %4762 = vmatprep.subr.mxu0 0.0
  %4763 = vmatpush1.msra.mxu0 0.0
  %4764 = vmatprep.subr.mxu0 0.0
  %4765 = vmatpush1.msra.mxu0 0.0
  %4766 = vmatprep.subr.mxu0 0.0
  %4767 = vmatpush1.msra.mxu0 0.0
  %4768 = vmatprep.subr.mxu0 0.0
  %4769 = vmatpush1.msra.mxu0 0.0
  %4770 = vmatprep.subr.mxu0 0.0
  %4771 = vmatpush1.msra.mxu0 0.0
  %4772 = vmatprep.subr.mxu0 0.0
  %4773 = vmatpush1.msra.mxu0 0.0
  %4774 = vmatprep.subr.mxu0 0.0
  %4775 = vmatpush1.msra.mxu0 0.0
  %4776 = vmatprep.subr.mxu0 0.0
  %4777 = vmatpush1.msra.mxu0 0.0
  %4778 = vmatprep.subr.mxu0 0.0
  %4779 = vmatpush1.msra.mxu0 0.0
  %4780 = vmatprep.subr.mxu0 0.0
  %4781 = vmatpush1.msra.mxu0 0.0
  %4782 = vmatprep.subr.mxu0 0.0
  %4783 = vmatpush1.msra.mxu0 0.0
  %4784 = vmatprep.subr.mxu0 0.0
  %4785 = vmatpush1.msra.mxu0 0.0
  %4786 = vmatprep.subr.mxu0 0.0
  %4787 = vmatpush1.msra.mxu0 0.0
  %4788 = vmatprep.subr.mxu0 0.0
  %4789 = vmatpush1.msra.mxu0 0.0
  %4790 = vmatprep.subr.mxu0 0.0
  %4791 = vmatpush1.msra.mxu0 0.0
  %4792 = vmatprep.subr.mxu0 0.0
  %4793 = vmatpush1.msra.mxu0 0.0
  %4794 = vmatprep.subr.mxu0 0.0
  %4795 = vmatpush1.msra.mxu0 0.0
  %4796 = vmatprep.subr.mxu0 0.0
  %4797 = vmatpush1.msra.mxu0 0.0
  %4798 = vmatprep.subr.mxu0 0.0
  %4799 = vmatpush1.msra.mxu0 0.0
  %4800 = vmatprep.subr.mxu0 0.0
  %4801 = vmatpush1.msra.mxu0 0.0
  %4802 = vmatprep.subr.mxu0 0.0
  %4803 = vmatpush1.msra.mxu0 0.0
  %4804 = vmatprep.subr.mxu0 0.0
  %4805 = vmatpush1.msra.mxu0 0.0
  %4806 = vmatprep.subr.mxu0 0.0
  %4807 = vmatpush1.msra.mxu0 0.0
  %4808 = vmatprep.subr.mxu0 0.0
  %4809 = vmatpush1.msra.mxu0 0.0
  %4810 = vmatprep.subr.mxu0 0.0
  %4811 = vmatpush1.msra.mxu0 0.0
  %4812 = vmatprep.subr.mxu0 0.0
  %4813 = vmatpush1.msra.mxu0 0.0
  %4814 = vmatprep.mubr.f32.mxu0 0.0
  %4815 = vmatmul.mubr.f32.gmra.mrb[0].mxu0 %v1803
  %v4816 = vpop.f32.mrb[0].mxu0
  %v4817 = vadd.f32 %v4747, %v4816
  %v4818 = vpop.f32.mrb[0].mxu0
  %4819 = vdwg.mxu0
  %v4820 = vadd.f32 %v4817, %v4113
  %4821 = vmatprep.subr.mxu0 0.0
  %4822 = vmatpush1.msra.mxu0 %v2804
  %4823 = vmatprep.subr.mxu0 0.0
  %4824 = vmatpush1.msra.mxu0 %v3964
  %4825 = vmatprep.subr.mxu0 0.0
  %4826 = vmatpush1.msra.mxu0 0.0
  %4827 = vmatprep.subr.mxu0 0.0
  %4828 = vmatpush1.msra.mxu0 0.0
  %4829 = vmatprep.subr.mxu0 0.0
  %4830 = vmatpush1.msra.mxu0 0.0
  %4831 = vmatprep.subr.mxu0 0.0
  %4832 = vmatpush1.msra.mxu0 0.0
  %4833 = vmatprep.subr.mxu0 0.0
  %4834 = vmatpush1.msra.mxu0 0.0
  %4835 = vmatprep.subr.mxu0 0.0
  %4836 = vmatpush1.msra.mxu0 0.0
  %4837 = vmatprep.subr.mxu0 0.0
  %4838 = vmatpush1.msra.mxu0 0.0
  %4839 = vmatprep.subr.mxu0 0.0
  %4840 = vmatpush1.msra.mxu0 0.0
  %4841 = vmatprep.subr.mxu0 0.0
  %4842 = vmatpush1.msra.mxu0 0.0
  %4843 = vmatprep.subr.mxu0 0.0
  %4844 = vmatpush1.msra.mxu0 0.0
  %4845 = vmatprep.subr.mxu0 0.0
  %4846 = vmatpush1.msra.mxu0 0.0
  %4847 = vmatprep.subr.mxu0 0.0
  %4848 = vmatpush1.msra.mxu0 0.0
  %4849 = vmatprep.subr.mxu0 0.0
  %4850 = vmatpush1.msra.mxu0 0.0
  %4851 = vmatprep.subr.mxu0 0.0
  %4852 = vmatpush1.msra.mxu0 0.0
  %4853 = vmatprep.subr.mxu0 0.0
  %4854 = vmatpush1.msra.mxu0 0.0
  %4855 = vmatprep.subr.mxu0 0.0
  %4856 = vmatpush1.msra.mxu0 0.0
  %4857 = vmatprep.subr.mxu0 0.0
  %4858 = vmatpush1.msra.mxu0 0.0
  %4859 = vmatprep.subr.mxu0 0.0
  %4860 = vmatpush1.msra.mxu0 0.0
  %4861 = vmatprep.subr.mxu0 0.0
  %4862 = vmatpush1.msra.mxu0 0.0
  %4863 = vmatprep.subr.mxu0 0.0
  %4864 = vmatpush1.msra.mxu0 0.0
  %4865 = vmatprep.subr.mxu0 0.0
  %4866 = vmatpush1.msra.mxu0 0.0
  %4867 = vmatprep.subr.mxu0 0.0
  %4868 = vmatpush1.msra.mxu0 0.0
  %4869 = vmatprep.subr.mxu0 0.0
  %4870 = vmatpush1.msra.mxu0 0.0
  %4871 = vmatprep.subr.mxu0 0.0
  %4872 = vmatpush1.msra.mxu0 0.0
  %4873 = vmatprep.subr.mxu0 0.0
  %4874 = vmatpush1.msra.mxu0 0.0
  %4875 = vmatprep.subr.mxu0 0.0
  %4876 = vmatpush1.msra.mxu0 0.0
  %4877 = vmatprep.subr.mxu0 0.0
  %4878 = vmatpush1.msra.mxu0 0.0
  %4879 = vmatprep.subr.mxu0 0.0
  %4880 = vmatpush1.msra.mxu0 0.0
  %4881 = vmatprep.subr.mxu0 0.0
  %4882 = vmatpush1.msra.mxu0 0.0
  %4883 = vmatprep.subr.mxu0 0.0
  %4884 = vmatpush1.msra.mxu0 0.0
  %4885 = vmatprep.mubr.f32.mxu0 0.0
  %4886 = vmatmul.mubr.f32.gmra.mrb[0].mxu0 %v2200
  %v4887 = vpop.f32.mrb[0].mxu0
  %v4888 = vadd.f32 0.0, %v4887
  %v4889 = vpop.f32.mrb[0].mxu0
  %4890 = vdwg.mxu0
  %4891 = vmatprep.subr.mxu0 0.0
  %4892 = vmatpush1.msra.mxu0 %v2801
  %4893 = vmatprep.subr.mxu0 0.0
  %4894 = vmatpush1.msra.mxu0 %v4037
  %4895 = vmatprep.subr.mxu0 0.0
  %4896 = vmatpush1.msra.mxu0 0.0
  %4897 = vmatprep.subr.mxu0 0.0
  %4898 = vmatpush1.msra.mxu0 0.0
  %4899 = vmatprep.subr.mxu0 0.0
  %4900 = vmatpush1.msra.mxu0 0.0
  %4901 = vmatprep.subr.mxu0 0.0
  %4902 = vmatpush1.msra.mxu0 0.0
  %4903 = vmatprep.subr.mxu0 0.0
  %4904 = vmatpush1.msra.mxu0 0.0
  %4905 = vmatprep.subr.mxu0 0.0
  %4906 = vmatpush1.msra.mxu0 0.0
  %4907 = vmatprep.subr.mxu0 0.0
  %4908 = vmatpush1.msra.mxu0 0.0
  %4909 = vmatprep.subr.mxu0 0.0
  %4910 = vmatpush1.msra.mxu0 0.0
  %4911 = vmatprep.subr.mxu0 0.0
  %4912 = vmatpush1.msra.mxu0 0.0
  %4913 = vmatprep.subr.mxu0 0.0
  %4914 = vmatpush1.msra.mxu0 0.0
  %4915 = vmatprep.subr.mxu0 0.0
  %4916 = vmatpush1.msra.mxu0 0.0
  %4917 = vmatprep.subr.mxu0 0.0
  %4918 = vmatpush1.msra.mxu0 0.0
  %4919 = vmatprep.subr.mxu0 0.0
  %4920 = vmatpush1.msra.mxu0 0.0
  %4921 = vmatprep.subr.mxu0 0.0
  %4922 = vmatpush1.msra.mxu0 0.0
  %4923 = vmatprep.subr.mxu0 0.0
  %4924 = vmatpush1.msra.mxu0 0.0
  %4925 = vmatprep.subr.mxu0 0.0
  %4926 = vmatpush1.msra.mxu0 0.0
  %4927 = vmatprep.subr.mxu0 0.0
  %4928 = vmatpush1.msra.mxu0 0.0
  %4929 = vmatprep.subr.mxu0 0.0
  %4930 = vmatpush1.msra.mxu0 0.0
  %4931 = vmatprep.subr.mxu0 0.0
  %4932 = vmatpush1.msra.mxu0 0.0
  %4933 = vmatprep.subr.mxu0 0.0
  %4934 = vmatpush1.msra.mxu0 0.0
  %4935 = vmatprep.subr.mxu0 0.0
  %4936 = vmatpush1.msra.mxu0 0.0
  %4937 = vmatprep.subr.mxu0 0.0
  %4938 = vmatpush1.msra.mxu0 0.0
  %4939 = vmatprep.subr.mxu0 0.0
  %4940 = vmatpush1.msra.mxu0 0.0
  %4941 = vmatprep.subr.mxu0 0.0
  %4942 = vmatpush1.msra.mxu0 0.0
  %4943 = vmatprep.subr.mxu0 0.0
  %4944 = vmatpush1.msra.mxu0 0.0
  %4945 = vmatprep.subr.mxu0 0.0
  %4946 = vmatpush1.msra.mxu0 0.0
  %4947 = vmatprep.subr.mxu0 0.0
  %4948 = vmatpush1.msra.mxu0 0.0
  %4949 = vmatprep.subr.mxu0 0.0
  %4950 = vmatpush1.msra.mxu0 0.0
  %4951 = vmatprep.subr.mxu0 0.0
  %4952 = vmatpush1.msra.mxu0 0.0
  %4953 = vmatprep.subr.mxu0 0.0
  %4954 = vmatpush1.msra.mxu0 0.0
  %4955 = vmatprep.mubr.f32.mxu0 0.0
  %4956 = vmatmul.mubr.f32.gmra.mrb[0].mxu0 %v1902
  %v4957 = vpop.f32.mrb[0].mxu0
  %v4958 = vadd.f32 %v4888, %v4957
  %v4959 = vpop.f32.mrb[0].mxu0
  %4960 = vdwg.mxu0
  %v4961 = vadd.f32 %v4958, %v4113
  %4962 = vmatprep.subr.mxu0 0.0
  %4963 = vmatpush1.msra.mxu0 %v2804
  %4964 = vmatprep.subr.mxu0 0.0
  %4965 = vmatpush1.msra.mxu0 %v3964
  %4966 = vmatprep.subr.mxu0 0.0
  %4967 = vmatpush1.msra.mxu0 0.0
  %4968 = vmatprep.subr.mxu0 0.0
  %4969 = vmatpush1.msra.mxu0 0.0
  %4970 = vmatprep.subr.mxu0 0.0
  %4971 = vmatpush1.msra.mxu0 0.0
  %4972 = vmatprep.subr.mxu0 0.0
  %4973 = vmatpush1.msra.mxu0 0.0
  %4974 = vmatprep.subr.mxu0 0.0
  %4975 = vmatpush1.msra.mxu0 0.0
  %4976 = vmatprep.subr.mxu0 0.0
  %4977 = vmatpush1.msra.mxu0 0.0
  %4978 = vmatprep.subr.mxu0 0.0
  %4979 = vmatpush1.msra.mxu0 0.0
  %4980 = vmatprep.subr.mxu0 0.0
  %4981 = vmatpush1.msra.mxu0 0.0
  %4982 = vmatprep.subr.mxu0 0.0
  %4983 = vmatpush1.msra.mxu0 0.0
  %4984 = vmatprep.subr.mxu0 0.0
  %4985 = vmatpush1.msra.mxu0 0.0
  %4986 = vmatprep.subr.mxu0 0.0
  %4987 = vmatpush1.msra.mxu0 0.0
  %4988 = vmatprep.subr.mxu0 0.0
  %4989 = vmatpush1.msra.mxu0 0.0
  %4990 = vmatprep.subr.mxu0 0.0
  %4991 = vmatpush1.msra.mxu0 0.0
  %4992 = vmatprep.subr.mxu0 0.0
  %4993 = vmatpush1.msra.mxu0 0.0
  %4994 = vmatprep.subr.mxu0 0.0
  %4995 = vmatpush1.msra.mxu0 0.0
  %4996 = vmatprep.subr.mxu0 0.0
  %4997 = vmatpush1.msra.mxu0 0.0
  %4998 = vmatprep.subr.mxu0 0.0
  %4999 = vmatpush1.msra.mxu0 0.0
  %5000 = vmatprep.subr.mxu0 0.0
  %5001 = vmatpush1.msra.mxu0 0.0
  %5002 = vmatprep.subr.mxu0 0.0
  %5003 = vmatpush1.msra.mxu0 0.0
  %5004 = vmatprep.subr.mxu0 0.0
  %5005 = vmatpush1.msra.mxu0 0.0
  %5006 = vmatprep.subr.mxu0 0.0
  %5007 = vmatpush1.msra.mxu0 0.0
  %5008 = vmatprep.subr.mxu0 0.0
  %5009 = vmatpush1.msra.mxu0 0.0
  %5010 = vmatprep.subr.mxu0 0.0
  %5011 = vmatpush1.msra.mxu0 0.0
  %5012 = vmatprep.subr.mxu0 0.0
  %5013 = vmatpush1.msra.mxu0 0.0
  %5014 = vmatprep.subr.mxu0 0.0
  %5015 = vmatpush1.msra.mxu0 0.0
  %5016 = vmatprep.subr.mxu0 0.0
  %5017 = vmatpush1.msra.mxu0 0.0
  %5018 = vmatprep.subr.mxu0 0.0
  %5019 = vmatpush1.msra.mxu0 0.0
  %5020 = vmatprep.subr.mxu0 0.0
  %5021 = vmatpush1.msra.mxu0 0.0
  %5022 = vmatprep.subr.mxu0 0.0
  %5023 = vmatpush1.msra.mxu0 0.0
  %5024 = vmatprep.subr.mxu0 0.0
  %5025 = vmatpush1.msra.mxu0 0.0
  %5026 = vmatprep.mubr.f32.mxu0 0.0
  %5027 = vmatmul.mubr.f32.gmra.mrb[0].mxu0 %v2101
  %v5028 = vpop.f32.mrb[0].mxu0
  %v5029 = vadd.f32 0.0, %v5028
  %v5030 = vpop.f32.mrb[0].mxu0
  %5031 = vdwg.mxu0
  %5032 = vmatprep.subr.mxu0 0.0
  %5033 = vmatpush1.msra.mxu0 %v2801
  %5034 = vmatprep.subr.mxu0 0.0
  %5035 = vmatpush1.msra.mxu0 %v4037
  %5036 = vmatprep.subr.mxu0 0.0
  %5037 = vmatpush1.msra.mxu0 0.0
  %5038 = vmatprep.subr.mxu0 0.0
  %5039 = vmatpush1.msra.mxu0 0.0
  %5040 = vmatprep.subr.mxu0 0.0
  %5041 = vmatpush1.msra.mxu0 0.0
  %5042 = vmatprep.subr.mxu0 0.0
  %5043 = vmatpush1.msra.mxu0 0.0
  %5044 = vmatprep.subr.mxu0 0.0
  %5045 = vmatpush1.msra.mxu0 0.0
  %5046 = vmatprep.subr.mxu0 0.0
  %5047 = vmatpush1.msra.mxu0 0.0
  %5048 = vmatprep.subr.mxu0 0.0
  %5049 = vmatpush1.msra.mxu0 0.0
  %5050 = vmatprep.subr.mxu0 0.0
  %5051 = vmatpush1.msra.mxu0 0.0
  %5052 = vmatprep.subr.mxu0 0.0
  %5053 = vmatpush1.msra.mxu0 0.0
  %5054 = vmatprep.subr.mxu0 0.0
  %5055 = vmatpush1.msra.mxu0 0.0
  %5056 = vmatprep.subr.mxu0 0.0
  %5057 = vmatpush1.msra.mxu0 0.0
  %5058 = vmatprep.subr.mxu0 0.0
  %5059 = vmatpush1.msra.mxu0 0.0
  %5060 = vmatprep.subr.mxu0 0.0
  %5061 = vmatpush1.msra.mxu0 0.0
  %5062 = vmatprep.subr.mxu0 0.0
  %5063 = vmatpush1.msra.mxu0 0.0
  %5064 = vmatprep.subr.mxu0 0.0
  %5065 = vmatpush1.msra.mxu0 0.0
  %5066 = vmatprep.subr.mxu0 0.0
  %5067 = vmatpush1.msra.mxu0 0.0
  %5068 = vmatprep.subr.mxu0 0.0
  %5069 = vmatpush1.msra.mxu0 0.0
  %5070 = vmatprep.subr.mxu0 0.0
  %5071 = vmatpush1.msra.mxu0 0.0
  %5072 = vmatprep.subr.mxu0 0.0
  %5073 = vmatpush1.msra.mxu0 0.0
  %5074 = vmatprep.subr.mxu0 0.0
  %5075 = vmatpush1.msra.mxu0 0.0
  %5076 = vmatprep.subr.mxu0 0.0
  %5077 = vmatpush1.msra.mxu0 0.0
  %5078 = vmatprep.subr.mxu0 0.0
  %5079 = vmatpush1.msra.mxu0 0.0
  %5080 = vmatprep.subr.mxu0 0.0
  %5081 = vmatpush1.msra.mxu0 0.0
  %5082 = vmatprep.subr.mxu0 0.0
  %5083 = vmatpush1.msra.mxu0 0.0
  %5084 = vmatprep.subr.mxu0 0.0
  %5085 = vmatpush1.msra.mxu0 0.0
  %5086 = vmatprep.subr.mxu0 0.0
  %5087 = vmatpush1.msra.mxu0 0.0
  %5088 = vmatprep.subr.mxu0 0.0
  %5089 = vmatpush1.msra.mxu0 0.0
  %5090 = vmatprep.subr.mxu0 0.0
  %5091 = vmatpush1.msra.mxu0 0.0
  %5092 = vmatprep.subr.mxu0 0.0
  %5093 = vmatpush1.msra.mxu0 0.0
  %5094 = vmatprep.subr.mxu0 0.0
  %5095 = vmatpush1.msra.mxu0 0.0
  %5096 = vmatprep.mubr.f32.mxu0 0.0
  %5097 = vmatmul.mubr.f32.gmra.mrb[0].mxu0 %v3890
  %v5098 = vpop.f32.mrb[0].mxu0
  %v5099 = vadd.f32 %v5029, %v5098
  %v5100 = vpop.f32.mrb[0].mxu0
  %5101 = vdwg.mxu0
  %v5102 = vadd.f32 %v5099, %v4113
  %v5104 = vsel %vm48, %v2799, 0
  %5106 = vmatprep.subr.mxu0 0.0
  %5107 = vmatpush1.msra.mxu0 %v2798
  %5108 = vmatprep.subr.mxu0 0.0
  %5109 = vmatpush1.msra.mxu0 %v5104
  %5110 = vmatprep.subr.mxu0 0.0
  %5111 = vmatpush1.msra.mxu0 0.0
  %5112 = vmatprep.subr.mxu0 0.0
  %5113 = vmatpush1.msra.mxu0 0.0
  %5114 = vmatprep.subr.mxu0 0.0
  %5115 = vmatpush1.msra.mxu0 0.0
  %5116 = vmatprep.subr.mxu0 0.0
  %5117 = vmatpush1.msra.mxu0 0.0
  %5118 = vmatprep.subr.mxu0 0.0
  %5119 = vmatpush1.msra.mxu0 0.0
  %5120 = vmatprep.subr.mxu0 0.0
  %5121 = vmatpush1.msra.mxu0 0.0
  %5122 = vmatprep.subr.mxu0 0.0
  %5123 = vmatpush1.msra.mxu0 0.0
  %5124 = vmatprep.subr.mxu0 0.0
  %5125 = vmatpush1.msra.mxu0 0.0
  %5126 = vmatprep.subr.mxu0 0.0
  %5127 = vmatpush1.msra.mxu0 0.0
  %5128 = vmatprep.subr.mxu0 0.0
  %5129 = vmatpush1.msra.mxu0 0.0
  %5130 = vmatprep.subr.mxu0 0.0
  %5131 = vmatpush1.msra.mxu0 0.0
  %5132 = vmatprep.subr.mxu0 0.0
  %5133 = vmatpush1.msra.mxu0 0.0
  %5134 = vmatprep.subr.mxu0 0.0
  %5135 = vmatpush1.msra.mxu0 0.0
  %5136 = vmatprep.subr.mxu0 0.0
  %5137 = vmatpush1.msra.mxu0 0.0
  %5138 = vmatprep.subr.mxu0 0.0
  %5139 = vmatpush1.msra.mxu0 0.0
  %5140 = vmatprep.subr.mxu0 0.0
  %5141 = vmatpush1.msra.mxu0 0.0
  %5142 = vmatprep.subr.mxu0 0.0
  %5143 = vmatpush1.msra.mxu0 0.0
  %5144 = vmatprep.subr.mxu0 0.0
  %5145 = vmatpush1.msra.mxu0 0.0
  %5146 = vmatprep.subr.mxu0 0.0
  %5147 = vmatpush1.msra.mxu0 0.0
  %5148 = vmatprep.subr.mxu0 0.0
  %5149 = vmatpush1.msra.mxu0 0.0
  %5150 = vmatprep.subr.mxu0 0.0
  %5151 = vmatpush1.msra.mxu0 0.0
  %5152 = vmatprep.subr.mxu0 0.0
  %5153 = vmatpush1.msra.mxu0 0.0
  %5154 = vmatprep.subr.mxu0 0.0
  %5155 = vmatpush1.msra.mxu0 0.0
  %5156 = vmatprep.subr.mxu0 0.0
  %5157 = vmatpush1.msra.mxu0 0.0
  %5158 = vmatprep.subr.mxu0 0.0
  %5159 = vmatpush1.msra.mxu0 0.0
  %5160 = vmatprep.subr.mxu0 0.0
  %5161 = vmatpush1.msra.mxu0 0.0
  %5162 = vmatprep.subr.mxu0 0.0
  %5163 = vmatpush1.msra.mxu0 0.0
  %5164 = vmatprep.subr.mxu0 0.0
  %5165 = vmatpush1.msra.mxu0 0.0
  %5166 = vmatprep.subr.mxu0 0.0
  %5167 = vmatpush1.msra.mxu0 0.0
  %5168 = vmatprep.subr.mxu0 0.0
  %5169 = vmatpush1.msra.mxu0 0.0
  %5170 = vmatprep.mubr.f32.mxu0 0.0
  %5171 = vmatmul.mubr.f32.gmra.mrb[0].mxu0 %v1206
  %v5172 = vpop.f32.mrb[0].mxu0
  %v5173 = vadd.f32 %v2970, %v5172
  %v5174 = vpop.f32.mrb[0].mxu0
  %5175 = vdwg.mxu0
  %v5176 = vxor.u32 %v5173, 2147483648
  %v5177 = vmul.f32 %v5176, 1.442695
  %v5178 = vpow.pop %v5177
  %v5179 = vadd.f32 %v5178, 1.0
  %v5180 = vrcp.pop %v5179
  %v5181 = vmul.f32 1.0, %v5180
  %v5182 = vtanh.pop %v5173
  %v5183 = vmul.f32 %v5181, 0.0
  %5185 = vrot.lane.b32.xlu0 %v5182, 100
  %v5186 = vpop.permute.xlu0 %5185
  %v5188 = vmul.f32 %v5181, %v5186
  %5190 = vrot.lane.b32.xlu0 %v5188, 14
  %v5191 = vpop.permute.xlu0 %5190
  %v5193 = vadd.f32 %v5183, %v5191
  %v5194 = vtanh.pop %v5193
  %5196 = vrot.lane.b32.xlu0 %v5194, 28
  %v5197 = vpop.permute.xlu0 %5196
  %v5199 = vmul.f32 %v5181, %v5197
  %5201 = vrot.lane.b32.xlu0 %v5199, 86
  %v5202 = vpop.permute.xlu0 %5201
  %v5203 = vsel %vm1204, %v5202, 0
  %5205 = vmatprep.subr.mxu0 0.0
  %5206 = vmatpush1.msra.mxu0 %v2798
  %5207 = vmatprep.subr.mxu0 0.0
  %5208 = vmatpush1.msra.mxu0 %v5104
  %5209 = vmatprep.subr.mxu0 0.0
  %5210 = vmatpush1.msra.mxu0 0.0
  %5211 = vmatprep.subr.mxu0 0.0
  %5212 = vmatpush1.msra.mxu0 0.0
  %5213 = vmatprep.subr.mxu0 0.0
  %5214 = vmatpush1.msra.mxu0 0.0
  %5215 = vmatprep.subr.mxu0 0.0
  %5216 = vmatpush1.msra.mxu0 0.0
  %5217 = vmatprep.subr.mxu0 0.0
  %5218 = vmatpush1.msra.mxu0 0.0
  %5219 = vmatprep.subr.mxu0 0.0
  %5220 = vmatpush1.msra.mxu0 0.0
  %5221 = vmatprep.subr.mxu0 0.0
  %5222 = vmatpush1.msra.mxu0 0.0
  %5223 = vmatprep.subr.mxu0 0.0
  %5224 = vmatpush1.msra.mxu0 0.0
  %5225 = vmatprep.subr.mxu0 0.0
  %5226 = vmatpush1.msra.mxu0 0.0
  %5227 = vmatprep.subr.mxu0 0.0
  %5228 = vmatpush1.msra.mxu0 0.0
  %5229 = vmatprep.subr.mxu0 0.0
  %5230 = vmatpush1.msra.mxu0 0.0
  %5231 = vmatprep.subr.mxu0 0.0
  %5232 = vmatpush1.msra.mxu0 0.0
  %5233 = vmatprep.subr.mxu0 0.0
  %5234 = vmatpush1.msra.mxu0 0.0
  %5235 = vmatprep.subr.mxu0 0.0
  %5236 = vmatpush1.msra.mxu0 0.0
  %5237 = vmatprep.subr.mxu0 0.0
  %5238 = vmatpush1.msra.mxu0 0.0
  %5239 = vmatprep.subr.mxu0 0.0
  %5240 = vmatpush1.msra.mxu0 0.0
  %5241 = vmatprep.subr.mxu0 0.0
  %5242 = vmatpush1.msra.mxu0 0.0
  %5243 = vmatprep.subr.mxu0 0.0
  %5244 = vmatpush1.msra.mxu0 0.0
  %5245 = vmatprep.subr.mxu0 0.0
  %5246 = vmatpush1.msra.mxu0 0.0
  %5247 = vmatprep.subr.mxu0 0.0
  %5248 = vmatpush1.msra.mxu0 0.0
  %5249 = vmatprep.subr.mxu0 0.0
  %5250 = vmatpush1.msra.mxu0 0.0
  %5251 = vmatprep.subr.mxu0 0.0
  %5252 = vmatpush1.msra.mxu0 0.0
  %5253 = vmatprep.subr.mxu0 0.0
  %5254 = vmatpush1.msra.mxu0 0.0
  %5255 = vmatprep.subr.mxu0 0.0
  %5256 = vmatpush1.msra.mxu0 0.0
  %5257 = vmatprep.subr.mxu0 0.0
  %5258 = vmatpush1.msra.mxu0 0.0
  %5259 = vmatprep.subr.mxu0 0.0
  %5260 = vmatpush1.msra.mxu0 0.0
  %5261 = vmatprep.subr.mxu0 0.0
  %5262 = vmatpush1.msra.mxu0 0.0
  %5263 = vmatprep.subr.mxu0 0.0
  %5264 = vmatpush1.msra.mxu0 0.0
  %5265 = vmatprep.subr.mxu0 0.0
  %5266 = vmatpush1.msra.mxu0 0.0
  %5267 = vmatprep.subr.mxu0 0.0
  %5268 = vmatpush1.msra.mxu0 0.0
  %5269 = vmatprep.mubr.f32.mxu0 0.0
  %5270 = vmatmul.mubr.f32.gmra.mrb[0].mxu0 %v5203
  %v5271 = vpop.f32.mrb[0].mxu0
  %v5272 = vadd.f32 %v3111, %v5271
  %v5273 = vpop.f32.mrb[0].mxu0
  %5274 = vdwg.mxu0
  %v5275 = vxor.u32 %v5272, 2147483648
  %v5276 = vmul.f32 %v5275, 1.442695
  %v5277 = vpow.pop %v5276
  %v5278 = vadd.f32 %v5277, 1.0
  %v5279 = vrcp.pop %v5278
  %v5280 = vmul.f32 1.0, %v5279
  %v5281 = vtanh.pop %v5272
  %v5282 = vmul.f32 %v5280, %v5193
  %5284 = vrot.lane.b32.xlu0 %v5281, 100
  %v5285 = vpop.permute.xlu0 %5284
  %v5287 = vmul.f32 %v5280, %v5285
  %5289 = vrot.lane.b32.xlu0 %v5287, 14
  %v5290 = vpop.permute.xlu0 %5289
  %v5292 = vadd.f32 %v5282, %v5290
  %v5293 = vtanh.pop %v5292
  %5295 = vrot.lane.b32.xlu0 %v5293, 28
  %v5296 = vpop.permute.xlu0 %5295
  %v5298 = vmul.f32 %v5280, %v5296
  %5300 = vrot.lane.b32.xlu0 %v5298, 86
  %v5301 = vpop.permute.xlu0 %5300
  %v5302 = vsel %vm1204, %v5301, 0
  %5304 = vmatprep.subr.mxu0 0.0
  %5305 = vmatpush1.msra.mxu0 %v2798
  %5306 = vmatprep.subr.mxu0 0.0
  %5307 = vmatpush1.msra.mxu0 %v5104
  %5308 = vmatprep.subr.mxu0 0.0
  %5309 = vmatpush1.msra.mxu0 0.0
  %5310 = vmatprep.subr.mxu0 0.0
  %5311 = vmatpush1.msra.mxu0 0.0
  %5312 = vmatprep.subr.mxu0 0.0
  %5313 = vmatpush1.msra.mxu0 0.0
  %5314 = vmatprep.subr.mxu0 0.0
  %5315 = vmatpush1.msra.mxu0 0.0
  %5316 = vmatprep.subr.mxu0 0.0
  %5317 = vmatpush1.msra.mxu0 0.0
  %5318 = vmatprep.subr.mxu0 0.0
  %5319 = vmatpush1.msra.mxu0 0.0
  %5320 = vmatprep.subr.mxu0 0.0
  %5321 = vmatpush1.msra.mxu0 0.0
  %5322 = vmatprep.subr.mxu0 0.0
  %5323 = vmatpush1.msra.mxu0 0.0
  %5324 = vmatprep.subr.mxu0 0.0
  %5325 = vmatpush1.msra.mxu0 0.0
  %5326 = vmatprep.subr.mxu0 0.0
  %5327 = vmatpush1.msra.mxu0 0.0
  %5328 = vmatprep.subr.mxu0 0.0
  %5329 = vmatpush1.msra.mxu0 0.0
  %5330 = vmatprep.subr.mxu0 0.0
  %5331 = vmatpush1.msra.mxu0 0.0
  %5332 = vmatprep.subr.mxu0 0.0
  %5333 = vmatpush1.msra.mxu0 0.0
  %5334 = vmatprep.subr.mxu0 0.0
  %5335 = vmatpush1.msra.mxu0 0.0
  %5336 = vmatprep.subr.mxu0 0.0
  %5337 = vmatpush1.msra.mxu0 0.0
  %5338 = vmatprep.subr.mxu0 0.0
  %5339 = vmatpush1.msra.mxu0 0.0
  %5340 = vmatprep.subr.mxu0 0.0
  %5341 = vmatpush1.msra.mxu0 0.0
  %5342 = vmatprep.subr.mxu0 0.0
  %5343 = vmatpush1.msra.mxu0 0.0
  %5344 = vmatprep.subr.mxu0 0.0
  %5345 = vmatpush1.msra.mxu0 0.0
  %5346 = vmatprep.subr.mxu0 0.0
  %5347 = vmatpush1.msra.mxu0 0.0
  %5348 = vmatprep.subr.mxu0 0.0
  %5349 = vmatpush1.msra.mxu0 0.0
  %5350 = vmatprep.subr.mxu0 0.0
  %5351 = vmatpush1.msra.mxu0 0.0
  %5352 = vmatprep.subr.mxu0 0.0
  %5353 = vmatpush1.msra.mxu0 0.0
  %5354 = vmatprep.subr.mxu0 0.0
  %5355 = vmatpush1.msra.mxu0 0.0
  %5356 = vmatprep.subr.mxu0 0.0
  %5357 = vmatpush1.msra.mxu0 0.0
  %5358 = vmatprep.subr.mxu0 0.0
  %5359 = vmatpush1.msra.mxu0 0.0
  %5360 = vmatprep.subr.mxu0 0.0
  %5361 = vmatpush1.msra.mxu0 0.0
  %5362 = vmatprep.subr.mxu0 0.0
  %5363 = vmatpush1.msra.mxu0 0.0
  %5364 = vmatprep.subr.mxu0 0.0
  %5365 = vmatpush1.msra.mxu0 0.0
  %5366 = vmatprep.subr.mxu0 0.0
  %5367 = vmatpush1.msra.mxu0 0.0
  %5368 = vmatprep.mubr.f32.mxu0 0.0
  %5369 = vmatmul.mubr.f32.gmra.mrb[0].mxu0 %v5302
  %v5370 = vpop.f32.mrb[0].mxu0
  %v5371 = vadd.f32 %v3252, %v5370
  %v5372 = vpop.f32.mrb[0].mxu0
  %5373 = vdwg.mxu0
  %v5374 = vxor.u32 %v5371, 2147483648
  %v5375 = vmul.f32 %v5374, 1.442695
  %v5376 = vpow.pop %v5375
  %v5377 = vadd.f32 %v5376, 1.0
  %v5378 = vrcp.pop %v5377
  %v5379 = vmul.f32 1.0, %v5378
  %v5380 = vtanh.pop %v5371
  %v5381 = vmul.f32 %v5379, %v5292
  %5383 = vrot.lane.b32.xlu0 %v5380, 100
  %v5384 = vpop.permute.xlu0 %5383
  %v5386 = vmul.f32 %v5379, %v5384
  %5388 = vrot.lane.b32.xlu0 %v5386, 14
  %v5389 = vpop.permute.xlu0 %5388
  %v5391 = vadd.f32 %v5381, %v5389
  %v5392 = vtanh.pop %v5391
  %5394 = vrot.lane.b32.xlu0 %v5392, 28
  %v5395 = vpop.permute.xlu0 %5394
  %v5397 = vmul.f32 %v5379, %v5395
  %5399 = vrot.lane.b32.xlu0 %v5397, 86
  %v5400 = vpop.permute.xlu0 %5399
  %v5401 = vsel %vm1204, %v5400, 0
  %5403 = vmatprep.subr.mxu0 0.0
  %5404 = vmatpush1.msra.mxu0 %v2798
  %5405 = vmatprep.subr.mxu0 0.0
  %5406 = vmatpush1.msra.mxu0 %v5104
  %5407 = vmatprep.subr.mxu0 0.0
  %5408 = vmatpush1.msra.mxu0 0.0
  %5409 = vmatprep.subr.mxu0 0.0
  %5410 = vmatpush1.msra.mxu0 0.0
  %5411 = vmatprep.subr.mxu0 0.0
  %5412 = vmatpush1.msra.mxu0 0.0
  %5413 = vmatprep.subr.mxu0 0.0
  %5414 = vmatpush1.msra.mxu0 0.0
  %5415 = vmatprep.subr.mxu0 0.0
  %5416 = vmatpush1.msra.mxu0 0.0
  %5417 = vmatprep.subr.mxu0 0.0
  %5418 = vmatpush1.msra.mxu0 0.0
  %5419 = vmatprep.subr.mxu0 0.0
  %5420 = vmatpush1.msra.mxu0 0.0
  %5421 = vmatprep.subr.mxu0 0.0
  %5422 = vmatpush1.msra.mxu0 0.0
  %5423 = vmatprep.subr.mxu0 0.0
  %5424 = vmatpush1.msra.mxu0 0.0
  %5425 = vmatprep.subr.mxu0 0.0
  %5426 = vmatpush1.msra.mxu0 0.0
  %5427 = vmatprep.subr.mxu0 0.0
  %5428 = vmatpush1.msra.mxu0 0.0
  %5429 = vmatprep.subr.mxu0 0.0
  %5430 = vmatpush1.msra.mxu0 0.0
  %5431 = vmatprep.subr.mxu0 0.0
  %5432 = vmatpush1.msra.mxu0 0.0
  %5433 = vmatprep.subr.mxu0 0.0
  %5434 = vmatpush1.msra.mxu0 0.0
  %5435 = vmatprep.subr.mxu0 0.0
  %5436 = vmatpush1.msra.mxu0 0.0
  %5437 = vmatprep.subr.mxu0 0.0
  %5438 = vmatpush1.msra.mxu0 0.0
  %5439 = vmatprep.subr.mxu0 0.0
  %5440 = vmatpush1.msra.mxu0 0.0
  %5441 = vmatprep.subr.mxu0 0.0
  %5442 = vmatpush1.msra.mxu0 0.0
  %5443 = vmatprep.subr.mxu0 0.0
  %5444 = vmatpush1.msra.mxu0 0.0
  %5445 = vmatprep.subr.mxu0 0.0
  %5446 = vmatpush1.msra.mxu0 0.0
  %5447 = vmatprep.subr.mxu0 0.0
  %5448 = vmatpush1.msra.mxu0 0.0
  %5449 = vmatprep.subr.mxu0 0.0
  %5450 = vmatpush1.msra.mxu0 0.0
  %5451 = vmatprep.subr.mxu0 0.0
  %5452 = vmatpush1.msra.mxu0 0.0
  %5453 = vmatprep.subr.mxu0 0.0
  %5454 = vmatpush1.msra.mxu0 0.0
  %5455 = vmatprep.subr.mxu0 0.0
  %5456 = vmatpush1.msra.mxu0 0.0
  %5457 = vmatprep.subr.mxu0 0.0
  %5458 = vmatpush1.msra.mxu0 0.0
  %5459 = vmatprep.subr.mxu0 0.0
  %5460 = vmatpush1.msra.mxu0 0.0
  %5461 = vmatprep.subr.mxu0 0.0
  %5462 = vmatpush1.msra.mxu0 0.0
  %5463 = vmatprep.subr.mxu0 0.0
  %5464 = vmatpush1.msra.mxu0 0.0
  %5465 = vmatprep.subr.mxu0 0.0
  %5466 = vmatpush1.msra.mxu0 0.0
  %5467 = vmatprep.mubr.f32.mxu0 0.0
  %5468 = vmatmul.mubr.f32.gmra.mrb[0].mxu0 %v5401
  %v5469 = vpop.f32.mrb[0].mxu0
  %v5470 = vadd.f32 %v3393, %v5469
  %v5471 = vpop.f32.mrb[0].mxu0
  %5472 = vdwg.mxu0
  %v5473 = vxor.u32 %v5470, 2147483648
  %v5474 = vmul.f32 %v5473, 1.442695
  %v5475 = vpow.pop %v5474
  %v5476 = vadd.f32 %v5475, 1.0
  %v5477 = vrcp.pop %v5476
  %v5478 = vmul.f32 1.0, %v5477
  %v5479 = vtanh.pop %v5470
  %v5480 = vmul.f32 %v5478, %v5391
  %5482 = vrot.lane.b32.xlu0 %v5479, 100
  %v5483 = vpop.permute.xlu0 %5482
  %v5485 = vmul.f32 %v5478, %v5483
  %5487 = vrot.lane.b32.xlu0 %v5485, 14
  %v5488 = vpop.permute.xlu0 %5487
  %v5490 = vadd.f32 %v5480, %v5488
  %v5491 = vtanh.pop %v5490
  %5493 = vrot.lane.b32.xlu0 %v5491, 28
  %v5494 = vpop.permute.xlu0 %5493
  %v5496 = vmul.f32 %v5478, %v5494
  %5498 = vrot.lane.b32.xlu0 %v5496, 86
  %v5499 = vpop.permute.xlu0 %5498
  %v5500 = vsel %vm1204, %v5499, 0
  %5502 = vmatprep.subr.mxu0 0.0
  %5503 = vmatpush1.msra.mxu0 %v2798
  %5504 = vmatprep.subr.mxu0 0.0
  %5505 = vmatpush1.msra.mxu0 %v5104
  %5506 = vmatprep.subr.mxu0 0.0
  %5507 = vmatpush1.msra.mxu0 0.0
  %5508 = vmatprep.subr.mxu0 0.0
  %5509 = vmatpush1.msra.mxu0 0.0
  %5510 = vmatprep.subr.mxu0 0.0
  %5511 = vmatpush1.msra.mxu0 0.0
  %5512 = vmatprep.subr.mxu0 0.0
  %5513 = vmatpush1.msra.mxu0 0.0
  %5514 = vmatprep.subr.mxu0 0.0
  %5515 = vmatpush1.msra.mxu0 0.0
  %5516 = vmatprep.subr.mxu0 0.0
  %5517 = vmatpush1.msra.mxu0 0.0
  %5518 = vmatprep.subr.mxu0 0.0
  %5519 = vmatpush1.msra.mxu0 0.0
  %5520 = vmatprep.subr.mxu0 0.0
  %5521 = vmatpush1.msra.mxu0 0.0
  %5522 = vmatprep.subr.mxu0 0.0
  %5523 = vmatpush1.msra.mxu0 0.0
  %5524 = vmatprep.subr.mxu0 0.0
  %5525 = vmatpush1.msra.mxu0 0.0
  %5526 = vmatprep.subr.mxu0 0.0
  %5527 = vmatpush1.msra.mxu0 0.0
  %5528 = vmatprep.subr.mxu0 0.0
  %5529 = vmatpush1.msra.mxu0 0.0
  %5530 = vmatprep.subr.mxu0 0.0
  %5531 = vmatpush1.msra.mxu0 0.0
  %5532 = vmatprep.subr.mxu0 0.0
  %5533 = vmatpush1.msra.mxu0 0.0
  %5534 = vmatprep.subr.mxu0 0.0
  %5535 = vmatpush1.msra.mxu0 0.0
  %5536 = vmatprep.subr.mxu0 0.0
  %5537 = vmatpush1.msra.mxu0 0.0
  %5538 = vmatprep.subr.mxu0 0.0
  %5539 = vmatpush1.msra.mxu0 0.0
  %5540 = vmatprep.subr.mxu0 0.0
  %5541 = vmatpush1.msra.mxu0 0.0
  %5542 = vmatprep.subr.mxu0 0.0
  %5543 = vmatpush1.msra.mxu0 0.0
  %5544 = vmatprep.subr.mxu0 0.0
  %5545 = vmatpush1.msra.mxu0 0.0
  %5546 = vmatprep.subr.mxu0 0.0
  %5547 = vmatpush1.msra.mxu0 0.0
  %5548 = vmatprep.subr.mxu0 0.0
  %5549 = vmatpush1.msra.mxu0 0.0
  %5550 = vmatprep.subr.mxu0 0.0
  %5551 = vmatpush1.msra.mxu0 0.0
  %5552 = vmatprep.subr.mxu0 0.0
  %5553 = vmatpush1.msra.mxu0 0.0
  %5554 = vmatprep.subr.mxu0 0.0
  %5555 = vmatpush1.msra.mxu0 0.0
  %5556 = vmatprep.subr.mxu0 0.0
  %5557 = vmatpush1.msra.mxu0 0.0
  %5558 = vmatprep.subr.mxu0 0.0
  %5559 = vmatpush1.msra.mxu0 0.0
  %5560 = vmatprep.subr.mxu0 0.0
  %5561 = vmatpush1.msra.mxu0 0.0
  %5562 = vmatprep.subr.mxu0 0.0
  %5563 = vmatpush1.msra.mxu0 0.0
  %5564 = vmatprep.subr.mxu0 0.0
  %5565 = vmatpush1.msra.mxu0 0.0
  %5566 = vmatprep.mubr.f32.mxu0 0.0
  %5567 = vmatmul.mubr.f32.gmra.mrb[0].mxu0 %v5500
  %v5568 = vpop.f32.mrb[0].mxu0
  %v5569 = vadd.f32 %v3534, %v5568
  %v5570 = vpop.f32.mrb[0].mxu0
  %5571 = vdwg.mxu0
  %v5572 = vxor.u32 %v5569, 2147483648
  %v5573 = vmul.f32 %v5572, 1.442695
  %v5574 = vpow.pop %v5573
  %v5575 = vadd.f32 %v5574, 1.0
  %v5576 = vrcp.pop %v5575
  %v5577 = vmul.f32 1.0, %v5576
  %v5578 = vtanh.pop %v5569
  %v5579 = vmul.f32 %v5577, %v5490
  %5581 = vrot.lane.b32.xlu0 %v5578, 100
  %v5582 = vpop.permute.xlu0 %5581
  %v5584 = vmul.f32 %v5577, %v5582
  %5586 = vrot.lane.b32.xlu0 %v5584, 14
  %v5587 = vpop.permute.xlu0 %5586
  %v5589 = vadd.f32 %v5579, %v5587
  %v5590 = vtanh.pop %v5589
  %5592 = vrot.lane.b32.xlu0 %v5590, 28
  %v5593 = vpop.permute.xlu0 %5592
  %v5595 = vmul.f32 %v5577, %v5593
  %5597 = vrot.lane.b32.xlu0 %v5595, 86
  %v5598 = vpop.permute.xlu0 %5597
  %v5599 = vsel %vm1204, %v5598, 0
  %5601 = vmatprep.subr.mxu0 0.0
  %5602 = vmatpush1.msra.mxu0 %v2798
  %5603 = vmatprep.subr.mxu0 0.0
  %5604 = vmatpush1.msra.mxu0 %v5104
  %5605 = vmatprep.subr.mxu0 0.0
  %5606 = vmatpush1.msra.mxu0 0.0
  %5607 = vmatprep.subr.mxu0 0.0
  %5608 = vmatpush1.msra.mxu0 0.0
  %5609 = vmatprep.subr.mxu0 0.0
  %5610 = vmatpush1.msra.mxu0 0.0
  %5611 = vmatprep.subr.mxu0 0.0
  %5612 = vmatpush1.msra.mxu0 0.0
  %5613 = vmatprep.subr.mxu0 0.0
  %5614 = vmatpush1.msra.mxu0 0.0
  %5615 = vmatprep.subr.mxu0 0.0
  %5616 = vmatpush1.msra.mxu0 0.0
  %5617 = vmatprep.subr.mxu0 0.0
  %5618 = vmatpush1.msra.mxu0 0.0
  %5619 = vmatprep.subr.mxu0 0.0
  %5620 = vmatpush1.msra.mxu0 0.0
  %5621 = vmatprep.subr.mxu0 0.0
  %5622 = vmatpush1.msra.mxu0 0.0
  %5623 = vmatprep.subr.mxu0 0.0
  %5624 = vmatpush1.msra.mxu0 0.0
  %5625 = vmatprep.subr.mxu0 0.0
  %5626 = vmatpush1.msra.mxu0 0.0
  %5627 = vmatprep.subr.mxu0 0.0
  %5628 = vmatpush1.msra.mxu0 0.0
  %5629 = vmatprep.subr.mxu0 0.0
  %5630 = vmatpush1.msra.mxu0 0.0
  %5631 = vmatprep.subr.mxu0 0.0
  %5632 = vmatpush1.msra.mxu0 0.0
  %5633 = vmatprep.subr.mxu0 0.0
  %5634 = vmatpush1.msra.mxu0 0.0
  %5635 = vmatprep.subr.mxu0 0.0
  %5636 = vmatpush1.msra.mxu0 0.0
  %5637 = vmatprep.subr.mxu0 0.0
  %5638 = vmatpush1.msra.mxu0 0.0
  %5639 = vmatprep.subr.mxu0 0.0
  %5640 = vmatpush1.msra.mxu0 0.0
  %5641 = vmatprep.subr.mxu0 0.0
  %5642 = vmatpush1.msra.mxu0 0.0
  %5643 = vmatprep.subr.mxu0 0.0
  %5644 = vmatpush1.msra.mxu0 0.0
  %5645 = vmatprep.subr.mxu0 0.0
  %5646 = vmatpush1.msra.mxu0 0.0
  %5647 = vmatprep.subr.mxu0 0.0
  %5648 = vmatpush1.msra.mxu0 0.0
  %5649 = vmatprep.subr.mxu0 0.0
  %5650 = vmatpush1.msra.mxu0 0.0
  %5651 = vmatprep.subr.mxu0 0.0
  %5652 = vmatpush1.msra.mxu0 0.0
  %5653 = vmatprep.subr.mxu0 0.0
  %5654 = vmatpush1.msra.mxu0 0.0
  %5655 = vmatprep.subr.mxu0 0.0
  %5656 = vmatpush1.msra.mxu0 0.0
  %5657 = vmatprep.subr.mxu0 0.0
  %5658 = vmatpush1.msra.mxu0 0.0
  %5659 = vmatprep.subr.mxu0 0.0
  %5660 = vmatpush1.msra.mxu0 0.0
  %5661 = vmatprep.subr.mxu0 0.0
  %5662 = vmatpush1.msra.mxu0 0.0
  %5663 = vmatprep.subr.mxu0 0.0
  %5664 = vmatpush1.msra.mxu0 0.0
  %5665 = vmatprep.mubr.f32.mxu0 0.0
  %5666 = vmatmul.mubr.f32.gmra.mrb[0].mxu0 %v5599
  %v5667 = vpop.f32.mrb[0].mxu0
  %v5668 = vadd.f32 %v3675, %v5667
  %v5669 = vpop.f32.mrb[0].mxu0
  %5670 = vdwg.mxu0
  %v5671 = vxor.u32 %v5668, 2147483648
  %v5672 = vmul.f32 %v5671, 1.442695
  %v5673 = vpow.pop %v5672
  %v5674 = vadd.f32 %v5673, 1.0
  %v5675 = vrcp.pop %v5674
  %v5676 = vmul.f32 1.0, %v5675
  %v5677 = vtanh.pop %v5668
  %v5678 = vmul.f32 %v5676, %v5589
  %5680 = vrot.lane.b32.xlu0 %v5677, 100
  %v5681 = vpop.permute.xlu0 %5680
  %v5683 = vmul.f32 %v5676, %v5681
  %5685 = vrot.lane.b32.xlu0 %v5683, 14
  %v5686 = vpop.permute.xlu0 %5685
  %v5688 = vadd.f32 %v5678, %v5686
  %v5689 = vtanh.pop %v5688
  %5691 = vrot.lane.b32.xlu0 %v5689, 28
  %v5692 = vpop.permute.xlu0 %5691
  %v5694 = vmul.f32 %v5676, %v5692
  %5696 = vrot.lane.b32.xlu0 %v5694, 86
  %v5697 = vpop.permute.xlu0 %5696
  %v5698 = vsel %vm1204, %v5697, 0
  %5700 = vmatprep.subr.mxu0 0.0
  %5701 = vmatpush1.msra.mxu0 %v2798
  %5702 = vmatprep.subr.mxu0 0.0
  %5703 = vmatpush1.msra.mxu0 %v5104
  %5704 = vmatprep.subr.mxu0 0.0
  %5705 = vmatpush1.msra.mxu0 0.0
  %5706 = vmatprep.subr.mxu0 0.0
  %5707 = vmatpush1.msra.mxu0 0.0
  %5708 = vmatprep.subr.mxu0 0.0
  %5709 = vmatpush1.msra.mxu0 0.0
  %5710 = vmatprep.subr.mxu0 0.0
  %5711 = vmatpush1.msra.mxu0 0.0
  %5712 = vmatprep.subr.mxu0 0.0
  %5713 = vmatpush1.msra.mxu0 0.0
  %5714 = vmatprep.subr.mxu0 0.0
  %5715 = vmatpush1.msra.mxu0 0.0
  %5716 = vmatprep.subr.mxu0 0.0
  %5717 = vmatpush1.msra.mxu0 0.0
  %5718 = vmatprep.subr.mxu0 0.0
  %5719 = vmatpush1.msra.mxu0 0.0
  %5720 = vmatprep.subr.mxu0 0.0
  %5721 = vmatpush1.msra.mxu0 0.0
  %5722 = vmatprep.subr.mxu0 0.0
  %5723 = vmatpush1.msra.mxu0 0.0
  %5724 = vmatprep.subr.mxu0 0.0
  %5725 = vmatpush1.msra.mxu0 0.0
  %5726 = vmatprep.subr.mxu0 0.0
  %5727 = vmatpush1.msra.mxu0 0.0
  %5728 = vmatprep.subr.mxu0 0.0
  %5729 = vmatpush1.msra.mxu0 0.0
  %5730 = vmatprep.subr.mxu0 0.0
  %5731 = vmatpush1.msra.mxu0 0.0
  %5732 = vmatprep.subr.mxu0 0.0
  %5733 = vmatpush1.msra.mxu0 0.0
  %5734 = vmatprep.subr.mxu0 0.0
  %5735 = vmatpush1.msra.mxu0 0.0
  %5736 = vmatprep.subr.mxu0 0.0
  %5737 = vmatpush1.msra.mxu0 0.0
  %5738 = vmatprep.subr.mxu0 0.0
  %5739 = vmatpush1.msra.mxu0 0.0
  %5740 = vmatprep.subr.mxu0 0.0
  %5741 = vmatpush1.msra.mxu0 0.0
  %5742 = vmatprep.subr.mxu0 0.0
  %5743 = vmatpush1.msra.mxu0 0.0
  %5744 = vmatprep.subr.mxu0 0.0
  %5745 = vmatpush1.msra.mxu0 0.0
  %5746 = vmatprep.subr.mxu0 0.0
  %5747 = vmatpush1.msra.mxu0 0.0
  %5748 = vmatprep.subr.mxu0 0.0
  %5749 = vmatpush1.msra.mxu0 0.0
  %5750 = vmatprep.subr.mxu0 0.0
  %5751 = vmatpush1.msra.mxu0 0.0
  %5752 = vmatprep.subr.mxu0 0.0
  %5753 = vmatpush1.msra.mxu0 0.0
  %5754 = vmatprep.subr.mxu0 0.0
  %5755 = vmatpush1.msra.mxu0 0.0
  %5756 = vmatprep.subr.mxu0 0.0
  %5757 = vmatpush1.msra.mxu0 0.0
  %5758 = vmatprep.subr.mxu0 0.0
  %5759 = vmatpush1.msra.mxu0 0.0
  %5760 = vmatprep.subr.mxu0 0.0
  %5761 = vmatpush1.msra.mxu0 0.0
  %5762 = vmatprep.subr.mxu0 0.0
  %5763 = vmatpush1.msra.mxu0 0.0
  %5764 = vmatprep.mubr.f32.mxu0 0.0
  %5765 = vmatmul.mubr.f32.gmra.mrb[0].mxu0 %v5698
  %v5766 = vpop.f32.mrb[0].mxu0
  %v5767 = vadd.f32 %v3816, %v5766
  %v5768 = vpop.f32.mrb[0].mxu0
  %5769 = vdwg.mxu0
  %v5770 = vxor.u32 %v5767, 2147483648
  %v5771 = vmul.f32 %v5770, 1.442695
  %v5772 = vpow.pop %v5771
  %v5773 = vadd.f32 %v5772, 1.0
  %v5774 = vrcp.pop %v5773
  %v5775 = vmul.f32 1.0, %v5774
  %v5776 = vtanh.pop %v5767
  %v5777 = vmul.f32 %v5775, %v5688
  %5779 = vrot.lane.b32.xlu0 %v5776, 100
  %v5780 = vpop.permute.xlu0 %5779
  %v5782 = vmul.f32 %v5775, %v5780
  %5784 = vrot.lane.b32.xlu0 %v5782, 14
  %v5785 = vpop.permute.xlu0 %5784
  %v5787 = vadd.f32 %v5777, %v5785
  %v5788 = vtanh.pop %v5787
  %5790 = vrot.lane.b32.xlu0 %v5788, 28
  %v5791 = vpop.permute.xlu0 %5790
  %v5793 = vmul.f32 %v5775, %v5791
  %5795 = vrot.lane.b32.xlu0 %v5793, 86
  %v5796 = vpop.permute.xlu0 %5795
  %v5797 = vsel %vm1204, %v5796, 0
  %5799 = vmatprep.subr.mxu0 0.0
  %5800 = vmatpush1.msra.mxu0 %v2798
  %5801 = vmatprep.subr.mxu0 0.0
  %5802 = vmatpush1.msra.mxu0 %v5104
  %5803 = vmatprep.subr.mxu0 0.0
  %5804 = vmatpush1.msra.mxu0 0.0
  %5805 = vmatprep.subr.mxu0 0.0
  %5806 = vmatpush1.msra.mxu0 0.0
  %5807 = vmatprep.subr.mxu0 0.0
  %5808 = vmatpush1.msra.mxu0 0.0
  %5809 = vmatprep.subr.mxu0 0.0
  %5810 = vmatpush1.msra.mxu0 0.0
  %5811 = vmatprep.subr.mxu0 0.0
  %5812 = vmatpush1.msra.mxu0 0.0
  %5813 = vmatprep.subr.mxu0 0.0
  %5814 = vmatpush1.msra.mxu0 0.0
  %5815 = vmatprep.subr.mxu0 0.0
  %5816 = vmatpush1.msra.mxu0 0.0
  %5817 = vmatprep.subr.mxu0 0.0
  %5818 = vmatpush1.msra.mxu0 0.0
  %5819 = vmatprep.subr.mxu0 0.0
  %5820 = vmatpush1.msra.mxu0 0.0
  %5821 = vmatprep.subr.mxu0 0.0
  %5822 = vmatpush1.msra.mxu0 0.0
  %5823 = vmatprep.subr.mxu0 0.0
  %5824 = vmatpush1.msra.mxu0 0.0
  %5825 = vmatprep.subr.mxu0 0.0
  %5826 = vmatpush1.msra.mxu0 0.0
  %5827 = vmatprep.subr.mxu0 0.0
  %5828 = vmatpush1.msra.mxu0 0.0
  %5829 = vmatprep.subr.mxu0 0.0
  %5830 = vmatpush1.msra.mxu0 0.0
  %5831 = vmatprep.subr.mxu0 0.0
  %5832 = vmatpush1.msra.mxu0 0.0
  %5833 = vmatprep.subr.mxu0 0.0
  %5834 = vmatpush1.msra.mxu0 0.0
  %5835 = vmatprep.subr.mxu0 0.0
  %5836 = vmatpush1.msra.mxu0 0.0
  %5837 = vmatprep.subr.mxu0 0.0
  %5838 = vmatpush1.msra.mxu0 0.0
  %5839 = vmatprep.subr.mxu0 0.0
  %5840 = vmatpush1.msra.mxu0 0.0
  %5841 = vmatprep.subr.mxu0 0.0
  %5842 = vmatpush1.msra.mxu0 0.0
  %5843 = vmatprep.subr.mxu0 0.0
  %5844 = vmatpush1.msra.mxu0 0.0
  %5845 = vmatprep.subr.mxu0 0.0
  %5846 = vmatpush1.msra.mxu0 0.0
  %5847 = vmatprep.subr.mxu0 0.0
  %5848 = vmatpush1.msra.mxu0 0.0
  %5849 = vmatprep.subr.mxu0 0.0
  %5850 = vmatpush1.msra.mxu0 0.0
  %5851 = vmatprep.subr.mxu0 0.0
  %5852 = vmatpush1.msra.mxu0 0.0
  %5853 = vmatprep.subr.mxu0 0.0
  %5854 = vmatpush1.msra.mxu0 0.0
  %5855 = vmatprep.subr.mxu0 0.0
  %5856 = vmatpush1.msra.mxu0 0.0
  %5857 = vmatprep.subr.mxu0 0.0
  %5858 = vmatpush1.msra.mxu0 0.0
  %5859 = vmatprep.subr.mxu0 0.0
  %5860 = vmatpush1.msra.mxu0 0.0
  %5861 = vmatprep.subr.mxu0 0.0
  %5862 = vmatpush1.msra.mxu0 0.0
  %5863 = vmatprep.mubr.f32.mxu0 0.0
  %5864 = vmatmul.mubr.f32.gmra.mrb[0].mxu0 %v5797
  %v5865 = vpop.f32.mrb[0].mxu0
  %v5866 = vadd.f32 %v3962, %v5865
  %v5867 = vpop.f32.mrb[0].mxu0
  %5868 = vdwg.mxu0
  %v5869 = vxor.u32 %v5866, 2147483648
  %v5870 = vmul.f32 %v5869, 1.442695
  %v5871 = vpow.pop %v5870
  %v5872 = vadd.f32 %v5871, 1.0
  %v5873 = vrcp.pop %v5872
  %v5874 = vmul.f32 1.0, %v5873
  %v5875 = vtanh.pop %v5866
  %v5876 = vmul.f32 %v5874, %v5787
  %5878 = vrot.lane.b32.xlu0 %v5875, 100
  %v5879 = vpop.permute.xlu0 %5878
  %v5881 = vmul.f32 %v5874, %v5879
  %5883 = vrot.lane.b32.xlu0 %v5881, 14
  %v5884 = vpop.permute.xlu0 %5883
  %v5886 = vadd.f32 %v5876, %v5884
  %v5887 = vtanh.pop %v5886
  %5889 = vrot.lane.b32.xlu0 %v5887, 28
  %v5890 = vpop.permute.xlu0 %5889
  %v5892 = vmul.f32 %v5874, %v5890
  %v5894 = vsel %vm48, %v2808, 0
  %5896 = vmatprep.subr.mxu0 0.0
  %5897 = vmatpush1.msra.mxu0 %v2807
  %5898 = vmatprep.subr.mxu0 0.0
  %5899 = vmatpush1.msra.mxu0 %v5894
  %5900 = vmatprep.subr.mxu0 0.0
  %5901 = vmatpush1.msra.mxu0 0.0
  %5902 = vmatprep.subr.mxu0 0.0
  %5903 = vmatpush1.msra.mxu0 0.0
  %5904 = vmatprep.subr.mxu0 0.0
  %5905 = vmatpush1.msra.mxu0 0.0
  %5906 = vmatprep.subr.mxu0 0.0
  %5907 = vmatpush1.msra.mxu0 0.0
  %5908 = vmatprep.subr.mxu0 0.0
  %5909 = vmatpush1.msra.mxu0 0.0
  %5910 = vmatprep.subr.mxu0 0.0
  %5911 = vmatpush1.msra.mxu0 0.0
  %5912 = vmatprep.subr.mxu0 0.0
  %5913 = vmatpush1.msra.mxu0 0.0
  %5914 = vmatprep.subr.mxu0 0.0
  %5915 = vmatpush1.msra.mxu0 0.0
  %5916 = vmatprep.subr.mxu0 0.0
  %5917 = vmatpush1.msra.mxu0 0.0
  %5918 = vmatprep.subr.mxu0 0.0
  %5919 = vmatpush1.msra.mxu0 0.0
  %5920 = vmatprep.subr.mxu0 0.0
  %5921 = vmatpush1.msra.mxu0 0.0
  %5922 = vmatprep.subr.mxu0 0.0
  %5923 = vmatpush1.msra.mxu0 0.0
  %5924 = vmatprep.subr.mxu0 0.0
  %5925 = vmatpush1.msra.mxu0 0.0
  %5926 = vmatprep.subr.mxu0 0.0
  %5927 = vmatpush1.msra.mxu0 0.0
  %5928 = vmatprep.subr.mxu0 0.0
  %5929 = vmatpush1.msra.mxu0 0.0
  %5930 = vmatprep.subr.mxu0 0.0
  %5931 = vmatpush1.msra.mxu0 0.0
  %5932 = vmatprep.subr.mxu0 0.0
  %5933 = vmatpush1.msra.mxu0 0.0
  %5934 = vmatprep.subr.mxu0 0.0
  %5935 = vmatpush1.msra.mxu0 0.0
  %5936 = vmatprep.subr.mxu0 0.0
  %5937 = vmatpush1.msra.mxu0 0.0
  %5938 = vmatprep.subr.mxu0 0.0
  %5939 = vmatpush1.msra.mxu0 0.0
  %5940 = vmatprep.subr.mxu0 0.0
  %5941 = vmatpush1.msra.mxu0 0.0
  %5942 = vmatprep.subr.mxu0 0.0
  %5943 = vmatpush1.msra.mxu0 0.0
  %5944 = vmatprep.subr.mxu0 0.0
  %5945 = vmatpush1.msra.mxu0 0.0
  %5946 = vmatprep.subr.mxu0 0.0
  %5947 = vmatpush1.msra.mxu0 0.0
  %5948 = vmatprep.subr.mxu0 0.0
  %5949 = vmatpush1.msra.mxu0 0.0
  %5950 = vmatprep.subr.mxu0 0.0
  %5951 = vmatpush1.msra.mxu0 0.0
  %5952 = vmatprep.subr.mxu0 0.0
  %5953 = vmatpush1.msra.mxu0 0.0
  %5954 = vmatprep.subr.mxu0 0.0
  %5955 = vmatpush1.msra.mxu0 0.0
  %5956 = vmatprep.subr.mxu0 0.0
  %5957 = vmatpush1.msra.mxu0 0.0
  %5958 = vmatprep.subr.mxu0 0.0
  %5959 = vmatpush1.msra.mxu0 0.0
  %5960 = vmatprep.mubr.f32.mxu0 0.0
  %5961 = vmatmul.mubr.f32.gmra.mrb[0].mxu0 %v1206
  %v5962 = vpop.f32.mrb[0].mxu0
  %v5963 = vadd.f32 %v5102, %v5962
  %v5964 = vpop.f32.mrb[0].mxu0
  %5965 = vdwg.mxu0
  %v5966 = vxor.u32 %v5963, 2147483648
  %v5967 = vmul.f32 %v5966, 1.442695
  %v5968 = vpow.pop %v5967
  %v5969 = vadd.f32 %v5968, 1.0
  %v5970 = vrcp.pop %v5969
  %v5971 = vmul.f32 1.0, %v5970
  %v5972 = vtanh.pop %v5963
  %v5973 = vmul.f32 %v5971, 0.0
  %5975 = vrot.lane.b32.xlu0 %v5972, 100
  %v5976 = vpop.permute.xlu0 %5975
  %v5978 = vmul.f32 %v5971, %v5976
  %5980 = vrot.lane.b32.xlu0 %v5978, 14
  %v5981 = vpop.permute.xlu0 %5980
  %v5983 = vadd.f32 %v5973, %v5981
  %v5984 = vtanh.pop %v5983
  %5986 = vrot.lane.b32.xlu0 %v5984, 28
  %v5987 = vpop.permute.xlu0 %5986
  %v5989 = vmul.f32 %v5971, %v5987
  %5991 = vrot.lane.b32.xlu0 %v5989, 86
  %v5992 = vpop.permute.xlu0 %5991
  %v5993 = vsel %vm1204, %v5992, 0
  %5995 = vmatprep.subr.mxu0 0.0
  %5996 = vmatpush1.msra.mxu0 %v2807
  %5997 = vmatprep.subr.mxu0 0.0
  %5998 = vmatpush1.msra.mxu0 %v5894
  %5999 = vmatprep.subr.mxu0 0.0
  %6000 = vmatpush1.msra.mxu0 0.0
  %6001 = vmatprep.subr.mxu0 0.0
  %6002 = vmatpush1.msra.mxu0 0.0
  %6003 = vmatprep.subr.mxu0 0.0
  %6004 = vmatpush1.msra.mxu0 0.0
  %6005 = vmatprep.subr.mxu0 0.0
  %6006 = vmatpush1.msra.mxu0 0.0
  %6007 = vmatprep.subr.mxu0 0.0
  %6008 = vmatpush1.msra.mxu0 0.0
  %6009 = vmatprep.subr.mxu0 0.0
  %6010 = vmatpush1.msra.mxu0 0.0
  %6011 = vmatprep.subr.mxu0 0.0
  %6012 = vmatpush1.msra.mxu0 0.0
  %6013 = vmatprep.subr.mxu0 0.0
  %6014 = vmatpush1.msra.mxu0 0.0
  %6015 = vmatprep.subr.mxu0 0.0
  %6016 = vmatpush1.msra.mxu0 0.0
  %6017 = vmatprep.subr.mxu0 0.0
  %6018 = vmatpush1.msra.mxu0 0.0
  %6019 = vmatprep.subr.mxu0 0.0
  %6020 = vmatpush1.msra.mxu0 0.0
  %6021 = vmatprep.subr.mxu0 0.0
  %6022 = vmatpush1.msra.mxu0 0.0
  %6023 = vmatprep.subr.mxu0 0.0
  %6024 = vmatpush1.msra.mxu0 0.0
  %6025 = vmatprep.subr.mxu0 0.0
  %6026 = vmatpush1.msra.mxu0 0.0
  %6027 = vmatprep.subr.mxu0 0.0
  %6028 = vmatpush1.msra.mxu0 0.0
  %6029 = vmatprep.subr.mxu0 0.0
  %6030 = vmatpush1.msra.mxu0 0.0
  %6031 = vmatprep.subr.mxu0 0.0
  %6032 = vmatpush1.msra.mxu0 0.0
  %6033 = vmatprep.subr.mxu0 0.0
  %6034 = vmatpush1.msra.mxu0 0.0
  %6035 = vmatprep.subr.mxu0 0.0
  %6036 = vmatpush1.msra.mxu0 0.0
  %6037 = vmatprep.subr.mxu0 0.0
  %6038 = vmatpush1.msra.mxu0 0.0
  %6039 = vmatprep.subr.mxu0 0.0
  %6040 = vmatpush1.msra.mxu0 0.0
  %6041 = vmatprep.subr.mxu0 0.0
  %6042 = vmatpush1.msra.mxu0 0.0
  %6043 = vmatprep.subr.mxu0 0.0
  %6044 = vmatpush1.msra.mxu0 0.0
  %6045 = vmatprep.subr.mxu0 0.0
  %6046 = vmatpush1.msra.mxu0 0.0
  %6047 = vmatprep.subr.mxu0 0.0
  %6048 = vmatpush1.msra.mxu0 0.0
  %6049 = vmatprep.subr.mxu0 0.0
  %6050 = vmatpush1.msra.mxu0 0.0
  %6051 = vmatprep.subr.mxu0 0.0
  %6052 = vmatpush1.msra.mxu0 0.0
  %6053 = vmatprep.subr.mxu0 0.0
  %6054 = vmatpush1.msra.mxu0 0.0
  %6055 = vmatprep.subr.mxu0 0.0
  %6056 = vmatpush1.msra.mxu0 0.0
  %6057 = vmatprep.subr.mxu0 0.0
  %6058 = vmatpush1.msra.mxu0 0.0
  %6059 = vmatprep.mubr.f32.mxu0 0.0
  %6060 = vmatmul.mubr.f32.gmra.mrb[0].mxu0 %v5993
  %v6061 = vpop.f32.mrb[0].mxu0
  %v6062 = vadd.f32 %v4961, %v6061
  %v6063 = vpop.f32.mrb[0].mxu0
  %6064 = vdwg.mxu0
  %v6065 = vxor.u32 %v6062, 2147483648
  %v6066 = vmul.f32 %v6065, 1.442695
  %v6067 = vpow.pop %v6066
  %v6068 = vadd.f32 %v6067, 1.0
  %v6069 = vrcp.pop %v6068
  %v6070 = vmul.f32 1.0, %v6069
  %v6071 = vtanh.pop %v6062
  %v6072 = vmul.f32 %v6070, %v5983
  %6074 = vrot.lane.b32.xlu0 %v6071, 100
  %v6075 = vpop.permute.xlu0 %6074
  %v6077 = vmul.f32 %v6070, %v6075
  %6079 = vrot.lane.b32.xlu0 %v6077, 14
  %v6080 = vpop.permute.xlu0 %6079
  %v6082 = vadd.f32 %v6072, %v6080
  %v6083 = vtanh.pop %v6082
  %6085 = vrot.lane.b32.xlu0 %v6083, 28
  %v6086 = vpop.permute.xlu0 %6085
  %v6088 = vmul.f32 %v6070, %v6086
  %6090 = vrot.lane.b32.xlu0 %v6088, 86
  %v6091 = vpop.permute.xlu0 %6090
  %v6092 = vsel %vm1204, %v6091, 0
  %6094 = vmatprep.subr.mxu0 0.0
  %6095 = vmatpush1.msra.mxu0 %v2807
  %6096 = vmatprep.subr.mxu0 0.0
  %6097 = vmatpush1.msra.mxu0 %v5894
  %6098 = vmatprep.subr.mxu0 0.0
  %6099 = vmatpush1.msra.mxu0 0.0
  %6100 = vmatprep.subr.mxu0 0.0
  %6101 = vmatpush1.msra.mxu0 0.0
  %6102 = vmatprep.subr.mxu0 0.0
  %6103 = vmatpush1.msra.mxu0 0.0
  %6104 = vmatprep.subr.mxu0 0.0
  %6105 = vmatpush1.msra.mxu0 0.0
  %6106 = vmatprep.subr.mxu0 0.0
  %6107 = vmatpush1.msra.mxu0 0.0
  %6108 = vmatprep.subr.mxu0 0.0
  %6109 = vmatpush1.msra.mxu0 0.0
  %6110 = vmatprep.subr.mxu0 0.0
  %6111 = vmatpush1.msra.mxu0 0.0
  %6112 = vmatprep.subr.mxu0 0.0
  %6113 = vmatpush1.msra.mxu0 0.0
  %6114 = vmatprep.subr.mxu0 0.0
  %6115 = vmatpush1.msra.mxu0 0.0
  %6116 = vmatprep.subr.mxu0 0.0
  %6117 = vmatpush1.msra.mxu0 0.0
  %6118 = vmatprep.subr.mxu0 0.0
  %6119 = vmatpush1.msra.mxu0 0.0
  %6120 = vmatprep.subr.mxu0 0.0
  %6121 = vmatpush1.msra.mxu0 0.0
  %6122 = vmatprep.subr.mxu0 0.0
  %6123 = vmatpush1.msra.mxu0 0.0
  %6124 = vmatprep.subr.mxu0 0.0
  %6125 = vmatpush1.msra.mxu0 0.0
  %6126 = vmatprep.subr.mxu0 0.0
  %6127 = vmatpush1.msra.mxu0 0.0
  %6128 = vmatprep.subr.mxu0 0.0
  %6129 = vmatpush1.msra.mxu0 0.0
  %6130 = vmatprep.subr.mxu0 0.0
  %6131 = vmatpush1.msra.mxu0 0.0
  %6132 = vmatprep.subr.mxu0 0.0
  %6133 = vmatpush1.msra.mxu0 0.0
  %6134 = vmatprep.subr.mxu0 0.0
  %6135 = vmatpush1.msra.mxu0 0.0
  %6136 = vmatprep.subr.mxu0 0.0
  %6137 = vmatpush1.msra.mxu0 0.0
  %6138 = vmatprep.subr.mxu0 0.0
  %6139 = vmatpush1.msra.mxu0 0.0
  %6140 = vmatprep.subr.mxu0 0.0
  %6141 = vmatpush1.msra.mxu0 0.0
  %6142 = vmatprep.subr.mxu0 0.0
  %6143 = vmatpush1.msra.mxu0 0.0
  %6144 = vmatprep.subr.mxu0 0.0
  %6145 = vmatpush1.msra.mxu0 0.0
  %6146 = vmatprep.subr.mxu0 0.0
  %6147 = vmatpush1.msra.mxu0 0.0
  %6148 = vmatprep.subr.mxu0 0.0
  %6149 = vmatpush1.msra.mxu0 0.0
  %6150 = vmatprep.subr.mxu0 0.0
  %6151 = vmatpush1.msra.mxu0 0.0
  %6152 = vmatprep.subr.mxu0 0.0
  %6153 = vmatpush1.msra.mxu0 0.0
  %6154 = vmatprep.subr.mxu0 0.0
  %6155 = vmatpush1.msra.mxu0 0.0
  %6156 = vmatprep.subr.mxu0 0.0
  %6157 = vmatpush1.msra.mxu0 0.0
  %6158 = vmatprep.mubr.f32.mxu0 0.0
  %6159 = vmatmul.mubr.f32.gmra.mrb[0].mxu0 %v6092
  %v6160 = vpop.f32.mrb[0].mxu0
  %v6161 = vadd.f32 %v4820, %v6160
  %v6162 = vpop.f32.mrb[0].mxu0
  %6163 = vdwg.mxu0
  %v6164 = vxor.u32 %v6161, 2147483648
  %v6165 = vmul.f32 %v6164, 1.442695
  %v6166 = vpow.pop %v6165
  %v6167 = vadd.f32 %v6166, 1.0
  %v6168 = vrcp.pop %v6167
  %v6169 = vmul.f32 1.0, %v6168
  %v6170 = vtanh.pop %v6161
  %v6171 = vmul.f32 %v6169, %v6082
  %6173 = vrot.lane.b32.xlu0 %v6170, 100
  %v6174 = vpop.permute.xlu0 %6173
  %v6176 = vmul.f32 %v6169, %v6174
  %6178 = vrot.lane.b32.xlu0 %v6176, 14
  %v6179 = vpop.permute.xlu0 %6178
  %v6181 = vadd.f32 %v6171, %v6179
  %v6182 = vtanh.pop %v6181
  %6184 = vrot.lane.b32.xlu0 %v6182, 28
  %v6185 = vpop.permute.xlu0 %6184
  %v6187 = vmul.f32 %v6169, %v6185
  %6189 = vrot.lane.b32.xlu0 %v6187, 86
  %v6190 = vpop.permute.xlu0 %6189
  %v6191 = vsel %vm1204, %v6190, 0
  %6193 = vmatprep.subr.mxu0 0.0
  %6194 = vmatpush1.msra.mxu0 %v2807
  %6195 = vmatprep.subr.mxu0 0.0
  %6196 = vmatpush1.msra.mxu0 %v5894
  %6197 = vmatprep.subr.mxu0 0.0
  %6198 = vmatpush1.msra.mxu0 0.0
  %6199 = vmatprep.subr.mxu0 0.0
  %6200 = vmatpush1.msra.mxu0 0.0
  %6201 = vmatprep.subr.mxu0 0.0
  %6202 = vmatpush1.msra.mxu0 0.0
  %6203 = vmatprep.subr.mxu0 0.0
  %6204 = vmatpush1.msra.mxu0 0.0
  %6205 = vmatprep.subr.mxu0 0.0
  %6206 = vmatpush1.msra.mxu0 0.0
  %6207 = vmatprep.subr.mxu0 0.0
  %6208 = vmatpush1.msra.mxu0 0.0
  %6209 = vmatprep.subr.mxu0 0.0
  %6210 = vmatpush1.msra.mxu0 0.0
  %6211 = vmatprep.subr.mxu0 0.0
  %6212 = vmatpush1.msra.mxu0 0.0
  %6213 = vmatprep.subr.mxu0 0.0
  %6214 = vmatpush1.msra.mxu0 0.0
  %6215 = vmatprep.subr.mxu0 0.0
  %6216 = vmatpush1.msra.mxu0 0.0
  %6217 = vmatprep.subr.mxu0 0.0
  %6218 = vmatpush1.msra.mxu0 0.0
  %6219 = vmatprep.subr.mxu0 0.0
  %6220 = vmatpush1.msra.mxu0 0.0
  %6221 = vmatprep.subr.mxu0 0.0
  %6222 = vmatpush1.msra.mxu0 0.0
  %6223 = vmatprep.subr.mxu0 0.0
  %6224 = vmatpush1.msra.mxu0 0.0
  %6225 = vmatprep.subr.mxu0 0.0
  %6226 = vmatpush1.msra.mxu0 0.0
  %6227 = vmatprep.subr.mxu0 0.0
  %6228 = vmatpush1.msra.mxu0 0.0
  %6229 = vmatprep.subr.mxu0 0.0
  %6230 = vmatpush1.msra.mxu0 0.0
  %6231 = vmatprep.subr.mxu0 0.0
  %6232 = vmatpush1.msra.mxu0 0.0
  %6233 = vmatprep.subr.mxu0 0.0
  %6234 = vmatpush1.msra.mxu0 0.0
  %6235 = vmatprep.subr.mxu0 0.0
  %6236 = vmatpush1.msra.mxu0 0.0
  %6237 = vmatprep.subr.mxu0 0.0
  %6238 = vmatpush1.msra.mxu0 0.0
  %6239 = vmatprep.subr.mxu0 0.0
  %6240 = vmatpush1.msra.mxu0 0.0
  %6241 = vmatprep.subr.mxu0 0.0
  %6242 = vmatpush1.msra.mxu0 0.0
  %6243 = vmatprep.subr.mxu0 0.0
  %6244 = vmatpush1.msra.mxu0 0.0
  %6245 = vmatprep.subr.mxu0 0.0
  %6246 = vmatpush1.msra.mxu0 0.0
  %6247 = vmatprep.subr.mxu0 0.0
  %6248 = vmatpush1.msra.mxu0 0.0
  %6249 = vmatprep.subr.mxu0 0.0
  %6250 = vmatpush1.msra.mxu0 0.0
  %6251 = vmatprep.subr.mxu0 0.0
  %6252 = vmatpush1.msra.mxu0 0.0
  %6253 = vmatprep.subr.mxu0 0.0
  %6254 = vmatpush1.msra.mxu0 0.0
  %6255 = vmatprep.subr.mxu0 0.0
  %6256 = vmatpush1.msra.mxu0 0.0
  %6257 = vmatprep.mubr.f32.mxu0 0.0
  %6258 = vmatmul.mubr.f32.gmra.mrb[0].mxu0 %v6191
  %v6259 = vpop.f32.mrb[0].mxu0
  %v6260 = vadd.f32 %v4679, %v6259
  %v6261 = vpop.f32.mrb[0].mxu0
  %6262 = vdwg.mxu0
  %v6263 = vxor.u32 %v6260, 2147483648
  %v6264 = vmul.f32 %v6263, 1.442695
  %v6265 = vpow.pop %v6264
  %v6266 = vadd.f32 %v6265, 1.0
  %v6267 = vrcp.pop %v6266
  %v6268 = vmul.f32 1.0, %v6267
  %v6269 = vtanh.pop %v6260
  %v6270 = vmul.f32 %v6268, %v6181
  %6272 = vrot.lane.b32.xlu0 %v6269, 100
  %v6273 = vpop.permute.xlu0 %6272
  %v6275 = vmul.f32 %v6268, %v6273
  %6277 = vrot.lane.b32.xlu0 %v6275, 14
  %v6278 = vpop.permute.xlu0 %6277
  %v6280 = vadd.f32 %v6270, %v6278
  %v6281 = vtanh.pop %v6280
  %6283 = vrot.lane.b32.xlu0 %v6281, 28
  %v6284 = vpop.permute.xlu0 %6283
  %v6286 = vmul.f32 %v6268, %v6284
  %6288 = vrot.lane.b32.xlu0 %v6286, 86
  %v6289 = vpop.permute.xlu0 %6288
  %v6290 = vsel %vm1204, %v6289, 0
  %6292 = vmatprep.subr.mxu0 0.0
  %6293 = vmatpush1.msra.mxu0 %v2807
  %6294 = vmatprep.subr.mxu0 0.0
  %6295 = vmatpush1.msra.mxu0 %v5894
  %6296 = vmatprep.subr.mxu0 0.0
  %6297 = vmatpush1.msra.mxu0 0.0
  %6298 = vmatprep.subr.mxu0 0.0
  %6299 = vmatpush1.msra.mxu0 0.0
  %6300 = vmatprep.subr.mxu0 0.0
  %6301 = vmatpush1.msra.mxu0 0.0
  %6302 = vmatprep.subr.mxu0 0.0
  %6303 = vmatpush1.msra.mxu0 0.0
  %6304 = vmatprep.subr.mxu0 0.0
  %6305 = vmatpush1.msra.mxu0 0.0
  %6306 = vmatprep.subr.mxu0 0.0
  %6307 = vmatpush1.msra.mxu0 0.0
  %6308 = vmatprep.subr.mxu0 0.0
  %6309 = vmatpush1.msra.mxu0 0.0
  %6310 = vmatprep.subr.mxu0 0.0
  %6311 = vmatpush1.msra.mxu0 0.0
  %6312 = vmatprep.subr.mxu0 0.0
  %6313 = vmatpush1.msra.mxu0 0.0
  %6314 = vmatprep.subr.mxu0 0.0
  %6315 = vmatpush1.msra.mxu0 0.0
  %6316 = vmatprep.subr.mxu0 0.0
  %6317 = vmatpush1.msra.mxu0 0.0
  %6318 = vmatprep.subr.mxu0 0.0
  %6319 = vmatpush1.msra.mxu0 0.0
  %6320 = vmatprep.subr.mxu0 0.0
  %6321 = vmatpush1.msra.mxu0 0.0
  %6322 = vmatprep.subr.mxu0 0.0
  %6323 = vmatpush1.msra.mxu0 0.0
  %6324 = vmatprep.subr.mxu0 0.0
  %6325 = vmatpush1.msra.mxu0 0.0
  %6326 = vmatprep.subr.mxu0 0.0
  %6327 = vmatpush1.msra.mxu0 0.0
  %6328 = vmatprep.subr.mxu0 0.0
  %6329 = vmatpush1.msra.mxu0 0.0
  %6330 = vmatprep.subr.mxu0 0.0
  %6331 = vmatpush1.msra.mxu0 0.0
  %6332 = vmatprep.subr.mxu0 0.0
  %6333 = vmatpush1.msra.mxu0 0.0
  %6334 = vmatprep.subr.mxu0 0.0
  %6335 = vmatpush1.msra.mxu0 0.0
  %6336 = vmatprep.subr.mxu0 0.0
  %6337 = vmatpush1.msra.mxu0 0.0
  %6338 = vmatprep.subr.mxu0 0.0
  %6339 = vmatpush1.msra.mxu0 0.0
  %6340 = vmatprep.subr.mxu0 0.0
  %6341 = vmatpush1.msra.mxu0 0.0
  %6342 = vmatprep.subr.mxu0 0.0
  %6343 = vmatpush1.msra.mxu0 0.0
  %6344 = vmatprep.subr.mxu0 0.0
  %6345 = vmatpush1.msra.mxu0 0.0
  %6346 = vmatprep.subr.mxu0 0.0
  %6347 = vmatpush1.msra.mxu0 0.0
  %6348 = vmatprep.subr.mxu0 0.0
  %6349 = vmatpush1.msra.mxu0 0.0
  %6350 = vmatprep.subr.mxu0 0.0
  %6351 = vmatpush1.msra.mxu0 0.0
  %6352 = vmatprep.subr.mxu0 0.0
  %6353 = vmatpush1.msra.mxu0 0.0
  %6354 = vmatprep.subr.mxu0 0.0
  %6355 = vmatpush1.msra.mxu0 0.0
  %6356 = vmatprep.mubr.f32.mxu0 0.0
  %6357 = vmatmul.mubr.f32.gmra.mrb[0].mxu0 %v6290
  %v6358 = vpop.f32.mrb[0].mxu0
  %v6359 = vadd.f32 %v4538, %v6358
  %v6360 = vpop.f32.mrb[0].mxu0
  %6361 = vdwg.mxu0
  %v6362 = vxor.u32 %v6359, 2147483648
  %v6363 = vmul.f32 %v6362, 1.442695
  %v6364 = vpow.pop %v6363
  %v6365 = vadd.f32 %v6364, 1.0
  %v6366 = vrcp.pop %v6365
  %v6367 = vmul.f32 1.0, %v6366
  %v6368 = vtanh.pop %v6359
  %v6369 = vmul.f32 %v6367, %v6280
  %6371 = vrot.lane.b32.xlu0 %v6368, 100
  %v6372 = vpop.permute.xlu0 %6371
  %v6374 = vmul.f32 %v6367, %v6372
  %6376 = vrot.lane.b32.xlu0 %v6374, 14
  %v6377 = vpop.permute.xlu0 %6376
  %v6379 = vadd.f32 %v6369, %v6377
  %v6380 = vtanh.pop %v6379
  %6382 = vrot.lane.b32.xlu0 %v6380, 28
  %v6383 = vpop.permute.xlu0 %6382
  %v6385 = vmul.f32 %v6367, %v6383
  %6387 = vrot.lane.b32.xlu0 %v6385, 86
  %v6388 = vpop.permute.xlu0 %6387
  %v6389 = vsel %vm1204, %v6388, 0
  %6391 = vmatprep.subr.mxu0 0.0
  %6392 = vmatpush1.msra.mxu0 %v2807
  %6393 = vmatprep.subr.mxu0 0.0
  %6394 = vmatpush1.msra.mxu0 %v5894
  %6395 = vmatprep.subr.mxu0 0.0
  %6396 = vmatpush1.msra.mxu0 0.0
  %6397 = vmatprep.subr.mxu0 0.0
  %6398 = vmatpush1.msra.mxu0 0.0
  %6399 = vmatprep.subr.mxu0 0.0
  %6400 = vmatpush1.msra.mxu0 0.0
  %6401 = vmatprep.subr.mxu0 0.0
  %6402 = vmatpush1.msra.mxu0 0.0
  %6403 = vmatprep.subr.mxu0 0.0
  %6404 = vmatpush1.msra.mxu0 0.0
  %6405 = vmatprep.subr.mxu0 0.0
  %6406 = vmatpush1.msra.mxu0 0.0
  %6407 = vmatprep.subr.mxu0 0.0
  %6408 = vmatpush1.msra.mxu0 0.0
  %6409 = vmatprep.subr.mxu0 0.0
  %6410 = vmatpush1.msra.mxu0 0.0
  %6411 = vmatprep.subr.mxu0 0.0
  %6412 = vmatpush1.msra.mxu0 0.0
  %6413 = vmatprep.subr.mxu0 0.0
  %6414 = vmatpush1.msra.mxu0 0.0
  %6415 = vmatprep.subr.mxu0 0.0
  %6416 = vmatpush1.msra.mxu0 0.0
  %6417 = vmatprep.subr.mxu0 0.0
  %6418 = vmatpush1.msra.mxu0 0.0
  %6419 = vmatprep.subr.mxu0 0.0
  %6420 = vmatpush1.msra.mxu0 0.0
  %6421 = vmatprep.subr.mxu0 0.0
  %6422 = vmatpush1.msra.mxu0 0.0
  %6423 = vmatprep.subr.mxu0 0.0
  %6424 = vmatpush1.msra.mxu0 0.0
  %6425 = vmatprep.subr.mxu0 0.0
  %6426 = vmatpush1.msra.mxu0 0.0
  %6427 = vmatprep.subr.mxu0 0.0
  %6428 = vmatpush1.msra.mxu0 0.0
  %6429 = vmatprep.subr.mxu0 0.0
  %6430 = vmatpush1.msra.mxu0 0.0
  %6431 = vmatprep.subr.mxu0 0.0
  %6432 = vmatpush1.msra.mxu0 0.0
  %6433 = vmatprep.subr.mxu0 0.0
  %6434 = vmatpush1.msra.mxu0 0.0
  %6435 = vmatprep.subr.mxu0 0.0
  %6436 = vmatpush1.msra.mxu0 0.0
  %6437 = vmatprep.subr.mxu0 0.0
  %6438 = vmatpush1.msra.mxu0 0.0
  %6439 = vmatprep.subr.mxu0 0.0
  %6440 = vmatpush1.msra.mxu0 0.0
  %6441 = vmatprep.subr.mxu0 0.0
  %6442 = vmatpush1.msra.mxu0 0.0
  %6443 = vmatprep.subr.mxu0 0.0
  %6444 = vmatpush1.msra.mxu0 0.0
  %6445 = vmatprep.subr.mxu0 0.0
  %6446 = vmatpush1.msra.mxu0 0.0
  %6447 = vmatprep.subr.mxu0 0.0
  %6448 = vmatpush1.msra.mxu0 0.0
  %6449 = vmatprep.subr.mxu0 0.0
  %6450 = vmatpush1.msra.mxu0 0.0
  %6451 = vmatprep.subr.mxu0 0.0
  %6452 = vmatpush1.msra.mxu0 0.0
  %6453 = vmatprep.subr.mxu0 0.0
  %6454 = vmatpush1.msra.mxu0 0.0
  %6455 = vmatprep.mubr.f32.mxu0 0.0
  %6456 = vmatmul.mubr.f32.gmra.mrb[0].mxu0 %v6389
  %v6457 = vpop.f32.mrb[0].mxu0
  %v6458 = vadd.f32 %v4397, %v6457
  %v6459 = vpop.f32.mrb[0].mxu0
  %6460 = vdwg.mxu0
  %v6461 = vxor.u32 %v6458, 2147483648
  %v6462 = vmul.f32 %v6461, 1.442695
  %v6463 = vpow.pop %v6462
  %v6464 = vadd.f32 %v6463, 1.0
  %v6465 = vrcp.pop %v6464
  %v6466 = vmul.f32 1.0, %v6465
  %v6467 = vtanh.pop %v6458
  %v6468 = vmul.f32 %v6466, %v6379
  %6470 = vrot.lane.b32.xlu0 %v6467, 100
  %v6471 = vpop.permute.xlu0 %6470
  %v6473 = vmul.f32 %v6466, %v6471
  %6475 = vrot.lane.b32.xlu0 %v6473, 14
  %v6476 = vpop.permute.xlu0 %6475
  %v6478 = vadd.f32 %v6468, %v6476
  %v6479 = vtanh.pop %v6478
  %6481 = vrot.lane.b32.xlu0 %v6479, 28
  %v6482 = vpop.permute.xlu0 %6481
  %v6484 = vmul.f32 %v6466, %v6482
  %6486 = vrot.lane.b32.xlu0 %v6484, 86
  %v6487 = vpop.permute.xlu0 %6486
  %v6488 = vsel %vm1204, %v6487, 0
  %6490 = vmatprep.subr.mxu0 0.0
  %6491 = vmatpush1.msra.mxu0 %v2807
  %6492 = vmatprep.subr.mxu0 0.0
  %6493 = vmatpush1.msra.mxu0 %v5894
  %6494 = vmatprep.subr.mxu0 0.0
  %6495 = vmatpush1.msra.mxu0 0.0
  %6496 = vmatprep.subr.mxu0 0.0
  %6497 = vmatpush1.msra.mxu0 0.0
  %6498 = vmatprep.subr.mxu0 0.0
  %6499 = vmatpush1.msra.mxu0 0.0
  %6500 = vmatprep.subr.mxu0 0.0
  %6501 = vmatpush1.msra.mxu0 0.0
  %6502 = vmatprep.subr.mxu0 0.0
  %6503 = vmatpush1.msra.mxu0 0.0
  %6504 = vmatprep.subr.mxu0 0.0
  %6505 = vmatpush1.msra.mxu0 0.0
  %6506 = vmatprep.subr.mxu0 0.0
  %6507 = vmatpush1.msra.mxu0 0.0
  %6508 = vmatprep.subr.mxu0 0.0
  %6509 = vmatpush1.msra.mxu0 0.0
  %6510 = vmatprep.subr.mxu0 0.0
  %6511 = vmatpush1.msra.mxu0 0.0
  %6512 = vmatprep.subr.mxu0 0.0
  %6513 = vmatpush1.msra.mxu0 0.0
  %6514 = vmatprep.subr.mxu0 0.0
  %6515 = vmatpush1.msra.mxu0 0.0
  %6516 = vmatprep.subr.mxu0 0.0
  %6517 = vmatpush1.msra.mxu0 0.0
  %6518 = vmatprep.subr.mxu0 0.0
  %6519 = vmatpush1.msra.mxu0 0.0
  %6520 = vmatprep.subr.mxu0 0.0
  %6521 = vmatpush1.msra.mxu0 0.0
  %6522 = vmatprep.subr.mxu0 0.0
  %6523 = vmatpush1.msra.mxu0 0.0
  %6524 = vmatprep.subr.mxu0 0.0
  %6525 = vmatpush1.msra.mxu0 0.0
  %6526 = vmatprep.subr.mxu0 0.0
  %6527 = vmatpush1.msra.mxu0 0.0
  %6528 = vmatprep.subr.mxu0 0.0
  %6529 = vmatpush1.msra.mxu0 0.0
  %6530 = vmatprep.subr.mxu0 0.0
  %6531 = vmatpush1.msra.mxu0 0.0
  %6532 = vmatprep.subr.mxu0 0.0
  %6533 = vmatpush1.msra.mxu0 0.0
  %6534 = vmatprep.subr.mxu0 0.0
  %6535 = vmatpush1.msra.mxu0 0.0
  %6536 = vmatprep.subr.mxu0 0.0
  %6537 = vmatpush1.msra.mxu0 0.0
  %6538 = vmatprep.subr.mxu0 0.0
  %6539 = vmatpush1.msra.mxu0 0.0
  %6540 = vmatprep.subr.mxu0 0.0
  %6541 = vmatpush1.msra.mxu0 0.0
  %6542 = vmatprep.subr.mxu0 0.0
  %6543 = vmatpush1.msra.mxu0 0.0
  %6544 = vmatprep.subr.mxu0 0.0
  %6545 = vmatpush1.msra.mxu0 0.0
  %6546 = vmatprep.subr.mxu0 0.0
  %6547 = vmatpush1.msra.mxu0 0.0
  %6548 = vmatprep.subr.mxu0 0.0
  %6549 = vmatpush1.msra.mxu0 0.0
  %6550 = vmatprep.subr.mxu0 0.0
  %6551 = vmatpush1.msra.mxu0 0.0
  %6552 = vmatprep.subr.mxu0 0.0
  %6553 = vmatpush1.msra.mxu0 0.0
  %6554 = vmatprep.mubr.f32.mxu0 0.0
  %6555 = vmatmul.mubr.f32.gmra.mrb[0].mxu0 %v6488
  %v6556 = vpop.f32.mrb[0].mxu0
  %v6557 = vadd.f32 %v4256, %v6556
  %v6558 = vpop.f32.mrb[0].mxu0
  %6559 = vdwg.mxu0
  %v6560 = vxor.u32 %v6557, 2147483648
  %v6561 = vmul.f32 %v6560, 1.442695
  %v6562 = vpow.pop %v6561
  %v6563 = vadd.f32 %v6562, 1.0
  %v6564 = vrcp.pop %v6563
  %v6565 = vmul.f32 1.0, %v6564
  %v6566 = vtanh.pop %v6557
  %v6567 = vmul.f32 %v6565, %v6478
  %6569 = vrot.lane.b32.xlu0 %v6566, 100
  %v6570 = vpop.permute.xlu0 %6569
  %v6572 = vmul.f32 %v6565, %v6570
  %6574 = vrot.lane.b32.xlu0 %v6572, 14
  %v6575 = vpop.permute.xlu0 %6574
  %v6577 = vadd.f32 %v6567, %v6575
  %v6578 = vtanh.pop %v6577
  %6580 = vrot.lane.b32.xlu0 %v6578, 28
  %v6581 = vpop.permute.xlu0 %6580
  %v6583 = vmul.f32 %v6565, %v6581
  %6585 = vrot.lane.b32.xlu0 %v6583, 86
  %v6586 = vpop.permute.xlu0 %6585
  %v6587 = vsel %vm1204, %v6586, 0
  %6589 = vmatprep.subr.mxu0 0.0
  %6590 = vmatpush1.msra.mxu0 %v2807
  %6591 = vmatprep.subr.mxu0 0.0
  %6592 = vmatpush1.msra.mxu0 %v5894
  %6593 = vmatprep.subr.mxu0 0.0
  %6594 = vmatpush1.msra.mxu0 0.0
  %6595 = vmatprep.subr.mxu0 0.0
  %6596 = vmatpush1.msra.mxu0 0.0
  %6597 = vmatprep.subr.mxu0 0.0
  %6598 = vmatpush1.msra.mxu0 0.0
  %6599 = vmatprep.subr.mxu0 0.0
  %6600 = vmatpush1.msra.mxu0 0.0
  %6601 = vmatprep.subr.mxu0 0.0
  %6602 = vmatpush1.msra.mxu0 0.0
  %6603 = vmatprep.subr.mxu0 0.0
  %6604 = vmatpush1.msra.mxu0 0.0
  %6605 = vmatprep.subr.mxu0 0.0
  %6606 = vmatpush1.msra.mxu0 0.0
  %6607 = vmatprep.subr.mxu0 0.0
  %6608 = vmatpush1.msra.mxu0 0.0
  %6609 = vmatprep.subr.mxu0 0.0
  %6610 = vmatpush1.msra.mxu0 0.0
  %6611 = vmatprep.subr.mxu0 0.0
  %6612 = vmatpush1.msra.mxu0 0.0
  %6613 = vmatprep.subr.mxu0 0.0
  %6614 = vmatpush1.msra.mxu0 0.0
  %6615 = vmatprep.subr.mxu0 0.0
  %6616 = vmatpush1.msra.mxu0 0.0
  %6617 = vmatprep.subr.mxu0 0.0
  %6618 = vmatpush1.msra.mxu0 0.0
  %6619 = vmatprep.subr.mxu0 0.0
  %6620 = vmatpush1.msra.mxu0 0.0
  %6621 = vmatprep.subr.mxu0 0.0
  %6622 = vmatpush1.msra.mxu0 0.0
  %6623 = vmatprep.subr.mxu0 0.0
  %6624 = vmatpush1.msra.mxu0 0.0
  %6625 = vmatprep.subr.mxu0 0.0
  %6626 = vmatpush1.msra.mxu0 0.0
  %6627 = vmatprep.subr.mxu0 0.0
  %6628 = vmatpush1.msra.mxu0 0.0
  %6629 = vmatprep.subr.mxu0 0.0
  %6630 = vmatpush1.msra.mxu0 0.0
  %6631 = vmatprep.subr.mxu0 0.0
  %6632 = vmatpush1.msra.mxu0 0.0
  %6633 = vmatprep.subr.mxu0 0.0
  %6634 = vmatpush1.msra.mxu0 0.0
  %6635 = vmatprep.subr.mxu0 0.0
  %6636 = vmatpush1.msra.mxu0 0.0
  %6637 = vmatprep.subr.mxu0 0.0
  %6638 = vmatpush1.msra.mxu0 0.0
  %6639 = vmatprep.subr.mxu0 0.0
  %6640 = vmatpush1.msra.mxu0 0.0
  %6641 = vmatprep.subr.mxu0 0.0
  %6642 = vmatpush1.msra.mxu0 0.0
  %6643 = vmatprep.subr.mxu0 0.0
  %6644 = vmatpush1.msra.mxu0 0.0
  %6645 = vmatprep.subr.mxu0 0.0
  %6646 = vmatpush1.msra.mxu0 0.0
  %6647 = vmatprep.subr.mxu0 0.0
  %6648 = vmatpush1.msra.mxu0 0.0
  %6649 = vmatprep.subr.mxu0 0.0
  %6650 = vmatpush1.msra.mxu0 0.0
  %6651 = vmatprep.subr.mxu0 0.0
  %6652 = vmatpush1.msra.mxu0 0.0
  %6653 = vmatprep.mubr.f32.mxu0 0.0
  %6654 = vmatmul.mubr.f32.gmra.mrb[0].mxu0 %v6587
  %v6655 = vpop.f32.mrb[0].mxu0
  %v6656 = vadd.f32 %v4115, %v6655
  %v6657 = vpop.f32.mrb[0].mxu0
  %6658 = vdwg.mxu0
  %v6659 = vxor.u32 %v6656, 2147483648
  %v6660 = vmul.f32 %v6659, 1.442695
  %v6661 = vpow.pop %v6660
  %v6662 = vadd.f32 %v6661, 1.0
  %v6663 = vrcp.pop %v6662
  %v6664 = vmul.f32 1.0, %v6663
  %v6665 = vtanh.pop %v6656
  %v6666 = vmul.f32 %v6664, %v6577
  %6668 = vrot.lane.b32.xlu0 %v6665, 100
  %v6669 = vpop.permute.xlu0 %6668
  %v6671 = vmul.f32 %v6664, %v6669
  %6673 = vrot.lane.b32.xlu0 %v6671, 14
  %v6674 = vpop.permute.xlu0 %6673
  %v6676 = vadd.f32 %v6666, %v6674
  %v6677 = vtanh.pop %v6676
  %6679 = vrot.lane.b32.xlu0 %v6677, 28
  %v6680 = vpop.permute.xlu0 %6679
  %v6682 = vmul.f32 %v6664, %v6680
  %s6683 = scalar_lea.vmem %s2, 128
  %v6684 = vld [vmem:[%s6683] sm:$0xff]
  %v6685 = vld [vmem:[%s6683 + $0x8] sm:$0x3f]
  %s6686 = scalar_lea.vmem %s2, 144
  %v6687 = vld [vmem:[%s6686] sm:$0xff]
  %v6688 = vld [vmem:[%s6686 + $0x8] sm:$0x3f]
  %s6689 = scalar_lea.vmem %s2, 160
  %v6690 = vld [vmem:[%s6689] sm:$0xff]
  %v6691 = vld [vmem:[%s6689 + $0x8] sm:$0x3f]
  %s6692 = scalar_lea.vmem %s3, 4
  %v6693 = vld [vmem:[%s6692] sm:$0x1]
  %6695 = vrot.lane.b32.xlu0 %v6682, 86
  %v6696 = vpop.permute.xlu0 %6695
  %v6697 = vsel %vm1204, %v6696, 0
  %v6700 = vsel %vm48, %v6688, 0
  %6702 = vmatprep.subr.mxu0 0.0
  %6703 = vmatpush1.msra.mxu0 %v6687
  %6704 = vmatprep.subr.mxu0 0.0
  %6705 = vmatpush1.msra.mxu0 %v6700
  %6706 = vmatprep.subr.mxu0 0.0
  %6707 = vmatpush1.msra.mxu0 0.0
  %6708 = vmatprep.subr.mxu0 0.0
  %6709 = vmatpush1.msra.mxu0 0.0
  %6710 = vmatprep.subr.mxu0 0.0
  %6711 = vmatpush1.msra.mxu0 0.0
  %6712 = vmatprep.subr.mxu0 0.0
  %6713 = vmatpush1.msra.mxu0 0.0
  %6714 = vmatprep.subr.mxu0 0.0
  %6715 = vmatpush1.msra.mxu0 0.0
  %6716 = vmatprep.subr.mxu0 0.0
  %6717 = vmatpush1.msra.mxu0 0.0
  %6718 = vmatprep.subr.mxu0 0.0
  %6719 = vmatpush1.msra.mxu0 0.0
  %6720 = vmatprep.subr.mxu0 0.0
  %6721 = vmatpush1.msra.mxu0 0.0
  %6722 = vmatprep.subr.mxu0 0.0
  %6723 = vmatpush1.msra.mxu0 0.0
  %6724 = vmatprep.subr.mxu0 0.0
  %6725 = vmatpush1.msra.mxu0 0.0
  %6726 = vmatprep.subr.mxu0 0.0
  %6727 = vmatpush1.msra.mxu0 0.0
  %6728 = vmatprep.subr.mxu0 0.0
  %6729 = vmatpush1.msra.mxu0 0.0
  %6730 = vmatprep.subr.mxu0 0.0
  %6731 = vmatpush1.msra.mxu0 0.0
  %6732 = vmatprep.subr.mxu0 0.0
  %6733 = vmatpush1.msra.mxu0 0.0
  %6734 = vmatprep.subr.mxu0 0.0
  %6735 = vmatpush1.msra.mxu0 0.0
  %6736 = vmatprep.subr.mxu0 0.0
  %6737 = vmatpush1.msra.mxu0 0.0
  %6738 = vmatprep.subr.mxu0 0.0
  %6739 = vmatpush1.msra.mxu0 0.0
  %6740 = vmatprep.subr.mxu0 0.0
  %6741 = vmatpush1.msra.mxu0 0.0
  %6742 = vmatprep.subr.mxu0 0.0
  %6743 = vmatpush1.msra.mxu0 0.0
  %6744 = vmatprep.subr.mxu0 0.0
  %6745 = vmatpush1.msra.mxu0 0.0
  %6746 = vmatprep.subr.mxu0 0.0
  %6747 = vmatpush1.msra.mxu0 0.0
  %6748 = vmatprep.subr.mxu0 0.0
  %6749 = vmatpush1.msra.mxu0 0.0
  %6750 = vmatprep.subr.mxu0 0.0
  %6751 = vmatpush1.msra.mxu0 0.0
  %6752 = vmatprep.subr.mxu0 0.0
  %6753 = vmatpush1.msra.mxu0 0.0
  %6754 = vmatprep.subr.mxu0 0.0
  %6755 = vmatpush1.msra.mxu0 0.0
  %6756 = vmatprep.subr.mxu0 0.0
  %6757 = vmatpush1.msra.mxu0 0.0
  %6758 = vmatprep.subr.mxu0 0.0
  %6759 = vmatpush1.msra.mxu0 0.0
  %6760 = vmatprep.subr.mxu0 0.0
  %6761 = vmatpush1.msra.mxu0 0.0
  %6762 = vmatprep.subr.mxu0 0.0
  %6763 = vmatpush1.msra.mxu0 0.0
  %6764 = vmatprep.subr.mxu0 0.0
  %6765 = vmatpush1.msra.mxu0 0.0
  %6766 = vmatprep.mubr.f32.mxu0 0.0
  %6767 = vmatmul.mubr.f32.gmra.mrb[0].mxu0 %v6697
  %v6768 = vpop.f32.mrb[0].mxu0
  %v6769 = vadd.f32 0.0, %v6768
  %v6770 = vpop.f32.mrb[0].mxu0
  %6771 = vdwg.mxu0
  %v6773 = vsel %vm48, %v6685, 0
  %6775 = vmatprep.subr.mxu0 0.0
  %6776 = vmatpush1.msra.mxu0 %v6684
  %6777 = vmatprep.subr.mxu0 0.0
  %6778 = vmatpush1.msra.mxu0 %v6773
  %6779 = vmatprep.subr.mxu0 0.0
  %6780 = vmatpush1.msra.mxu0 0.0
  %6781 = vmatprep.subr.mxu0 0.0
  %6782 = vmatpush1.msra.mxu0 0.0
  %6783 = vmatprep.subr.mxu0 0.0
  %6784 = vmatpush1.msra.mxu0 0.0
  %6785 = vmatprep.subr.mxu0 0.0
  %6786 = vmatpush1.msra.mxu0 0.0
  %6787 = vmatprep.subr.mxu0 0.0
  %6788 = vmatpush1.msra.mxu0 0.0
  %6789 = vmatprep.subr.mxu0 0.0
  %6790 = vmatpush1.msra.mxu0 0.0
  %6791 = vmatprep.subr.mxu0 0.0
  %6792 = vmatpush1.msra.mxu0 0.0
  %6793 = vmatprep.subr.mxu0 0.0
  %6794 = vmatpush1.msra.mxu0 0.0
  %6795 = vmatprep.subr.mxu0 0.0
  %6796 = vmatpush1.msra.mxu0 0.0
  %6797 = vmatprep.subr.mxu0 0.0
  %6798 = vmatpush1.msra.mxu0 0.0
  %6799 = vmatprep.subr.mxu0 0.0
  %6800 = vmatpush1.msra.mxu0 0.0
  %6801 = vmatprep.subr.mxu0 0.0
  %6802 = vmatpush1.msra.mxu0 0.0
  %6803 = vmatprep.subr.mxu0 0.0
  %6804 = vmatpush1.msra.mxu0 0.0
  %6805 = vmatprep.subr.mxu0 0.0
  %6806 = vmatpush1.msra.mxu0 0.0
  %6807 = vmatprep.subr.mxu0 0.0
  %6808 = vmatpush1.msra.mxu0 0.0
  %6809 = vmatprep.subr.mxu0 0.0
  %6810 = vmatpush1.msra.mxu0 0.0
  %6811 = vmatprep.subr.mxu0 0.0
  %6812 = vmatpush1.msra.mxu0 0.0
  %6813 = vmatprep.subr.mxu0 0.0
  %6814 = vmatpush1.msra.mxu0 0.0
  %6815 = vmatprep.subr.mxu0 0.0
  %6816 = vmatpush1.msra.mxu0 0.0
  %6817 = vmatprep.subr.mxu0 0.0
  %6818 = vmatpush1.msra.mxu0 0.0
  %6819 = vmatprep.subr.mxu0 0.0
  %6820 = vmatpush1.msra.mxu0 0.0
  %6821 = vmatprep.subr.mxu0 0.0
  %6822 = vmatpush1.msra.mxu0 0.0
  %6823 = vmatprep.subr.mxu0 0.0
  %6824 = vmatpush1.msra.mxu0 0.0
  %6825 = vmatprep.subr.mxu0 0.0
  %6826 = vmatpush1.msra.mxu0 0.0
  %6827 = vmatprep.subr.mxu0 0.0
  %6828 = vmatpush1.msra.mxu0 0.0
  %6829 = vmatprep.subr.mxu0 0.0
  %6830 = vmatpush1.msra.mxu0 0.0
  %6831 = vmatprep.subr.mxu0 0.0
  %6832 = vmatpush1.msra.mxu0 0.0
  %6833 = vmatprep.subr.mxu0 0.0
  %6834 = vmatpush1.msra.mxu0 0.0
  %6835 = vmatprep.subr.mxu0 0.0
  %6836 = vmatpush1.msra.mxu0 0.0
  %6837 = vmatprep.subr.mxu0 0.0
  %6838 = vmatpush1.msra.mxu0 0.0
  %6839 = vmatprep.mubr.f32.mxu0 0.0
  %6840 = vmatmul.mubr.f32.gmra.mrb[0].mxu0 %v5203
  %v6841 = vpop.f32.mrb[0].mxu0
  %v6842 = vadd.f32 %v6769, %v6841
  %v6843 = vpop.f32.mrb[0].mxu0
  %6844 = vdwg.mxu0
  %v6846 = vlaneseq
  %v6847 = vshrl.u32 %v6846, 7
  %v6848 = vsub.s32 0, %v6847
  %v6849 = vrot.slane %v6693, %v6848
  %v6851 = vadd.f32 %v6842, %v6849
  %6852 = vmatprep.subr.mxu0 0.0
  %6853 = vmatpush1.msra.mxu0 %v6687
  %6854 = vmatprep.subr.mxu0 0.0
  %6855 = vmatpush1.msra.mxu0 %v6700
  %6856 = vmatprep.subr.mxu0 0.0
  %6857 = vmatpush1.msra.mxu0 0.0
  %6858 = vmatprep.subr.mxu0 0.0
  %6859 = vmatpush1.msra.mxu0 0.0
  %6860 = vmatprep.subr.mxu0 0.0
  %6861 = vmatpush1.msra.mxu0 0.0
  %6862 = vmatprep.subr.mxu0 0.0
  %6863 = vmatpush1.msra.mxu0 0.0
  %6864 = vmatprep.subr.mxu0 0.0
  %6865 = vmatpush1.msra.mxu0 0.0
  %6866 = vmatprep.subr.mxu0 0.0
  %6867 = vmatpush1.msra.mxu0 0.0
  %6868 = vmatprep.subr.mxu0 0.0
  %6869 = vmatpush1.msra.mxu0 0.0
  %6870 = vmatprep.subr.mxu0 0.0
  %6871 = vmatpush1.msra.mxu0 0.0
  %6872 = vmatprep.subr.mxu0 0.0
  %6873 = vmatpush1.msra.mxu0 0.0
  %6874 = vmatprep.subr.mxu0 0.0
  %6875 = vmatpush1.msra.mxu0 0.0
  %6876 = vmatprep.subr.mxu0 0.0
  %6877 = vmatpush1.msra.mxu0 0.0
  %6878 = vmatprep.subr.mxu0 0.0
  %6879 = vmatpush1.msra.mxu0 0.0
  %6880 = vmatprep.subr.mxu0 0.0
  %6881 = vmatpush1.msra.mxu0 0.0
  %6882 = vmatprep.subr.mxu0 0.0
  %6883 = vmatpush1.msra.mxu0 0.0
  %6884 = vmatprep.subr.mxu0 0.0
  %6885 = vmatpush1.msra.mxu0 0.0
  %6886 = vmatprep.subr.mxu0 0.0
  %6887 = vmatpush1.msra.mxu0 0.0
  %6888 = vmatprep.subr.mxu0 0.0
  %6889 = vmatpush1.msra.mxu0 0.0
  %6890 = vmatprep.subr.mxu0 0.0
  %6891 = vmatpush1.msra.mxu0 0.0
  %6892 = vmatprep.subr.mxu0 0.0
  %6893 = vmatpush1.msra.mxu0 0.0
  %6894 = vmatprep.subr.mxu0 0.0
  %6895 = vmatpush1.msra.mxu0 0.0
  %6896 = vmatprep.subr.mxu0 0.0
  %6897 = vmatpush1.msra.mxu0 0.0
  %6898 = vmatprep.subr.mxu0 0.0
  %6899 = vmatpush1.msra.mxu0 0.0
  %6900 = vmatprep.subr.mxu0 0.0
  %6901 = vmatpush1.msra.mxu0 0.0
  %6902 = vmatprep.subr.mxu0 0.0
  %6903 = vmatpush1.msra.mxu0 0.0
  %6904 = vmatprep.subr.mxu0 0.0
  %6905 = vmatpush1.msra.mxu0 0.0
  %6906 = vmatprep.subr.mxu0 0.0
  %6907 = vmatpush1.msra.mxu0 0.0
  %6908 = vmatprep.subr.mxu0 0.0
  %6909 = vmatpush1.msra.mxu0 0.0
  %6910 = vmatprep.subr.mxu0 0.0
  %6911 = vmatpush1.msra.mxu0 0.0
  %6912 = vmatprep.subr.mxu0 0.0
  %6913 = vmatpush1.msra.mxu0 0.0
  %6914 = vmatprep.subr.mxu0 0.0
  %6915 = vmatpush1.msra.mxu0 0.0
  %6916 = vmatprep.mubr.f32.mxu0 0.0
  %6917 = vmatmul.mubr.f32.gmra.mrb[0].mxu0 %v6587
  %v6918 = vpop.f32.mrb[0].mxu0
  %v6919 = vadd.f32 0.0, %v6918
  %v6920 = vpop.f32.mrb[0].mxu0
  %6921 = vdwg.mxu0
  %6922 = vmatprep.subr.mxu0 0.0
  %6923 = vmatpush1.msra.mxu0 %v6684
  %6924 = vmatprep.subr.mxu0 0.0
  %6925 = vmatpush1.msra.mxu0 %v6773
  %6926 = vmatprep.subr.mxu0 0.0
  %6927 = vmatpush1.msra.mxu0 0.0
  %6928 = vmatprep.subr.mxu0 0.0
  %6929 = vmatpush1.msra.mxu0 0.0
  %6930 = vmatprep.subr.mxu0 0.0
  %6931 = vmatpush1.msra.mxu0 0.0
  %6932 = vmatprep.subr.mxu0 0.0
  %6933 = vmatpush1.msra.mxu0 0.0
  %6934 = vmatprep.subr.mxu0 0.0
  %6935 = vmatpush1.msra.mxu0 0.0
  %6936 = vmatprep.subr.mxu0 0.0
  %6937 = vmatpush1.msra.mxu0 0.0
  %6938 = vmatprep.subr.mxu0 0.0
  %6939 = vmatpush1.msra.mxu0 0.0
  %6940 = vmatprep.subr.mxu0 0.0
  %6941 = vmatpush1.msra.mxu0 0.0
  %6942 = vmatprep.subr.mxu0 0.0
  %6943 = vmatpush1.msra.mxu0 0.0
  %6944 = vmatprep.subr.mxu0 0.0
  %6945 = vmatpush1.msra.mxu0 0.0
  %6946 = vmatprep.subr.mxu0 0.0
  %6947 = vmatpush1.msra.mxu0 0.0
  %6948 = vmatprep.subr.mxu0 0.0
  %6949 = vmatpush1.msra.mxu0 0.0
  %6950 = vmatprep.subr.mxu0 0.0
  %6951 = vmatpush1.msra.mxu0 0.0
  %6952 = vmatprep.subr.mxu0 0.0
  %6953 = vmatpush1.msra.mxu0 0.0
  %6954 = vmatprep.subr.mxu0 0.0
  %6955 = vmatpush1.msra.mxu0 0.0
  %6956 = vmatprep.subr.mxu0 0.0
  %6957 = vmatpush1.msra.mxu0 0.0
  %6958 = vmatprep.subr.mxu0 0.0
  %6959 = vmatpush1.msra.mxu0 0.0
  %6960 = vmatprep.subr.mxu0 0.0
  %6961 = vmatpush1.msra.mxu0 0.0
  %6962 = vmatprep.subr.mxu0 0.0
  %6963 = vmatpush1.msra.mxu0 0.0
  %6964 = vmatprep.subr.mxu0 0.0
  %6965 = vmatpush1.msra.mxu0 0.0
  %6966 = vmatprep.subr.mxu0 0.0
  %6967 = vmatpush1.msra.mxu0 0.0
  %6968 = vmatprep.subr.mxu0 0.0
  %6969 = vmatpush1.msra.mxu0 0.0
  %6970 = vmatprep.subr.mxu0 0.0
  %6971 = vmatpush1.msra.mxu0 0.0
  %6972 = vmatprep.subr.mxu0 0.0
  %6973 = vmatpush1.msra.mxu0 0.0
  %6974 = vmatprep.subr.mxu0 0.0
  %6975 = vmatpush1.msra.mxu0 0.0
  %6976 = vmatprep.subr.mxu0 0.0
  %6977 = vmatpush1.msra.mxu0 0.0
  %6978 = vmatprep.subr.mxu0 0.0
  %6979 = vmatpush1.msra.mxu0 0.0
  %6980 = vmatprep.subr.mxu0 0.0
  %6981 = vmatpush1.msra.mxu0 0.0
  %6982 = vmatprep.subr.mxu0 0.0
  %6983 = vmatpush1.msra.mxu0 0.0
  %6984 = vmatprep.subr.mxu0 0.0
  %6985 = vmatpush1.msra.mxu0 0.0
  %6986 = vmatprep.mubr.f32.mxu0 0.0
  %6987 = vmatmul.mubr.f32.gmra.mrb[0].mxu0 %v5302
  %v6988 = vpop.f32.mrb[0].mxu0
  %v6989 = vadd.f32 %v6919, %v6988
  %v6990 = vpop.f32.mrb[0].mxu0
  %6991 = vdwg.mxu0
  %v6992 = vadd.f32 %v6989, %v6849
  %6993 = vmatprep.subr.mxu0 0.0
  %6994 = vmatpush1.msra.mxu0 %v6687
  %6995 = vmatprep.subr.mxu0 0.0
  %6996 = vmatpush1.msra.mxu0 %v6700
  %6997 = vmatprep.subr.mxu0 0.0
  %6998 = vmatpush1.msra.mxu0 0.0
  %6999 = vmatprep.subr.mxu0 0.0
  %7000 = vmatpush1.msra.mxu0 0.0
  %7001 = vmatprep.subr.mxu0 0.0
  %7002 = vmatpush1.msra.mxu0 0.0
  %7003 = vmatprep.subr.mxu0 0.0
  %7004 = vmatpush1.msra.mxu0 0.0
  %7005 = vmatprep.subr.mxu0 0.0
  %7006 = vmatpush1.msra.mxu0 0.0
  %7007 = vmatprep.subr.mxu0 0.0
  %7008 = vmatpush1.msra.mxu0 0.0
  %7009 = vmatprep.subr.mxu0 0.0
  %7010 = vmatpush1.msra.mxu0 0.0
  %7011 = vmatprep.subr.mxu0 0.0
  %7012 = vmatpush1.msra.mxu0 0.0
  %7013 = vmatprep.subr.mxu0 0.0
  %7014 = vmatpush1.msra.mxu0 0.0
  %7015 = vmatprep.subr.mxu0 0.0
  %7016 = vmatpush1.msra.mxu0 0.0
  %7017 = vmatprep.subr.mxu0 0.0
  %7018 = vmatpush1.msra.mxu0 0.0
  %7019 = vmatprep.subr.mxu0 0.0
  %7020 = vmatpush1.msra.mxu0 0.0
  %7021 = vmatprep.subr.mxu0 0.0
  %7022 = vmatpush1.msra.mxu0 0.0
  %7023 = vmatprep.subr.mxu0 0.0
  %7024 = vmatpush1.msra.mxu0 0.0
  %7025 = vmatprep.subr.mxu0 0.0
  %7026 = vmatpush1.msra.mxu0 0.0
  %7027 = vmatprep.subr.mxu0 0.0
  %7028 = vmatpush1.msra.mxu0 0.0
  %7029 = vmatprep.subr.mxu0 0.0
  %7030 = vmatpush1.msra.mxu0 0.0
  %7031 = vmatprep.subr.mxu0 0.0
  %7032 = vmatpush1.msra.mxu0 0.0
  %7033 = vmatprep.subr.mxu0 0.0
  %7034 = vmatpush1.msra.mxu0 0.0
  %7035 = vmatprep.subr.mxu0 0.0
  %7036 = vmatpush1.msra.mxu0 0.0
  %7037 = vmatprep.subr.mxu0 0.0
  %7038 = vmatpush1.msra.mxu0 0.0
  %7039 = vmatprep.subr.mxu0 0.0
  %7040 = vmatpush1.msra.mxu0 0.0
  %7041 = vmatprep.subr.mxu0 0.0
  %7042 = vmatpush1.msra.mxu0 0.0
  %7043 = vmatprep.subr.mxu0 0.0
  %7044 = vmatpush1.msra.mxu0 0.0
  %7045 = vmatprep.subr.mxu0 0.0
  %7046 = vmatpush1.msra.mxu0 0.0
  %7047 = vmatprep.subr.mxu0 0.0
  %7048 = vmatpush1.msra.mxu0 0.0
  %7049 = vmatprep.subr.mxu0 0.0
  %7050 = vmatpush1.msra.mxu0 0.0
  %7051 = vmatprep.subr.mxu0 0.0
  %7052 = vmatpush1.msra.mxu0 0.0
  %7053 = vmatprep.subr.mxu0 0.0
  %7054 = vmatpush1.msra.mxu0 0.0
  %7055 = vmatprep.subr.mxu0 0.0
  %7056 = vmatpush1.msra.mxu0 0.0
  %7057 = vmatprep.mubr.f32.mxu0 0.0
  %7058 = vmatmul.mubr.f32.gmra.mrb[0].mxu0 %v6488
  %v7059 = vpop.f32.mrb[0].mxu0
  %v7060 = vadd.f32 0.0, %v7059
  %v7061 = vpop.f32.mrb[0].mxu0
  %7062 = vdwg.mxu0
  %7063 = vmatprep.subr.mxu0 0.0
  %7064 = vmatpush1.msra.mxu0 %v6684
  %7065 = vmatprep.subr.mxu0 0.0
  %7066 = vmatpush1.msra.mxu0 %v6773
  %7067 = vmatprep.subr.mxu0 0.0
  %7068 = vmatpush1.msra.mxu0 0.0
  %7069 = vmatprep.subr.mxu0 0.0
  %7070 = vmatpush1.msra.mxu0 0.0
  %7071 = vmatprep.subr.mxu0 0.0
  %7072 = vmatpush1.msra.mxu0 0.0
  %7073 = vmatprep.subr.mxu0 0.0
  %7074 = vmatpush1.msra.mxu0 0.0
  %7075 = vmatprep.subr.mxu0 0.0
  %7076 = vmatpush1.msra.mxu0 0.0
  %7077 = vmatprep.subr.mxu0 0.0
  %7078 = vmatpush1.msra.mxu0 0.0
  %7079 = vmatprep.subr.mxu0 0.0
  %7080 = vmatpush1.msra.mxu0 0.0
  %7081 = vmatprep.subr.mxu0 0.0
  %7082 = vmatpush1.msra.mxu0 0.0
  %7083 = vmatprep.subr.mxu0 0.0
  %7084 = vmatpush1.msra.mxu0 0.0
  %7085 = vmatprep.subr.mxu0 0.0
  %7086 = vmatpush1.msra.mxu0 0.0
  %7087 = vmatprep.subr.mxu0 0.0
  %7088 = vmatpush1.msra.mxu0 0.0
  %7089 = vmatprep.subr.mxu0 0.0
  %7090 = vmatpush1.msra.mxu0 0.0
  %7091 = vmatprep.subr.mxu0 0.0
  %7092 = vmatpush1.msra.mxu0 0.0
  %7093 = vmatprep.subr.mxu0 0.0
  %7094 = vmatpush1.msra.mxu0 0.0
  %7095 = vmatprep.subr.mxu0 0.0
  %7096 = vmatpush1.msra.mxu0 0.0
  %7097 = vmatprep.subr.mxu0 0.0
  %7098 = vmatpush1.msra.mxu0 0.0
  %7099 = vmatprep.subr.mxu0 0.0
  %7100 = vmatpush1.msra.mxu0 0.0
  %7101 = vmatprep.subr.mxu0 0.0
  %7102 = vmatpush1.msra.mxu0 0.0
  %7103 = vmatprep.subr.mxu0 0.0
  %7104 = vmatpush1.msra.mxu0 0.0
  %7105 = vmatprep.subr.mxu0 0.0
  %7106 = vmatpush1.msra.mxu0 0.0
  %7107 = vmatprep.subr.mxu0 0.0
  %7108 = vmatpush1.msra.mxu0 0.0
  %7109 = vmatprep.subr.mxu0 0.0
  %7110 = vmatpush1.msra.mxu0 0.0
  %7111 = vmatprep.subr.mxu0 0.0
  %7112 = vmatpush1.msra.mxu0 0.0
  %7113 = vmatprep.subr.mxu0 0.0
  %7114 = vmatpush1.msra.mxu0 0.0
  %7115 = vmatprep.subr.mxu0 0.0
  %7116 = vmatpush1.msra.mxu0 0.0
  %7117 = vmatprep.subr.mxu0 0.0
  %7118 = vmatpush1.msra.mxu0 0.0
  %7119 = vmatprep.subr.mxu0 0.0
  %7120 = vmatpush1.msra.mxu0 0.0
  %7121 = vmatprep.subr.mxu0 0.0
  %7122 = vmatpush1.msra.mxu0 0.0
  %7123 = vmatprep.subr.mxu0 0.0
  %7124 = vmatpush1.msra.mxu0 0.0
  %7125 = vmatprep.subr.mxu0 0.0
  %7126 = vmatpush1.msra.mxu0 0.0
  %7127 = vmatprep.mubr.f32.mxu0 0.0
  %7128 = vmatmul.mubr.f32.gmra.mrb[0].mxu0 %v5401
  %v7129 = vpop.f32.mrb[0].mxu0
  %v7130 = vadd.f32 %v7060, %v7129
  %v7131 = vpop.f32.mrb[0].mxu0
  %7132 = vdwg.mxu0
  %v7133 = vadd.f32 %v7130, %v6849
  %7134 = vmatprep.subr.mxu0 0.0
  %7135 = vmatpush1.msra.mxu0 %v6687
  %7136 = vmatprep.subr.mxu0 0.0
  %7137 = vmatpush1.msra.mxu0 %v6700
  %7138 = vmatprep.subr.mxu0 0.0
  %7139 = vmatpush1.msra.mxu0 0.0
  %7140 = vmatprep.subr.mxu0 0.0
  %7141 = vmatpush1.msra.mxu0 0.0
  %7142 = vmatprep.subr.mxu0 0.0
  %7143 = vmatpush1.msra.mxu0 0.0
  %7144 = vmatprep.subr.mxu0 0.0
  %7145 = vmatpush1.msra.mxu0 0.0
  %7146 = vmatprep.subr.mxu0 0.0
  %7147 = vmatpush1.msra.mxu0 0.0
  %7148 = vmatprep.subr.mxu0 0.0
  %7149 = vmatpush1.msra.mxu0 0.0
  %7150 = vmatprep.subr.mxu0 0.0
  %7151 = vmatpush1.msra.mxu0 0.0
  %7152 = vmatprep.subr.mxu0 0.0
  %7153 = vmatpush1.msra.mxu0 0.0
  %7154 = vmatprep.subr.mxu0 0.0
  %7155 = vmatpush1.msra.mxu0 0.0
  %7156 = vmatprep.subr.mxu0 0.0
  %7157 = vmatpush1.msra.mxu0 0.0
  %7158 = vmatprep.subr.mxu0 0.0
  %7159 = vmatpush1.msra.mxu0 0.0
  %7160 = vmatprep.subr.mxu0 0.0
  %7161 = vmatpush1.msra.mxu0 0.0
  %7162 = vmatprep.subr.mxu0 0.0
  %7163 = vmatpush1.msra.mxu0 0.0
  %7164 = vmatprep.subr.mxu0 0.0
  %7165 = vmatpush1.msra.mxu0 0.0
  %7166 = vmatprep.subr.mxu0 0.0
  %7167 = vmatpush1.msra.mxu0 0.0
  %7168 = vmatprep.subr.mxu0 0.0
  %7169 = vmatpush1.msra.mxu0 0.0
  %7170 = vmatprep.subr.mxu0 0.0
  %7171 = vmatpush1.msra.mxu0 0.0
  %7172 = vmatprep.subr.mxu0 0.0
  %7173 = vmatpush1.msra.mxu0 0.0
  %7174 = vmatprep.subr.mxu0 0.0
  %7175 = vmatpush1.msra.mxu0 0.0
  %7176 = vmatprep.subr.mxu0 0.0
  %7177 = vmatpush1.msra.mxu0 0.0
  %7178 = vmatprep.subr.mxu0 0.0
  %7179 = vmatpush1.msra.mxu0 0.0
  %7180 = vmatprep.subr.mxu0 0.0
  %7181 = vmatpush1.msra.mxu0 0.0
  %7182 = vmatprep.subr.mxu0 0.0
  %7183 = vmatpush1.msra.mxu0 0.0
  %7184 = vmatprep.subr.mxu0 0.0
  %7185 = vmatpush1.msra.mxu0 0.0
  %7186 = vmatprep.subr.mxu0 0.0
  %7187 = vmatpush1.msra.mxu0 0.0
  %7188 = vmatprep.subr.mxu0 0.0
  %7189 = vmatpush1.msra.mxu0 0.0
  %7190 = vmatprep.subr.mxu0 0.0
  %7191 = vmatpush1.msra.mxu0 0.0
  %7192 = vmatprep.subr.mxu0 0.0
  %7193 = vmatpush1.msra.mxu0 0.0
  %7194 = vmatprep.subr.mxu0 0.0
  %7195 = vmatpush1.msra.mxu0 0.0
  %7196 = vmatprep.subr.mxu0 0.0
  %7197 = vmatpush1.msra.mxu0 0.0
  %7198 = vmatprep.mubr.f32.mxu0 0.0
  %7199 = vmatmul.mubr.f32.gmra.mrb[0].mxu0 %v6389
  %v7200 = vpop.f32.mrb[0].mxu0
  %v7201 = vadd.f32 0.0, %v7200
  %v7202 = vpop.f32.mrb[0].mxu0
  %7203 = vdwg.mxu0
  %7204 = vmatprep.subr.mxu0 0.0
  %7205 = vmatpush1.msra.mxu0 %v6684
  %7206 = vmatprep.subr.mxu0 0.0
  %7207 = vmatpush1.msra.mxu0 %v6773
  %7208 = vmatprep.subr.mxu0 0.0
  %7209 = vmatpush1.msra.mxu0 0.0
  %7210 = vmatprep.subr.mxu0 0.0
  %7211 = vmatpush1.msra.mxu0 0.0
  %7212 = vmatprep.subr.mxu0 0.0
  %7213 = vmatpush1.msra.mxu0 0.0
  %7214 = vmatprep.subr.mxu0 0.0
  %7215 = vmatpush1.msra.mxu0 0.0
  %7216 = vmatprep.subr.mxu0 0.0
  %7217 = vmatpush1.msra.mxu0 0.0
  %7218 = vmatprep.subr.mxu0 0.0
  %7219 = vmatpush1.msra.mxu0 0.0
  %7220 = vmatprep.subr.mxu0 0.0
  %7221 = vmatpush1.msra.mxu0 0.0
  %7222 = vmatprep.subr.mxu0 0.0
  %7223 = vmatpush1.msra.mxu0 0.0
  %7224 = vmatprep.subr.mxu0 0.0
  %7225 = vmatpush1.msra.mxu0 0.0
  %7226 = vmatprep.subr.mxu0 0.0
  %7227 = vmatpush1.msra.mxu0 0.0
  %7228 = vmatprep.subr.mxu0 0.0
  %7229 = vmatpush1.msra.mxu0 0.0
  %7230 = vmatprep.subr.mxu0 0.0
  %7231 = vmatpush1.msra.mxu0 0.0
  %7232 = vmatprep.subr.mxu0 0.0
  %7233 = vmatpush1.msra.mxu0 0.0
  %7234 = vmatprep.subr.mxu0 0.0
  %7235 = vmatpush1.msra.mxu0 0.0
  %7236 = vmatprep.subr.mxu0 0.0
  %7237 = vmatpush1.msra.mxu0 0.0
  %7238 = vmatprep.subr.mxu0 0.0
  %7239 = vmatpush1.msra.mxu0 0.0
  %7240 = vmatprep.subr.mxu0 0.0
  %7241 = vmatpush1.msra.mxu0 0.0
  %7242 = vmatprep.subr.mxu0 0.0
  %7243 = vmatpush1.msra.mxu0 0.0
  %7244 = vmatprep.subr.mxu0 0.0
  %7245 = vmatpush1.msra.mxu0 0.0
  %7246 = vmatprep.subr.mxu0 0.0
  %7247 = vmatpush1.msra.mxu0 0.0
  %7248 = vmatprep.subr.mxu0 0.0
  %7249 = vmatpush1.msra.mxu0 0.0
  %7250 = vmatprep.subr.mxu0 0.0
  %7251 = vmatpush1.msra.mxu0 0.0
  %7252 = vmatprep.subr.mxu0 0.0
  %7253 = vmatpush1.msra.mxu0 0.0
  %7254 = vmatprep.subr.mxu0 0.0
  %7255 = vmatpush1.msra.mxu0 0.0
  %7256 = vmatprep.subr.mxu0 0.0
  %7257 = vmatpush1.msra.mxu0 0.0
  %7258 = vmatprep.subr.mxu0 0.0
  %7259 = vmatpush1.msra.mxu0 0.0
  %7260 = vmatprep.subr.mxu0 0.0
  %7261 = vmatpush1.msra.mxu0 0.0
  %7262 = vmatprep.subr.mxu0 0.0
  %7263 = vmatpush1.msra.mxu0 0.0
  %7264 = vmatprep.subr.mxu0 0.0
  %7265 = vmatpush1.msra.mxu0 0.0
  %7266 = vmatprep.subr.mxu0 0.0
  %7267 = vmatpush1.msra.mxu0 0.0
  %7268 = vmatprep.mubr.f32.mxu0 0.0
  %7269 = vmatmul.mubr.f32.gmra.mrb[0].mxu0 %v5500
  %v7270 = vpop.f32.mrb[0].mxu0
  %v7271 = vadd.f32 %v7201, %v7270
  %v7272 = vpop.f32.mrb[0].mxu0
  %7273 = vdwg.mxu0
  %v7274 = vadd.f32 %v7271, %v6849
  %7275 = vmatprep.subr.mxu0 0.0
  %7276 = vmatpush1.msra.mxu0 %v6687
  %7277 = vmatprep.subr.mxu0 0.0
  %7278 = vmatpush1.msra.mxu0 %v6700
  %7279 = vmatprep.subr.mxu0 0.0
  %7280 = vmatpush1.msra.mxu0 0.0
  %7281 = vmatprep.subr.mxu0 0.0
  %7282 = vmatpush1.msra.mxu0 0.0
  %7283 = vmatprep.subr.mxu0 0.0
  %7284 = vmatpush1.msra.mxu0 0.0
  %7285 = vmatprep.subr.mxu0 0.0
  %7286 = vmatpush1.msra.mxu0 0.0
  %7287 = vmatprep.subr.mxu0 0.0
  %7288 = vmatpush1.msra.mxu0 0.0
  %7289 = vmatprep.subr.mxu0 0.0
  %7290 = vmatpush1.msra.mxu0 0.0
  %7291 = vmatprep.subr.mxu0 0.0
  %7292 = vmatpush1.msra.mxu0 0.0
  %7293 = vmatprep.subr.mxu0 0.0
  %7294 = vmatpush1.msra.mxu0 0.0
  %7295 = vmatprep.subr.mxu0 0.0
  %7296 = vmatpush1.msra.mxu0 0.0
  %7297 = vmatprep.subr.mxu0 0.0
  %7298 = vmatpush1.msra.mxu0 0.0
  %7299 = vmatprep.subr.mxu0 0.0
  %7300 = vmatpush1.msra.mxu0 0.0
  %7301 = vmatprep.subr.mxu0 0.0
  %7302 = vmatpush1.msra.mxu0 0.0
  %7303 = vmatprep.subr.mxu0 0.0
  %7304 = vmatpush1.msra.mxu0 0.0
  %7305 = vmatprep.subr.mxu0 0.0
  %7306 = vmatpush1.msra.mxu0 0.0
  %7307 = vmatprep.subr.mxu0 0.0
  %7308 = vmatpush1.msra.mxu0 0.0
  %7309 = vmatprep.subr.mxu0 0.0
  %7310 = vmatpush1.msra.mxu0 0.0
  %7311 = vmatprep.subr.mxu0 0.0
  %7312 = vmatpush1.msra.mxu0 0.0
  %7313 = vmatprep.subr.mxu0 0.0
  %7314 = vmatpush1.msra.mxu0 0.0
  %7315 = vmatprep.subr.mxu0 0.0
  %7316 = vmatpush1.msra.mxu0 0.0
  %7317 = vmatprep.subr.mxu0 0.0
  %7318 = vmatpush1.msra.mxu0 0.0
  %7319 = vmatprep.subr.mxu0 0.0
  %7320 = vmatpush1.msra.mxu0 0.0
  %7321 = vmatprep.subr.mxu0 0.0
  %7322 = vmatpush1.msra.mxu0 0.0
  %7323 = vmatprep.subr.mxu0 0.0
  %7324 = vmatpush1.msra.mxu0 0.0
  %7325 = vmatprep.subr.mxu0 0.0
  %7326 = vmatpush1.msra.mxu0 0.0
  %7327 = vmatprep.subr.mxu0 0.0
  %7328 = vmatpush1.msra.mxu0 0.0
  %7329 = vmatprep.subr.mxu0 0.0
  %7330 = vmatpush1.msra.mxu0 0.0
  %7331 = vmatprep.subr.mxu0 0.0
  %7332 = vmatpush1.msra.mxu0 0.0
  %7333 = vmatprep.subr.mxu0 0.0
  %7334 = vmatpush1.msra.mxu0 0.0
  %7335 = vmatprep.subr.mxu0 0.0
  %7336 = vmatpush1.msra.mxu0 0.0
  %7337 = vmatprep.subr.mxu0 0.0
  %7338 = vmatpush1.msra.mxu0 0.0
  %7339 = vmatprep.mubr.f32.mxu0 0.0
  %7340 = vmatmul.mubr.f32.gmra.mrb[0].mxu0 %v6290
  %v7341 = vpop.f32.mrb[0].mxu0
  %v7342 = vadd.f32 0.0, %v7341
  %v7343 = vpop.f32.mrb[0].mxu0
  %7344 = vdwg.mxu0
  %7345 = vmatprep.subr.mxu0 0.0
  %7346 = vmatpush1.msra.mxu0 %v6684
  %7347 = vmatprep.subr.mxu0 0.0
  %7348 = vmatpush1.msra.mxu0 %v6773
  %7349 = vmatprep.subr.mxu0 0.0
  %7350 = vmatpush1.msra.mxu0 0.0
  %7351 = vmatprep.subr.mxu0 0.0
  %7352 = vmatpush1.msra.mxu0 0.0
  %7353 = vmatprep.subr.mxu0 0.0
  %7354 = vmatpush1.msra.mxu0 0.0
  %7355 = vmatprep.subr.mxu0 0.0
  %7356 = vmatpush1.msra.mxu0 0.0
  %7357 = vmatprep.subr.mxu0 0.0
  %7358 = vmatpush1.msra.mxu0 0.0
  %7359 = vmatprep.subr.mxu0 0.0
  %7360 = vmatpush1.msra.mxu0 0.0
  %7361 = vmatprep.subr.mxu0 0.0
  %7362 = vmatpush1.msra.mxu0 0.0
  %7363 = vmatprep.subr.mxu0 0.0
  %7364 = vmatpush1.msra.mxu0 0.0
  %7365 = vmatprep.subr.mxu0 0.0
  %7366 = vmatpush1.msra.mxu0 0.0
  %7367 = vmatprep.subr.mxu0 0.0
  %7368 = vmatpush1.msra.mxu0 0.0
  %7369 = vmatprep.subr.mxu0 0.0
  %7370 = vmatpush1.msra.mxu0 0.0
  %7371 = vmatprep.subr.mxu0 0.0
  %7372 = vmatpush1.msra.mxu0 0.0
  %7373 = vmatprep.subr.mxu0 0.0
  %7374 = vmatpush1.msra.mxu0 0.0
  %7375 = vmatprep.subr.mxu0 0.0
  %7376 = vmatpush1.msra.mxu0 0.0
  %7377 = vmatprep.subr.mxu0 0.0
  %7378 = vmatpush1.msra.mxu0 0.0
  %7379 = vmatprep.subr.mxu0 0.0
  %7380 = vmatpush1.msra.mxu0 0.0
  %7381 = vmatprep.subr.mxu0 0.0
  %7382 = vmatpush1.msra.mxu0 0.0
  %7383 = vmatprep.subr.mxu0 0.0
  %7384 = vmatpush1.msra.mxu0 0.0
  %7385 = vmatprep.subr.mxu0 0.0
  %7386 = vmatpush1.msra.mxu0 0.0
  %7387 = vmatprep.subr.mxu0 0.0
  %7388 = vmatpush1.msra.mxu0 0.0
  %7389 = vmatprep.subr.mxu0 0.0
  %7390 = vmatpush1.msra.mxu0 0.0
  %7391 = vmatprep.subr.mxu0 0.0
  %7392 = vmatpush1.msra.mxu0 0.0
  %7393 = vmatprep.subr.mxu0 0.0
  %7394 = vmatpush1.msra.mxu0 0.0
  %7395 = vmatprep.subr.mxu0 0.0
  %7396 = vmatpush1.msra.mxu0 0.0
  %7397 = vmatprep.subr.mxu0 0.0
  %7398 = vmatpush1.msra.mxu0 0.0
  %7399 = vmatprep.subr.mxu0 0.0
  %7400 = vmatpush1.msra.mxu0 0.0
  %7401 = vmatprep.subr.mxu0 0.0
  %7402 = vmatpush1.msra.mxu0 0.0
  %7403 = vmatprep.subr.mxu0 0.0
  %7404 = vmatpush1.msra.mxu0 0.0
  %7405 = vmatprep.subr.mxu0 0.0
  %7406 = vmatpush1.msra.mxu0 0.0
  %7407 = vmatprep.subr.mxu0 0.0
  %7408 = vmatpush1.msra.mxu0 0.0
  %7409 = vmatprep.mubr.f32.mxu0 0.0
  %7410 = vmatmul.mubr.f32.gmra.mrb[0].mxu0 %v5599
  %v7411 = vpop.f32.mrb[0].mxu0
  %v7412 = vadd.f32 %v7342, %v7411
  %v7413 = vpop.f32.mrb[0].mxu0
  %7414 = vdwg.mxu0
  %v7415 = vadd.f32 %v7412, %v6849
  %7416 = vmatprep.subr.mxu0 0.0
  %7417 = vmatpush1.msra.mxu0 %v6687
  %7418 = vmatprep.subr.mxu0 0.0
  %7419 = vmatpush1.msra.mxu0 %v6700
  %7420 = vmatprep.subr.mxu0 0.0
  %7421 = vmatpush1.msra.mxu0 0.0
  %7422 = vmatprep.subr.mxu0 0.0
  %7423 = vmatpush1.msra.mxu0 0.0
  %7424 = vmatprep.subr.mxu0 0.0
  %7425 = vmatpush1.msra.mxu0 0.0
  %7426 = vmatprep.subr.mxu0 0.0
  %7427 = vmatpush1.msra.mxu0 0.0
  %7428 = vmatprep.subr.mxu0 0.0
  %7429 = vmatpush1.msra.mxu0 0.0
  %7430 = vmatprep.subr.mxu0 0.0
  %7431 = vmatpush1.msra.mxu0 0.0
  %7432 = vmatprep.subr.mxu0 0.0
  %7433 = vmatpush1.msra.mxu0 0.0
  %7434 = vmatprep.subr.mxu0 0.0
  %7435 = vmatpush1.msra.mxu0 0.0
  %7436 = vmatprep.subr.mxu0 0.0
  %7437 = vmatpush1.msra.mxu0 0.0
  %7438 = vmatprep.subr.mxu0 0.0
  %7439 = vmatpush1.msra.mxu0 0.0
  %7440 = vmatprep.subr.mxu0 0.0
  %7441 = vmatpush1.msra.mxu0 0.0
  %7442 = vmatprep.subr.mxu0 0.0
  %7443 = vmatpush1.msra.mxu0 0.0
  %7444 = vmatprep.subr.mxu0 0.0
  %7445 = vmatpush1.msra.mxu0 0.0
  %7446 = vmatprep.subr.mxu0 0.0
  %7447 = vmatpush1.msra.mxu0 0.0
  %7448 = vmatprep.subr.mxu0 0.0
  %7449 = vmatpush1.msra.mxu0 0.0
  %7450 = vmatprep.subr.mxu0 0.0
  %7451 = vmatpush1.msra.mxu0 0.0
  %7452 = vmatprep.subr.mxu0 0.0
  %7453 = vmatpush1.msra.mxu0 0.0
  %7454 = vmatprep.subr.mxu0 0.0
  %7455 = vmatpush1.msra.mxu0 0.0
  %7456 = vmatprep.subr.mxu0 0.0
  %7457 = vmatpush1.msra.mxu0 0.0
  %7458 = vmatprep.subr.mxu0 0.0
  %7459 = vmatpush1.msra.mxu0 0.0
  %7460 = vmatprep.subr.mxu0 0.0
  %7461 = vmatpush1.msra.mxu0 0.0
  %7462 = vmatprep.subr.mxu0 0.0
  %7463 = vmatpush1.msra.mxu0 0.0
  %7464 = vmatprep.subr.mxu0 0.0
  %7465 = vmatpush1.msra.mxu0 0.0
  %7466 = vmatprep.subr.mxu0 0.0
  %7467 = vmatpush1.msra.mxu0 0.0
  %7468 = vmatprep.subr.mxu0 0.0
  %7469 = vmatpush1.msra.mxu0 0.0
  %7470 = vmatprep.subr.mxu0 0.0
  %7471 = vmatpush1.msra.mxu0 0.0
  %7472 = vmatprep.subr.mxu0 0.0
  %7473 = vmatpush1.msra.mxu0 0.0
  %7474 = vmatprep.subr.mxu0 0.0
  %7475 = vmatpush1.msra.mxu0 0.0
  %7476 = vmatprep.subr.mxu0 0.0
  %7477 = vmatpush1.msra.mxu0 0.0
  %7478 = vmatprep.subr.mxu0 0.0
  %7479 = vmatpush1.msra.mxu0 0.0
  %7480 = vmatprep.mubr.f32.mxu0 0.0
  %7481 = vmatmul.mubr.f32.gmra.mrb[0].mxu0 %v6191
  %v7482 = vpop.f32.mrb[0].mxu0
  %v7483 = vadd.f32 0.0, %v7482
  %v7484 = vpop.f32.mrb[0].mxu0
  %7485 = vdwg.mxu0
  %7486 = vmatprep.subr.mxu0 0.0
  %7487 = vmatpush1.msra.mxu0 %v6684
  %7488 = vmatprep.subr.mxu0 0.0
  %7489 = vmatpush1.msra.mxu0 %v6773
  %7490 = vmatprep.subr.mxu0 0.0
  %7491 = vmatpush1.msra.mxu0 0.0
  %7492 = vmatprep.subr.mxu0 0.0
  %7493 = vmatpush1.msra.mxu0 0.0
  %7494 = vmatprep.subr.mxu0 0.0
  %7495 = vmatpush1.msra.mxu0 0.0
  %7496 = vmatprep.subr.mxu0 0.0
  %7497 = vmatpush1.msra.mxu0 0.0
  %7498 = vmatprep.subr.mxu0 0.0
  %7499 = vmatpush1.msra.mxu0 0.0
  %7500 = vmatprep.subr.mxu0 0.0
  %7501 = vmatpush1.msra.mxu0 0.0
  %7502 = vmatprep.subr.mxu0 0.0
  %7503 = vmatpush1.msra.mxu0 0.0
  %7504 = vmatprep.subr.mxu0 0.0
  %7505 = vmatpush1.msra.mxu0 0.0
  %7506 = vmatprep.subr.mxu0 0.0
  %7507 = vmatpush1.msra.mxu0 0.0
  %7508 = vmatprep.subr.mxu0 0.0
  %7509 = vmatpush1.msra.mxu0 0.0
  %7510 = vmatprep.subr.mxu0 0.0
  %7511 = vmatpush1.msra.mxu0 0.0
  %7512 = vmatprep.subr.mxu0 0.0
  %7513 = vmatpush1.msra.mxu0 0.0
  %7514 = vmatprep.subr.mxu0 0.0
  %7515 = vmatpush1.msra.mxu0 0.0
  %7516 = vmatprep.subr.mxu0 0.0
  %7517 = vmatpush1.msra.mxu0 0.0
  %7518 = vmatprep.subr.mxu0 0.0
  %7519 = vmatpush1.msra.mxu0 0.0
  %7520 = vmatprep.subr.mxu0 0.0
  %7521 = vmatpush1.msra.mxu0 0.0
  %7522 = vmatprep.subr.mxu0 0.0
  %7523 = vmatpush1.msra.mxu0 0.0
  %7524 = vmatprep.subr.mxu0 0.0
  %7525 = vmatpush1.msra.mxu0 0.0
  %7526 = vmatprep.subr.mxu0 0.0
  %7527 = vmatpush1.msra.mxu0 0.0
  %7528 = vmatprep.subr.mxu0 0.0
  %7529 = vmatpush1.msra.mxu0 0.0
  %7530 = vmatprep.subr.mxu0 0.0
  %7531 = vmatpush1.msra.mxu0 0.0
  %7532 = vmatprep.subr.mxu0 0.0
  %7533 = vmatpush1.msra.mxu0 0.0
  %7534 = vmatprep.subr.mxu0 0.0
  %7535 = vmatpush1.msra.mxu0 0.0
  %7536 = vmatprep.subr.mxu0 0.0
  %7537 = vmatpush1.msra.mxu0 0.0
  %7538 = vmatprep.subr.mxu0 0.0
  %7539 = vmatpush1.msra.mxu0 0.0
  %7540 = vmatprep.subr.mxu0 0.0
  %7541 = vmatpush1.msra.mxu0 0.0
  %7542 = vmatprep.subr.mxu0 0.0
  %7543 = vmatpush1.msra.mxu0 0.0
  %7544 = vmatprep.subr.mxu0 0.0
  %7545 = vmatpush1.msra.mxu0 0.0
  %7546 = vmatprep.subr.mxu0 0.0
  %7547 = vmatpush1.msra.mxu0 0.0
  %7548 = vmatprep.subr.mxu0 0.0
  %7549 = vmatpush1.msra.mxu0 0.0
  %7550 = vmatprep.mubr.f32.mxu0 0.0
  %7551 = vmatmul.mubr.f32.gmra.mrb[0].mxu0 %v5698
  %v7552 = vpop.f32.mrb[0].mxu0
  %v7553 = vadd.f32 %v7483, %v7552
  %v7554 = vpop.f32.mrb[0].mxu0
  %7555 = vdwg.mxu0
  %v7556 = vadd.f32 %v7553, %v6849
  %7557 = vmatprep.subr.mxu0 0.0
  %7558 = vmatpush1.msra.mxu0 %v6687
  %7559 = vmatprep.subr.mxu0 0.0
  %7560 = vmatpush1.msra.mxu0 %v6700
  %7561 = vmatprep.subr.mxu0 0.0
  %7562 = vmatpush1.msra.mxu0 0.0
  %7563 = vmatprep.subr.mxu0 0.0
  %7564 = vmatpush1.msra.mxu0 0.0
  %7565 = vmatprep.subr.mxu0 0.0
  %7566 = vmatpush1.msra.mxu0 0.0
  %7567 = vmatprep.subr.mxu0 0.0
  %7568 = vmatpush1.msra.mxu0 0.0
  %7569 = vmatprep.subr.mxu0 0.0
  %7570 = vmatpush1.msra.mxu0 0.0
  %7571 = vmatprep.subr.mxu0 0.0
  %7572 = vmatpush1.msra.mxu0 0.0
  %7573 = vmatprep.subr.mxu0 0.0
  %7574 = vmatpush1.msra.mxu0 0.0
  %7575 = vmatprep.subr.mxu0 0.0
  %7576 = vmatpush1.msra.mxu0 0.0
  %7577 = vmatprep.subr.mxu0 0.0
  %7578 = vmatpush1.msra.mxu0 0.0
  %7579 = vmatprep.subr.mxu0 0.0
  %7580 = vmatpush1.msra.mxu0 0.0
  %7581 = vmatprep.subr.mxu0 0.0
  %7582 = vmatpush1.msra.mxu0 0.0
  %7583 = vmatprep.subr.mxu0 0.0
  %7584 = vmatpush1.msra.mxu0 0.0
  %7585 = vmatprep.subr.mxu0 0.0
  %7586 = vmatpush1.msra.mxu0 0.0
  %7587 = vmatprep.subr.mxu0 0.0
  %7588 = vmatpush1.msra.mxu0 0.0
  %7589 = vmatprep.subr.mxu0 0.0
  %7590 = vmatpush1.msra.mxu0 0.0
  %7591 = vmatprep.subr.mxu0 0.0
  %7592 = vmatpush1.msra.mxu0 0.0
  %7593 = vmatprep.subr.mxu0 0.0
  %7594 = vmatpush1.msra.mxu0 0.0
  %7595 = vmatprep.subr.mxu0 0.0
  %7596 = vmatpush1.msra.mxu0 0.0
  %7597 = vmatprep.subr.mxu0 0.0
  %7598 = vmatpush1.msra.mxu0 0.0
  %7599 = vmatprep.subr.mxu0 0.0
  %7600 = vmatpush1.msra.mxu0 0.0
  %7601 = vmatprep.subr.mxu0 0.0
  %7602 = vmatpush1.msra.mxu0 0.0
  %7603 = vmatprep.subr.mxu0 0.0
  %7604 = vmatpush1.msra.mxu0 0.0
  %7605 = vmatprep.subr.mxu0 0.0
  %7606 = vmatpush1.msra.mxu0 0.0
  %7607 = vmatprep.subr.mxu0 0.0
  %7608 = vmatpush1.msra.mxu0 0.0
  %7609 = vmatprep.subr.mxu0 0.0
  %7610 = vmatpush1.msra.mxu0 0.0
  %7611 = vmatprep.subr.mxu0 0.0
  %7612 = vmatpush1.msra.mxu0 0.0
  %7613 = vmatprep.subr.mxu0 0.0
  %7614 = vmatpush1.msra.mxu0 0.0
  %7615 = vmatprep.subr.mxu0 0.0
  %7616 = vmatpush1.msra.mxu0 0.0
  %7617 = vmatprep.subr.mxu0 0.0
  %7618 = vmatpush1.msra.mxu0 0.0
  %7619 = vmatprep.subr.mxu0 0.0
  %7620 = vmatpush1.msra.mxu0 0.0
  %7621 = vmatprep.mubr.f32.mxu0 0.0
  %7622 = vmatmul.mubr.f32.gmra.mrb[0].mxu0 %v6092
  %v7623 = vpop.f32.mrb[0].mxu0
  %v7624 = vadd.f32 0.0, %v7623
  %v7625 = vpop.f32.mrb[0].mxu0
  %7626 = vdwg.mxu0
  %7627 = vmatprep.subr.mxu0 0.0
  %7628 = vmatpush1.msra.mxu0 %v6684
  %7629 = vmatprep.subr.mxu0 0.0
  %7630 = vmatpush1.msra.mxu0 %v6773
  %7631 = vmatprep.subr.mxu0 0.0
  %7632 = vmatpush1.msra.mxu0 0.0
  %7633 = vmatprep.subr.mxu0 0.0
  %7634 = vmatpush1.msra.mxu0 0.0
  %7635 = vmatprep.subr.mxu0 0.0
  %7636 = vmatpush1.msra.mxu0 0.0
  %7637 = vmatprep.subr.mxu0 0.0
  %7638 = vmatpush1.msra.mxu0 0.0
  %7639 = vmatprep.subr.mxu0 0.0
  %7640 = vmatpush1.msra.mxu0 0.0
  %7641 = vmatprep.subr.mxu0 0.0
  %7642 = vmatpush1.msra.mxu0 0.0
  %7643 = vmatprep.subr.mxu0 0.0
  %7644 = vmatpush1.msra.mxu0 0.0
  %7645 = vmatprep.subr.mxu0 0.0
  %7646 = vmatpush1.msra.mxu0 0.0
  %7647 = vmatprep.subr.mxu0 0.0
  %7648 = vmatpush1.msra.mxu0 0.0
  %7649 = vmatprep.subr.mxu0 0.0
  %7650 = vmatpush1.msra.mxu0 0.0
  %7651 = vmatprep.subr.mxu0 0.0
  %7652 = vmatpush1.msra.mxu0 0.0
  %7653 = vmatprep.subr.mxu0 0.0
  %7654 = vmatpush1.msra.mxu0 0.0
  %7655 = vmatprep.subr.mxu0 0.0
  %7656 = vmatpush1.msra.mxu0 0.0
  %7657 = vmatprep.subr.mxu0 0.0
  %7658 = vmatpush1.msra.mxu0 0.0
  %7659 = vmatprep.subr.mxu0 0.0
  %7660 = vmatpush1.msra.mxu0 0.0
  %7661 = vmatprep.subr.mxu0 0.0
  %7662 = vmatpush1.msra.mxu0 0.0
  %7663 = vmatprep.subr.mxu0 0.0
  %7664 = vmatpush1.msra.mxu0 0.0
  %7665 = vmatprep.subr.mxu0 0.0
  %7666 = vmatpush1.msra.mxu0 0.0
  %7667 = vmatprep.subr.mxu0 0.0
  %7668 = vmatpush1.msra.mxu0 0.0
  %7669 = vmatprep.subr.mxu0 0.0
  %7670 = vmatpush1.msra.mxu0 0.0
  %7671 = vmatprep.subr.mxu0 0.0
  %7672 = vmatpush1.msra.mxu0 0.0
  %7673 = vmatprep.subr.mxu0 0.0
  %7674 = vmatpush1.msra.mxu0 0.0
  %7675 = vmatprep.subr.mxu0 0.0
  %7676 = vmatpush1.msra.mxu0 0.0
  %7677 = vmatprep.subr.mxu0 0.0
  %7678 = vmatpush1.msra.mxu0 0.0
  %7679 = vmatprep.subr.mxu0 0.0
  %7680 = vmatpush1.msra.mxu0 0.0
  %7681 = vmatprep.subr.mxu0 0.0
  %7682 = vmatpush1.msra.mxu0 0.0
  %7683 = vmatprep.subr.mxu0 0.0
  %7684 = vmatpush1.msra.mxu0 0.0
  %7685 = vmatprep.subr.mxu0 0.0
  %7686 = vmatpush1.msra.mxu0 0.0
  %7687 = vmatprep.subr.mxu0 0.0
  %7688 = vmatpush1.msra.mxu0 0.0
  %7689 = vmatprep.subr.mxu0 0.0
  %7690 = vmatpush1.msra.mxu0 0.0
  %7691 = vmatprep.mubr.f32.mxu0 0.0
  %7692 = vmatmul.mubr.f32.gmra.mrb[0].mxu0 %v5797
  %v7693 = vpop.f32.mrb[0].mxu0
  %v7694 = vadd.f32 %v7624, %v7693
  %v7695 = vpop.f32.mrb[0].mxu0
  %7696 = vdwg.mxu0
  %v7697 = vadd.f32 %v7694, %v6849
  %7698 = vmatprep.subr.mxu0 0.0
  %7699 = vmatpush1.msra.mxu0 %v6687
  %7700 = vmatprep.subr.mxu0 0.0
  %7701 = vmatpush1.msra.mxu0 %v6700
  %7702 = vmatprep.subr.mxu0 0.0
  %7703 = vmatpush1.msra.mxu0 0.0
  %7704 = vmatprep.subr.mxu0 0.0
  %7705 = vmatpush1.msra.mxu0 0.0
  %7706 = vmatprep.subr.mxu0 0.0
  %7707 = vmatpush1.msra.mxu0 0.0
  %7708 = vmatprep.subr.mxu0 0.0
  %7709 = vmatpush1.msra.mxu0 0.0
  %7710 = vmatprep.subr.mxu0 0.0
  %7711 = vmatpush1.msra.mxu0 0.0
  %7712 = vmatprep.subr.mxu0 0.0
  %7713 = vmatpush1.msra.mxu0 0.0
  %7714 = vmatprep.subr.mxu0 0.0
  %7715 = vmatpush1.msra.mxu0 0.0
  %7716 = vmatprep.subr.mxu0 0.0
  %7717 = vmatpush1.msra.mxu0 0.0
  %7718 = vmatprep.subr.mxu0 0.0
  %7719 = vmatpush1.msra.mxu0 0.0
  %7720 = vmatprep.subr.mxu0 0.0
  %7721 = vmatpush1.msra.mxu0 0.0
  %7722 = vmatprep.subr.mxu0 0.0
  %7723 = vmatpush1.msra.mxu0 0.0
  %7724 = vmatprep.subr.mxu0 0.0
  %7725 = vmatpush1.msra.mxu0 0.0
  %7726 = vmatprep.subr.mxu0 0.0
  %7727 = vmatpush1.msra.mxu0 0.0
  %7728 = vmatprep.subr.mxu0 0.0
  %7729 = vmatpush1.msra.mxu0 0.0
  %7730 = vmatprep.subr.mxu0 0.0
  %7731 = vmatpush1.msra.mxu0 0.0
  %7732 = vmatprep.subr.mxu0 0.0
  %7733 = vmatpush1.msra.mxu0 0.0
  %7734 = vmatprep.subr.mxu0 0.0
  %7735 = vmatpush1.msra.mxu0 0.0
  %7736 = vmatprep.subr.mxu0 0.0
  %7737 = vmatpush1.msra.mxu0 0.0
  %7738 = vmatprep.subr.mxu0 0.0
  %7739 = vmatpush1.msra.mxu0 0.0
  %7740 = vmatprep.subr.mxu0 0.0
  %7741 = vmatpush1.msra.mxu0 0.0
  %7742 = vmatprep.subr.mxu0 0.0
  %7743 = vmatpush1.msra.mxu0 0.0
  %7744 = vmatprep.subr.mxu0 0.0
  %7745 = vmatpush1.msra.mxu0 0.0
  %7746 = vmatprep.subr.mxu0 0.0
  %7747 = vmatpush1.msra.mxu0 0.0
  %7748 = vmatprep.subr.mxu0 0.0
  %7749 = vmatpush1.msra.mxu0 0.0
  %7750 = vmatprep.subr.mxu0 0.0
  %7751 = vmatpush1.msra.mxu0 0.0
  %7752 = vmatprep.subr.mxu0 0.0
  %7753 = vmatpush1.msra.mxu0 0.0
  %7754 = vmatprep.subr.mxu0 0.0
  %7755 = vmatpush1.msra.mxu0 0.0
  %7756 = vmatprep.subr.mxu0 0.0
  %7757 = vmatpush1.msra.mxu0 0.0
  %7758 = vmatprep.subr.mxu0 0.0
  %7759 = vmatpush1.msra.mxu0 0.0
  %7760 = vmatprep.subr.mxu0 0.0
  %7761 = vmatpush1.msra.mxu0 0.0
  %7762 = vmatprep.mubr.f32.mxu0 0.0
  %7763 = vmatmul.mubr.f32.gmra.mrb[0].mxu0 %v5993
  %v7764 = vpop.f32.mrb[0].mxu0
  %v7765 = vadd.f32 0.0, %v7764
  %v7766 = vpop.f32.mrb[0].mxu0
  %7767 = vdwg.mxu0
  %7769 = vrot.lane.b32.xlu0 %v5892, 86
  %v7770 = vpop.permute.xlu0 %7769
  %v7771 = vsel %vm1204, %v7770, 0
  %7773 = vmatprep.subr.mxu0 0.0
  %7774 = vmatpush1.msra.mxu0 %v6684
  %7775 = vmatprep.subr.mxu0 0.0
  %7776 = vmatpush1.msra.mxu0 %v6773
  %7777 = vmatprep.subr.mxu0 0.0
  %7778 = vmatpush1.msra.mxu0 0.0
  %7779 = vmatprep.subr.mxu0 0.0
  %7780 = vmatpush1.msra.mxu0 0.0
  %7781 = vmatprep.subr.mxu0 0.0
  %7782 = vmatpush1.msra.mxu0 0.0
  %7783 = vmatprep.subr.mxu0 0.0
  %7784 = vmatpush1.msra.mxu0 0.0
  %7785 = vmatprep.subr.mxu0 0.0
  %7786 = vmatpush1.msra.mxu0 0.0
  %7787 = vmatprep.subr.mxu0 0.0
  %7788 = vmatpush1.msra.mxu0 0.0
  %7789 = vmatprep.subr.mxu0 0.0
  %7790 = vmatpush1.msra.mxu0 0.0
  %7791 = vmatprep.subr.mxu0 0.0
  %7792 = vmatpush1.msra.mxu0 0.0
  %7793 = vmatprep.subr.mxu0 0.0
  %7794 = vmatpush1.msra.mxu0 0.0
  %7795 = vmatprep.subr.mxu0 0.0
  %7796 = vmatpush1.msra.mxu0 0.0
  %7797 = vmatprep.subr.mxu0 0.0
  %7798 = vmatpush1.msra.mxu0 0.0
  %7799 = vmatprep.subr.mxu0 0.0
  %7800 = vmatpush1.msra.mxu0 0.0
  %7801 = vmatprep.subr.mxu0 0.0
  %7802 = vmatpush1.msra.mxu0 0.0
  %7803 = vmatprep.subr.mxu0 0.0
  %7804 = vmatpush1.msra.mxu0 0.0
  %7805 = vmatprep.subr.mxu0 0.0
  %7806 = vmatpush1.msra.mxu0 0.0
  %7807 = vmatprep.subr.mxu0 0.0
  %7808 = vmatpush1.msra.mxu0 0.0
  %7809 = vmatprep.subr.mxu0 0.0
  %7810 = vmatpush1.msra.mxu0 0.0
  %7811 = vmatprep.subr.mxu0 0.0
  %7812 = vmatpush1.msra.mxu0 0.0
  %7813 = vmatprep.subr.mxu0 0.0
  %7814 = vmatpush1.msra.mxu0 0.0
  %7815 = vmatprep.subr.mxu0 0.0
  %7816 = vmatpush1.msra.mxu0 0.0
  %7817 = vmatprep.subr.mxu0 0.0
  %7818 = vmatpush1.msra.mxu0 0.0
  %7819 = vmatprep.subr.mxu0 0.0
  %7820 = vmatpush1.msra.mxu0 0.0
  %7821 = vmatprep.subr.mxu0 0.0
  %7822 = vmatpush1.msra.mxu0 0.0
  %7823 = vmatprep.subr.mxu0 0.0
  %7824 = vmatpush1.msra.mxu0 0.0
  %7825 = vmatprep.subr.mxu0 0.0
  %7826 = vmatpush1.msra.mxu0 0.0
  %7827 = vmatprep.subr.mxu0 0.0
  %7828 = vmatpush1.msra.mxu0 0.0
  %7829 = vmatprep.subr.mxu0 0.0
  %7830 = vmatpush1.msra.mxu0 0.0
  %7831 = vmatprep.subr.mxu0 0.0
  %7832 = vmatpush1.msra.mxu0 0.0
  %7833 = vmatprep.subr.mxu0 0.0
  %7834 = vmatpush1.msra.mxu0 0.0
  %7835 = vmatprep.subr.mxu0 0.0
  %7836 = vmatpush1.msra.mxu0 0.0
  %7837 = vmatprep.mubr.f32.mxu0 0.0
  %7838 = vmatmul.mubr.f32.gmra.mrb[0].mxu0 %v7771
  %v7839 = vpop.f32.mrb[0].mxu0
  %v7840 = vadd.f32 %v7765, %v7839
  %v7841 = vpop.f32.mrb[0].mxu0
  %7842 = vdwg.mxu0
  %v7843 = vadd.f32 %v7840, %v6849
  %v7845 = vsel %vm48, %v6691, 0
  %7847 = vmatprep.subr.mxu0 0.0
  %7848 = vmatpush1.msra.mxu0 %v6690
  %7849 = vmatprep.subr.mxu0 0.0
  %7850 = vmatpush1.msra.mxu0 %v7845
  %7851 = vmatprep.subr.mxu0 0.0
  %7852 = vmatpush1.msra.mxu0 0.0
  %7853 = vmatprep.subr.mxu0 0.0
  %7854 = vmatpush1.msra.mxu0 0.0
  %7855 = vmatprep.subr.mxu0 0.0
  %7856 = vmatpush1.msra.mxu0 0.0
  %7857 = vmatprep.subr.mxu0 0.0
  %7858 = vmatpush1.msra.mxu0 0.0
  %7859 = vmatprep.subr.mxu0 0.0
  %7860 = vmatpush1.msra.mxu0 0.0
  %7861 = vmatprep.subr.mxu0 0.0
  %7862 = vmatpush1.msra.mxu0 0.0
  %7863 = vmatprep.subr.mxu0 0.0
  %7864 = vmatpush1.msra.mxu0 0.0
  %7865 = vmatprep.subr.mxu0 0.0
  %7866 = vmatpush1.msra.mxu0 0.0
  %7867 = vmatprep.subr.mxu0 0.0
  %7868 = vmatpush1.msra.mxu0 0.0
  %7869 = vmatprep.subr.mxu0 0.0
  %7870 = vmatpush1.msra.mxu0 0.0
  %7871 = vmatprep.subr.mxu0 0.0
  %7872 = vmatpush1.msra.mxu0 0.0
  %7873 = vmatprep.subr.mxu0 0.0
  %7874 = vmatpush1.msra.mxu0 0.0
  %7875 = vmatprep.subr.mxu0 0.0
  %7876 = vmatpush1.msra.mxu0 0.0
  %7877 = vmatprep.subr.mxu0 0.0
  %7878 = vmatpush1.msra.mxu0 0.0
  %7879 = vmatprep.subr.mxu0 0.0
  %7880 = vmatpush1.msra.mxu0 0.0
  %7881 = vmatprep.subr.mxu0 0.0
  %7882 = vmatpush1.msra.mxu0 0.0
  %7883 = vmatprep.subr.mxu0 0.0
  %7884 = vmatpush1.msra.mxu0 0.0
  %7885 = vmatprep.subr.mxu0 0.0
  %7886 = vmatpush1.msra.mxu0 0.0
  %7887 = vmatprep.subr.mxu0 0.0
  %7888 = vmatpush1.msra.mxu0 0.0
  %7889 = vmatprep.subr.mxu0 0.0
  %7890 = vmatpush1.msra.mxu0 0.0
  %7891 = vmatprep.subr.mxu0 0.0
  %7892 = vmatpush1.msra.mxu0 0.0
  %7893 = vmatprep.subr.mxu0 0.0
  %7894 = vmatpush1.msra.mxu0 0.0
  %7895 = vmatprep.subr.mxu0 0.0
  %7896 = vmatpush1.msra.mxu0 0.0
  %7897 = vmatprep.subr.mxu0 0.0
  %7898 = vmatpush1.msra.mxu0 0.0
  %7899 = vmatprep.subr.mxu0 0.0
  %7900 = vmatpush1.msra.mxu0 0.0
  %7901 = vmatprep.subr.mxu0 0.0
  %7902 = vmatpush1.msra.mxu0 0.0
  %7903 = vmatprep.subr.mxu0 0.0
  %7904 = vmatpush1.msra.mxu0 0.0
  %7905 = vmatprep.subr.mxu0 0.0
  %7906 = vmatpush1.msra.mxu0 0.0
  %7907 = vmatprep.subr.mxu0 0.0
  %7908 = vmatpush1.msra.mxu0 0.0
  %7909 = vmatprep.subr.mxu0 0.0
  %7910 = vmatpush1.msra.mxu0 0.0
  %7911 = vmatprep.mubr.f32.mxu0 0.0
  %7912 = vmatmul.mubr.f32.gmra.mrb[0].mxu0 %v1206
  %v7913 = vpop.f32.mrb[0].mxu0
  %v7914 = vadd.f32 %v6851, %v7913
  %v7915 = vpop.f32.mrb[0].mxu0
  %7916 = vdwg.mxu0
  %v7917 = vxor.u32 %v7914, 2147483648
  %v7918 = vmul.f32 %v7917, 1.442695
  %v7919 = vpow.pop %v7918
  %v7920 = vadd.f32 %v7919, 1.0
  %v7921 = vrcp.pop %v7920
  %v7922 = vmul.f32 1.0, %v7921
  %v7923 = vtanh.pop %v7914
  %v7924 = vmul.f32 %v7922, 0.0
  %7926 = vrot.lane.b32.xlu0 %v7923, 100
  %v7927 = vpop.permute.xlu0 %7926
  %v7929 = vmul.f32 %v7922, %v7927
  %7931 = vrot.lane.b32.xlu0 %v7929, 14
  %v7932 = vpop.permute.xlu0 %7931
  %v7934 = vadd.f32 %v7924, %v7932
  %v7935 = vtanh.pop %v7934
  %7937 = vrot.lane.b32.xlu0 %v7935, 28
  %v7938 = vpop.permute.xlu0 %7937
  %v7940 = vmul.f32 %v7922, %v7938
  %7942 = vrot.lane.b32.xlu0 %v7940, 86
  %v7943 = vpop.permute.xlu0 %7942
  %vm7945 = vcmask 107520
  %7946 = vst.msk [vmem:[%s4] sm:$0x3] %vm7945, %v7943
  %v7947 = vsel %vm1204, %v7943, 0
  %7949 = vmatprep.subr.mxu0 0.0
  %7950 = vmatpush1.msra.mxu0 %v6690
  %7951 = vmatprep.subr.mxu0 0.0
  %7952 = vmatpush1.msra.mxu0 %v7845
  %7953 = vmatprep.subr.mxu0 0.0
  %7954 = vmatpush1.msra.mxu0 0.0
  %7955 = vmatprep.subr.mxu0 0.0
  %7956 = vmatpush1.msra.mxu0 0.0
  %7957 = vmatprep.subr.mxu0 0.0
  %7958 = vmatpush1.msra.mxu0 0.0
  %7959 = vmatprep.subr.mxu0 0.0
  %7960 = vmatpush1.msra.mxu0 0.0
  %7961 = vmatprep.subr.mxu0 0.0
  %7962 = vmatpush1.msra.mxu0 0.0
  %7963 = vmatprep.subr.mxu0 0.0
  %7964 = vmatpush1.msra.mxu0 0.0
  %7965 = vmatprep.subr.mxu0 0.0
  %7966 = vmatpush1.msra.mxu0 0.0
  %7967 = vmatprep.subr.mxu0 0.0
  %7968 = vmatpush1.msra.mxu0 0.0
  %7969 = vmatprep.subr.mxu0 0.0
  %7970 = vmatpush1.msra.mxu0 0.0
  %7971 = vmatprep.subr.mxu0 0.0
  %7972 = vmatpush1.msra.mxu0 0.0
  %7973 = vmatprep.subr.mxu0 0.0
  %7974 = vmatpush1.msra.mxu0 0.0
  %7975 = vmatprep.subr.mxu0 0.0
  %7976 = vmatpush1.msra.mxu0 0.0
  %7977 = vmatprep.subr.mxu0 0.0
  %7978 = vmatpush1.msra.mxu0 0.0
  %7979 = vmatprep.subr.mxu0 0.0
  %7980 = vmatpush1.msra.mxu0 0.0
  %7981 = vmatprep.subr.mxu0 0.0
  %7982 = vmatpush1.msra.mxu0 0.0
  %7983 = vmatprep.subr.mxu0 0.0
  %7984 = vmatpush1.msra.mxu0 0.0
  %7985 = vmatprep.subr.mxu0 0.0
  %7986 = vmatpush1.msra.mxu0 0.0
  %7987 = vmatprep.subr.mxu0 0.0
  %7988 = vmatpush1.msra.mxu0 0.0
  %7989 = vmatprep.subr.mxu0 0.0
  %7990 = vmatpush1.msra.mxu0 0.0
  %7991 = vmatprep.subr.mxu0 0.0
  %7992 = vmatpush1.msra.mxu0 0.0
  %7993 = vmatprep.subr.mxu0 0.0
  %7994 = vmatpush1.msra.mxu0 0.0
  %7995 = vmatprep.subr.mxu0 0.0
  %7996 = vmatpush1.msra.mxu0 0.0
  %7997 = vmatprep.subr.mxu0 0.0
  %7998 = vmatpush1.msra.mxu0 0.0
  %7999 = vmatprep.subr.mxu0 0.0
  %8000 = vmatpush1.msra.mxu0 0.0
  %8001 = vmatprep.subr.mxu0 0.0
  %8002 = vmatpush1.msra.mxu0 0.0
  %8003 = vmatprep.subr.mxu0 0.0
  %8004 = vmatpush1.msra.mxu0 0.0
  %8005 = vmatprep.subr.mxu0 0.0
  %8006 = vmatpush1.msra.mxu0 0.0
  %8007 = vmatprep.subr.mxu0 0.0
  %8008 = vmatpush1.msra.mxu0 0.0
  %8009 = vmatprep.subr.mxu0 0.0
  %8010 = vmatpush1.msra.mxu0 0.0
  %8011 = vmatprep.subr.mxu0 0.0
  %8012 = vmatpush1.msra.mxu0 0.0
  %8013 = vmatprep.mubr.f32.mxu0 0.0
  %8014 = vmatmul.mubr.f32.gmra.mrb[0].mxu0 %v7947
  %v8015 = vpop.f32.mrb[0].mxu0
  %v8016 = vadd.f32 %v6992, %v8015
  %v8017 = vpop.f32.mrb[0].mxu0
  %8018 = vdwg.mxu0
  %v8019 = vxor.u32 %v8016, 2147483648
  %v8020 = vmul.f32 %v8019, 1.442695
  %v8021 = vpow.pop %v8020
  %v8022 = vadd.f32 %v8021, 1.0
  %v8023 = vrcp.pop %v8022
  %v8024 = vmul.f32 1.0, %v8023
  %v8025 = vtanh.pop %v8016
  %v8026 = vmul.f32 %v8024, %v7934
  %8028 = vrot.lane.b32.xlu0 %v8025, 100
  %v8029 = vpop.permute.xlu0 %8028
  %v8031 = vmul.f32 %v8024, %v8029
  %8033 = vrot.lane.b32.xlu0 %v8031, 14
  %v8034 = vpop.permute.xlu0 %8033
  %v8036 = vadd.f32 %v8026, %v8034
  %v8037 = vtanh.pop %v8036
  %8039 = vrot.lane.b32.xlu0 %v8037, 28
  %v8040 = vpop.permute.xlu0 %8039
  %v8042 = vmul.f32 %v8024, %v8040
  %8044 = vrot.lane.b32.xlu0 %v8042, 86
  %v8045 = vpop.permute.xlu0 %8044
  %s8047 = scalar_lea.vmem %s4, 2
  %8048 = vst.msk [vmem:[%s8047] sm:$0x3] %vm7945, %v8045
  %v8049 = vsel %vm1204, %v8045, 0
  %8051 = vmatprep.subr.mxu0 0.0
  %8052 = vmatpush1.msra.mxu0 %v6690
  %8053 = vmatprep.subr.mxu0 0.0
  %8054 = vmatpush1.msra.mxu0 %v7845
  %8055 = vmatprep.subr.mxu0 0.0
  %8056 = vmatpush1.msra.mxu0 0.0
  %8057 = vmatprep.subr.mxu0 0.0
  %8058 = vmatpush1.msra.mxu0 0.0
  %8059 = vmatprep.subr.mxu0 0.0
  %8060 = vmatpush1.msra.mxu0 0.0
  %8061 = vmatprep.subr.mxu0 0.0
  %8062 = vmatpush1.msra.mxu0 0.0
  %8063 = vmatprep.subr.mxu0 0.0
  %8064 = vmatpush1.msra.mxu0 0.0
  %8065 = vmatprep.subr.mxu0 0.0
  %8066 = vmatpush1.msra.mxu0 0.0
  %8067 = vmatprep.subr.mxu0 0.0
  %8068 = vmatpush1.msra.mxu0 0.0
  %8069 = vmatprep.subr.mxu0 0.0
  %8070 = vmatpush1.msra.mxu0 0.0
  %8071 = vmatprep.subr.mxu0 0.0
  %8072 = vmatpush1.msra.mxu0 0.0
  %8073 = vmatprep.subr.mxu0 0.0
  %8074 = vmatpush1.msra.mxu0 0.0
  %8075 = vmatprep.subr.mxu0 0.0
  %8076 = vmatpush1.msra.mxu0 0.0
  %8077 = vmatprep.subr.mxu0 0.0
  %8078 = vmatpush1.msra.mxu0 0.0
  %8079 = vmatprep.subr.mxu0 0.0
  %8080 = vmatpush1.msra.mxu0 0.0
  %8081 = vmatprep.subr.mxu0 0.0
  %8082 = vmatpush1.msra.mxu0 0.0
  %8083 = vmatprep.subr.mxu0 0.0
  %8084 = vmatpush1.msra.mxu0 0.0
  %8085 = vmatprep.subr.mxu0 0.0
  %8086 = vmatpush1.msra.mxu0 0.0
  %8087 = vmatprep.subr.mxu0 0.0
  %8088 = vmatpush1.msra.mxu0 0.0
  %8089 = vmatprep.subr.mxu0 0.0
  %8090 = vmatpush1.msra.mxu0 0.0
  %8091 = vmatprep.subr.mxu0 0.0
  %8092 = vmatpush1.msra.mxu0 0.0
  %8093 = vmatprep.subr.mxu0 0.0
  %8094 = vmatpush1.msra.mxu0 0.0
  %8095 = vmatprep.subr.mxu0 0.0
  %8096 = vmatpush1.msra.mxu0 0.0
  %8097 = vmatprep.subr.mxu0 0.0
  %8098 = vmatpush1.msra.mxu0 0.0
  %8099 = vmatprep.subr.mxu0 0.0
  %8100 = vmatpush1.msra.mxu0 0.0
  %8101 = vmatprep.subr.mxu0 0.0
  %8102 = vmatpush1.msra.mxu0 0.0
  %8103 = vmatprep.subr.mxu0 0.0
  %8104 = vmatpush1.msra.mxu0 0.0
  %8105 = vmatprep.subr.mxu0 0.0
  %8106 = vmatpush1.msra.mxu0 0.0
  %8107 = vmatprep.subr.mxu0 0.0
  %8108 = vmatpush1.msra.mxu0 0.0
  %8109 = vmatprep.subr.mxu0 0.0
  %8110 = vmatpush1.msra.mxu0 0.0
  %8111 = vmatprep.subr.mxu0 0.0
  %8112 = vmatpush1.msra.mxu0 0.0
  %8113 = vmatprep.subr.mxu0 0.0
  %8114 = vmatpush1.msra.mxu0 0.0
  %8115 = vmatprep.mubr.f32.mxu0 0.0
  %8116 = vmatmul.mubr.f32.gmra.mrb[0].mxu0 %v8049
  %v8117 = vpop.f32.mrb[0].mxu0
  %v8118 = vadd.f32 %v7133, %v8117
  %v8119 = vpop.f32.mrb[0].mxu0
  %8120 = vdwg.mxu0
  %v8121 = vxor.u32 %v8118, 2147483648
  %v8122 = vmul.f32 %v8121, 1.442695
  %v8123 = vpow.pop %v8122
  %v8124 = vadd.f32 %v8123, 1.0
  %v8125 = vrcp.pop %v8124
  %v8126 = vmul.f32 1.0, %v8125
  %v8127 = vtanh.pop %v8118
  %v8128 = vmul.f32 %v8126, %v8036
  %8130 = vrot.lane.b32.xlu0 %v8127, 100
  %v8131 = vpop.permute.xlu0 %8130
  %v8133 = vmul.f32 %v8126, %v8131
  %8135 = vrot.lane.b32.xlu0 %v8133, 14
  %v8136 = vpop.permute.xlu0 %8135
  %v8138 = vadd.f32 %v8128, %v8136
  %v8139 = vtanh.pop %v8138
  %8141 = vrot.lane.b32.xlu0 %v8139, 28
  %v8142 = vpop.permute.xlu0 %8141
  %v8144 = vmul.f32 %v8126, %v8142
  %8146 = vrot.lane.b32.xlu0 %v8144, 86
  %v8147 = vpop.permute.xlu0 %8146
  %s8149 = scalar_lea.vmem %s4, 4
  %8150 = vst.msk [vmem:[%s8149] sm:$0x3] %vm7945, %v8147
  %v8151 = vsel %vm1204, %v8147, 0
  %8153 = vmatprep.subr.mxu0 0.0
  %8154 = vmatpush1.msra.mxu0 %v6690
  %8155 = vmatprep.subr.mxu0 0.0
  %8156 = vmatpush1.msra.mxu0 %v7845
  %8157 = vmatprep.subr.mxu0 0.0
  %8158 = vmatpush1.msra.mxu0 0.0
  %8159 = vmatprep.subr.mxu0 0.0
  %8160 = vmatpush1.msra.mxu0 0.0
  %8161 = vmatprep.subr.mxu0 0.0
  %8162 = vmatpush1.msra.mxu0 0.0
  %8163 = vmatprep.subr.mxu0 0.0
  %8164 = vmatpush1.msra.mxu0 0.0
  %8165 = vmatprep.subr.mxu0 0.0
  %8166 = vmatpush1.msra.mxu0 0.0
  %8167 = vmatprep.subr.mxu0 0.0
  %8168 = vmatpush1.msra.mxu0 0.0
  %8169 = vmatprep.subr.mxu0 0.0
  %8170 = vmatpush1.msra.mxu0 0.0
  %8171 = vmatprep.subr.mxu0 0.0
  %8172 = vmatpush1.msra.mxu0 0.0
  %8173 = vmatprep.subr.mxu0 0.0
  %8174 = vmatpush1.msra.mxu0 0.0
  %8175 = vmatprep.subr.mxu0 0.0
  %8176 = vmatpush1.msra.mxu0 0.0
  %8177 = vmatprep.subr.mxu0 0.0
  %8178 = vmatpush1.msra.mxu0 0.0
  %8179 = vmatprep.subr.mxu0 0.0
  %8180 = vmatpush1.msra.mxu0 0.0
  %8181 = vmatprep.subr.mxu0 0.0
  %8182 = vmatpush1.msra.mxu0 0.0
  %8183 = vmatprep.subr.mxu0 0.0
  %8184 = vmatpush1.msra.mxu0 0.0
  %8185 = vmatprep.subr.mxu0 0.0
  %8186 = vmatpush1.msra.mxu0 0.0
  %8187 = vmatprep.subr.mxu0 0.0
  %8188 = vmatpush1.msra.mxu0 0.0
  %8189 = vmatprep.subr.mxu0 0.0
  %8190 = vmatpush1.msra.mxu0 0.0
  %8191 = vmatprep.subr.mxu0 0.0
  %8192 = vmatpush1.msra.mxu0 0.0
  %8193 = vmatprep.subr.mxu0 0.0
  %8194 = vmatpush1.msra.mxu0 0.0
  %8195 = vmatprep.subr.mxu0 0.0
  %8196 = vmatpush1.msra.mxu0 0.0
  %8197 = vmatprep.subr.mxu0 0.0
  %8198 = vmatpush1.msra.mxu0 0.0
  %8199 = vmatprep.subr.mxu0 0.0
  %8200 = vmatpush1.msra.mxu0 0.0
  %8201 = vmatprep.subr.mxu0 0.0
  %8202 = vmatpush1.msra.mxu0 0.0
  %8203 = vmatprep.subr.mxu0 0.0
  %8204 = vmatpush1.msra.mxu0 0.0
  %8205 = vmatprep.subr.mxu0 0.0
  %8206 = vmatpush1.msra.mxu0 0.0
  %8207 = vmatprep.subr.mxu0 0.0
  %8208 = vmatpush1.msra.mxu0 0.0
  %8209 = vmatprep.subr.mxu0 0.0
  %8210 = vmatpush1.msra.mxu0 0.0
  %8211 = vmatprep.subr.mxu0 0.0
  %8212 = vmatpush1.msra.mxu0 0.0
  %8213 = vmatprep.subr.mxu0 0.0
  %8214 = vmatpush1.msra.mxu0 0.0
  %8215 = vmatprep.subr.mxu0 0.0
  %8216 = vmatpush1.msra.mxu0 0.0
  %8217 = vmatprep.mubr.f32.mxu0 0.0
  %8218 = vmatmul.mubr.f32.gmra.mrb[0].mxu0 %v8151
  %v8219 = vpop.f32.mrb[0].mxu0
  %v8220 = vadd.f32 %v7274, %v8219
  %v8221 = vpop.f32.mrb[0].mxu0
  %8222 = vdwg.mxu0
  %v8223 = vxor.u32 %v8220, 2147483648
  %v8224 = vmul.f32 %v8223, 1.442695
  %v8225 = vpow.pop %v8224
  %v8226 = vadd.f32 %v8225, 1.0
  %v8227 = vrcp.pop %v8226
  %v8228 = vmul.f32 1.0, %v8227
  %v8229 = vtanh.pop %v8220
  %v8230 = vmul.f32 %v8228, %v8138
  %8232 = vrot.lane.b32.xlu0 %v8229, 100
  %v8233 = vpop.permute.xlu0 %8232
  %v8235 = vmul.f32 %v8228, %v8233
  %8237 = vrot.lane.b32.xlu0 %v8235, 14
  %v8238 = vpop.permute.xlu0 %8237
  %v8240 = vadd.f32 %v8230, %v8238
  %v8241 = vtanh.pop %v8240
  %8243 = vrot.lane.b32.xlu0 %v8241, 28
  %v8244 = vpop.permute.xlu0 %8243
  %v8246 = vmul.f32 %v8228, %v8244
  %8248 = vrot.lane.b32.xlu0 %v8246, 86
  %v8249 = vpop.permute.xlu0 %8248
  %s8251 = scalar_lea.vmem %s4, 6
  %8252 = vst.msk [vmem:[%s8251] sm:$0x3] %vm7945, %v8249
  %v8253 = vsel %vm1204, %v8249, 0
  %8255 = vmatprep.subr.mxu0 0.0
  %8256 = vmatpush1.msra.mxu0 %v6690
  %8257 = vmatprep.subr.mxu0 0.0
  %8258 = vmatpush1.msra.mxu0 %v7845
  %8259 = vmatprep.subr.mxu0 0.0
  %8260 = vmatpush1.msra.mxu0 0.0
  %8261 = vmatprep.subr.mxu0 0.0
  %8262 = vmatpush1.msra.mxu0 0.0
  %8263 = vmatprep.subr.mxu0 0.0
  %8264 = vmatpush1.msra.mxu0 0.0
  %8265 = vmatprep.subr.mxu0 0.0
  %8266 = vmatpush1.msra.mxu0 0.0
  %8267 = vmatprep.subr.mxu0 0.0
  %8268 = vmatpush1.msra.mxu0 0.0
  %8269 = vmatprep.subr.mxu0 0.0
  %8270 = vmatpush1.msra.mxu0 0.0
  %8271 = vmatprep.subr.mxu0 0.0
  %8272 = vmatpush1.msra.mxu0 0.0
  %8273 = vmatprep.subr.mxu0 0.0
  %8274 = vmatpush1.msra.mxu0 0.0
  %8275 = vmatprep.subr.mxu0 0.0
  %8276 = vmatpush1.msra.mxu0 0.0
  %8277 = vmatprep.subr.mxu0 0.0
  %8278 = vmatpush1.msra.mxu0 0.0
  %8279 = vmatprep.subr.mxu0 0.0
  %8280 = vmatpush1.msra.mxu0 0.0
  %8281 = vmatprep.subr.mxu0 0.0
  %8282 = vmatpush1.msra.mxu0 0.0
  %8283 = vmatprep.subr.mxu0 0.0
  %8284 = vmatpush1.msra.mxu0 0.0
  %8285 = vmatprep.subr.mxu0 0.0
  %8286 = vmatpush1.msra.mxu0 0.0
  %8287 = vmatprep.subr.mxu0 0.0
  %8288 = vmatpush1.msra.mxu0 0.0
  %8289 = vmatprep.subr.mxu0 0.0
  %8290 = vmatpush1.msra.mxu0 0.0
  %8291 = vmatprep.subr.mxu0 0.0
  %8292 = vmatpush1.msra.mxu0 0.0
  %8293 = vmatprep.subr.mxu0 0.0
  %8294 = vmatpush1.msra.mxu0 0.0
  %8295 = vmatprep.subr.mxu0 0.0
  %8296 = vmatpush1.msra.mxu0 0.0
  %8297 = vmatprep.subr.mxu0 0.0
  %8298 = vmatpush1.msra.mxu0 0.0
  %8299 = vmatprep.subr.mxu0 0.0
  %8300 = vmatpush1.msra.mxu0 0.0
  %8301 = vmatprep.subr.mxu0 0.0
  %8302 = vmatpush1.msra.mxu0 0.0
  %8303 = vmatprep.subr.mxu0 0.0
  %8304 = vmatpush1.msra.mxu0 0.0
  %8305 = vmatprep.subr.mxu0 0.0
  %8306 = vmatpush1.msra.mxu0 0.0
  %8307 = vmatprep.subr.mxu0 0.0
  %8308 = vmatpush1.msra.mxu0 0.0
  %8309 = vmatprep.subr.mxu0 0.0
  %8310 = vmatpush1.msra.mxu0 0.0
  %8311 = vmatprep.subr.mxu0 0.0
  %8312 = vmatpush1.msra.mxu0 0.0
  %8313 = vmatprep.subr.mxu0 0.0
  %8314 = vmatpush1.msra.mxu0 0.0
  %8315 = vmatprep.subr.mxu0 0.0
  %8316 = vmatpush1.msra.mxu0 0.0
  %8317 = vmatprep.subr.mxu0 0.0
  %8318 = vmatpush1.msra.mxu0 0.0
  %8319 = vmatprep.mubr.f32.mxu0 0.0
  %8320 = vmatmul.mubr.f32.gmra.mrb[0].mxu0 %v8253
  %v8321 = vpop.f32.mrb[0].mxu0
  %v8322 = vadd.f32 %v7415, %v8321
  %v8323 = vpop.f32.mrb[0].mxu0
  %8324 = vdwg.mxu0
  %v8325 = vxor.u32 %v8322, 2147483648
  %v8326 = vmul.f32 %v8325, 1.442695
  %v8327 = vpow.pop %v8326
  %v8328 = vadd.f32 %v8327, 1.0
  %v8329 = vrcp.pop %v8328
  %v8330 = vmul.f32 1.0, %v8329
  %v8331 = vtanh.pop %v8322
  %v8332 = vmul.f32 %v8330, %v8240
  %8334 = vrot.lane.b32.xlu0 %v8331, 100
  %v8335 = vpop.permute.xlu0 %8334
  %v8337 = vmul.f32 %v8330, %v8335
  %8339 = vrot.lane.b32.xlu0 %v8337, 14
  %v8340 = vpop.permute.xlu0 %8339
  %v8342 = vadd.f32 %v8332, %v8340
  %v8343 = vtanh.pop %v8342
  %8345 = vrot.lane.b32.xlu0 %v8343, 28
  %v8346 = vpop.permute.xlu0 %8345
  %v8348 = vmul.f32 %v8330, %v8346
  %8350 = vrot.lane.b32.xlu0 %v8348, 86
  %v8351 = vpop.permute.xlu0 %8350
  %s8353 = scalar_lea.vmem %s4, 8
  %8354 = vst.msk [vmem:[%s8353] sm:$0x3] %vm7945, %v8351
  %v8355 = vsel %vm1204, %v8351, 0
  %8357 = vmatprep.subr.mxu0 0.0
  %8358 = vmatpush1.msra.mxu0 %v6690
  %8359 = vmatprep.subr.mxu0 0.0
  %8360 = vmatpush1.msra.mxu0 %v7845
  %8361 = vmatprep.subr.mxu0 0.0
  %8362 = vmatpush1.msra.mxu0 0.0
  %8363 = vmatprep.subr.mxu0 0.0
  %8364 = vmatpush1.msra.mxu0 0.0
  %8365 = vmatprep.subr.mxu0 0.0
  %8366 = vmatpush1.msra.mxu0 0.0
  %8367 = vmatprep.subr.mxu0 0.0
  %8368 = vmatpush1.msra.mxu0 0.0
  %8369 = vmatprep.subr.mxu0 0.0
  %8370 = vmatpush1.msra.mxu0 0.0
  %8371 = vmatprep.subr.mxu0 0.0
  %8372 = vmatpush1.msra.mxu0 0.0
  %8373 = vmatprep.subr.mxu0 0.0
  %8374 = vmatpush1.msra.mxu0 0.0
  %8375 = vmatprep.subr.mxu0 0.0
  %8376 = vmatpush1.msra.mxu0 0.0
  %8377 = vmatprep.subr.mxu0 0.0
  %8378 = vmatpush1.msra.mxu0 0.0
  %8379 = vmatprep.subr.mxu0 0.0
  %8380 = vmatpush1.msra.mxu0 0.0
  %8381 = vmatprep.subr.mxu0 0.0
  %8382 = vmatpush1.msra.mxu0 0.0
  %8383 = vmatprep.subr.mxu0 0.0
  %8384 = vmatpush1.msra.mxu0 0.0
  %8385 = vmatprep.subr.mxu0 0.0
  %8386 = vmatpush1.msra.mxu0 0.0
  %8387 = vmatprep.subr.mxu0 0.0
  %8388 = vmatpush1.msra.mxu0 0.0
  %8389 = vmatprep.subr.mxu0 0.0
  %8390 = vmatpush1.msra.mxu0 0.0
  %8391 = vmatprep.subr.mxu0 0.0
  %8392 = vmatpush1.msra.mxu0 0.0
  %8393 = vmatprep.subr.mxu0 0.0
  %8394 = vmatpush1.msra.mxu0 0.0
  %8395 = vmatprep.subr.mxu0 0.0
  %8396 = vmatpush1.msra.mxu0 0.0
  %8397 = vmatprep.subr.mxu0 0.0
  %8398 = vmatpush1.msra.mxu0 0.0
  %8399 = vmatprep.subr.mxu0 0.0
  %8400 = vmatpush1.msra.mxu0 0.0
  %8401 = vmatprep.subr.mxu0 0.0
  %8402 = vmatpush1.msra.mxu0 0.0
  %8403 = vmatprep.subr.mxu0 0.0
  %8404 = vmatpush1.msra.mxu0 0.0
  %8405 = vmatprep.subr.mxu0 0.0
  %8406 = vmatpush1.msra.mxu0 0.0
  %8407 = vmatprep.subr.mxu0 0.0
  %8408 = vmatpush1.msra.mxu0 0.0
  %8409 = vmatprep.subr.mxu0 0.0
  %8410 = vmatpush1.msra.mxu0 0.0
  %8411 = vmatprep.subr.mxu0 0.0
  %8412 = vmatpush1.msra.mxu0 0.0
  %8413 = vmatprep.subr.mxu0 0.0
  %8414 = vmatpush1.msra.mxu0 0.0
  %8415 = vmatprep.subr.mxu0 0.0
  %8416 = vmatpush1.msra.mxu0 0.0
  %8417 = vmatprep.subr.mxu0 0.0
  %8418 = vmatpush1.msra.mxu0 0.0
  %8419 = vmatprep.subr.mxu0 0.0
  %8420 = vmatpush1.msra.mxu0 0.0
  %8421 = vmatprep.mubr.f32.mxu0 0.0
  %8422 = vmatmul.mubr.f32.gmra.mrb[0].mxu0 %v8355
  %v8423 = vpop.f32.mrb[0].mxu0
  %v8424 = vadd.f32 %v7556, %v8423
  %v8425 = vpop.f32.mrb[0].mxu0
  %8426 = vdwg.mxu0
  %v8427 = vxor.u32 %v8424, 2147483648
  %v8428 = vmul.f32 %v8427, 1.442695
  %v8429 = vpow.pop %v8428
  %v8430 = vadd.f32 %v8429, 1.0
  %v8431 = vrcp.pop %v8430
  %v8432 = vmul.f32 1.0, %v8431
  %v8433 = vtanh.pop %v8424
  %v8434 = vmul.f32 %v8432, %v8342
  %8436 = vrot.lane.b32.xlu0 %v8433, 100
  %v8437 = vpop.permute.xlu0 %8436
  %v8439 = vmul.f32 %v8432, %v8437
  %8441 = vrot.lane.b32.xlu0 %v8439, 14
  %v8442 = vpop.permute.xlu0 %8441
  %v8444 = vadd.f32 %v8434, %v8442
  %v8445 = vtanh.pop %v8444
  %8447 = vrot.lane.b32.xlu0 %v8445, 28
  %v8448 = vpop.permute.xlu0 %8447
  %v8450 = vmul.f32 %v8432, %v8448
  %8452 = vrot.lane.b32.xlu0 %v8450, 86
  %v8453 = vpop.permute.xlu0 %8452
  %s8455 = scalar_lea.vmem %s4, 10
  %8456 = vst.msk [vmem:[%s8455] sm:$0x3] %vm7945, %v8453
  %v8457 = vsel %vm1204, %v8453, 0
  %8459 = vmatprep.subr.mxu0 0.0
  %8460 = vmatpush1.msra.mxu0 %v6690
  %8461 = vmatprep.subr.mxu0 0.0
  %8462 = vmatpush1.msra.mxu0 %v7845
  %8463 = vmatprep.subr.mxu0 0.0
  %8464 = vmatpush1.msra.mxu0 0.0
  %8465 = vmatprep.subr.mxu0 0.0
  %8466 = vmatpush1.msra.mxu0 0.0
  %8467 = vmatprep.subr.mxu0 0.0
  %8468 = vmatpush1.msra.mxu0 0.0
  %8469 = vmatprep.subr.mxu0 0.0
  %8470 = vmatpush1.msra.mxu0 0.0
  %8471 = vmatprep.subr.mxu0 0.0
  %8472 = vmatpush1.msra.mxu0 0.0
  %8473 = vmatprep.subr.mxu0 0.0
  %8474 = vmatpush1.msra.mxu0 0.0
  %8475 = vmatprep.subr.mxu0 0.0
  %8476 = vmatpush1.msra.mxu0 0.0
  %8477 = vmatprep.subr.mxu0 0.0
  %8478 = vmatpush1.msra.mxu0 0.0
  %8479 = vmatprep.subr.mxu0 0.0
  %8480 = vmatpush1.msra.mxu0 0.0
  %8481 = vmatprep.subr.mxu0 0.0
  %8482 = vmatpush1.msra.mxu0 0.0
  %8483 = vmatprep.subr.mxu0 0.0
  %8484 = vmatpush1.msra.mxu0 0.0
  %8485 = vmatprep.subr.mxu0 0.0
  %8486 = vmatpush1.msra.mxu0 0.0
  %8487 = vmatprep.subr.mxu0 0.0
  %8488 = vmatpush1.msra.mxu0 0.0
  %8489 = vmatprep.subr.mxu0 0.0
  %8490 = vmatpush1.msra.mxu0 0.0
  %8491 = vmatprep.subr.mxu0 0.0
  %8492 = vmatpush1.msra.mxu0 0.0
  %8493 = vmatprep.subr.mxu0 0.0
  %8494 = vmatpush1.msra.mxu0 0.0
  %8495 = vmatprep.subr.mxu0 0.0
  %8496 = vmatpush1.msra.mxu0 0.0
  %8497 = vmatprep.subr.mxu0 0.0
  %8498 = vmatpush1.msra.mxu0 0.0
  %8499 = vmatprep.subr.mxu0 0.0
  %8500 = vmatpush1.msra.mxu0 0.0
  %8501 = vmatprep.subr.mxu0 0.0
  %8502 = vmatpush1.msra.mxu0 0.0
  %8503 = vmatprep.subr.mxu0 0.0
  %8504 = vmatpush1.msra.mxu0 0.0
  %8505 = vmatprep.subr.mxu0 0.0
  %8506 = vmatpush1.msra.mxu0 0.0
  %8507 = vmatprep.subr.mxu0 0.0
  %8508 = vmatpush1.msra.mxu0 0.0
  %8509 = vmatprep.subr.mxu0 0.0
  %8510 = vmatpush1.msra.mxu0 0.0
  %8511 = vmatprep.subr.mxu0 0.0
  %8512 = vmatpush1.msra.mxu0 0.0
  %8513 = vmatprep.subr.mxu0 0.0
  %8514 = vmatpush1.msra.mxu0 0.0
  %8515 = vmatprep.subr.mxu0 0.0
  %8516 = vmatpush1.msra.mxu0 0.0
  %8517 = vmatprep.subr.mxu0 0.0
  %8518 = vmatpush1.msra.mxu0 0.0
  %8519 = vmatprep.subr.mxu0 0.0
  %8520 = vmatpush1.msra.mxu0 0.0
  %8521 = vmatprep.subr.mxu0 0.0
  %8522 = vmatpush1.msra.mxu0 0.0
  %8523 = vmatprep.mubr.f32.mxu0 0.0
  %8524 = vmatmul.mubr.f32.gmra.mrb[0].mxu0 %v8457
  %v8525 = vpop.f32.mrb[0].mxu0
  %v8526 = vadd.f32 %v7697, %v8525
  %v8527 = vpop.f32.mrb[0].mxu0
  %8528 = vdwg.mxu0
  %v8529 = vxor.u32 %v8526, 2147483648
  %v8530 = vmul.f32 %v8529, 1.442695
  %v8531 = vpow.pop %v8530
  %v8532 = vadd.f32 %v8531, 1.0
  %v8533 = vrcp.pop %v8532
  %v8534 = vmul.f32 1.0, %v8533
  %v8535 = vtanh.pop %v8526
  %v8536 = vmul.f32 %v8534, %v8444
  %8538 = vrot.lane.b32.xlu0 %v8535, 100
  %v8539 = vpop.permute.xlu0 %8538
  %v8541 = vmul.f32 %v8534, %v8539
  %8543 = vrot.lane.b32.xlu0 %v8541, 14
  %v8544 = vpop.permute.xlu0 %8543
  %v8546 = vadd.f32 %v8536, %v8544
  %v8547 = vtanh.pop %v8546
  %8549 = vrot.lane.b32.xlu0 %v8547, 28
  %v8550 = vpop.permute.xlu0 %8549
  %v8552 = vmul.f32 %v8534, %v8550
  %8554 = vrot.lane.b32.xlu0 %v8552, 86
  %v8555 = vpop.permute.xlu0 %8554
  %s8557 = scalar_lea.vmem %s4, 12
  %8558 = vst.msk [vmem:[%s8557] sm:$0x3] %vm7945, %v8555
  %v8559 = vsel %vm1204, %v8555, 0
  %8561 = vmatprep.subr.mxu0 0.0
  %8562 = vmatpush1.msra.mxu0 %v6690
  %8563 = vmatprep.subr.mxu0 0.0
  %8564 = vmatpush1.msra.mxu0 %v7845
  %8565 = vmatprep.subr.mxu0 0.0
  %8566 = vmatpush1.msra.mxu0 0.0
  %8567 = vmatprep.subr.mxu0 0.0
  %8568 = vmatpush1.msra.mxu0 0.0
  %8569 = vmatprep.subr.mxu0 0.0
  %8570 = vmatpush1.msra.mxu0 0.0
  %8571 = vmatprep.subr.mxu0 0.0
  %8572 = vmatpush1.msra.mxu0 0.0
  %8573 = vmatprep.subr.mxu0 0.0
  %8574 = vmatpush1.msra.mxu0 0.0
  %8575 = vmatprep.subr.mxu0 0.0
  %8576 = vmatpush1.msra.mxu0 0.0
  %8577 = vmatprep.subr.mxu0 0.0
  %8578 = vmatpush1.msra.mxu0 0.0
  %8579 = vmatprep.subr.mxu0 0.0
  %8580 = vmatpush1.msra.mxu0 0.0
  %8581 = vmatprep.subr.mxu0 0.0
  %8582 = vmatpush1.msra.mxu0 0.0
  %8583 = vmatprep.subr.mxu0 0.0
  %8584 = vmatpush1.msra.mxu0 0.0
  %8585 = vmatprep.subr.mxu0 0.0
  %8586 = vmatpush1.msra.mxu0 0.0
  %8587 = vmatprep.subr.mxu0 0.0
  %8588 = vmatpush1.msra.mxu0 0.0
  %8589 = vmatprep.subr.mxu0 0.0
  %8590 = vmatpush1.msra.mxu0 0.0
  %8591 = vmatprep.subr.mxu0 0.0
  %8592 = vmatpush1.msra.mxu0 0.0
  %8593 = vmatprep.subr.mxu0 0.0
  %8594 = vmatpush1.msra.mxu0 0.0
  %8595 = vmatprep.subr.mxu0 0.0
  %8596 = vmatpush1.msra.mxu0 0.0
  %8597 = vmatprep.subr.mxu0 0.0
  %8598 = vmatpush1.msra.mxu0 0.0
  %8599 = vmatprep.subr.mxu0 0.0
  %8600 = vmatpush1.msra.mxu0 0.0
  %8601 = vmatprep.subr.mxu0 0.0
  %8602 = vmatpush1.msra.mxu0 0.0
  %8603 = vmatprep.subr.mxu0 0.0
  %8604 = vmatpush1.msra.mxu0 0.0
  %8605 = vmatprep.subr.mxu0 0.0
  %8606 = vmatpush1.msra.mxu0 0.0
  %8607 = vmatprep.subr.mxu0 0.0
  %8608 = vmatpush1.msra.mxu0 0.0
  %8609 = vmatprep.subr.mxu0 0.0
  %8610 = vmatpush1.msra.mxu0 0.0
  %8611 = vmatprep.subr.mxu0 0.0
  %8612 = vmatpush1.msra.mxu0 0.0
  %8613 = vmatprep.subr.mxu0 0.0
  %8614 = vmatpush1.msra.mxu0 0.0
  %8615 = vmatprep.subr.mxu0 0.0
  %8616 = vmatpush1.msra.mxu0 0.0
  %8617 = vmatprep.subr.mxu0 0.0
  %8618 = vmatpush1.msra.mxu0 0.0
  %8619 = vmatprep.subr.mxu0 0.0
  %8620 = vmatpush1.msra.mxu0 0.0
  %8621 = vmatprep.subr.mxu0 0.0
  %8622 = vmatpush1.msra.mxu0 0.0
  %8623 = vmatprep.subr.mxu0 0.0
  %8624 = vmatpush1.msra.mxu0 0.0
  %8625 = vmatprep.mubr.f32.mxu0 0.0
  %8626 = vmatmul.mubr.f32.gmra.mrb[0].mxu0 %v8559
  %v8627 = vpop.f32.mrb[0].mxu0
  %v8628 = vadd.f32 %v7843, %v8627
  %v8629 = vpop.f32.mrb[0].mxu0
  %8630 = vdwg.mxu0
  %v8631 = vxor.u32 %v8628, 2147483648
  %v8632 = vmul.f32 %v8631, 1.442695
  %v8633 = vpow.pop %v8632
  %v8634 = vadd.f32 %v8633, 1.0
  %v8635 = vrcp.pop %v8634
  %v8636 = vmul.f32 1.0, %v8635
  %v8637 = vtanh.pop %v8628
  %v8638 = vmul.f32 %v8636, %v8546
  %8640 = vrot.lane.b32.xlu0 %v8637, 100
  %v8641 = vpop.permute.xlu0 %8640
  %v8643 = vmul.f32 %v8636, %v8641
  %8645 = vrot.lane.b32.xlu0 %v8643, 14
  %v8646 = vpop.permute.xlu0 %8645
  %v8648 = vadd.f32 %v8638, %v8646
  %v8649 = vtanh.pop %v8648
  %8651 = vrot.lane.b32.xlu0 %v8649, 28
  %v8652 = vpop.permute.xlu0 %8651
  %v8654 = vmul.f32 %v8636, %v8652
  %8656 = vrot.lane.b32.xlu0 %v8654, 86
  %v8657 = vpop.permute.xlu0 %8656
  %s8659 = scalar_lea.vmem %s4, 14
  %8660 = vst.msk [vmem:[%s8659] sm:$0x3] %vm7945, %v8657
  // Predicated region
  $region18: #{encoder_forward.1} parent=0 // pred_check
    _
  $region19: #{encoder_forward.1} parent=0 // pred_check_branch
    %8662 = sbr.rel (0) target = $region21
  $region20: #{encoder_forward.1} parent=0 // pred_region
    _
  $region21: #{encoder_forward.1} parent=0 // pred_fallthru
    _
  // Predicated region
  $region22: #{encoder_forward.1} parent=0 // pred_check
    _
  $region23: #{encoder_forward.1} parent=0 // pred_check_branch
    %8664 = sbr.rel (0) target = $region25
  $region24: #{encoder_forward.1} parent=0 // pred_region
    _
  $region25: #{encoder_forward.1} parent=0 // pred_fallthru
    _

</llo_original>
